<compile_context>
chip_gen: v6e
topology: v6e:2x2x1
jax: 0.10.0
libtpu: 0.0.40
codegen_flags: <defaults>
</compile_context>

<pallas_src>
import functools

import jax
import jax.numpy as jnp
from jax.experimental import pallas as pl
from jax.experimental.pallas import tpu as pltpu


def _tpu_defaults():
    """(vmem_limit_bytes, spatial tile target) -- generation aware."""
    vmem_cap = 128 * 1024 * 1024
    try:
        vmem_cap = int(getattr(pltpu.get_tpu_info(), "vmem_capacity_bytes", vmem_cap))
    except Exception:
        pass
    if vmem_cap >= 100 * 1024 * 1024:        # v5e / v6e: 128 MiB physical VMEM
        return 96 * 1024 * 1024, 2048
    return 48 * 1024 * 1024, 1024            # v7x: 64 MiB physical VMEM


VMEM_LIMIT, TM_TARGET = _tpu_defaults()


def _pick_tile(m, target):
    """Largest legal spatial tile <= target: either the full axis, or a multiple of
    128 that divides it (keeps lane-aligned, lane-dense blocks)."""
    if m <= target:
        return m
    for t in range(target, 127, -128):
        if m % t == 0:
            return t
    return m


# ----------------------------------------------------------------------------
# LowMixer front-end: fused 2x2 avg-pool + single-head attention, per batch
# ----------------------------------------------------------------------------

def _make_attn_kernel(H, W, hd, ld, hp, wp, pool):
    N = hp * wp

    def kernel(x_ref, wq_ref, wk_ref, wv_ref, o_ref):
        # fused avg-pool of the LOW channel half, done in VMEM (no HBM round trip)
        lx = x_ref[0][:, :, hd:]                                   # (H, W, ld) f32
        rowp = lx.reshape(hp, pool, W, ld).mean(axis=1)            # (hp, W, ld)
        pooled = rowp.reshape(hp, wp, pool, ld).mean(axis=2)       # (hp, wp, ld)
        t = pooled.reshape(N, ld).astype(jnp.bfloat16)

        # qkv as three separate (ld, ld) matmuls; softmax scale pre-folded into wq
        q = jnp.dot(t, wq_ref[...], preferred_element_type=jnp.float32)
        k = jnp.dot(t, wk_ref[...], preferred_element_type=jnp.float32)
        v = jnp.dot(t, wv_ref[...], preferred_element_type=jnp.float32)

        # TODO(synk): for large N this should become KV-tiled flash-style (online
        # softmax) instead of materializing the full NxN score matrix.
        nt = (((1,), (1,)), ((), ()))                              # contract last dims
        s = jax.lax.dot_general(q.astype(jnp.bfloat16), k.astype(jnp.bfloat16), nt,
                                preferred_element_type=jnp.float32)
        s = s - jnp.max(s, axis=-1, keepdims=True)
        e = jnp.exp(s)                                             # f32 softmax
        p = e * pl.reciprocal(jnp.sum(e, axis=-1, keepdims=True), approx=True)
        out = jnp.dot(p.astype(jnp.bfloat16), v.astype(jnp.bfloat16),
                      preferred_element_type=jnp.float32)
        o_ref[0] = out.reshape(hp, wp, ld)

    return kernel


def low_mixer_attention(x_nhwc, wq, wk, wv, hd, ld, pool):
    """Pool + attention (attn_drop p=0 -> identity). Output (B, hp, wp, ld)."""
    B, H, W, C = x_nhwc.shape
    hp, wp = H // pool, W // pool
    kern = _make_attn_kernel(H, W, hd, ld, hp, wp, pool)
    return pl.pallas_call(
        kern,
        out_shape=jax.ShapeDtypeStruct((B, hp, wp, ld), jnp.float32),
        grid=(B,),
        in_specs=[pl.BlockSpec((1, H, W, C), lambda b: (b, 0, 0, 0)),
                  pl.BlockSpec((ld, ld), lambda b: (0, 0)),
                  pl.BlockSpec((ld, ld), lambda b: (0, 0)),
                  pl.BlockSpec((ld, ld), lambda b: (0, 0))],
        out_specs=pl.BlockSpec((1, hp, wp, ld), lambda b: (b, 0, 0, 0)),
        compiler_params=pltpu.CompilerParams(
            dimension_semantics=("parallel",),
            vmem_limit_bytes=VMEM_LIMIT),
    )(x_nhwc, wq, wk, wv)


# ----------------------------------------------------------------------------
# Fused spatial path: HighMixer + upsample + concat + (x + conv_fuse(x)) + proj
# ----------------------------------------------------------------------------

def _make_spatial_kernel(H, W, hd, ld, pool):
    C = hd + ld
    hp, wp = H // pool, W // pool
    taps = [(dh, dw) for dh in range(3) for dw in range(3)]

    def kernel(x_ref, att_ref, w1_ref, hmdw_ref, fdw_ref, pw_ref, pb_ref,
               o_ref, pad_ref):
        # Zero only the 1-wide halo border (the interior is fully overwritten below).
        # Done every step so it stays correct if the B axis is megacore-sharded.
        zrow = jnp.zeros((1, W + 2, C), jnp.float32)
        zcol = jnp.zeros((H + 2, 1, C), jnp.float32)
        pad_ref[0:1, :, :] = zrow
        pad_ref[H + 1:H + 2, :, :] = zrow
        pad_ref[:, 0:1, :] = zcol
        pad_ref[:, W + 1:W + 2, :] = zcol

        # ---- HighMixer: 1x1 conv (bias-free, bf16 MXU) on the unpadded tile ----
        hx = x_ref[0][:, :, :hd]                                   # (H, W, hd)
        c1 = jnp.dot(hx.reshape(H * W, hd).astype(jnp.bfloat16), w1_ref[...],
                     preferred_element_type=jnp.float32).reshape(H, W, hd)
        # zero-padded depthwise 3x3 with the halo in VMEM scratch; acc init from tap 0
        pad_ref[1:H + 1, 1:W + 1, 0:hd] = c1
        acc = pad_ref[0:H, 0:W, 0:hd] * hmdw_ref[0, 0][None, None, :]
        for dh, dw in taps[1:]:
            acc = acc + pad_ref[dh:dh + H, dw:dw + W, 0:hd] * hmdw_ref[dh, dw][None, None, :]
        # TODO(synk): PyTorch nn.GELU is exact (erf); tanh approximation used because
        # erf lowering is not guaranteed in Mosaic.
        hx_out = jax.nn.gelu(acc, approximate=True)

        # ---- fused 2x nearest upsample of the attention tile (no HBM round trip) ----
        a = att_ref[0]                                             # (hp, wp, ld)
        a = jnp.broadcast_to(a[:, None, :, :], (hp, pool, wp, ld)).reshape(H, wp, ld)
        att_up = jnp.broadcast_to(a[:, :, None, :], (H, wp, pool, ld)).reshape(H, W, ld)

        # ---- channel concat [high | low]; depthwise conv_fuse never mixes channels ----
        f_cat = jnp.concatenate([hx_out, att_up], axis=-1)         # (H, W, C)
        pad_ref[1:H + 1, 1:W + 1, :] = f_cat

        # ---- x + conv_fuse(x): depthwise 3x3 over the full C channels ----
        f = f_cat * (fdw_ref[1, 1][None, None, :] + 1.0)           # residual + center tap
        for dh, dw in taps:
            if (dh, dw) == (1, 1):
                continue
            f = f + pad_ref[dh:dh + H, dw:dw + W, :] * fdw_ref[dh, dw][None, None, :]

        # ---- proj 1x1 (+bias): one full-C contraction, output (C, H*W) lane-dense ----
        fm = f.reshape(H * W, C).astype(jnp.bfloat16)
        nt = (((1,), (1,)), ((), ()))                              # contract channel dims
        y = jax.lax.dot_general(pw_ref[...], fm, nt, preferred_element_type=jnp.float32)
        o_ref[0] = (y + pb_ref[...]).astype(o_ref.dtype)

    return kernel


def spatial_path(x_nhwc, att, params, pool):
    B, H, W, C = x_nhwc.shape
    ld = C // 2
    hd = C - ld
    hp, wp = att.shape[1], att.shape[2]
    kern = _make_spatial_kernel(H, W, hd, ld, pool)
    # TODO(synk): for v7x (2 TCs, 64 MiB VMEM) at large H*W this should add an H-band
    # grid axis (with a 1-row halo per band) instead of parallelizing only over B.
    return pl.pallas_call(
        kern,
        out_shape=jax.ShapeDtypeStruct((B, C, H * W), jnp.bfloat16),
        grid=(B,),
        in_specs=[pl.BlockSpec((1, H, W, C), lambda b: (b, 0, 0, 0)),
                  pl.BlockSpec((1, hp, wp, ld), lambda b: (b, 0, 0, 0)),
                  pl.BlockSpec((hd, hd), lambda b: (0, 0)),
                  pl.BlockSpec((3, 3, hd), lambda b: (0, 0, 0)),
                  pl.BlockSpec((3, 3, C), lambda b: (0, 0, 0)),
                  pl.BlockSpec((C, C), lambda b: (0, 0)),
                  pl.BlockSpec((C, 1), lambda b: (0, 0))],
        out_specs=pl.BlockSpec((1, C, H * W), lambda b: (b, 0, 0)),
        scratch_shapes=[pltpu.VMEM((H + 2, W + 2, C), jnp.float32)],
        compiler_params=pltpu.CompilerParams(
            dimension_semantics=("parallel",),
            vmem_limit_bytes=VMEM_LIMIT),
    )(x_nhwc, att, params["hm_w1t"], params["hm_dw"], params["fuse_dw"],
      params["proj_w"], params["proj_b"])


# ----------------------------------------------------------------------------
# FreBlock 1x1-conv chains, channels-first, tiled over (batch, spatial)
# ----------------------------------------------------------------------------

def _freblock_kernel(mag_ref, pha_ref, w1m_ref, b1m_ref, w2m_ref, b2m_ref,
                     w1p_ref, b1p_ref, w2p_ref, b2p_ref, re_ref, im_ref):
    mag = mag_ref[0].astype(jnp.bfloat16)                          # (C, TM)
    pha = pha_ref[0].astype(jnp.bfloat16)
    m = jnp.dot(w1m_ref[...], mag, preferred_element_type=jnp.float32) + b1m_ref[...]
    m = jnp.where(m > 0, m, 0.1 * m)                               # LeakyReLU(0.1), f32
    m = jnp.dot(w2m_ref[...], m.astype(jnp.bfloat16),
                preferred_element_type=jnp.float32) + b2m_ref[...]
    p = jnp.dot(w1p_ref[...], pha, preferred_element_type=jnp.float32) + b1p_ref[...]
    p = jnp.where(p > 0, p, 0.1 * p)
    p = jnp.dot(w2p_ref[...], p.astype(jnp.bfloat16),
                preferred_element_type=jnp.float32) + b2p_ref[...]
    re_ref[0] = m * jnp.cos(p)
    im_ref[0] = m * jnp.sin(p)


def freblock_process(mag, pha, params):
    B, C, M = mag.shape
    TM = _pick_tile(M, TM_TARGET)
    io = pl.BlockSpec((1, C, TM), lambda b, i: (b, 0, i))
    wsp = pl.BlockSpec((C, C), lambda b, i: (0, 0))
    bsp = pl.BlockSpec((C, 1), lambda b, i: (0, 0))
    return pl.pallas_call(
        _freblock_kernel,
        out_shape=(jax.ShapeDtypeStruct((B, C, M), jnp.float32),
                   jax.ShapeDtypeStruct((B, C, M), jnp.float32)),
        grid=(B, M // TM),
        in_specs=[io, io, wsp, bsp, wsp, bsp, wsp, bsp, wsp, bsp],
        out_specs=(io, io),
        compiler_params=pltpu.CompilerParams(
            dimension_semantics=("parallel", "parallel"),
            vmem_limit_bytes=VMEM_LIMIT),
    )(mag, pha,
      params["mag_w1"], params["mag_b1"], params["mag_w2"], params["mag_b2"],
      params["pha_w1"], params["pha_b1"], params["pha_w2"], params["pha_b2"])


# ----------------------------------------------------------------------------
# Final projection: finalproj(cat(spatial, freq)) + bias + residual
# ----------------------------------------------------------------------------

def _final_kernel(xs_ref, xf_ref, xo_ref, ws_ref, wf_ref, b_ref, o_ref):
    xs = xs_ref[0].astype(jnp.bfloat16)                            # (C, TM), already bf16
    xf = xf_ref[0].astype(jnp.bfloat16)
    y = jnp.dot(ws_ref[...], xs, preferred_element_type=jnp.float32)
    y = y + jnp.dot(wf_ref[...], xf, preferred_element_type=jnp.float32)
    # finalproj bias + residual (proj_drop p=0 -> identity)
    o_ref[0] = y + b_ref[...] + xo_ref[0]


def final_proj(x_spatial, x_freq, x_ori, params):
    B, C, M = x_freq.shape
    TM = _pick_tile(M, TM_TARGET)
    io = pl.BlockSpec((1, C, TM), lambda b, i: (b, 0, i))
    wsp = pl.BlockSpec((C, C), lambda b, i: (0, 0))
    w = params["final_w"]
    return pl.pallas_call(
        _final_kernel,
        out_shape=jax.ShapeDtypeStruct((B, C, M), jnp.float32),
        grid=(B, M // TM),
        in_specs=[io, io, io, wsp, wsp,
                  pl.BlockSpec((C, 1), lambda b, i: (0, 0))],
        out_specs=io,
        compiler_params=pltpu.CompilerParams(
            dimension_semantics=("parallel", "parallel"),
            vmem_limit_bytes=VMEM_LIMIT),
    )(x_spatial, x_freq, x_ori, w[:, :C], w[:, C:], params["final_b"])


# ----------------------------------------------------------------------------
# Mixer forward (minimal JAX glue around the Pallas kernels)
# ----------------------------------------------------------------------------

def mixer_forward(x_nchw, params, pool_size=2):
    B, C, H, W = x_nchw.shape
    ld = C // 2
    hd = C - ld
    x_nchw = x_nchw.astype(jnp.float32)
    # TODO(synk): the NCHW->NHWC transpose stays as XLA glue; doing it in-kernel would
    # need an in-kernel layout transpose that is not worth the lowering risk here.
    x_nhwc = jnp.transpose(x_nchw, (0, 2, 3, 1))

    # --- LowMixer: fused pool + attention (single head, scale = ld**-0.5) ---
    scale = float(ld) ** -0.5
    wqkv = params["wqkv"]
    wq = (wqkv[:, :ld].astype(jnp.float32) * scale).astype(jnp.bfloat16)  # scale folded
    wk = wqkv[:, ld:2 * ld]
    wv = wqkv[:, 2 * ld:]
    att = low_mixer_attention(x_nhwc, wq, wk, wv, hd, ld, pool_size)   # (B, hp, wp, ld)

    # --- fused spatial path (HighMixer + upsample + concat + x+conv_fuse + proj) ---
    x_spatial = spatial_path(x_nhwc, att, params, pool_size)           # (B, C, H*W) bf16

    # --- FreBlock on the ORIGINAL input ---
    # TODO(synk): rfft2 / irfft2 (+ abs/angle/complex) have no Pallas equivalent; XLA glue.
    xf = jnp.fft.rfft2(x_nchw, axes=(-2, -1))                          # (B, C, H, Wf)
    Wf = xf.shape[-1]
    mag = jnp.abs(xf).reshape(B, C, H * Wf).astype(jnp.float32)
    pha = jnp.angle(xf).reshape(B, C, H * Wf).astype(jnp.float32)
    re, im = freblock_process(mag, pha, params)
    x_freq = jnp.fft.irfft2((re + 1j * im).reshape(B, C, H, Wf),
                            s=(H, W), axes=(-2, -1)).astype(jnp.float32)

    # --- finalproj(cat(spatial, freq)) + residual ---
    out = final_proj(x_spatial, x_freq.reshape(B, C, H * W),
                     x_nchw.reshape(B, C, H * W), params)
    return out.reshape(B, C, H, W)


# ----------------------------------------------------------------------------
# Deterministic parameter init (shapes follow the PyTorch module __init__)
# ----------------------------------------------------------------------------

def init_params(key, dim):
    hd = dim - dim // 2
    ld = dim // 2
    ks = jax.random.split(key, 16)
    bf = jnp.bfloat16

    def w(k, shape, scale=0.1, dtype=jnp.float32):
        return (scale * jax.random.normal(k, shape, dtype=jnp.float32)).astype(dtype)

    return {
        # HighMixer: conv1 1x1 (bias=False) stored (Cin, Cout); proj1 depthwise (3,3,C)
        "hm_w1t": w(ks[0], (hd, hd), dtype=bf),
        "hm_dw": w(ks[1], (3, 3, hd)),
        # LowMixer fused qkv Linear(ld, 3*ld, bias=False), stored transposed (ld, 3ld)
        "wqkv": w(ks[2], (ld, 3 * ld), dtype=bf),
        # conv_fuse depthwise 3x3 (bias=False)
        "fuse_dw": w(ks[3], (3, 3, dim)),
        # proj 1x1 (dim->dim, bias) stored (Cout, Cin) for the channels-first matmul
        "proj_w": w(ks[4], (dim, dim), dtype=bf),
        "proj_b": w(ks[5], (dim, 1)),
        # FreBlock processmag / processpha (1x1 conv, LeakyReLU(0.1), 1x1 conv)
        "mag_w1": w(ks[6], (dim, dim), dtype=bf), "mag_b1": w(ks[7], (dim, 1)),
        "mag_w2": w(ks[8], (dim, dim), dtype=bf), "mag_b2": w(ks[9], (dim, 1)),
        "pha_w1": w(ks[10], (dim, dim), dtype=bf), "pha_b1": w(ks[11], (dim, 1)),
        "pha_w2": w(ks[12], (dim, dim), dtype=bf), "pha_b2": w(ks[13], (dim, 1)),
        # finalproj 1x1 (2*dim -> dim, bias); [:, :dim] -> spatial, [:, dim:] -> freq
        "final_w": w(ks[14], (dim, 2 * dim), dtype=bf),
        "final_b": w(ks[15], (dim, 1)),
    }


if __name__ == "__main__":
    B, dim, H, W = 2, 16, 16, 16
    key = jax.random.PRNGKey(0)
    kx, kp = jax.random.split(key)
    x = jax.random.normal(kx, (B, dim, H, W), dtype=jnp.float32)       # NCHW like PyTorch
    params = init_params(kp, dim)

    fwd = jax.jit(functools.partial(mixer_forward, pool_size=2))
    out = jax.block_until_ready(fwd(x, params))

    assert out.shape == (B, dim, H, W), out.shape
    assert bool(jnp.all(jnp.isfinite(out)))
    print("KERNEL_OK")
</pallas_src>

<mosaic_0001>
module attributes {stable_mosaic.version = 11 : i64} {
  func.func @_freblock_kernel(%arg0: i32, %arg1: i32, %arg2: memref<1x16x144xf32, #tpu.memory_space<vmem>>, %arg3: memref<1x16x144xf32, #tpu.memory_space<vmem>>, %arg4: memref<16x16xbf16, #tpu.memory_space<vmem>>, %arg5: memref<16x1xf32, #tpu.memory_space<vmem>>, %arg6: memref<16x16xbf16, #tpu.memory_space<vmem>>, %arg7: memref<16x1xf32, #tpu.memory_space<vmem>>, %arg8: memref<16x16xbf16, #tpu.memory_space<vmem>>, %arg9: memref<16x1xf32, #tpu.memory_space<vmem>>, %arg10: memref<16x16xbf16, #tpu.memory_space<vmem>>, %arg11: memref<16x1xf32, #tpu.memory_space<vmem>>, %arg12: memref<1x16x144xf32, #tpu.memory_space<vmem>>, %arg13: memref<1x16x144xf32, #tpu.memory_space<vmem>>) attributes {dimension_semantics = [#tpu.dimension_semantics<parallel>, #tpu.dimension_semantics<parallel>], iteration_bounds = array<i64: 2, 1>, scalar_prefetch = 0 : i64, scratch_operands = 0 : i64, tpu.core_type = #tpu.core_type<tc>, window_params = [{transform_indices = @transform_0, window_bounds = array<i64: 1, 16, 144>}, {transform_indices = @transform_1, window_bounds = array<i64: 1, 16, 144>}, {pipeline_mode = #tpu.pipeline_mode<synchronous>, transform_indices = @transform_2, window_bounds = array<i64: 16, 16>}, {pipeline_mode = #tpu.pipeline_mode<synchronous>, transform_indices = @transform_3, window_bounds = array<i64: 16, 1>}, {pipeline_mode = #tpu.pipeline_mode<synchronous>, transform_indices = @transform_4, window_bounds = array<i64: 16, 16>}, {pipeline_mode = #tpu.pipeline_mode<synchronous>, transform_indices = @transform_5, window_bounds = array<i64: 16, 1>}, {pipeline_mode = #tpu.pipeline_mode<synchronous>, transform_indices = @transform_6, window_bounds = array<i64: 16, 16>}, {pipeline_mode = #tpu.pipeline_mode<synchronous>, transform_indices = @transform_7, window_bounds = array<i64: 16, 1>}, {pipeline_mode = #tpu.pipeline_mode<synchronous>, transform_indices = @transform_8, window_bounds = array<i64: 16, 16>}, {pipeline_mode = #tpu.pipeline_mode<synchronous>, transform_indices = @transform_9, window_bounds = array<i64: 16, 1>}, {transform_indices = @transform_10, window_bounds = array<i64: 1, 16, 144>}, {transform_indices = @transform_11, window_bounds = array<i64: 1, 16, 144>}]} {
    %c0 = arith.constant 0 : index
    %c0_0 = arith.constant 0 : index
    %c0_1 = arith.constant 0 : index
    %0 = vector.load %arg2[%c0, %c0_0, %c0_1] : memref<1x16x144xf32, #tpu.memory_space<vmem>>, vector<1x16x144xf32>
    %1 = vector.shape_cast %0 : vector<1x16x144xf32> to vector<16x144xf32>
    %2 = arith.truncf %1 : vector<16x144xf32> to vector<16x144xbf16>
    %c0_2 = arith.constant 0 : index
    %c0_3 = arith.constant 0 : index
    %c0_4 = arith.constant 0 : index
    %3 = vector.load %arg3[%c0_2, %c0_3, %c0_4] : memref<1x16x144xf32, #tpu.memory_space<vmem>>, vector<1x16x144xf32>
    %4 = vector.shape_cast %3 : vector<1x16x144xf32> to vector<16x144xf32>
    %5 = arith.truncf %4 : vector<16x144xf32> to vector<16x144xbf16>
    %c0_5 = arith.constant 0 : index
    %c0_6 = arith.constant 0 : index
    %6 = vector.load %arg4[%c0_5, %c0_6] : memref<16x16xbf16, #tpu.memory_space<vmem>>, vector<16x16xbf16>
    %cst = arith.constant dense<0.000000e+00> : vector<16x144xf32>
    %7 = tpu.matmul %6, %2, %cst {dimension_numbers = #tpu.dot_dimension_numbers<[1], [0], [0], [1], [0, 0, 1, 1], [], []>} : vector<16x16xbf16>, vector<16x144xbf16>, vector<16x144xf32> -> vector<16x144xf32>
    %c0_7 = arith.constant 0 : index
    %c0_8 = arith.constant 0 : index
    %8 = vector.load %arg5[%c0_7, %c0_8] : memref<16x1xf32, #tpu.memory_space<vmem>>, vector<16x1xf32>
    %9 = vector.broadcast %8 : vector<16x1xf32> to vector<16x144xf32>
    %10 = arith.addf %7, %9 : vector<16x144xf32>
    %cst_9 = arith.constant 0.000000e+00 : f32
    %11 = vector.broadcast %cst_9 : f32 to vector<16x144xf32>
    %12 = arith.cmpf ogt, %10, %11 : vector<16x144xf32>
    %cst_10 = arith.constant 1.000000e-01 : f32
    %13 = vector.broadcast %cst_10 : f32 to vector<16x144xf32>
    %14 = arith.mulf %13, %10 : vector<16x144xf32>
    %15 = arith.select %12, %10, %14 : vector<16x144xi1>, vector<16x144xf32>
    %c0_11 = arith.constant 0 : index
    %c0_12 = arith.constant 0 : index
    %16 = vector.load %arg6[%c0_11, %c0_12] : memref<16x16xbf16, #tpu.memory_space<vmem>>, vector<16x16xbf16>
    %17 = arith.truncf %15 : vector<16x144xf32> to vector<16x144xbf16>
    %cst_13 = arith.constant dense<0.000000e+00> : vector<16x144xf32>
    %18 = tpu.matmul %16, %17, %cst_13 {dimension_numbers = #tpu.dot_dimension_numbers<[1], [0], [0], [1], [0, 0, 1, 1], [], []>} : vector<16x16xbf16>, vector<16x144xbf16>, vector<16x144xf32> -> vector<16x144xf32>
    %c0_14 = arith.constant 0 : index
    %c0_15 = arith.constant 0 : index
    %19 = vector.load %arg7[%c0_14, %c0_15] : memref<16x1xf32, #tpu.memory_space<vmem>>, vector<16x1xf32>
    %20 = vector.broadcast %19 : vector<16x1xf32> to vector<16x144xf32>
    %21 = arith.addf %18, %20 : vector<16x144xf32>
    %c0_16 = arith.constant 0 : index
    %c0_17 = arith.constant 0 : index
    %22 = vector.load %arg8[%c0_16, %c0_17] : memref<16x16xbf16, #tpu.memory_space<vmem>>, vector<16x16xbf16>
    %cst_18 = arith.constant dense<0.000000e+00> : vector<16x144xf32>
    %23 = tpu.matmul %22, %5, %cst_18 {dimension_numbers = #tpu.dot_dimension_numbers<[1], [0], [0], [1], [0, 0, 1, 1], [], []>} : vector<16x16xbf16>, vector<16x144xbf16>, vector<16x144xf32> -> vector<16x144xf32>
    %c0_19 = arith.constant 0 : index
    %c0_20 = arith.constant 0 : index
    %24 = vector.load %arg9[%c0_19, %c0_20] : memref<16x1xf32, #tpu.memory_space<vmem>>, vector<16x1xf32>
    %25 = vector.broadcast %24 : vector<16x1xf32> to vector<16x144xf32>
    %26 = arith.addf %23, %25 : vector<16x144xf32>
    %cst_21 = arith.constant 0.000000e+00 : f32
    %27 = vector.broadcast %cst_21 : f32 to vector<16x144xf32>
    %28 = arith.cmpf ogt, %26, %27 : vector<16x144xf32>
    %cst_22 = arith.constant 1.000000e-01 : f32
    %29 = vector.broadcast %cst_22 : f32 to vector<16x144xf32>
    %30 = arith.mulf %29, %26 : vector<16x144xf32>
    %31 = arith.select %28, %26, %30 : vector<16x144xi1>, vector<16x144xf32>
    %c0_23 = arith.constant 0 : index
    %c0_24 = arith.constant 0 : index
    %32 = vector.load %arg10[%c0_23, %c0_24] : memref<16x16xbf16, #tpu.memory_space<vmem>>, vector<16x16xbf16>
    %33 = arith.truncf %31 : vector<16x144xf32> to vector<16x144xbf16>
    %cst_25 = arith.constant dense<0.000000e+00> : vector<16x144xf32>
    %34 = tpu.matmul %32, %33, %cst_25 {dimension_numbers = #tpu.dot_dimension_numbers<[1], [0], [0], [1], [0, 0, 1, 1], [], []>} : vector<16x16xbf16>, vector<16x144xbf16>, vector<16x144xf32> -> vector<16x144xf32>
    %c0_26 = arith.constant 0 : index
    %c0_27 = arith.constant 0 : index
    %35 = vector.load %arg11[%c0_26, %c0_27] : memref<16x1xf32, #tpu.memory_space<vmem>>, vector<16x1xf32>
    %36 = vector.broadcast %35 : vector<16x1xf32> to vector<16x144xf32>
    %37 = arith.addf %34, %36 : vector<16x144xf32>
    %38 = math.cos %37 : vector<16x144xf32>
    %39 = arith.mulf %21, %38 : vector<16x144xf32>
    %c0_28 = arith.constant 0 : index
    %c0_29 = arith.constant 0 : index
    %c0_30 = arith.constant 0 : index
    %40 = vector.load %arg12[%c0_28, %c0_29, %c0_30] : memref<1x16x144xf32, #tpu.memory_space<vmem>>, vector<1x16x144xf32>
    %41 = vector.shape_cast %40 : vector<1x16x144xf32> to vector<16x144xf32>
    %42 = vector.shape_cast %39 : vector<16x144xf32> to vector<1x16x144xf32>
    tpu.vector_store %arg12[%c0_28, %c0_29, %c0_30], %42 {strides = array<i32>} : memref<1x16x144xf32, #tpu.memory_space<vmem>>, vector<1x16x144xf32>,
    %43 = math.sin %37 : vector<16x144xf32>
    %44 = arith.mulf %21, %43 : vector<16x144xf32>
    %c0_31 = arith.constant 0 : index
    %c0_32 = arith.constant 0 : index
    %c0_33 = arith.constant 0 : index
    %45 = vector.load %arg13[%c0_31, %c0_32, %c0_33] : memref<1x16x144xf32, #tpu.memory_space<vmem>>, vector<1x16x144xf32>
    %46 = vector.shape_cast %45 : vector<1x16x144xf32> to vector<16x144xf32>
    %47 = vector.shape_cast %44 : vector<16x144xf32> to vector<1x16x144xf32>
    tpu.vector_store %arg13[%c0_31, %c0_32, %c0_33], %47 {strides = array<i32>} : memref<1x16x144xf32, #tpu.memory_space<vmem>>, vector<1x16x144xf32>,
    return
  }
  func.func @transform_0(%arg0: i32, %arg1: i32) -> (i32, i32, i32) {
    %c0_i32 = arith.constant 0 : i32
    %c0_i32_0 = arith.constant 0 : i32
    return %arg0, %c0_i32, %arg1 : i32, i32, i32
  }
  func.func @transform_1(%arg0: i32, %arg1: i32) -> (i32, i32, i32) {
    %c0_i32 = arith.constant 0 : i32
    %c0_i32_0 = arith.constant 0 : i32
    return %arg0, %c0_i32, %arg1 : i32, i32, i32
  }
  func.func @transform_2(%arg0: i32, %arg1: i32) -> (i32, i32) {
    %c0_i32 = arith.constant 0 : i32
    %c0_i32_0 = arith.constant 0 : i32
    %c0_i32_1 = arith.constant 0 : i32
    return %c0_i32, %c0_i32_0 : i32, i32
  }
  func.func @transform_3(%arg0: i32, %arg1: i32) -> (i32, i32) {
    %c0_i32 = arith.constant 0 : i32
    %c0_i32_0 = arith.constant 0 : i32
    %c0_i32_1 = arith.constant 0 : i32
    return %c0_i32, %c0_i32_0 : i32, i32
  }
  func.func @transform_4(%arg0: i32, %arg1: i32) -> (i32, i32) {
    %c0_i32 = arith.constant 0 : i32
    %c0_i32_0 = arith.constant 0 : i32
    %c0_i32_1 = arith.constant 0 : i32
    return %c0_i32, %c0_i32_0 : i32, i32
  }
  func.func @transform_5(%arg0: i32, %arg1: i32) -> (i32, i32) {
    %c0_i32 = arith.constant 0 : i32
    %c0_i32_0 = arith.constant 0 : i32
    %c0_i32_1 = arith.constant 0 : i32
    return %c0_i32, %c0_i32_0 : i32, i32
  }
  func.func @transform_6(%arg0: i32, %arg1: i32) -> (i32, i32) {
    %c0_i32 = arith.constant 0 : i32
    %c0_i32_0 = arith.constant 0 : i32
    %c0_i32_1 = arith.constant 0 : i32
    return %c0_i32, %c0_i32_0 : i32, i32
  }
  func.func @transform_7(%arg0: i32, %arg1: i32) -> (i32, i32) {
    %c0_i32 = arith.constant 0 : i32
    %c0_i32_0 = arith.constant 0 : i32
    %c0_i32_1 = arith.constant 0 : i32
    return %c0_i32, %c0_i32_0 : i32, i32
  }
  func.func @transform_8(%arg0: i32, %arg1: i32) -> (i32, i32) {
    %c0_i32 = arith.constant 0 : i32
    %c0_i32_0 = arith.constant 0 : i32
    %c0_i32_1 = arith.constant 0 : i32
    return %c0_i32, %c0_i32_0 : i32, i32
  }
  func.func @transform_9(%arg0: i32, %arg1: i32) -> (i32, i32) {
    %c0_i32 = arith.constant 0 : i32
    %c0_i32_0 = arith.constant 0 : i32
    %c0_i32_1 = arith.constant 0 : i32
    return %c0_i32, %c0_i32_0 : i32, i32
  }
  func.func @transform_10(%arg0: i32, %arg1: i32) -> (i32, i32, i32) {
    %c0_i32 = arith.constant 0 : i32
    %c0_i32_0 = arith.constant 0 : i32
    return %arg0, %c0_i32, %arg1 : i32, i32, i32
  }
  func.func @transform_11(%arg0: i32, %arg1: i32) -> (i32, i32, i32) {
    %c0_i32 = arith.constant 0 : i32
    %c0_i32_0 = arith.constant 0 : i32
    return %arg0, %c0_i32, %arg1 : i32, i32, i32
  }
}

module attributes {stable_mosaic.version = 11 : i64} {
  func.func @kernel(%arg0: i32, %arg1: memref<1x16x16x16xf32, #tpu.memory_space<vmem>>, %arg2: memref<8x8xbf16, #tpu.memory_space<vmem>>, %arg3: memref<8x8xbf16, #tpu.memory_space<vmem>>, %arg4: memref<8x8xbf16, #tpu.memory_space<vmem>>, %arg5: memref<1x8x8x8xf32, #tpu.memory_space<vmem>>) attributes {dimension_semantics = [#tpu.dimension_semantics<parallel>], iteration_bounds = array<i64: 2>, scalar_prefetch = 0 : i64, scratch_operands = 0 : i64, tpu.core_type = #tpu.core_type<tc>, window_params = [{transform_indices = @transform_0, window_bounds = array<i64: 1, 16, 16, 16>}, {pipeline_mode = #tpu.pipeline_mode<synchronous>, transform_indices = @transform_1, window_bounds = array<i64: 8, 8>}, {pipeline_mode = #tpu.pipeline_mode<synchronous>, transform_indices = @transform_2, window_bounds = array<i64: 8, 8>}, {pipeline_mode = #tpu.pipeline_mode<synchronous>, transform_indices = @transform_3, window_bounds = array<i64: 8, 8>}, {transform_indices = @transform_4, window_bounds = array<i64: 1, 8, 8, 8>}]} {
    %c0 = arith.constant 0 : index
    %c0_0 = arith.constant 0 : index
    %c0_1 = arith.constant 0 : index
    %c0_2 = arith.constant 0 : index
    %0 = vector.load %arg1[%c0, %c0_0, %c0_1, %c0_2] : memref<1x16x16x16xf32, #tpu.memory_space<vmem>>, vector<1x16x16x16xf32>
    %1 = vector.shape_cast %0 : vector<1x16x16x16xf32> to vector<16x16x16xf32>
    %2 = vector.extract_strided_slice %1 {offsets = [0, 0, 8], sizes = [16, 16, 8], strides = [1, 1, 1]} : vector<16x16x16xf32> to vector<16x16x8xf32>
    %3 = vector.shape_cast %2 : vector<16x16x8xf32> to vector<8x2x16x8xf32>
    %cst = arith.constant dense<0.000000e+00> : vector<8x16x8xf32>
    %4 = vector.multi_reduction <add>, %3, %cst [1] : vector<8x2x16x8xf32> to vector<8x16x8xf32>
    %cst_3 = arith.constant 2.000000e+00 : f32
    %5 = vector.broadcast %cst_3 : f32 to vector<8x16x8xf32>
    %6 = arith.divf %4, %5 : vector<8x16x8xf32>
    %7 = vector.shape_cast %6 : vector<8x16x8xf32> to vector<8x8x2x8xf32>
    %cst_4 = arith.constant dense<0.000000e+00> : vector<8x8x8xf32>
    %8 = vector.multi_reduction <add>, %7, %cst_4 [2] : vector<8x8x2x8xf32> to vector<8x8x8xf32>
    %cst_5 = arith.constant 2.000000e+00 : f32
    %9 = vector.broadcast %cst_5 : f32 to vector<8x8x8xf32>
    %10 = arith.divf %8, %9 : vector<8x8x8xf32>
    %11 = vector.shape_cast %10 : vector<8x8x8xf32> to vector<64x8xf32>
    %12 = arith.truncf %11 : vector<64x8xf32> to vector<64x8xbf16>
    %c0_6 = arith.constant 0 : index
    %c0_7 = arith.constant 0 : index
    %13 = vector.load %arg2[%c0_6, %c0_7] : memref<8x8xbf16, #tpu.memory_space<vmem>>, vector<8x8xbf16>
    %cst_8 = arith.constant dense<0.000000e+00> : vector<64x8xf32>
    %14 = tpu.matmul %12, %13, %cst_8 {dimension_numbers = #tpu.dot_dimension_numbers<[1], [0], [0], [1], [0, 0, 1, 1], [], []>} : vector<64x8xbf16>, vector<8x8xbf16>, vector<64x8xf32> -> vector<64x8xf32>
    %c0_9 = arith.constant 0 : index
    %c0_10 = arith.constant 0 : index
    %15 = vector.load %arg3[%c0_9, %c0_10] : memref<8x8xbf16, #tpu.memory_space<vmem>>, vector<8x8xbf16>
    %cst_11 = arith.constant dense<0.000000e+00> : vector<64x8xf32>
    %16 = tpu.matmul %12, %15, %cst_11 {dimension_numbers = #tpu.dot_dimension_numbers<[1], [0], [0], [1], [0, 0, 1, 1], [], []>} : vector<64x8xbf16>, vector<8x8xbf16>, vector<64x8xf32> -> vector<64x8xf32>
    %c0_12 = arith.constant 0 : index
    %c0_13 = arith.constant 0 : index
    %17 = vector.load %arg4[%c0_12, %c0_13] : memref<8x8xbf16, #tpu.memory_space<vmem>>, vector<8x8xbf16>
    %cst_14 = arith.constant dense<0.000000e+00> : vector<64x8xf32>
    %18 = tpu.matmul %12, %17, %cst_14 {dimension_numbers = #tpu.dot_dimension_numbers<[1], [0], [0], [1], [0, 0, 1, 1], [], []>} : vector<64x8xbf16>, vector<8x8xbf16>, vector<64x8xf32> -> vector<64x8xf32>
    %19 = arith.truncf %14 : vector<64x8xf32> to vector<64x8xbf16>
    %20 = arith.truncf %16 : vector<64x8xf32> to vector<64x8xbf16>
    %cst_15 = arith.constant dense<0.000000e+00> : vector<64x64xf32>
    %21 = tpu.matmul %19, %20, %cst_15 {dimension_numbers = #tpu.dot_dimension_numbers<[1], [1], [0], [0], [0, 0, 1, 0], [], []>} : vector<64x8xbf16>, vector<64x8xbf16>, vector<64x64xf32> -> vector<64x64xf32>
    %cst_16 = arith.constant dense<0xFF800000> : vector<64xf32>
    %22 = vector.multi_reduction <maximumf>, %21, %cst_16 [1] : vector<64x64xf32> to vector<64xf32>
    %23 = vector.shape_cast %22 : vector<64xf32> to vector<64x1xf32>
    %24 = vector.broadcast %23 : vector<64x1xf32> to vector<64x64xf32>
    %25 = arith.subf %21, %24 : vector<64x64xf32>
    %26 = math.exp %25 : vector<64x64xf32>
    %cst_17 = arith.constant dense<0.000000e+00> : vector<64xf32>
    %27 = vector.multi_reduction <add>, %26, %cst_17 [1] : vector<64x64xf32> to vector<64xf32>
    %28 = vector.shape_cast %27 : vector<64xf32> to vector<64x1xf32>
    %29 = tpu.reciprocal %28 {approx = true} : vector<64x1xf32> -> vector<64x1xf32>
    %30 = vector.broadcast %29 : vector<64x1xf32> to vector<64x64xf32>
    %31 = arith.mulf %26, %30 : vector<64x64xf32>
    %32 = arith.truncf %31 : vector<64x64xf32> to vector<64x64xbf16>
    %33 = arith.truncf %18 : vector<64x8xf32> to vector<64x8xbf16>
    %cst_18 = arith.constant dense<0.000000e+00> : vector<64x8xf32>
    %34 = tpu.matmul %32, %33, %cst_18 {dimension_numbers = #tpu.dot_dimension_numbers<[1], [0], [0], [1], [0, 0, 1, 1], [], []>} : vector<64x64xbf16>, vector<64x8xbf16>, vector<64x8xf32> -> vector<64x8xf32>
    %35 = vector.shape_cast %34 : vector<64x8xf32> to vector<8x8x8xf32>
    %c0_19 = arith.constant 0 : index
    %c0_20 = arith.constant 0 : index
    %c0_21 = arith.constant 0 : index
    %c0_22 = arith.constant 0 : index
    %36 = vector.load %arg5[%c0_19, %c0_20, %c0_21, %c0_22] : memref<1x8x8x8xf32, #tpu.memory_space<vmem>>, vector<1x8x8x8xf32>
    %37 = vector.shape_cast %36 : vector<1x8x8x8xf32> to vector<8x8x8xf32>
    %38 = vector.shape_cast %35 : vector<8x8x8xf32> to vector<1x8x8x8xf32>
    tpu.vector_store %arg5[%c0_19, %c0_20, %c0_21, %c0_22], %38 {strides = array<i32>} : memref<1x8x8x8xf32, #tpu.memory_space<vmem>>, vector<1x8x8x8xf32>,
    return
  }
  func.func @transform_0(%arg0: i32) -> (i32, i32, i32, i32) {
    %c0_i32 = arith.constant 0 : i32
    %c0_i32_0 = arith.constant 0 : i32
    %c0_i32_1 = arith.constant 0 : i32
    %c0_i32_2 = arith.constant 0 : i32
    return %arg0, %c0_i32, %c0_i32_0, %c0_i32_1 : i32, i32, i32, i32
  }
  func.func @transform_1(%arg0: i32) -> (i32, i32) {
    %c0_i32 = arith.constant 0 : i32
    %c0_i32_0 = arith.constant 0 : i32
    %c0_i32_1 = arith.constant 0 : i32
    return %c0_i32, %c0_i32_0 : i32, i32
  }
  func.func @transform_2(%arg0: i32) -> (i32, i32) {
    %c0_i32 = arith.constant 0 : i32
    %c0_i32_0 = arith.constant 0 : i32
    %c0_i32_1 = arith.constant 0 : i32
    return %c0_i32, %c0_i32_0 : i32, i32
  }
  func.func @transform_3(%arg0: i32) -> (i32, i32) {
    %c0_i32 = arith.constant 0 : i32
    %c0_i32_0 = arith.constant 0 : i32
    %c0_i32_1 = arith.constant 0 : i32
    return %c0_i32, %c0_i32_0 : i32, i32
  }
  func.func @transform_4(%arg0: i32) -> (i32, i32, i32, i32) {
    %c0_i32 = arith.constant 0 : i32
    %c0_i32_0 = arith.constant 0 : i32
    %c0_i32_1 = arith.constant 0 : i32
    %c0_i32_2 = arith.constant 0 : i32
    return %arg0, %c0_i32, %c0_i32_0, %c0_i32_1 : i32, i32, i32, i32
  }
}

module attributes {stable_mosaic.version = 11 : i64} {
  func.func @kernel(%arg0: i32, %arg1: memref<1x16x16x16xf32, #tpu.memory_space<vmem>>, %arg2: memref<1x8x8x8xf32, #tpu.memory_space<vmem>>, %arg3: memref<8x8xbf16, #tpu.memory_space<vmem>>, %arg4: memref<3x3x8xf32, #tpu.memory_space<vmem>>, %arg5: memref<3x3x16xf32, #tpu.memory_space<vmem>>, %arg6: memref<16x16xbf16, #tpu.memory_space<vmem>>, %arg7: memref<16x1xf32, #tpu.memory_space<vmem>>, %arg8: memref<1x16x256xbf16, #tpu.memory_space<vmem>>, %arg9: memref<18x18x16xf32, #tpu.memory_space<vmem>>) attributes {dimension_semantics = [#tpu.dimension_semantics<parallel>], iteration_bounds = array<i64: 2>, scalar_prefetch = 0 : i64, scratch_operands = 1 : i64, tpu.core_type = #tpu.core_type<tc>, window_params = [{transform_indices = @transform_0, window_bounds = array<i64: 1, 16, 16, 16>}, {transform_indices = @transform_1, window_bounds = array<i64: 1, 8, 8, 8>}, {pipeline_mode = #tpu.pipeline_mode<synchronous>, transform_indices = @transform_2, window_bounds = array<i64: 8, 8>}, {pipeline_mode = #tpu.pipeline_mode<synchronous>, transform_indices = @transform_3, window_bounds = array<i64: 3, 3, 8>}, {pipeline_mode = #tpu.pipeline_mode<synchronous>, transform_indices = @transform_4, window_bounds = array<i64: 3, 3, 16>}, {pipeline_mode = #tpu.pipeline_mode<synchronous>, transform_indices = @transform_5, window_bounds = array<i64: 16, 16>}, {pipeline_mode = #tpu.pipeline_mode<synchronous>, transform_indices = @transform_6, window_bounds = array<i64: 16, 1>}, {transform_indices = @transform_7, window_bounds = array<i64: 1, 16, 256>}]} {
    %cst = arith.constant 0.000000e+00 : f32
    %0 = vector.broadcast %cst : f32 to vector<1x18x16xf32>
    %cst_0 = arith.constant 0.000000e+00 : f32
    %1 = vector.broadcast %cst_0 : f32 to vector<18x1x16xf32>
    %c0 = arith.constant 0 : index
    %c0_1 = arith.constant 0 : index
    %c0_2 = arith.constant 0 : index
    %2 = vector.load %arg9[%c0, %c0_1, %c0_2] : memref<18x18x16xf32, #tpu.memory_space<vmem>>, vector<1x18x16xf32>
    tpu.vector_store %arg9[%c0, %c0_1, %c0_2], %0 {strides = array<i32>} : memref<18x18x16xf32, #tpu.memory_space<vmem>>, vector<1x18x16xf32>,
    %c17 = arith.constant 17 : index
    %c0_3 = arith.constant 0 : index
    %c0_4 = arith.constant 0 : index
    %3 = vector.load %arg9[%c17, %c0_3, %c0_4] : memref<18x18x16xf32, #tpu.memory_space<vmem>>, vector<1x18x16xf32>
    tpu.vector_store %arg9[%c17, %c0_3, %c0_4], %0 {strides = array<i32>} : memref<18x18x16xf32, #tpu.memory_space<vmem>>, vector<1x18x16xf32>,
    %c0_5 = arith.constant 0 : index
    %c0_6 = arith.constant 0 : index
    %c0_7 = arith.constant 0 : index
    %4 = vector.load %arg9[%c0_5, %c0_6, %c0_7] : memref<18x18x16xf32, #tpu.memory_space<vmem>>, vector<18x1x16xf32>
    tpu.vector_store %arg9[%c0_5, %c0_6, %c0_7], %1 {strides = array<i32>} : memref<18x18x16xf32, #tpu.memory_space<vmem>>, vector<18x1x16xf32>,
    %c0_8 = arith.constant 0 : index
    %c17_9 = arith.constant 17 : index
    %c0_10 = arith.constant 0 : index
    %5 = vector.load %arg9[%c0_8, %c17_9, %c0_10] : memref<18x18x16xf32, #tpu.memory_space<vmem>>, vector<18x1x16xf32>
    tpu.vector_store %arg9[%c0_8, %c17_9, %c0_10], %1 {strides = array<i32>} : memref<18x18x16xf32, #tpu.memory_space<vmem>>, vector<18x1x16xf32>,
    %c0_11 = arith.constant 0 : index
    %c0_12 = arith.constant 0 : index
    %c0_13 = arith.constant 0 : index
    %c0_14 = arith.constant 0 : index
    %6 = vector.load %arg1[%c0_11, %c0_12, %c0_13, %c0_14] : memref<1x16x16x16xf32, #tpu.memory_space<vmem>>, vector<1x16x16x16xf32>
    %7 = vector.shape_cast %6 : vector<1x16x16x16xf32> to vector<16x16x16xf32>
    %8 = vector.extract_strided_slice %7 {offsets = [0, 0, 0], sizes = [16, 16, 8], strides = [1, 1, 1]} : vector<16x16x16xf32> to vector<16x16x8xf32>
    %9 = vector.shape_cast %8 : vector<16x16x8xf32> to vector<256x8xf32>
    %10 = arith.truncf %9 : vector<256x8xf32> to vector<256x8xbf16>
    %c0_15 = arith.constant 0 : index
    %c0_16 = arith.constant 0 : index
    %11 = vector.load %arg3[%c0_15, %c0_16] : memref<8x8xbf16, #tpu.memory_space<vmem>>, vector<8x8xbf16>
    %cst_17 = arith.constant dense<0.000000e+00> : vector<256x8xf32>
    %12 = tpu.matmul %10, %11, %cst_17 {dimension_numbers = #tpu.dot_dimension_numbers<[1], [0], [0], [1], [0, 0, 1, 1], [], []>} : vector<256x8xbf16>, vector<8x8xbf16>, vector<256x8xf32> -> vector<256x8xf32>
    %13 = vector.shape_cast %12 : vector<256x8xf32> to vector<16x16x8xf32>
    %c1 = arith.constant 1 : index
    %c1_18 = arith.constant 1 : index
    %c0_19 = arith.constant 0 : index
    %14 = vector.load %arg9[%c1, %c1_18, %c0_19] : memref<18x18x16xf32, #tpu.memory_space<vmem>>, vector<16x16x8xf32>
    tpu.vector_store %arg9[%c1, %c1_18, %c0_19], %13 {strides = array<i32>} : memref<18x18x16xf32, #tpu.memory_space<vmem>>, vector<16x16x8xf32>,
    %c0_20 = arith.constant 0 : index
    %c0_21 = arith.constant 0 : index
    %c0_22 = arith.constant 0 : index
    %15 = vector.load %arg9[%c0_20, %c0_21, %c0_22] : memref<18x18x16xf32, #tpu.memory_space<vmem>>, vector<16x16x8xf32>
    %c0_23 = arith.constant 0 : index
    %c0_24 = arith.constant 0 : index
    %c0_25 = arith.constant 0 : index
    %16 = vector.load %arg4[%c0_23, %c0_24, %c0_25] : memref<3x3x8xf32, #tpu.memory_space<vmem>>, vector<1x1x8xf32>
    %17 = vector.shape_cast %16 : vector<1x1x8xf32> to vector<8xf32>
    %18 = vector.shape_cast %17 : vector<8xf32> to vector<1x1x8xf32>
    %19 = vector.broadcast %18 : vector<1x1x8xf32> to vector<16x16x8xf32>
    %20 = arith.mulf %15, %19 : vector<16x16x8xf32>
    %c0_26 = arith.constant 0 : index
    %c1_27 = arith.constant 1 : index
    %c0_28 = arith.constant 0 : index
    %21 = vector.load %arg9[%c0_26, %c1_27, %c0_28] : memref<18x18x16xf32, #tpu.memory_space<vmem>>, vector<16x16x8xf32>
    %c0_29 = arith.constant 0 : index
    %c1_30 = arith.constant 1 : index
    %c0_31 = arith.constant 0 : index
    %22 = vector.load %arg4[%c0_29, %c1_30, %c0_31] : memref<3x3x8xf32, #tpu.memory_space<vmem>>, vector<1x1x8xf32>
    %23 = vector.shape_cast %22 : vector<1x1x8xf32> to vector<8xf32>
    %24 = vector.shape_cast %23 : vector<8xf32> to vector<1x1x8xf32>
    %25 = vector.broadcast %24 : vector<1x1x8xf32> to vector<16x16x8xf32>
    %26 = arith.mulf %21, %25 : vector<16x16x8xf32>
    %27 = arith.addf %20, %26 : vector<16x16x8xf32>
    %c0_32 = arith.constant 0 : index
    %c2 = arith.constant 2 : index
    %c0_33 = arith.constant 0 : index
    %28 = vector.load %arg9[%c0_32, %c2, %c0_33] : memref<18x18x16xf32, #tpu.memory_space<vmem>>, vector<16x16x8xf32>
    %c0_34 = arith.constant 0 : index
    %c2_35 = arith.constant 2 : index
    %c0_36 = arith.constant 0 : index
    %29 = vector.load %arg4[%c0_34, %c2_35, %c0_36] : memref<3x3x8xf32, #tpu.memory_space<vmem>>, vector<1x1x8xf32>
    %30 = vector.shape_cast %29 : vector<1x1x8xf32> to vector<8xf32>
    %31 = vector.shape_cast %30 : vector<8xf32> to vector<1x1x8xf32>
    %32 = vector.broadcast %31 : vector<1x1x8xf32> to vector<16x16x8xf32>
    %33 = arith.mulf %28, %32 : vector<16x16x8xf32>
    %34 = arith.addf %27, %33 : vector<16x16x8xf32>
    %c1_37 = arith.constant 1 : index
    %c0_38 = arith.constant 0 : index
    %c0_39 = arith.constant 0 : index
    %35 = vector.load %arg9[%c1_37, %c0_38, %c0_39] : memref<18x18x16xf32, #tpu.memory_space<vmem>>, vector<16x16x8xf32>
    %c1_40 = arith.constant 1 : index
    %c0_41 = arith.constant 0 : index
    %c0_42 = arith.constant 0 : index
    %36 = vector.load %arg4[%c1_40, %c0_41, %c0_42] : memref<3x3x8xf32, #tpu.memory_space<vmem>>, vector<1x1x8xf32>
    %37 = vector.shape_cast %36 : vector<1x1x8xf32> to vector<8xf32>
    %38 = vector.shape_cast %37 : vector<8xf32> to vector<1x1x8xf32>
    %39 = vector.broadcast %38 : vector<1x1x8xf32> to vector<16x16x8xf32>
    %40 = arith.mulf %35, %39 : vector<16x16x8xf32>
    %41 = arith.addf %34, %40 : vector<16x16x8xf32>
    %c1_43 = arith.constant 1 : index
    %c1_44 = arith.constant 1 : index
    %c0_45 = arith.constant 0 : index
    %42 = vector.load %arg9[%c1_43, %c1_44, %c0_45] : memref<18x18x16xf32, #tpu.memory_space<vmem>>, vector<16x16x8xf32>
    %c1_46 = arith.constant 1 : index
    %c1_47 = arith.constant 1 : index
    %c0_48 = arith.constant 0 : index
    %43 = vector.load %arg4[%c1_46, %c1_47, %c0_48] : memref<3x3x8xf32, #tpu.memory_space<vmem>>, vector<1x1x8xf32>
    %44 = vector.shape_cast %43 : vector<1x1x8xf32> to vector<8xf32>
    %45 = vector.shape_cast %44 : vector<8xf32> to vector<1x1x8xf32>
    %46 = vector.broadcast %45 : vector<1x1x8xf32> to vector<16x16x8xf32>
    %47 = arith.mulf %42, %46 : vector<16x16x8xf32>
    %48 = arith.addf %41, %47 : vector<16x16x8xf32>
    %c1_49 = arith.constant 1 : index
    %c2_50 = arith.constant 2 : index
    %c0_51 = arith.constant 0 : index
    %49 = vector.load %arg9[%c1_49, %c2_50, %c0_51] : memref<18x18x16xf32, #tpu.memory_space<vmem>>, vector<16x16x8xf32>
    %c1_52 = arith.constant 1 : index
    %c2_53 = arith.constant 2 : index
    %c0_54 = arith.constant 0 : index
    %50 = vector.load %arg4[%c1_52, %c2_53, %c0_54] : memref<3x3x8xf32, #tpu.memory_space<vmem>>, vector<1x1x8xf32>
    %51 = vector.shape_cast %50 : vector<1x1x8xf32> to vector<8xf32>
    %52 = vector.shape_cast %51 : vector<8xf32> to vector<1x1x8xf32>
    %53 = vector.broadcast %52 : vector<1x1x8xf32> to vector<16x16x8xf32>
    %54 = arith.mulf %49, %53 : vector<16x16x8xf32>
    %55 = arith.addf %48, %54 : vector<16x16x8xf32>
    %c2_55 = arith.constant 2 : index
    %c0_56 = arith.constant 0 : index
    %c0_57 = arith.constant 0 : index
    %56 = vector.load %arg9[%c2_55, %c0_56, %c0_57] : memref<18x18x16xf32, #tpu.memory_space<vmem>>, vector<16x16x8xf32>
    %c2_58 = arith.constant 2 : index
    %c0_59 = arith.constant 0 : index
    %c0_60 = arith.constant 0 : index
    %57 = vector.load %arg4[%c2_58, %c0_59, %c0_60] : memref<3x3x8xf32, #tpu.memory_space<vmem>>, vector<1x1x8xf32>
    %58 = vector.shape_cast %57 : vector<1x1x8xf32> to vector<8xf32>
    %59 = vector.shape_cast %58 : vector<8xf32> to vector<1x1x8xf32>
    %60 = vector.broadcast %59 : vector<1x1x8xf32> to vector<16x16x8xf32>
    %61 = arith.mulf %56, %60 : vector<16x16x8xf32>
    %62 = arith.addf %55, %61 : vector<16x16x8xf32>
    %c2_61 = arith.constant 2 : index
    %c1_62 = arith.constant 1 : index
    %c0_63 = arith.constant 0 : index
    %63 = vector.load %arg9[%c2_61, %c1_62, %c0_63] : memref<18x18x16xf32, #tpu.memory_space<vmem>>, vector<16x16x8xf32>
    %c2_64 = arith.constant 2 : index
    %c1_65 = arith.constant 1 : index
    %c0_66 = arith.constant 0 : index
    %64 = vector.load %arg4[%c2_64, %c1_65, %c0_66] : memref<3x3x8xf32, #tpu.memory_space<vmem>>, vector<1x1x8xf32>
    %65 = vector.shape_cast %64 : vector<1x1x8xf32> to vector<8xf32>
    %66 = vector.shape_cast %65 : vector<8xf32> to vector<1x1x8xf32>
    %67 = vector.broadcast %66 : vector<1x1x8xf32> to vector<16x16x8xf32>
    %68 = arith.mulf %63, %67 : vector<16x16x8xf32>
    %69 = arith.addf %62, %68 : vector<16x16x8xf32>
    %c2_67 = arith.constant 2 : index
    %c2_68 = arith.constant 2 : index
    %c0_69 = arith.constant 0 : index
    %70 = vector.load %arg9[%c2_67, %c2_68, %c0_69] : memref<18x18x16xf32, #tpu.memory_space<vmem>>, vector<16x16x8xf32>
    %c2_70 = arith.constant 2 : index
    %c2_71 = arith.constant 2 : index
    %c0_72 = arith.constant 0 : index
    %71 = vector.load %arg4[%c2_70, %c2_71, %c0_72] : memref<3x3x8xf32, #tpu.memory_space<vmem>>, vector<1x1x8xf32>
    %72 = vector.shape_cast %71 : vector<1x1x8xf32> to vector<8xf32>
    %73 = vector.shape_cast %72 : vector<8xf32> to vector<1x1x8xf32>
    %74 = vector.broadcast %73 : vector<1x1x8xf32> to vector<16x16x8xf32>
    %75 = arith.mulf %70, %74 : vector<16x16x8xf32>
    %76 = arith.addf %69, %75 : vector<16x16x8xf32>
    %77 = arith.mulf %76, %76 : vector<16x16x8xf32>
    %78 = arith.mulf %76, %77 : vector<16x16x8xf32>
    %cst_73 = arith.constant 4.471500e-02 : f32
    %79 = vector.broadcast %cst_73 : f32 to vector<16x16x8xf32>
    %80 = arith.mulf %79, %78 : vector<16x16x8xf32>
    %81 = arith.addf %76, %80 : vector<16x16x8xf32>
    %cst_74 = arith.constant 0.797884583 : f32
    %82 = vector.broadcast %cst_74 : f32 to vector<16x16x8xf32>
    %83 = arith.mulf %82, %81 : vector<16x16x8xf32>
    %84 = math.tanh %83 : vector<16x16x8xf32>
    %cst_75 = arith.constant 1.000000e+00 : f32
    %85 = vector.broadcast %cst_75 : f32 to vector<16x16x8xf32>
    %86 = arith.addf %85, %84 : vector<16x16x8xf32>
    %cst_76 = arith.constant 5.000000e-01 : f32
    %87 = vector.broadcast %cst_76 : f32 to vector<16x16x8xf32>
    %88 = arith.mulf %87, %86 : vector<16x16x8xf32>
    %89 = arith.mulf %76, %88 : vector<16x16x8xf32>
    %c0_77 = arith.constant 0 : index
    %c0_78 = arith.constant 0 : index
    %c0_79 = arith.constant 0 : index
    %c0_80 = arith.constant 0 : index
    %90 = vector.load %arg2[%c0_77, %c0_78, %c0_79, %c0_80] : memref<1x8x8x8xf32, #tpu.memory_space<vmem>>, vector<1x8x8x8xf32>
    %91 = vector.shape_cast %90 : vector<1x8x8x8xf32> to vector<8x8x8xf32>
    %92 = vector.shape_cast %91 : vector<8x8x8xf32> to vector<8x1x8x8xf32>
    %93 = vector.shape_cast %92 : vector<8x1x8x8xf32> to vector<8x1x8x8xf32>
    %94 = vector.broadcast %93 : vector<8x1x8x8xf32> to vector<8x2x8x8xf32>
    %95 = vector.shape_cast %94 : vector<8x2x8x8xf32> to vector<16x8x8xf32>
    %96 = vector.shape_cast %95 : vector<16x8x8xf32> to vector<16x8x1x8xf32>
    %97 = vector.shape_cast %96 : vector<16x8x1x8xf32> to vector<16x8x1x8xf32>
    %98 = vector.broadcast %97 : vector<16x8x1x8xf32> to vector<16x8x2x8xf32>
    %99 = vector.shape_cast %98 : vector<16x8x2x8xf32> to vector<16x16x8xf32>
    %100 = tpu.concatenate %89, %99 in 2 : vector<16x16x8xf32>, vector<16x16x8xf32> -> vector<16x16x16xf32>
    %c1_81 = arith.constant 1 : index
    %c1_82 = arith.constant 1 : index
    %c0_83 = arith.constant 0 : index
    %101 = vector.load %arg9[%c1_81, %c1_82, %c0_83] : memref<18x18x16xf32, #tpu.memory_space<vmem>>, vector<16x16x16xf32>
    tpu.vector_store %arg9[%c1_81, %c1_82, %c0_83], %100 {strides = array<i32>} : memref<18x18x16xf32, #tpu.memory_space<vmem>>, vector<16x16x16xf32>,
    %c1_84 = arith.constant 1 : index
    %c1_85 = arith.constant 1 : index
    %c0_86 = arith.constant 0 : index
    %102 = vector.load %arg5[%c1_84, %c1_85, %c0_86] : memref<3x3x16xf32, #tpu.memory_space<vmem>>, vector<1x1x16xf32>
    %103 = vector.shape_cast %102 : vector<1x1x16xf32> to vector<16xf32>
    %104 = vector.shape_cast %103 : vector<16xf32> to vector<1x1x16xf32>
    %cst_87 = arith.constant 1.000000e+00 : f32
    %105 = vector.broadcast %cst_87 : f32 to vector<1x1x16xf32>
    %106 = arith.addf %104, %105 : vector<1x1x16xf32>
    %107 = vector.broadcast %106 : vector<1x1x16xf32> to vector<16x16x16xf32>
    %108 = arith.mulf %100, %107 : vector<16x16x16xf32>
    %c0_88 = arith.constant 0 : index
    %c0_89 = arith.constant 0 : index
    %c0_90 = arith.constant 0 : index
    %109 = vector.load %arg9[%c0_88, %c0_89, %c0_90] : memref<18x18x16xf32, #tpu.memory_space<vmem>>, vector<16x16x16xf32>
    %c0_91 = arith.constant 0 : index
    %c0_92 = arith.constant 0 : index
    %c0_93 = arith.constant 0 : index
    %110 = vector.load %arg5[%c0_91, %c0_92, %c0_93] : memref<3x3x16xf32, #tpu.memory_space<vmem>>, vector<1x1x16xf32>
    %111 = vector.shape_cast %110 : vector<1x1x16xf32> to vector<16xf32>
    %112 = vector.shape_cast %111 : vector<16xf32> to vector<1x1x16xf32>
    %113 = vector.broadcast %112 : vector<1x1x16xf32> to vector<16x16x16xf32>
    %114 = arith.mulf %109, %113 : vector<16x16x16xf32>
    %115 = arith.addf %108, %114 : vector<16x16x16xf32>
    %c0_94 = arith.constant 0 : index
    %c1_95 = arith.constant 1 : index
    %c0_96 = arith.constant 0 : index
    %116 = vector.load %arg9[%c0_94, %c1_95, %c0_96] : memref<18x18x16xf32, #tpu.memory_space<vmem>>, vector<16x16x16xf32>
    %c0_97 = arith.constant 0 : index
    %c1_98 = arith.constant 1 : index
    %c0_99 = arith.constant 0 : index
    %117 = vector.load %arg5[%c0_97, %c1_98, %c0_99] : memref<3x3x16xf32, #tpu.memory_space<vmem>>, vector<1x1x16xf32>
    %118 = vector.shape_cast %117 : vector<1x1x16xf32> to vector<16xf32>
    %119 = vector.shape_cast %118 : vector<16xf32> to vector<1x1x16xf32>
    %120 = vector.broadcast %119 : vector<1x1x16xf32> to vector<16x16x16xf32>
    %121 = arith.mulf %116, %120 : vector<16x16x16xf32>
    %122 = arith.addf %115, %121 : vector<16x16x16xf32>
    %c0_100 = arith.constant 0 : index
    %c2_101 = arith.constant 2 : index
    %c0_102 = arith.constant 0 : index
    %123 = vector.load %arg9[%c0_100, %c2_101, %c0_102] : memref<18x18x16xf32, #tpu.memory_space<vmem>>, vector<16x16x16xf32>
    %c0_103 = arith.constant 0 : index
    %c2_104 = arith.constant 2 : index
    %c0_105 = arith.constant 0 : index
    %124 = vector.load %arg5[%c0_103, %c2_104, %c0_105] : memref<3x3x16xf32, #tpu.memory_space<vmem>>, vector<1x1x16xf32>
    %125 = vector.shape_cast %124 : vector<1x1x16xf32> to vector<16xf32>
    %126 = vector.shape_cast %125 : vector<16xf32> to vector<1x1x16xf32>
    %127 = vector.broadcast %126 : vector<1x1x16xf32> to vector<16x16x16xf32>
    %128 = arith.mulf %123, %127 : vector<16x16x16xf32>
    %129 = arith.addf %122, %128 : vector<16x16x16xf32>
    %c1_106 = arith.constant 1 : index
    %c0_107 = arith.constant 0 : index
    %c0_108 = arith.constant 0 : index
    %130 = vector.load %arg9[%c1_106, %c0_107, %c0_108] : memref<18x18x16xf32, #tpu.memory_space<vmem>>, vector<16x16x16xf32>
    %c1_109 = arith.constant 1 : index
    %c0_110 = arith.constant 0 : index
    %c0_111 = arith.constant 0 : index
    %131 = vector.load %arg5[%c1_109, %c0_110, %c0_111] : memref<3x3x16xf32, #tpu.memory_space<vmem>>, vector<1x1x16xf32>
    %132 = vector.shape_cast %131 : vector<1x1x16xf32> to vector<16xf32>
    %133 = vector.shape_cast %132 : vector<16xf32> to vector<1x1x16xf32>
    %134 = vector.broadcast %133 : vector<1x1x16xf32> to vector<16x16x16xf32>
    %135 = arith.mulf %130, %134 : vector<16x16x16xf32>
    %136 = arith.addf %129, %135 : vector<16x16x16xf32>
    %c1_112 = arith.constant 1 : index
    %c2_113 = arith.constant 2 : index
    %c0_114 = arith.constant 0 : index
    %137 = vector.load %arg9[%c1_112, %c2_113, %c0_114] : memref<18x18x16xf32, #tpu.memory_space<vmem>>, vector<16x16x16xf32>
    %c1_115 = arith.constant 1 : index
    %c2_116 = arith.constant 2 : index
    %c0_117 = arith.constant 0 : index
    %138 = vector.load %arg5[%c1_115, %c2_116, %c0_117] : memref<3x3x16xf32, #tpu.memory_space<vmem>>, vector<1x1x16xf32>
    %139 = vector.shape_cast %138 : vector<1x1x16xf32> to vector<16xf32>
    %140 = vector.shape_cast %139 : vector<16xf32> to vector<1x1x16xf32>
    %141 = vector.broadcast %140 : vector<1x1x16xf32> to vector<16x16x16xf32>
    %142 = arith.mulf %137, %141 : vector<16x16x16xf32>
    %143 = arith.addf %136, %142 : vector<16x16x16xf32>
    %c2_118 = arith.constant 2 : index
    %c0_119 = arith.constant 0 : index
    %c0_120 = arith.constant 0 : index
    %144 = vector.load %arg9[%c2_118, %c0_119, %c0_120] : memref<18x18x16xf32, #tpu.memory_space<vmem>>, vector<16x16x16xf32>
    %c2_121 = arith.constant 2 : index
    %c0_122 = arith.constant 0 : index
    %c0_123 = arith.constant 0 : index
    %145 = vector.load %arg5[%c2_121, %c0_122, %c0_123] : memref<3x3x16xf32, #tpu.memory_space<vmem>>, vector<1x1x16xf32>
    %146 = vector.shape_cast %145 : vector<1x1x16xf32> to vector<16xf32>
    %147 = vector.shape_cast %146 : vector<16xf32> to vector<1x1x16xf32>
    %148 = vector.broadcast %147 : vector<1x1x16xf32> to vector<16x16x16xf32>
    %149 = arith.mulf %144, %148 : vector<16x16x16xf32>
    %150 = arith.addf %143, %149 : vector<16x16x16xf32>
    %c2_124 = arith.constant 2 : index
    %c1_125 = arith.constant 1 : index
    %c0_126 = arith.constant 0 : index
    %151 = vector.load %arg9[%c2_124, %c1_125, %c0_126] : memref<18x18x16xf32, #tpu.memory_space<vmem>>, vector<16x16x16xf32>
    %c2_127 = arith.constant 2 : index
    %c1_128 = arith.constant 1 : index
    %c0_129 = arith.constant 0 : index
    %152 = vector.load %arg5[%c2_127, %c1_128, %c0_129] : memref<3x3x16xf32, #tpu.memory_space<vmem>>, vector<1x1x16xf32>
    %153 = vector.shape_cast %152 : vector<1x1x16xf32> to vector<16xf32>
    %154 = vector.shape_cast %153 : vector<16xf32> to vector<1x1x16xf32>
    %155 = vector.broadcast %154 : vector<1x1x16xf32> to vector<16x16x16xf32>
    %156 = arith.mulf %151, %155 : vector<16x16x16xf32>
    %157 = arith.addf %150, %156 : vector<16x16x16xf32>
    %c2_130 = arith.constant 2 : index
    %c2_131 = arith.constant 2 : index
    %c0_132 = arith.constant 0 : index
    %158 = vector.load %arg9[%c2_130, %c2_131, %c0_132] : memref<18x18x16xf32, #tpu.memory_space<vmem>>, vector<16x16x16xf32>
    %c2_133 = arith.constant 2 : index
    %c2_134 = arith.constant 2 : index
    %c0_135 = arith.constant 0 : index
    %159 = vector.load %arg5[%c2_133, %c2_134, %c0_135] : memref<3x3x16xf32, #tpu.memory_space<vmem>>, vector<1x1x16xf32>
    %160 = vector.shape_cast %159 : vector<1x1x16xf32> to vector<16xf32>
    %161 = vector.shape_cast %160 : vector<16xf32> to vector<1x1x16xf32>
    %162 = vector.broadcast %161 : vector<1x1x16xf32> to vector<16x16x16xf32>
    %163 = arith.mulf %158, %162 : vector<16x16x16xf32>
    %164 = arith.addf %157, %163 : vector<16x16x16xf32>
    %165 = vector.shape_cast %164 : vector<16x16x16xf32> to vector<256x16xf32>
    %166 = arith.truncf %165 : vector<256x16xf32> to vector<256x16xbf16>
    %c0_136 = arith.constant 0 : index
    %c0_137 = arith.constant 0 : index
    %167 = vector.load %arg6[%c0_136, %c0_137] : memref<16x16xbf16, #tpu.memory_space<vmem>>, vector<16x16xbf16>
    %cst_138 = arith.constant dense<0.000000e+00> : vector<16x256xf32>
    %168 = tpu.matmul %167, %166, %cst_138 {dimension_numbers = #tpu.dot_dimension_numbers<[1], [1], [0], [0], [0, 0, 1, 0], [], []>} : vector<16x16xbf16>, vector<256x16xbf16>, vector<16x256xf32> -> vector<16x256xf32>
    %c0_139 = arith.constant 0 : index
    %c0_140 = arith.constant 0 : index
    %169 = vector.load %arg7[%c0_139, %c0_140] : memref<16x1xf32, #tpu.memory_space<vmem>>, vector<16x1xf32>
    %170 = vector.broadcast %169 : vector<16x1xf32> to vector<16x256xf32>
    %171 = arith.addf %168, %170 : vector<16x256xf32>
    %172 = arith.truncf %171 : vector<16x256xf32> to vector<16x256xbf16>
    %c0_141 = arith.constant 0 : index
    %c0_142 = arith.constant 0 : index
    %c0_143 = arith.constant 0 : index
    %173 = vector.load %arg8[%c0_141, %c0_142, %c0_143] : memref<1x16x256xbf16, #tpu.memory_space<vmem>>, vector<1x16x256xbf16>
    %174 = vector.shape_cast %173 : vector<1x16x256xbf16> to vector<16x256xbf16>
    %175 = vector.shape_cast %172 : vector<16x256xbf16> to vector<1x16x256xbf16>
    tpu.vector_store %arg8[%c0_141, %c0_142, %c0_143], %175 {strides = array<i32>} : memref<1x16x256xbf16, #tpu.memory_space<vmem>>, vector<1x16x256xbf16>,
    return
  }
  func.func @transform_0(%arg0: i32) -> (i32, i32, i32, i32) {
    %c0_i32 = arith.constant 0 : i32
    %c0_i32_0 = arith.constant 0 : i32
    %c0_i32_1 = arith.constant 0 : i32
    %c0_i32_2 = arith.constant 0 : i32
    return %arg0, %c0_i32, %c0_i32_0, %c0_i32_1 : i32, i32, i32, i32
  }
  func.func @transform_1(%arg0: i32) -> (i32, i32, i32, i32) {
    %c0_i32 = arith.constant 0 : i32
    %c0_i32_0 = arith.constant 0 : i32
    %c0_i32_1 = arith.constant 0 : i32
    %c0_i32_2 = arith.constant 0 : i32
    return %arg0, %c0_i32, %c0_i32_0, %c0_i32_1 : i32, i32, i32, i32
  }
  func.func @transform_2(%arg0: i32) -> (i32, i32) {
    %c0_i32 = arith.constant 0 : i32
    %c0_i32_0 = arith.constant 0 : i32
    %c0_i32_1 = arith.constant 0 : i32
    return %c0_i32, %c0_i32_0 : i32, i32
  }
  func.func @transform_3(%arg0: i32) -> (i32, i32, i32) {
    %c0_i32 = arith.constant 0 : i32
    %c0_i32_0 = arith.constant 0 : i32
    %c0_i32_1 = arith.constant 0 : i32
    %c0_i32_2 = arith.constant 0 : i32
    return %c0_i32, %c0_i32_0, %c0_i32_1 : i32, i32, i32
  }
  func.func @transform_4(%arg0: i32) -> (i32, i32, i32) {
    %c0_i32 = arith.constant 0 : i32
    %c0_i32_0 = arith.constant 0 : i32
    %c0_i32_1 = arith.constant 0 : i32
    %c0_i32_2 = arith.constant 0 : i32
    return %c0_i32, %c0_i32_0, %c0_i32_1 : i32, i32, i32
  }
  func.func @transform_5(%arg0: i32) -> (i32, i32) {
    %c0_i32 = arith.constant 0 : i32
    %c0_i32_0 = arith.constant 0 : i32
    %c0_i32_1 = arith.constant 0 : i32
    return %c0_i32, %c0_i32_0 : i32, i32
  }
  func.func @transform_6(%arg0: i32) -> (i32, i32) {
    %c0_i32 = arith.constant 0 : i32
    %c0_i32_0 = arith.constant 0 : i32
    %c0_i32_1 = arith.constant 0 : i32
    return %c0_i32, %c0_i32_0 : i32, i32
  }
  func.func @transform_7(%arg0: i32) -> (i32, i32, i32) {
    %c0_i32 = arith.constant 0 : i32
    %c0_i32_0 = arith.constant 0 : i32
    %c0_i32_1 = arith.constant 0 : i32
    return %arg0, %c0_i32, %c0_i32_0 : i32, i32, i32
  }
}

module attributes {stable_mosaic.version = 11 : i64} {
  func.func @_final_kernel(%arg0: i32, %arg1: i32, %arg2: memref<1x16x256xbf16, #tpu.memory_space<vmem>>, %arg3: memref<1x16x256xf32, #tpu.memory_space<vmem>>, %arg4: memref<1x16x256xf32, #tpu.memory_space<vmem>>, %arg5: memref<16x16xbf16, #tpu.memory_space<vmem>>, %arg6: memref<16x16xbf16, #tpu.memory_space<vmem>>, %arg7: memref<16x1xf32, #tpu.memory_space<vmem>>, %arg8: memref<1x16x256xf32, #tpu.memory_space<vmem>>) attributes {dimension_semantics = [#tpu.dimension_semantics<parallel>, #tpu.dimension_semantics<parallel>], iteration_bounds = array<i64: 2, 1>, scalar_prefetch = 0 : i64, scratch_operands = 0 : i64, tpu.core_type = #tpu.core_type<tc>, window_params = [{transform_indices = @transform_0, window_bounds = array<i64: 1, 16, 256>}, {transform_indices = @transform_1, window_bounds = array<i64: 1, 16, 256>}, {transform_indices = @transform_2, window_bounds = array<i64: 1, 16, 256>}, {pipeline_mode = #tpu.pipeline_mode<synchronous>, transform_indices = @transform_3, window_bounds = array<i64: 16, 16>}, {pipeline_mode = #tpu.pipeline_mode<synchronous>, transform_indices = @transform_4, window_bounds = array<i64: 16, 16>}, {pipeline_mode = #tpu.pipeline_mode<synchronous>, transform_indices = @transform_5, window_bounds = array<i64: 16, 1>}, {transform_indices = @transform_6, window_bounds = array<i64: 1, 16, 256>}]} {
    %c0 = arith.constant 0 : index
    %c0_0 = arith.constant 0 : index
    %c0_1 = arith.constant 0 : index
    %0 = vector.load %arg2[%c0, %c0_0, %c0_1] : memref<1x16x256xbf16, #tpu.memory_space<vmem>>, vector<1x16x256xbf16>
    %1 = vector.shape_cast %0 : vector<1x16x256xbf16> to vector<16x256xbf16>
    %c0_2 = arith.constant 0 : index
    %c0_3 = arith.constant 0 : index
    %c0_4 = arith.constant 0 : index
    %2 = vector.load %arg3[%c0_2, %c0_3, %c0_4] : memref<1x16x256xf32, #tpu.memory_space<vmem>>, vector<1x16x256xf32>
    %3 = vector.shape_cast %2 : vector<1x16x256xf32> to vector<16x256xf32>
    %4 = arith.truncf %3 : vector<16x256xf32> to vector<16x256xbf16>
    %c0_5 = arith.constant 0 : index
    %c0_6 = arith.constant 0 : index
    %5 = vector.load %arg5[%c0_5, %c0_6] : memref<16x16xbf16, #tpu.memory_space<vmem>>, vector<16x16xbf16>
    %cst = arith.constant dense<0.000000e+00> : vector<16x256xf32>
    %6 = tpu.matmul %5, %1, %cst {dimension_numbers = #tpu.dot_dimension_numbers<[1], [0], [0], [1], [0, 0, 1, 1], [], []>} : vector<16x16xbf16>, vector<16x256xbf16>, vector<16x256xf32> -> vector<16x256xf32>
    %c0_7 = arith.constant 0 : index
    %c0_8 = arith.constant 0 : index
    %7 = vector.load %arg6[%c0_7, %c0_8] : memref<16x16xbf16, #tpu.memory_space<vmem>>, vector<16x16xbf16>
    %cst_9 = arith.constant dense<0.000000e+00> : vector<16x256xf32>
    %8 = tpu.matmul %7, %4, %cst_9 {dimension_numbers = #tpu.dot_dimension_numbers<[1], [0], [0], [1], [0, 0, 1, 1], [], []>} : vector<16x16xbf16>, vector<16x256xbf16>, vector<16x256xf32> -> vector<16x256xf32>
    %9 = arith.addf %6, %8 : vector<16x256xf32>
    %c0_10 = arith.constant 0 : index
    %c0_11 = arith.constant 0 : index
    %10 = vector.load %arg7[%c0_10, %c0_11] : memref<16x1xf32, #tpu.memory_space<vmem>>, vector<16x1xf32>
    %11 = vector.broadcast %10 : vector<16x1xf32> to vector<16x256xf32>
    %12 = arith.addf %9, %11 : vector<16x256xf32>
    %c0_12 = arith.constant 0 : index
    %c0_13 = arith.constant 0 : index
    %c0_14 = arith.constant 0 : index
    %13 = vector.load %arg4[%c0_12, %c0_13, %c0_14] : memref<1x16x256xf32, #tpu.memory_space<vmem>>, vector<1x16x256xf32>
    %14 = vector.shape_cast %13 : vector<1x16x256xf32> to vector<16x256xf32>
    %15 = arith.addf %12, %14 : vector<16x256xf32>
    %c0_15 = arith.constant 0 : index
    %c0_16 = arith.constant 0 : index
    %c0_17 = arith.constant 0 : index
    %16 = vector.load %arg8[%c0_15, %c0_16, %c0_17] : memref<1x16x256xf32, #tpu.memory_space<vmem>>, vector<1x16x256xf32>
    %17 = vector.shape_cast %16 : vector<1x16x256xf32> to vector<16x256xf32>
    %18 = vector.shape_cast %15 : vector<16x256xf32> to vector<1x16x256xf32>
    tpu.vector_store %arg8[%c0_15, %c0_16, %c0_17], %18 {strides = array<i32>} : memref<1x16x256xf32, #tpu.memory_space<vmem>>, vector<1x16x256xf32>,
    return
  }
  func.func @transform_0(%arg0: i32, %arg1: i32) -> (i32, i32, i32) {
    %c0_i32 = arith.constant 0 : i32
    %c0_i32_0 = arith.constant 0 : i32
    return %arg0, %c0_i32, %arg1 : i32, i32, i32
  }
  func.func @transform_1(%arg0: i32, %arg1: i32) -> (i32, i32, i32) {
    %c0_i32 = arith.constant 0 : i32
    %c0_i32_0 = arith.constant 0 : i32
    return %arg0, %c0_i32, %arg1 : i32, i32, i32
  }
  func.func @transform_2(%arg0: i32, %arg1: i32) -> (i32, i32, i32) {
    %c0_i32 = arith.constant 0 : i32
    %c0_i32_0 = arith.constant 0 : i32
    return %arg0, %c0_i32, %arg1 : i32, i32, i32
  }
  func.func @transform_3(%arg0: i32, %arg1: i32) -> (i32, i32) {
    %c0_i32 = arith.constant 0 : i32
    %c0_i32_0 = arith.constant 0 : i32
    %c0_i32_1 = arith.constant 0 : i32
    return %c0_i32, %c0_i32_0 : i32, i32
  }
  func.func @transform_4(%arg0: i32, %arg1: i32) -> (i32, i32) {
    %c0_i32 = arith.constant 0 : i32
    %c0_i32_0 = arith.constant 0 : i32
    %c0_i32_1 = arith.constant 0 : i32
    return %c0_i32, %c0_i32_0 : i32, i32
  }
  func.func @transform_5(%arg0: i32, %arg1: i32) -> (i32, i32) {
    %c0_i32 = arith.constant 0 : i32
    %c0_i32_0 = arith.constant 0 : i32
    %c0_i32_1 = arith.constant 0 : i32
    return %c0_i32, %c0_i32_0 : i32, i32
  }
  func.func @transform_6(%arg0: i32, %arg1: i32) -> (i32, i32, i32) {
    %c0_i32 = arith.constant 0 : i32
    %c0_i32_0 = arith.constant 0 : i32
    return %arg0, %c0_i32, %arg1 : i32, i32, i32
  }
}

</mosaic_0001>

<llo_original>
// kernel: mixer_forward.6
$region0: #{mixer_forward.6}
  #allocation0 [shape = 'u32[]', space=smem, size = 0x4, offset = 0x4, fixed_abs, tag = 'smem constant byte address 0x4 - core index']
  #allocation1 [shape = 'u32[144,128]{1,0:T(1,128)}', space=vmem, size = 0x12000, scoped, tag = 'internal scratch']
  %s0 = inlined_call_operand.vmem [shape: f32[2,16,144], index: 0, kind: input, shape index: {}]
  %s1 = inlined_call_operand.vmem [shape: f32[2,16,144], index: 1, kind: input, shape index: {}]
  %s2 = inlined_call_operand.vmem [shape: bf16[16,16], index: 2, kind: input, shape index: {}]
  %s3 = inlined_call_operand.vmem [shape: f32[16,1], index: 3, kind: input, shape index: {}]
  %s4 = inlined_call_operand.vmem [shape: bf16[16,16], index: 4, kind: input, shape index: {}]
  %s5 = inlined_call_operand.vmem [shape: f32[16,1], index: 5, kind: input, shape index: {}]
  %s6 = inlined_call_operand.vmem [shape: bf16[16,16], index: 6, kind: input, shape index: {}]
  %s7 = inlined_call_operand.vmem [shape: f32[16,1], index: 7, kind: input, shape index: {}]
  %s8 = inlined_call_operand.vmem [shape: bf16[16,16], index: 8, kind: input, shape index: {}]
  %s9 = inlined_call_operand.vmem [shape: f32[16,1], index: 9, kind: input, shape index: {}]
  %s10 = inlined_call_operand.vmem [shape: f32[2,16,144], index: 10, kind: output, shape index: {0}]
  %s11 = inlined_call_operand.vmem [shape: f32[2,16,144], index: 11, kind: output, shape index: {1}]
  %12 = xla_tuple %s10, %s11
  %s13 = sld [smem:[#allocation0]]
  $region81: #{mixer_forward.6} parent=0
    _
  %s15 = ssub.s32 1, %s13
  %s16 = scalar_select 0, %s15, %s13
  loop: start=0, step=1, limit=4
  $region2: #{mixer_forward.6} parent=0 // loop_pre_header
    _
  $region3: #{mixer_forward.6} parent=0 // loop_header
    %s18 = sphi 0, %s22
    %p19 = scmp.ge.s32.totalorder %s18, 4
    %s25 = sphi 0, %s37
    %s26 = sphi 0, %s33
    %s27 = sphi 0, %s25
    %s28 = sphi 0, %s26
    %s29 = sphi 0, %s27
    %s30 = sphi 0, %s28
    %s42 = sphi 0, %s44
    %s45 = sphi 0, %s42
    %s46 = sphi 0, %s45
    %s62 = sphi 0, %s46
    %s70 = sphi 0, %s72
    %s73 = sphi 0, %s70
    %s74 = sphi 0, %s73
    %s90 = sphi 0, %s74
    %s94 = sphi 0, %s94
    %s96 = sphi 0, %s94
    %s97 = sphi 0, %s96
    %s111 = sphi 0, %s97
    %s115 = sphi 0, %s115
    %s117 = sphi 0, %s115
    %s118 = sphi 0, %s117
    %s132 = sphi 0, %s118
    %s136 = sphi 0, %s136
    %s138 = sphi 0, %s136
    %s139 = sphi 0, %s138
    %s153 = sphi 0, %s139
    %s157 = sphi 0, %s157
    %s159 = sphi 0, %s157
    %s160 = sphi 0, %s159
    %s174 = sphi 0, %s160
    %s178 = sphi 0, %s178
    %s180 = sphi 0, %s178
    %s181 = sphi 0, %s180
    %s195 = sphi 0, %s181
    %s199 = sphi 0, %s199
    %s201 = sphi 0, %s199
    %s202 = sphi 0, %s201
    %s216 = sphi 0, %s202
    %s220 = sphi 0, %s220
    %s222 = sphi 0, %s220
    %s223 = sphi 0, %s222
    %s237 = sphi 0, %s223
    %s241 = sphi 0, %s241
    %s243 = sphi 0, %s241
    %s244 = sphi 0, %s243
    %s258 = sphi 0, %s244
    %s266 = sphi 0, %s268
    %s269 = sphi 0, %s266
    %s270 = sphi 0, %s269
    %s286 = sphi 0, %s270
    %s294 = sphi 0, %s296
    %s297 = sphi 0, %s294
    %s298 = sphi 0, %s297
    %s314 = sphi 0, %s298
  $region4: #{mixer_forward.6} parent=0 // loop_header_branch
    %21 = sbr.rel (%p19) target = $region8
  $region5: #{mixer_forward.6} parent=0 // loop_body
    %s23 = ssub.s32 %s18, 1
    %s24 = ssub.s32 %s18, 2
    %s31 = sadd.s32 1, %s26
    %p32 = scmp.ge.s32.totalorder %s31, 1
    %s33 = scalar_select %p32, 0, %s31
    %s34 = sadd.s32 1, %s25
    %s35 = scalar_select %p32, %s34, %s25
    %p36 = scmp.ge.s32.totalorder %s35, 2
    %s37 = scalar_select %p36, 0, %s35
    %s38 = ssub.s32 %s25, %s37
    %s39 = ssub.s32 %s26, %s33
    %s40 = sor.u32 %s38, %s39
    %p41 = scmp.eq.s32.totalorder %s40, 0
    %s43 = sadd.s32 %s42, 1
    %s44 = scalar_select %p41, %s42, %s43
    %p47 = pneg %p41
    %p48 = scmp.eq.s32.totalorder %s18, 1
    %p49 = por %p47, %p48
    %p50 = scmp.ne.s32.totalorder %s42, %s45
    %p51 = scmp.eq.s32.totalorder %s18, 0
    %p52 = por %p50, %p51
    %p53 = scmp.ne.s32.totalorder %s42, %s45
    %p54 = scmp.eq.s32.totalorder %s23, 1
    %p55 = por %p53, %p54
    %p56 = scmp.ne.s32.totalorder %s45, %s46
    %p57 = scmp.eq.s32.totalorder %s23, 0
    %p58 = por %p56, %p57
    %p59 = scmp.ne.s32.totalorder %s45, %s46
    %p60 = scmp.eq.s32.totalorder %s24, 1
    %p61 = por %p59, %p60
    %p63 = scmp.ne.s32.totalorder %s46, %s62
    %p64 = scmp.eq.s32.totalorder %s24, 0
    %p65 = por %p63, %p64
    %s66 = ssub.s32 %s25, %s37
    %s67 = ssub.s32 %s26, %s33
    %s68 = sor.u32 %s66, %s67
    %p69 = scmp.eq.s32.totalorder %s68, 0
    %s71 = sadd.s32 %s70, 1
    %s72 = scalar_select %p69, %s70, %s71
    %p75 = pneg %p69
    %p76 = scmp.eq.s32.totalorder %s18, 1
    %p77 = por %p75, %p76
    %p78 = scmp.ne.s32.totalorder %s70, %s73
    %p79 = scmp.eq.s32.totalorder %s18, 0
    %p80 = por %p78, %p79
    %p81 = scmp.ne.s32.totalorder %s70, %s73
    %p82 = scmp.eq.s32.totalorder %s23, 1
    %p83 = por %p81, %p82
    %p84 = scmp.ne.s32.totalorder %s73, %s74
    %p85 = scmp.eq.s32.totalorder %s23, 0
    %p86 = por %p84, %p85
    %p87 = scmp.ne.s32.totalorder %s73, %s74
    %p88 = scmp.eq.s32.totalorder %s24, 1
    %p89 = por %p87, %p88
    %p91 = scmp.ne.s32.totalorder %s74, %s90
    %p92 = scmp.eq.s32.totalorder %s24, 0
    %p93 = por %p91, %p92
    %s95 = sadd.s32 %s94, 1
    %p98 = scmp.eq.s32.totalorder %s18, 1
    %p99 = scmp.ne.s32.totalorder %s94, %s96
    %p100 = scmp.eq.s32.totalorder %s18, 0
    %p101 = por %p99, %p100
    %p102 = scmp.ne.s32.totalorder %s94, %s96
    %p103 = scmp.eq.s32.totalorder %s23, 1
    %p104 = por %p102, %p103
    %p105 = scmp.ne.s32.totalorder %s96, %s97
    %p106 = scmp.eq.s32.totalorder %s23, 0
    %p107 = por %p105, %p106
    %p108 = scmp.ne.s32.totalorder %s96, %s97
    %p109 = scmp.eq.s32.totalorder %s24, 1
    %p110 = por %p108, %p109
    %p112 = scmp.ne.s32.totalorder %s97, %s111
    %p113 = scmp.eq.s32.totalorder %s24, 0
    %p114 = por %p112, %p113
    %s116 = sadd.s32 %s115, 1
    %p119 = scmp.eq.s32.totalorder %s18, 1
    %p120 = scmp.ne.s32.totalorder %s115, %s117
    %p121 = scmp.eq.s32.totalorder %s18, 0
    %p122 = por %p120, %p121
    %p123 = scmp.ne.s32.totalorder %s115, %s117
    %p124 = scmp.eq.s32.totalorder %s23, 1
    %p125 = por %p123, %p124
    %p126 = scmp.ne.s32.totalorder %s117, %s118
    %p127 = scmp.eq.s32.totalorder %s23, 0
    %p128 = por %p126, %p127
    %p129 = scmp.ne.s32.totalorder %s117, %s118
    %p130 = scmp.eq.s32.totalorder %s24, 1
    %p131 = por %p129, %p130
    %p133 = scmp.ne.s32.totalorder %s118, %s132
    %p134 = scmp.eq.s32.totalorder %s24, 0
    %p135 = por %p133, %p134
    %s137 = sadd.s32 %s136, 1
    %p140 = scmp.eq.s32.totalorder %s18, 1
    %p141 = scmp.ne.s32.totalorder %s136, %s138
    %p142 = scmp.eq.s32.totalorder %s18, 0
    %p143 = por %p141, %p142
    %p144 = scmp.ne.s32.totalorder %s136, %s138
    %p145 = scmp.eq.s32.totalorder %s23, 1
    %p146 = por %p144, %p145
    %p147 = scmp.ne.s32.totalorder %s138, %s139
    %p148 = scmp.eq.s32.totalorder %s23, 0
    %p149 = por %p147, %p148
    %p150 = scmp.ne.s32.totalorder %s138, %s139
    %p151 = scmp.eq.s32.totalorder %s24, 1
    %p152 = por %p150, %p151
    %p154 = scmp.ne.s32.totalorder %s139, %s153
    %p155 = scmp.eq.s32.totalorder %s24, 0
    %p156 = por %p154, %p155
    %s158 = sadd.s32 %s157, 1
    %p161 = scmp.eq.s32.totalorder %s18, 1
    %p162 = scmp.ne.s32.totalorder %s157, %s159
    %p163 = scmp.eq.s32.totalorder %s18, 0
    %p164 = por %p162, %p163
    %p165 = scmp.ne.s32.totalorder %s157, %s159
    %p166 = scmp.eq.s32.totalorder %s23, 1
    %p167 = por %p165, %p166
    %p168 = scmp.ne.s32.totalorder %s159, %s160
    %p169 = scmp.eq.s32.totalorder %s23, 0
    %p170 = por %p168, %p169
    %p171 = scmp.ne.s32.totalorder %s159, %s160
    %p172 = scmp.eq.s32.totalorder %s24, 1
    %p173 = por %p171, %p172
    %p175 = scmp.ne.s32.totalorder %s160, %s174
    %p176 = scmp.eq.s32.totalorder %s24, 0
    %p177 = por %p175, %p176
    %s179 = sadd.s32 %s178, 1
    %p182 = scmp.eq.s32.totalorder %s18, 1
    %p183 = scmp.ne.s32.totalorder %s178, %s180
    %p184 = scmp.eq.s32.totalorder %s18, 0
    %p185 = por %p183, %p184
    %p186 = scmp.ne.s32.totalorder %s178, %s180
    %p187 = scmp.eq.s32.totalorder %s23, 1
    %p188 = por %p186, %p187
    %p189 = scmp.ne.s32.totalorder %s180, %s181
    %p190 = scmp.eq.s32.totalorder %s23, 0
    %p191 = por %p189, %p190
    %p192 = scmp.ne.s32.totalorder %s180, %s181
    %p193 = scmp.eq.s32.totalorder %s24, 1
    %p194 = por %p192, %p193
    %p196 = scmp.ne.s32.totalorder %s181, %s195
    %p197 = scmp.eq.s32.totalorder %s24, 0
    %p198 = por %p196, %p197
    %s200 = sadd.s32 %s199, 1
    %p203 = scmp.eq.s32.totalorder %s18, 1
    %p204 = scmp.ne.s32.totalorder %s199, %s201
    %p205 = scmp.eq.s32.totalorder %s18, 0
    %p206 = por %p204, %p205
    %p207 = scmp.ne.s32.totalorder %s199, %s201
    %p208 = scmp.eq.s32.totalorder %s23, 1
    %p209 = por %p207, %p208
    %p210 = scmp.ne.s32.totalorder %s201, %s202
    %p211 = scmp.eq.s32.totalorder %s23, 0
    %p212 = por %p210, %p211
    %p213 = scmp.ne.s32.totalorder %s201, %s202
    %p214 = scmp.eq.s32.totalorder %s24, 1
    %p215 = por %p213, %p214
    %p217 = scmp.ne.s32.totalorder %s202, %s216
    %p218 = scmp.eq.s32.totalorder %s24, 0
    %p219 = por %p217, %p218
    %s221 = sadd.s32 %s220, 1
    %p224 = scmp.eq.s32.totalorder %s18, 1
    %p225 = scmp.ne.s32.totalorder %s220, %s222
    %p226 = scmp.eq.s32.totalorder %s18, 0
    %p227 = por %p225, %p226
    %p228 = scmp.ne.s32.totalorder %s220, %s222
    %p229 = scmp.eq.s32.totalorder %s23, 1
    %p230 = por %p228, %p229
    %p231 = scmp.ne.s32.totalorder %s222, %s223
    %p232 = scmp.eq.s32.totalorder %s23, 0
    %p233 = por %p231, %p232
    %p234 = scmp.ne.s32.totalorder %s222, %s223
    %p235 = scmp.eq.s32.totalorder %s24, 1
    %p236 = por %p234, %p235
    %p238 = scmp.ne.s32.totalorder %s223, %s237
    %p239 = scmp.eq.s32.totalorder %s24, 0
    %p240 = por %p238, %p239
    %s242 = sadd.s32 %s241, 1
    %p245 = scmp.eq.s32.totalorder %s18, 1
    %p246 = scmp.ne.s32.totalorder %s241, %s243
    %p247 = scmp.eq.s32.totalorder %s18, 0
    %p248 = por %p246, %p247
    %p249 = scmp.ne.s32.totalorder %s241, %s243
    %p250 = scmp.eq.s32.totalorder %s23, 1
    %p251 = por %p249, %p250
    %p252 = scmp.ne.s32.totalorder %s243, %s244
    %p253 = scmp.eq.s32.totalorder %s23, 0
    %p254 = por %p252, %p253
    %p255 = scmp.ne.s32.totalorder %s243, %s244
    %p256 = scmp.eq.s32.totalorder %s24, 1
    %p257 = por %p255, %p256
    %p259 = scmp.ne.s32.totalorder %s244, %s258
    %p260 = scmp.eq.s32.totalorder %s24, 0
    %p261 = por %p259, %p260
    %s262 = ssub.s32 %s25, %s37
    %s263 = ssub.s32 %s26, %s33
    %s264 = sor.u32 %s262, %s263
    %p265 = scmp.eq.s32.totalorder %s264, 0
    %s267 = sadd.s32 %s266, 1
    %s268 = scalar_select %p265, %s266, %s267
    %p271 = pneg %p265
    %p272 = scmp.eq.s32.totalorder %s18, 1
    %p273 = por %p271, %p272
    %p274 = scmp.ne.s32.totalorder %s266, %s269
    %p275 = scmp.eq.s32.totalorder %s18, 0
    %p276 = por %p274, %p275
    %p277 = scmp.ne.s32.totalorder %s266, %s269
    %p278 = scmp.eq.s32.totalorder %s23, 1
    %p279 = por %p277, %p278
    %p280 = scmp.ne.s32.totalorder %s269, %s270
    %p281 = scmp.eq.s32.totalorder %s23, 0
    %p282 = por %p280, %p281
    %p283 = scmp.ne.s32.totalorder %s269, %s270
    %p284 = scmp.eq.s32.totalorder %s24, 1
    %p285 = por %p283, %p284
    %p287 = scmp.ne.s32.totalorder %s270, %s286
    %p288 = scmp.eq.s32.totalorder %s24, 0
    %p289 = por %p287, %p288
    %s290 = ssub.s32 %s25, %s37
    %s291 = ssub.s32 %s26, %s33
    %s292 = sor.u32 %s290, %s291
    %p293 = scmp.eq.s32.totalorder %s292, 0
    %s295 = sadd.s32 %s294, 1
    %s296 = scalar_select %p293, %s294, %s295
    %p299 = pneg %p293
    %p300 = scmp.eq.s32.totalorder %s18, 1
    %p301 = por %p299, %p300
    %p302 = scmp.ne.s32.totalorder %s294, %s297
    %p303 = scmp.eq.s32.totalorder %s18, 0
    %p304 = por %p302, %p303
    %p305 = scmp.ne.s32.totalorder %s294, %s297
    %p306 = scmp.eq.s32.totalorder %s23, 1
    %p307 = por %p305, %p306
    %p308 = scmp.ne.s32.totalorder %s297, %s298
    %p309 = scmp.eq.s32.totalorder %s23, 0
    %p310 = por %p308, %p309
    %p311 = scmp.ne.s32.totalorder %s297, %s298
    %p312 = scmp.eq.s32.totalorder %s24, 1
    %p313 = por %p311, %p312
    %p315 = scmp.ne.s32.totalorder %s298, %s314
    %p316 = scmp.eq.s32.totalorder %s24, 0
    %p317 = por %p315, %p316
    %p318 = scmp.le.s32.totalorder 1, %s18
    %p319 = scmp.lt.s32.totalorder %s18, 3
    %p320 = pnand %p318, %p319
    %p321 = pneg %p320
    // Predicated region
    $region9: #{mixer_forward.6} parent=5 // pred_check
      _
    $region10: #{mixer_forward.6} parent=5 // pred_check_branch
      %323 = sbr.rel (%p320) target = $region12
    $region11: #{mixer_forward.6} parent=5 // pred_region
      %s324 = ssub.s32 %s18, 1
      // Predicated region
      $region13: #{mixer_forward.6} parent=11 // pred_check
        %p325 = pneg %p107
      $region14: #{mixer_forward.6} parent=11 // pred_check_branch
        %327 = sbr.rel (%p325) target = $region16
      $region15: #{mixer_forward.6} parent=11 // pred_region
        _
      $region16: #{mixer_forward.6} parent=11 // pred_fallthru
        _
      // Predicated region
      $region17: #{mixer_forward.6} parent=11 // pred_check
        %p328 = pneg %p128
      $region18: #{mixer_forward.6} parent=11 // pred_check_branch
        %330 = sbr.rel (%p328) target = $region20
      $region19: #{mixer_forward.6} parent=11 // pred_region
        _
      $region20: #{mixer_forward.6} parent=11 // pred_fallthru
        _
      // Predicated region
      $region21: #{mixer_forward.6} parent=11 // pred_check
        %p331 = pneg %p149
      $region22: #{mixer_forward.6} parent=11 // pred_check_branch
        %333 = sbr.rel (%p331) target = $region24
      $region23: #{mixer_forward.6} parent=11 // pred_region
        _
      $region24: #{mixer_forward.6} parent=11 // pred_fallthru
        _
      // Predicated region
      $region25: #{mixer_forward.6} parent=11 // pred_check
        %p334 = pneg %p170
      $region26: #{mixer_forward.6} parent=11 // pred_check_branch
        %336 = sbr.rel (%p334) target = $region28
      $region27: #{mixer_forward.6} parent=11 // pred_region
        _
      $region28: #{mixer_forward.6} parent=11 // pred_fallthru
        _
      // Predicated region
      $region29: #{mixer_forward.6} parent=11 // pred_check
        %p337 = pneg %p191
      $region30: #{mixer_forward.6} parent=11 // pred_check_branch
        %339 = sbr.rel (%p337) target = $region32
      $region31: #{mixer_forward.6} parent=11 // pred_region
        _
      $region32: #{mixer_forward.6} parent=11 // pred_fallthru
        _
      // Predicated region
      $region33: #{mixer_forward.6} parent=11 // pred_check
        %p340 = pneg %p212
      $region34: #{mixer_forward.6} parent=11 // pred_check_branch
        %342 = sbr.rel (%p340) target = $region36
      $region35: #{mixer_forward.6} parent=11 // pred_region
        _
      $region36: #{mixer_forward.6} parent=11 // pred_fallthru
        _
      // Predicated region
      $region37: #{mixer_forward.6} parent=11 // pred_check
        %p343 = pneg %p233
      $region38: #{mixer_forward.6} parent=11 // pred_check_branch
        %345 = sbr.rel (%p343) target = $region40
      $region39: #{mixer_forward.6} parent=11 // pred_region
        _
      $region40: #{mixer_forward.6} parent=11 // pred_fallthru
        _
      // Predicated region
      $region41: #{mixer_forward.6} parent=11 // pred_check
        %p346 = pneg %p254
      $region42: #{mixer_forward.6} parent=11 // pred_check_branch
        %348 = sbr.rel (%p346) target = $region44
      $region43: #{mixer_forward.6} parent=11 // pred_region
        _
      $region44: #{mixer_forward.6} parent=11 // pred_fallthru
        _
    $region12: #{mixer_forward.6} parent=5 // pred_fallthru
      _
    %p349 = scmp.lt.s32.totalorder %s18, 2
    // Predicated region
    $region45: #{mixer_forward.6} parent=5 // pred_check
      %p350 = pneg %p349
    $region46: #{mixer_forward.6} parent=5 // pred_check_branch
      %352 = sbr.rel (%p350) target = $region48
    $region47: #{mixer_forward.6} parent=5 // pred_region
      // Predicated region
      $region49: #{mixer_forward.6} parent=47 // pred_check
        %p353 = pneg %p52
      $region50: #{mixer_forward.6} parent=47 // pred_check_branch
        %355 = sbr.rel (%p353) target = $region52
      $region51: #{mixer_forward.6} parent=47 // pred_region
        %s356 = smul.u32 2, %s26
        %p357 = scmp.lt.s32.totalorder %s25, 1
        %s358 = scalar_select %p357, %s25, 1
        %p359 = scmp.lt.s32.totalorder %s356, 1
        %s360 = scalar_select %p359, %s356, 1
        %s361 = smul.addr %s358, 4
        %s362 = sadd.s32 %s360, %s361
        %s363 = smul.addr %s362, 8
        %s364 = scalar_lea.vmem %s0, %s363
        %s365 = smul.u32 2, %s26
      $region52: #{mixer_forward.6} parent=47 // pred_fallthru
        _
      // Predicated region
      $region53: #{mixer_forward.6} parent=47 // pred_check
        %p366 = pneg %p80
      $region54: #{mixer_forward.6} parent=47 // pred_check_branch
        %368 = sbr.rel (%p366) target = $region56
      $region55: #{mixer_forward.6} parent=47 // pred_region
        %s369 = smul.u32 2, %s26
        %p370 = scmp.lt.s32.totalorder %s25, 1
        %s371 = scalar_select %p370, %s25, 1
        %p372 = scmp.lt.s32.totalorder %s369, 1
        %s373 = scalar_select %p372, %s369, 1
        %s374 = smul.addr %s371, 4
        %s375 = sadd.s32 %s373, %s374
        %s376 = smul.addr %s375, 8
        %s377 = scalar_lea.vmem %s1, %s376
        %s378 = smul.u32 2, %s26
      $region56: #{mixer_forward.6} parent=47 // pred_fallthru
        _
    $region48: #{mixer_forward.6} parent=5 // pred_fallthru
      _
    %p379 = scmp.le.s32.totalorder 1, %s18
    %p380 = scmp.lt.s32.totalorder %s18, 3
    %p381 = pnand %p379, %p380
    %p382 = pneg %p381
    // Predicated region
    $region57: #{mixer_forward.6} parent=5 // pred_check
      _
    $region58: #{mixer_forward.6} parent=5 // pred_check_branch
      %384 = sbr.rel (%p381) target = $region60
    $region59: #{mixer_forward.6} parent=5 // pred_region
      %s385 = ssub.s32 %s18, 1
      %s386 = smul.u32 2, %s28
      %p387 = scmp.lt.s32.totalorder %s27, 1
      %s388 = scalar_select %p387, %s27, 1
      %p389 = scmp.lt.s32.totalorder %s386, 1
      %s390 = scalar_select %p389, %s386, 1
      %s391 = smul.addr %s388, 4
      %s392 = sadd.s32 %s390, %s391
      %s393 = smul.addr %s392, 8
      %s394 = scalar_lea.vmem %s0, %s393
      %p395 = pneg %p58
      %p396 = pneg %p55
      %s397 = smul.u32 2, %s28
      %p398 = scmp.lt.s32.totalorder %s27, 1
      %s399 = scalar_select %p398, %s27, 1
      %p400 = scmp.lt.s32.totalorder %s397, 1
      %s401 = scalar_select %p400, %s397, 1
      %s402 = smul.addr %s399, 4
      %s403 = sadd.s32 %s401, %s402
      %s404 = smul.addr %s403, 8
      %s405 = scalar_lea.vmem %s1, %s404
      %p406 = pneg %p86
      %p407 = pneg %p83
      %p408 = pneg %p107
      %p409 = pneg %p104
      %p410 = pneg %p128
      %p411 = pneg %p125
      %p412 = pneg %p149
      %p413 = pneg %p146
      %p414 = pneg %p170
      %p415 = pneg %p167
      %p416 = pneg %p191
      %p417 = pneg %p188
      %p418 = pneg %p212
      %p419 = pneg %p209
      %p420 = pneg %p233
      %p421 = pneg %p230
      %p422 = pneg %p254
      %p423 = pneg %p251
      %p424 = pneg %p282
      %p425 = pneg %p279
      %s426 = smul.u32 2, %s28
      %p427 = scmp.lt.s32.totalorder %s27, 1
      %s428 = scalar_select %p427, %s27, 1
      %p429 = scmp.lt.s32.totalorder %s426, 1
      %s430 = scalar_select %p429, %s426, 1
      %s431 = smul.addr %s428, 4
      %s432 = sadd.s32 %s430, %s431
      %s433 = smul.addr %s432, 8
      %s434 = scalar_lea.vmem %s10, %s433
      %p435 = pneg %p310
      %p436 = pneg %p307
      %s437 = smul.u32 2, %s28
      %p438 = scmp.lt.s32.totalorder %s27, 1
      %s439 = scalar_select %p438, %s27, 1
      %p440 = scmp.lt.s32.totalorder %s437, 1
      %s441 = scalar_select %p440, %s437, 1
      %s442 = smul.addr %s439, 4
      %s443 = sadd.s32 %s441, %s442
      %s444 = smul.addr %s443, 8
      %s445 = scalar_lea.vmem %s11, %s444
      %s446 = smul.u32 2, %s28
      %p447 = scmp.lt.s32.totalorder %s27, 1
      %s448 = scalar_select %p447, %s27, 1
      %p449 = scmp.lt.s32.totalorder %s446, 1
      %s450 = scalar_select %p449, %s446, 1
      %s451 = smul.addr %s448, 4
      %s452 = sadd.s32 %s450, %s451
      %s453 = smul.addr %s452, 8
      %s454 = scalar_lea.vmem %s0, %s453
      %s455 = smul.u32 2, %s28
      %s456 = smul.u32 2, %s28
      %p457 = scmp.lt.s32.totalorder %s27, 1
      %s458 = scalar_select %p457, %s27, 1
      %p459 = scmp.lt.s32.totalorder %s456, 1
      %s460 = scalar_select %p459, %s456, 1
      %s461 = smul.addr %s458, 4
      %s462 = sadd.s32 %s460, %s461
      %s463 = smul.addr %s462, 8
      %s464 = scalar_lea.vmem %s1, %s463
      %s465 = smul.u32 2, %s28
      %s466 = smul.u32 2, %s28
      %p467 = scmp.lt.s32.totalorder %s27, 1
      %s468 = scalar_select %p467, %s27, 1
      %p469 = scmp.lt.s32.totalorder %s466, 1
      %s470 = scalar_select %p469, %s466, 1
      %s471 = smul.addr %s468, 4
      %s472 = sadd.s32 %s470, %s471
      %s473 = smul.addr %s472, 8
      %s474 = scalar_lea.vmem %s10, %s473
      %s475 = smul.u32 2, %s28
      %s476 = smul.u32 2, %s28
      %p477 = scmp.lt.s32.totalorder %s27, 1
      %s478 = scalar_select %p477, %s27, 1
      %p479 = scmp.lt.s32.totalorder %s476, 1
      %s480 = scalar_select %p479, %s476, 1
      %s481 = smul.addr %s478, 4
      %s482 = sadd.s32 %s480, %s481
      %s483 = smul.addr %s482, 8
      %s484 = scalar_lea.vmem %s11, %s483
      %s485 = smul.u32 2, %s28
      %v487 = vld [vmem:[%s454] sm:$0xff]
      %v488 = vld [vmem:[%s454 + $0x8] sm:$0xff]
      %v489 = vld [vmem:[%s454 + $0x10] sm:$0xff]
      %v490 = vld [vmem:[%s454 + $0x18] sm:$0xff]
      %v491 = vpack.c.bf16 %v489, %v487
      %v492 = vpack.c.bf16 %v490, %v488
      %v493 = vld [vmem:[%s464] sm:$0xff]
      %v494 = vld [vmem:[%s464 + $0x8] sm:$0xff]
      %v495 = vld [vmem:[%s464 + $0x10] sm:$0xff]
      %v496 = vld [vmem:[%s464 + $0x18] sm:$0xff]
      %v497 = vpack.c.bf16 %v495, %v493
      %v498 = vpack.c.bf16 %v496, %v494
      %v499 = vld [vmem:[%s2] sm:$0xf]
      %v500 = vld [vmem:[%s2 + $0x4] sm:$0xf]
      %v501 = vld [vmem:[%s3] sm:$0xff]
      %v502 = vld [vmem:[%s3 + $0x8] sm:$0xff]
      %504 = vset.pattern.permute.xlu0 0
      %505 = vperm.xlu0 %504, %v501
      %v506 = vpop.permute.xlu0 %505
      %509 = vset.pattern.permute.xlu0 0
      %510 = vperm.xlu0 %509, %v502
      %v511 = vpop.permute.xlu0 %510
      %v515 = vunpack.c.l.b16 %v499
      %v516 = vunpack.c.l.b16 %v500
      %v517 = vpack.c.b16 %v516, %v515
      %vm518 = vcmask 130048
      %v520 = vsel %vm518, %v517, 0
      %522 = vmatprep.subr.bf16.mxu0 0
      %523 = vmatpush1.bf16.msra.mxu0 0
      %524 = vmatprep.subr.bf16.mxu0 0
      %525 = vmatpush1.bf16.msra.mxu0 0
      %526 = vmatprep.subr.bf16.mxu0 0
      %527 = vmatpush1.bf16.msra.mxu0 0
      %528 = vmatprep.subr.bf16.mxu0 0
      %529 = vmatpush1.bf16.msra.mxu0 0
      %530 = vmatprep.subr.bf16.mxu0 0
      %531 = vmatpush1.bf16.msra.mxu0 0
      %532 = vmatprep.subr.bf16.mxu0 0
      %533 = vmatpush1.bf16.msra.mxu0 0
      %534 = vmatprep.subr.bf16.mxu0 0
      %535 = vmatpush1.bf16.msra.mxu0 0
      %536 = vmatprep.subr.bf16.mxu0 %v492
      %537 = vmatpush1.bf16.msra.mxu0 %v491
      %538 = vmatprep.subr.bf16.mxu0 0
      %539 = vmatpush2.bf16.msra.mxu0 0
      %540 = vmatprep.subr.bf16.mxu0 0
      %541 = vmatpush2.bf16.msra.mxu0 0
      %542 = vmatprep.subr.bf16.mxu0 0
      %543 = vmatpush2.bf16.msra.mxu0 0
      %544 = vmatprep.subr.bf16.mxu0 0
      %545 = vmatpush2.bf16.msra.mxu0 0
      %546 = vmatprep.subr.bf16.mxu0 0
      %547 = vmatpush2.bf16.msra.mxu0 0
      %548 = vmatprep.subr.bf16.mxu0 0
      %549 = vmatpush2.bf16.msra.mxu0 0
      %550 = vmatprep.subr.bf16.mxu0 0
      %551 = vmatpush2.bf16.msra.mxu0 0
      %552 = vmatprep.subr.bf16.mxu0 0
      %553 = vmatpush2.bf16.msra.mxu0 0
      %554 = vmatprep.mubr.bf16.mxu0 0
      %555 = vmatmul.mubr.bf16.gmra.mxu0 %v520
      %v556 = vpop.f32.mrf.mxu0
      %v557 = vadd.f32 %v506, %v556
      %v558 = vpop.f32.mrf.mxu0
      %v559 = vadd.f32 %v506, %v558
      %v560 = vpop.f32.mrf.mxu0
      %v561 = vadd.f32 %v511, %v560
      %v562 = vpop.f32.mrf.mxu0
      %v563 = vadd.f32 %v511, %v562
      %564 = vdwg.mxu0
      %vm565 = vcmp.gt.f32.partialorder %v557, 0.0
      %vm566 = vcmp.gt.f32.partialorder %v559, 0.0
      %vm567 = vcmp.gt.f32.partialorder %v561, 0.0
      %vm568 = vcmp.gt.f32.partialorder %v563, 0.0
      %v569 = vmul.f32 %v557, 0.1
      %v570 = vmul.f32 %v559, 0.1
      %v571 = vmul.f32 %v561, 0.1
      %v572 = vmul.f32 %v563, 0.1
      %v573 = vsel %vm565, %v557, %v569
      %v574 = vsel %vm566, %v559, %v570
      %v575 = vsel %vm567, %v561, %v571
      %v576 = vsel %vm568, %v563, %v572
      %v577 = vld [vmem:[%s4] sm:$0xf]
      %v578 = vld [vmem:[%s4 + $0x4] sm:$0xf]
      %v579 = vpack.c.bf16 %v575, %v573
      %v580 = vpack.c.bf16 %v576, %v574
      %v581 = vld [vmem:[%s5] sm:$0xff]
      %v582 = vld [vmem:[%s5 + $0x8] sm:$0xff]
      %584 = vset.pattern.permute.xlu0 0
      %585 = vperm.xlu0 %584, %v581
      %v586 = vpop.permute.xlu0 %585
      %589 = vset.pattern.permute.xlu0 0
      %590 = vperm.xlu0 %589, %v582
      %v591 = vpop.permute.xlu0 %590
      %v595 = vunpack.c.l.b16 %v577
      %v596 = vunpack.c.l.b16 %v578
      %v597 = vpack.c.b16 %v596, %v595
      %v599 = vsel %vm518, %v597, 0
      %601 = vmatprep.subr.bf16.mxu0 0
      %602 = vmatpush1.bf16.msra.mxu0 0
      %603 = vmatprep.subr.bf16.mxu0 0
      %604 = vmatpush1.bf16.msra.mxu0 0
      %605 = vmatprep.subr.bf16.mxu0 0
      %606 = vmatpush1.bf16.msra.mxu0 0
      %607 = vmatprep.subr.bf16.mxu0 0
      %608 = vmatpush1.bf16.msra.mxu0 0
      %609 = vmatprep.subr.bf16.mxu0 0
      %610 = vmatpush1.bf16.msra.mxu0 0
      %611 = vmatprep.subr.bf16.mxu0 0
      %612 = vmatpush1.bf16.msra.mxu0 0
      %613 = vmatprep.subr.bf16.mxu0 0
      %614 = vmatpush1.bf16.msra.mxu0 0
      %615 = vmatprep.subr.bf16.mxu0 %v580
      %616 = vmatpush1.bf16.msra.mxu0 %v579
      %617 = vmatprep.subr.bf16.mxu0 0
      %618 = vmatpush2.bf16.msra.mxu0 0
      %619 = vmatprep.subr.bf16.mxu0 0
      %620 = vmatpush2.bf16.msra.mxu0 0
      %621 = vmatprep.subr.bf16.mxu0 0
      %622 = vmatpush2.bf16.msra.mxu0 0
      %623 = vmatprep.subr.bf16.mxu0 0
      %624 = vmatpush2.bf16.msra.mxu0 0
      %625 = vmatprep.subr.bf16.mxu0 0
      %626 = vmatpush2.bf16.msra.mxu0 0
      %627 = vmatprep.subr.bf16.mxu0 0
      %628 = vmatpush2.bf16.msra.mxu0 0
      %629 = vmatprep.subr.bf16.mxu0 0
      %630 = vmatpush2.bf16.msra.mxu0 0
      %631 = vmatprep.subr.bf16.mxu0 0
      %632 = vmatpush2.bf16.msra.mxu0 0
      %633 = vmatprep.mubr.bf16.mxu0 0
      %634 = vmatmul.mubr.bf16.gmra.mxu0 %v599
      %v635 = vpop.f32.mrf.mxu0
      %v636 = vadd.f32 %v586, %v635
      %v637 = vpop.f32.mrf.mxu0
      %v638 = vadd.f32 %v586, %v637
      %v639 = vpop.f32.mrf.mxu0
      %v640 = vadd.f32 %v591, %v639
      %v641 = vpop.f32.mrf.mxu0
      %v642 = vadd.f32 %v591, %v641
      %643 = vdwg.mxu0
      %v644 = vld [vmem:[%s6] sm:$0xf]
      %v645 = vld [vmem:[%s6 + $0x4] sm:$0xf]
      %v646 = vld [vmem:[%s7] sm:$0xff]
      %v647 = vld [vmem:[%s7 + $0x8] sm:$0xff]
      %649 = vset.pattern.permute.xlu0 0
      %650 = vperm.xlu0 %649, %v646
      %v651 = vpop.permute.xlu0 %650
      %654 = vset.pattern.permute.xlu0 0
      %655 = vperm.xlu0 %654, %v647
      %v656 = vpop.permute.xlu0 %655
      %v660 = vunpack.c.l.b16 %v644
      %v661 = vunpack.c.l.b16 %v645
      %v662 = vpack.c.b16 %v661, %v660
      %v664 = vsel %vm518, %v662, 0
      %666 = vmatprep.subr.bf16.mxu0 0
      %667 = vmatpush1.bf16.msra.mxu0 0
      %668 = vmatprep.subr.bf16.mxu0 0
      %669 = vmatpush1.bf16.msra.mxu0 0
      %670 = vmatprep.subr.bf16.mxu0 0
      %671 = vmatpush1.bf16.msra.mxu0 0
      %672 = vmatprep.subr.bf16.mxu0 0
      %673 = vmatpush1.bf16.msra.mxu0 0
      %674 = vmatprep.subr.bf16.mxu0 0
      %675 = vmatpush1.bf16.msra.mxu0 0
      %676 = vmatprep.subr.bf16.mxu0 0
      %677 = vmatpush1.bf16.msra.mxu0 0
      %678 = vmatprep.subr.bf16.mxu0 0
      %679 = vmatpush1.bf16.msra.mxu0 0
      %680 = vmatprep.subr.bf16.mxu0 %v498
      %681 = vmatpush1.bf16.msra.mxu0 %v497
      %682 = vmatprep.subr.bf16.mxu0 0
      %683 = vmatpush2.bf16.msra.mxu0 0
      %684 = vmatprep.subr.bf16.mxu0 0
      %685 = vmatpush2.bf16.msra.mxu0 0
      %686 = vmatprep.subr.bf16.mxu0 0
      %687 = vmatpush2.bf16.msra.mxu0 0
      %688 = vmatprep.subr.bf16.mxu0 0
      %689 = vmatpush2.bf16.msra.mxu0 0
      %690 = vmatprep.subr.bf16.mxu0 0
      %691 = vmatpush2.bf16.msra.mxu0 0
      %692 = vmatprep.subr.bf16.mxu0 0
      %693 = vmatpush2.bf16.msra.mxu0 0
      %694 = vmatprep.subr.bf16.mxu0 0
      %695 = vmatpush2.bf16.msra.mxu0 0
      %696 = vmatprep.subr.bf16.mxu0 0
      %697 = vmatpush2.bf16.msra.mxu0 0
      %698 = vmatprep.mubr.bf16.mxu0 0
      %699 = vmatmul.mubr.bf16.gmra.mxu0 %v664
      %v700 = vpop.f32.mrf.mxu0
      %v701 = vadd.f32 %v651, %v700
      %v702 = vpop.f32.mrf.mxu0
      %v703 = vadd.f32 %v651, %v702
      %v704 = vpop.f32.mrf.mxu0
      %v705 = vadd.f32 %v656, %v704
      %v706 = vpop.f32.mrf.mxu0
      %v707 = vadd.f32 %v656, %v706
      %708 = vdwg.mxu0
      %vm709 = vcmp.gt.f32.partialorder %v701, 0.0
      %vm710 = vcmp.gt.f32.partialorder %v703, 0.0
      %vm711 = vcmp.gt.f32.partialorder %v705, 0.0
      %vm712 = vcmp.gt.f32.partialorder %v707, 0.0
      %v713 = vmul.f32 %v701, 0.1
      %v714 = vmul.f32 %v703, 0.1
      %v715 = vmul.f32 %v705, 0.1
      %v716 = vmul.f32 %v707, 0.1
      %v717 = vsel %vm709, %v701, %v713
      %v718 = vsel %vm710, %v703, %v714
      %v719 = vsel %vm711, %v705, %v715
      %v720 = vsel %vm712, %v707, %v716
      %v721 = vld [vmem:[%s8] sm:$0xf]
      %v722 = vld [vmem:[%s8 + $0x4] sm:$0xf]
      %v723 = vpack.c.bf16 %v719, %v717
      %v724 = vpack.c.bf16 %v720, %v718
      %v725 = vld [vmem:[%s9] sm:$0xff]
      %v726 = vld [vmem:[%s9 + $0x8] sm:$0xff]
      %728 = vset.pattern.permute.xlu0 0
      %729 = vperm.xlu0 %728, %v725
      %v730 = vpop.permute.xlu0 %729
      %733 = vset.pattern.permute.xlu0 0
      %734 = vperm.xlu0 %733, %v726
      %v735 = vpop.permute.xlu0 %734
      %v739 = vunpack.c.l.b16 %v721
      %v740 = vunpack.c.l.b16 %v722
      %v741 = vpack.c.b16 %v740, %v739
      %v743 = vsel %vm518, %v741, 0
      %745 = vmatprep.subr.bf16.mxu0 0
      %746 = vmatpush1.bf16.msra.mxu0 0
      %747 = vmatprep.subr.bf16.mxu0 0
      %748 = vmatpush1.bf16.msra.mxu0 0
      %749 = vmatprep.subr.bf16.mxu0 0
      %750 = vmatpush1.bf16.msra.mxu0 0
      %751 = vmatprep.subr.bf16.mxu0 0
      %752 = vmatpush1.bf16.msra.mxu0 0
      %753 = vmatprep.subr.bf16.mxu0 0
      %754 = vmatpush1.bf16.msra.mxu0 0
      %755 = vmatprep.subr.bf16.mxu0 0
      %756 = vmatpush1.bf16.msra.mxu0 0
      %757 = vmatprep.subr.bf16.mxu0 0
      %758 = vmatpush1.bf16.msra.mxu0 0
      %759 = vmatprep.subr.bf16.mxu0 %v724
      %760 = vmatpush1.bf16.msra.mxu0 %v723
      %761 = vmatprep.subr.bf16.mxu0 0
      %762 = vmatpush2.bf16.msra.mxu0 0
      %763 = vmatprep.subr.bf16.mxu0 0
      %764 = vmatpush2.bf16.msra.mxu0 0
      %765 = vmatprep.subr.bf16.mxu0 0
      %766 = vmatpush2.bf16.msra.mxu0 0
      %767 = vmatprep.subr.bf16.mxu0 0
      %768 = vmatpush2.bf16.msra.mxu0 0
      %769 = vmatprep.subr.bf16.mxu0 0
      %770 = vmatpush2.bf16.msra.mxu0 0
      %771 = vmatprep.subr.bf16.mxu0 0
      %772 = vmatpush2.bf16.msra.mxu0 0
      %773 = vmatprep.subr.bf16.mxu0 0
      %774 = vmatpush2.bf16.msra.mxu0 0
      %775 = vmatprep.subr.bf16.mxu0 0
      %776 = vmatpush2.bf16.msra.mxu0 0
      %777 = vmatprep.mubr.bf16.mxu0 0
      %778 = vmatmul.mubr.bf16.gmra.mxu0 %v743
      %v779 = vpop.f32.mrf.mxu0
      %v780 = vadd.f32 %v730, %v779
      %v781 = vpop.f32.mrf.mxu0
      %v782 = vadd.f32 %v730, %v781
      %v783 = vpop.f32.mrf.mxu0
      %v784 = vadd.f32 %v735, %v783
      %v785 = vpop.f32.mrf.mxu0
      %v786 = vadd.f32 %v735, %v785
      %787 = vdwg.mxu0
      %v788 = vand.u32 2147483647, %v780
      %vm789 = vcmp.le.f32.partialorder %v788, 0.7853982
      %vm790 = vcmp.lt.s32.totalorder %v780, 0
      %v791 = vand.u32 %v780, 2139095040
      %v792 = vshrl.u32 %v791, 23
      %v793 = vsub.s32 %v792, 127
      %v794 = vand.u32 2147483647, %v780
      %v795 = vand.u32 %v794, 8388607
      %v796 = vor.u32 %v795, 8388608
      %v797 = vsub.s32 0, %v796
      %v798 = vadd.s32 %v793, 1
      %vm799 = vcmp.gt.s32.totalorder %v798, 0
      %v800 = vsel %vm799, %v798, 0
      %v801 = vshrl.u32 %v800, 5
      %v802 = vand.u32 %v800, 31
      %v803 = vsub.s32 32, %v802
      %v804 = vshrl.u32 683565275, %v803
      %v805 = vshll.u32 683565275, %v802
      %v806 = vshrl.u32 2475754826, %v803
      %v807 = vor.u32 %v805, %v806
      %v808 = vshll.u32 2475754826, %v802
      %v809 = vshrl.u32 2131351028, %v803
      %v810 = vor.u32 %v808, %v809
      %v811 = vshll.u32 2131351028, %v802
      %v812 = vshrl.u32 2102212464, %v803
      %v813 = vor.u32 %v811, %v812
      %v814 = vshll.u32 2102212464, %v802
      %v815 = vshrl.u32 920167782, %v803
      %v816 = vor.u32 %v814, %v815
      %v817 = vshll.u32 920167782, %v802
      %v818 = vshrl.u32 1326507024, %v803
      %v819 = vor.u32 %v817, %v818
      %vm820 = vcmp.lt.s32.totalorder %v801, 1
      %vm821 = vcmp.lt.s32.totalorder %v801, 2
      %vm822 = vcmp.lt.s32.totalorder %v801, 3
      %vm823 = vcmp.lt.s32.totalorder %v801, 4
      %v824 = vsel %vm820, %v804, %v807
      %v825 = vsel %vm823, %v813, 2102212464
      %v826 = vsel %vm822, %v810, %v825
      %v827 = vsel %vm821, %v824, %v826
      %v828 = vsel %vm820, %v807, %v810
      %v829 = vsel %vm823, %v816, 920167782
      %v830 = vsel %vm822, %v813, %v829
      %v831 = vsel %vm821, %v828, %v830
      %v832 = vsel %vm820, %v810, %v813
      %v833 = vsel %vm823, %v819, 1326507024
      %v834 = vsel %vm822, %v816, %v833
      %v835 = vsel %vm821, %v832, %v834
      %v836 = vshll.u32 %v796, 8
      %v837 = vmul.u32.u64.compose %v836, %v835
      %v838 = vextract.low.u32 %v837
      %v839 = vextract.high.u32 %v837
      %v840 = vmul.u32.u64.compose %v836, %v831
      %v841 = vextract.low.u32 %v840
      %v842 = vextract.high.u32 %v840
      %v843 = vmul.u32 %v836, %v827
      %v844 = vadd.s32 %v839, %v841
      %vm845 = vc.u32 %v839, %v841
      %v846 = vadd.s32 %v842, 1
      %v847 = vsel %vm845, %v846, %v842
      %v848 = vadd.s32 %v843, %v847
      %v849 = vadd.s32 %v848, 536870912
      %v850 = vshrl.u32 %v849, 30
      %v851 = vshll.u32 %v850, 30
      %v852 = vsub.s32 %v848, %v851
      %vm853 = vcmp.lt.s32.totalorder %v852, 0
      %v854 = vsub.s32 0, %v852
      %v855 = vsel %vm853, %v854, %v852
      %v856 = vclz %v855
      %v857 = vsub.s32 %v856, 2
      %vm858 = vcmp.gt.s32.totalorder 0, %v857
      %v859 = vsel %vm858, 0, %v857
      %v860 = vsub.s32 32, %v859
      %v861 = vshll.u32 %v852, %v859
      %v862 = vshrl.u32 %v844, %v860
      %v863 = vor.u32 %v861, %v862
      %v864 = vsub.s32 4294967266, %v859
      %v865 = vadd.s32 %v864, 127
      %v866 = vshll.u32 %v865, 23
      %v867 = vor.u32 4788187, %v866
      %v868 = vand.u32 2147483647, %v867
      %v870 = vcvt.s32.f32 %v863
      %v871 = vmul.f32 %v870, %v868
      %v872 = vxor.u32 %v871, 2147483648
      %v873 = vsel %vm790, %v872, %v871
      %v874 = vsub.s32 4, %v850
      %v875 = vsel %vm790, %v874, %v850
      %v876 = vsel %vm789, %v780, %v873
      %v877 = vsel %vm789, 0, %v875
      %v878 = vcosq.f32.pop %v876
      %v879 = vsinq.f32.pop %v876
      %vm880 = vweird.f32 %v780
      %v881 = vand.u32 %v877, 3
      %vm882 = vcmp.lt.s32.totalorder %v881, 2
      %vm883 = vcmp.eq.s32.totalorder %v881, 0
      %v884 = vxor.u32 %v879, 2147483648
      %v885 = vsel %vm883, %v878, %v884
      %vm886 = vcmp.eq.s32.totalorder %v881, 2
      %v887 = vxor.u32 %v878, 2147483648
      %v888 = vsel %vm886, %v887, %v879
      %v889 = vsel %vm882, %v885, %v888
      %v890 = vsel %vm880, nan, %v889
      %v891 = vand.u32 2147483647, %v782
      %vm892 = vcmp.le.f32.partialorder %v891, 0.7853982
      %vm893 = vcmp.lt.s32.totalorder %v782, 0
      %v894 = vand.u32 %v782, 2139095040
      %v895 = vshrl.u32 %v894, 23
      %v896 = vsub.s32 %v895, 127
      %v897 = vand.u32 2147483647, %v782
      %v898 = vand.u32 %v897, 8388607
      %v899 = vor.u32 %v898, 8388608
      %v900 = vsub.s32 0, %v899
      %v901 = vadd.s32 %v896, 1
      %vm902 = vcmp.gt.s32.totalorder %v901, 0
      %v903 = vsel %vm902, %v901, 0
      %v904 = vshrl.u32 %v903, 5
      %v905 = vand.u32 %v903, 31
      %v906 = vsub.s32 32, %v905
      %v907 = vshrl.u32 683565275, %v906
      %v908 = vshll.u32 683565275, %v905
      %v909 = vshrl.u32 2475754826, %v906
      %v910 = vor.u32 %v908, %v909
      %v911 = vshll.u32 2475754826, %v905
      %v912 = vshrl.u32 2131351028, %v906
      %v913 = vor.u32 %v911, %v912
      %v914 = vshll.u32 2131351028, %v905
      %v915 = vshrl.u32 2102212464, %v906
      %v916 = vor.u32 %v914, %v915
      %v917 = vshll.u32 2102212464, %v905
      %v918 = vshrl.u32 920167782, %v906
      %v919 = vor.u32 %v917, %v918
      %v920 = vshll.u32 920167782, %v905
      %v921 = vshrl.u32 1326507024, %v906
      %v922 = vor.u32 %v920, %v921
      %vm923 = vcmp.lt.s32.totalorder %v904, 1
      %vm924 = vcmp.lt.s32.totalorder %v904, 2
      %vm925 = vcmp.lt.s32.totalorder %v904, 3
      %vm926 = vcmp.lt.s32.totalorder %v904, 4
      %v927 = vsel %vm923, %v907, %v910
      %v928 = vsel %vm926, %v916, 2102212464
      %v929 = vsel %vm925, %v913, %v928
      %v930 = vsel %vm924, %v927, %v929
      %v931 = vsel %vm923, %v910, %v913
      %v932 = vsel %vm926, %v919, 920167782
      %v933 = vsel %vm925, %v916, %v932
      %v934 = vsel %vm924, %v931, %v933
      %v935 = vsel %vm923, %v913, %v916
      %v936 = vsel %vm926, %v922, 1326507024
      %v937 = vsel %vm925, %v919, %v936
      %v938 = vsel %vm924, %v935, %v937
      %v939 = vshll.u32 %v899, 8
      %v940 = vmul.u32.u64.compose %v939, %v938
      %v941 = vextract.low.u32 %v940
      %v942 = vextract.high.u32 %v940
      %v943 = vmul.u32.u64.compose %v939, %v934
      %v944 = vextract.low.u32 %v943
      %v945 = vextract.high.u32 %v943
      %v946 = vmul.u32 %v939, %v930
      %v947 = vadd.s32 %v942, %v944
      %vm948 = vc.u32 %v942, %v944
      %v949 = vadd.s32 %v945, 1
      %v950 = vsel %vm948, %v949, %v945
      %v951 = vadd.s32 %v946, %v950
      %v952 = vadd.s32 %v951, 536870912
      %v953 = vshrl.u32 %v952, 30
      %v954 = vshll.u32 %v953, 30
      %v955 = vsub.s32 %v951, %v954
      %vm956 = vcmp.lt.s32.totalorder %v955, 0
      %v957 = vsub.s32 0, %v955
      %v958 = vsel %vm956, %v957, %v955
      %v959 = vclz %v958
      %v960 = vsub.s32 %v959, 2
      %vm961 = vcmp.gt.s32.totalorder 0, %v960
      %v962 = vsel %vm961, 0, %v960
      %v963 = vsub.s32 32, %v962
      %v964 = vshll.u32 %v955, %v962
      %v965 = vshrl.u32 %v947, %v963
      %v966 = vor.u32 %v964, %v965
      %v967 = vsub.s32 4294967266, %v962
      %v968 = vadd.s32 %v967, 127
      %v969 = vshll.u32 %v968, 23
      %v970 = vor.u32 4788187, %v969
      %v971 = vand.u32 2147483647, %v970
      %v973 = vcvt.s32.f32 %v966
      %v974 = vmul.f32 %v973, %v971
      %v975 = vxor.u32 %v974, 2147483648
      %v976 = vsel %vm893, %v975, %v974
      %v977 = vsub.s32 4, %v953
      %v978 = vsel %vm893, %v977, %v953
      %v979 = vsel %vm892, %v782, %v976
      %v980 = vsel %vm892, 0, %v978
      %v981 = vcosq.f32.pop %v979
      %v982 = vsinq.f32.pop %v979
      %vm983 = vweird.f32 %v782
      %v984 = vand.u32 %v980, 3
      %vm985 = vcmp.lt.s32.totalorder %v984, 2
      %vm986 = vcmp.eq.s32.totalorder %v984, 0
      %v987 = vxor.u32 %v982, 2147483648
      %v988 = vsel %vm986, %v981, %v987
      %vm989 = vcmp.eq.s32.totalorder %v984, 2
      %v990 = vxor.u32 %v981, 2147483648
      %v991 = vsel %vm989, %v990, %v982
      %v992 = vsel %vm985, %v988, %v991
      %v993 = vsel %vm983, nan, %v992
      %v994 = vand.u32 2147483647, %v784
      %vm995 = vcmp.le.f32.partialorder %v994, 0.7853982
      %vm996 = vcmp.lt.s32.totalorder %v784, 0
      %v997 = vand.u32 %v784, 2139095040
      %v998 = vshrl.u32 %v997, 23
      %v999 = vsub.s32 %v998, 127
      %v1000 = vand.u32 2147483647, %v784
      %v1001 = vand.u32 %v1000, 8388607
      %v1002 = vor.u32 %v1001, 8388608
      %v1003 = vsub.s32 0, %v1002
      %v1004 = vadd.s32 %v999, 1
      %vm1005 = vcmp.gt.s32.totalorder %v1004, 0
      %v1006 = vsel %vm1005, %v1004, 0
      %v1007 = vshrl.u32 %v1006, 5
      %v1008 = vand.u32 %v1006, 31
      %v1009 = vsub.s32 32, %v1008
      %v1010 = vshrl.u32 683565275, %v1009
      %v1011 = vshll.u32 683565275, %v1008
      %v1012 = vshrl.u32 2475754826, %v1009
      %v1013 = vor.u32 %v1011, %v1012
      %v1014 = vshll.u32 2475754826, %v1008
      %v1015 = vshrl.u32 2131351028, %v1009
      %v1016 = vor.u32 %v1014, %v1015
      %v1017 = vshll.u32 2131351028, %v1008
      %v1018 = vshrl.u32 2102212464, %v1009
      %v1019 = vor.u32 %v1017, %v1018
      %v1020 = vshll.u32 2102212464, %v1008
      %v1021 = vshrl.u32 920167782, %v1009
      %v1022 = vor.u32 %v1020, %v1021
      %v1023 = vshll.u32 920167782, %v1008
      %v1024 = vshrl.u32 1326507024, %v1009
      %v1025 = vor.u32 %v1023, %v1024
      %vm1026 = vcmp.lt.s32.totalorder %v1007, 1
      %vm1027 = vcmp.lt.s32.totalorder %v1007, 2
      %vm1028 = vcmp.lt.s32.totalorder %v1007, 3
      %vm1029 = vcmp.lt.s32.totalorder %v1007, 4
      %v1030 = vsel %vm1026, %v1010, %v1013
      %v1031 = vsel %vm1029, %v1019, 2102212464
      %v1032 = vsel %vm1028, %v1016, %v1031
      %v1033 = vsel %vm1027, %v1030, %v1032
      %v1034 = vsel %vm1026, %v1013, %v1016
      %v1035 = vsel %vm1029, %v1022, 920167782
      %v1036 = vsel %vm1028, %v1019, %v1035
      %v1037 = vsel %vm1027, %v1034, %v1036
      %v1038 = vsel %vm1026, %v1016, %v1019
      %v1039 = vsel %vm1029, %v1025, 1326507024
      %v1040 = vsel %vm1028, %v1022, %v1039
      %v1041 = vsel %vm1027, %v1038, %v1040
      %v1042 = vshll.u32 %v1002, 8
      %v1043 = vmul.u32.u64.compose %v1042, %v1041
      %v1044 = vextract.low.u32 %v1043
      %v1045 = vextract.high.u32 %v1043
      %v1046 = vmul.u32.u64.compose %v1042, %v1037
      %v1047 = vextract.low.u32 %v1046
      %v1048 = vextract.high.u32 %v1046
      %v1049 = vmul.u32 %v1042, %v1033
      %v1050 = vadd.s32 %v1045, %v1047
      %vm1051 = vc.u32 %v1045, %v1047
      %v1052 = vadd.s32 %v1048, 1
      %v1053 = vsel %vm1051, %v1052, %v1048
      %v1054 = vadd.s32 %v1049, %v1053
      %v1055 = vadd.s32 %v1054, 536870912
      %v1056 = vshrl.u32 %v1055, 30
      %v1057 = vshll.u32 %v1056, 30
      %v1058 = vsub.s32 %v1054, %v1057
      %vm1059 = vcmp.lt.s32.totalorder %v1058, 0
      %v1060 = vsub.s32 0, %v1058
      %v1061 = vsel %vm1059, %v1060, %v1058
      %v1062 = vclz %v1061
      %v1063 = vsub.s32 %v1062, 2
      %vm1064 = vcmp.gt.s32.totalorder 0, %v1063
      %v1065 = vsel %vm1064, 0, %v1063
      %v1066 = vsub.s32 32, %v1065
      %v1067 = vshll.u32 %v1058, %v1065
      %v1068 = vshrl.u32 %v1050, %v1066
      %v1069 = vor.u32 %v1067, %v1068
      %v1070 = vsub.s32 4294967266, %v1065
      %v1071 = vadd.s32 %v1070, 127
      %v1072 = vshll.u32 %v1071, 23
      %v1073 = vor.u32 4788187, %v1072
      %v1074 = vand.u32 2147483647, %v1073
      %v1076 = vcvt.s32.f32 %v1069
      %v1077 = vmul.f32 %v1076, %v1074
      %v1078 = vxor.u32 %v1077, 2147483648
      %v1079 = vsel %vm996, %v1078, %v1077
      %v1080 = vsub.s32 4, %v1056
      %v1081 = vsel %vm996, %v1080, %v1056
      %v1082 = vsel %vm995, %v784, %v1079
      %v1083 = vsel %vm995, 0, %v1081
      %v1084 = vcosq.f32.pop %v1082
      %v1085 = vsinq.f32.pop %v1082
      %vm1086 = vweird.f32 %v784
      %v1087 = vand.u32 %v1083, 3
      %vm1088 = vcmp.lt.s32.totalorder %v1087, 2
      %vm1089 = vcmp.eq.s32.totalorder %v1087, 0
      %v1090 = vxor.u32 %v1085, 2147483648
      %v1091 = vsel %vm1089, %v1084, %v1090
      %vm1092 = vcmp.eq.s32.totalorder %v1087, 2
      %v1093 = vxor.u32 %v1084, 2147483648
      %v1094 = vsel %vm1092, %v1093, %v1085
      %v1095 = vsel %vm1088, %v1091, %v1094
      %v1096 = vsel %vm1086, nan, %v1095
      %v1097 = vand.u32 2147483647, %v786
      %vm1098 = vcmp.le.f32.partialorder %v1097, 0.7853982
      %vm1099 = vcmp.lt.s32.totalorder %v786, 0
      %v1100 = vand.u32 %v786, 2139095040
      %v1101 = vshrl.u32 %v1100, 23
      %v1102 = vsub.s32 %v1101, 127
      %v1103 = vand.u32 2147483647, %v786
      %v1104 = vand.u32 %v1103, 8388607
      %v1105 = vor.u32 %v1104, 8388608
      %v1106 = vsub.s32 0, %v1105
      %v1107 = vadd.s32 %v1102, 1
      %vm1108 = vcmp.gt.s32.totalorder %v1107, 0
      %v1109 = vsel %vm1108, %v1107, 0
      %v1110 = vshrl.u32 %v1109, 5
      %v1111 = vand.u32 %v1109, 31
      %v1112 = vsub.s32 32, %v1111
      %v1113 = vshrl.u32 683565275, %v1112
      %v1114 = vshll.u32 683565275, %v1111
      %v1115 = vshrl.u32 2475754826, %v1112
      %v1116 = vor.u32 %v1114, %v1115
      %v1117 = vshll.u32 2475754826, %v1111
      %v1118 = vshrl.u32 2131351028, %v1112
      %v1119 = vor.u32 %v1117, %v1118
      %v1120 = vshll.u32 2131351028, %v1111
      %v1121 = vshrl.u32 2102212464, %v1112
      %v1122 = vor.u32 %v1120, %v1121
      %v1123 = vshll.u32 2102212464, %v1111
      %v1124 = vshrl.u32 920167782, %v1112
      %v1125 = vor.u32 %v1123, %v1124
      %v1126 = vshll.u32 920167782, %v1111
      %v1127 = vshrl.u32 1326507024, %v1112
      %v1128 = vor.u32 %v1126, %v1127
      %vm1129 = vcmp.lt.s32.totalorder %v1110, 1
      %vm1130 = vcmp.lt.s32.totalorder %v1110, 2
      %vm1131 = vcmp.lt.s32.totalorder %v1110, 3
      %vm1132 = vcmp.lt.s32.totalorder %v1110, 4
      %v1133 = vsel %vm1129, %v1113, %v1116
      %v1134 = vsel %vm1132, %v1122, 2102212464
      %v1135 = vsel %vm1131, %v1119, %v1134
      %v1136 = vsel %vm1130, %v1133, %v1135
      %v1137 = vsel %vm1129, %v1116, %v1119
      %v1138 = vsel %vm1132, %v1125, 920167782
      %v1139 = vsel %vm1131, %v1122, %v1138
      %v1140 = vsel %vm1130, %v1137, %v1139
      %v1141 = vsel %vm1129, %v1119, %v1122
      %v1142 = vsel %vm1132, %v1128, 1326507024
      %v1143 = vsel %vm1131, %v1125, %v1142
      %v1144 = vsel %vm1130, %v1141, %v1143
      %v1145 = vshll.u32 %v1105, 8
      %v1146 = vmul.u32.u64.compose %v1145, %v1144
      %v1147 = vextract.low.u32 %v1146
      %v1148 = vextract.high.u32 %v1146
      %v1149 = vmul.u32.u64.compose %v1145, %v1140
      %v1150 = vextract.low.u32 %v1149
      %v1151 = vextract.high.u32 %v1149
      %v1152 = vmul.u32 %v1145, %v1136
      %v1153 = vadd.s32 %v1148, %v1150
      %vm1154 = vc.u32 %v1148, %v1150
      %v1155 = vadd.s32 %v1151, 1
      %v1156 = vsel %vm1154, %v1155, %v1151
      %v1157 = vadd.s32 %v1152, %v1156
      %v1158 = vadd.s32 %v1157, 536870912
      %v1159 = vshrl.u32 %v1158, 30
      %v1160 = vshll.u32 %v1159, 30
      %v1161 = vsub.s32 %v1157, %v1160
      %vm1162 = vcmp.lt.s32.totalorder %v1161, 0
      %v1163 = vsub.s32 0, %v1161
      %v1164 = vsel %vm1162, %v1163, %v1161
      %v1165 = vclz %v1164
      %v1166 = vsub.s32 %v1165, 2
      %vm1167 = vcmp.gt.s32.totalorder 0, %v1166
      %v1168 = vsel %vm1167, 0, %v1166
      %v1169 = vsub.s32 32, %v1168
      %v1170 = vshll.u32 %v1161, %v1168
      %v1171 = vshrl.u32 %v1153, %v1169
      %v1172 = vor.u32 %v1170, %v1171
      %v1173 = vsub.s32 4294967266, %v1168
      %v1174 = vadd.s32 %v1173, 127
      %v1175 = vshll.u32 %v1174, 23
      %v1176 = vor.u32 4788187, %v1175
      %v1177 = vand.u32 2147483647, %v1176
      %v1179 = vcvt.s32.f32 %v1172
      %v1180 = vmul.f32 %v1179, %v1177
      %v1181 = vxor.u32 %v1180, 2147483648
      %v1182 = vsel %vm1099, %v1181, %v1180
      %v1183 = vsub.s32 4, %v1159
      %v1184 = vsel %vm1099, %v1183, %v1159
      %v1185 = vsel %vm1098, %v786, %v1182
      %v1186 = vsel %vm1098, 0, %v1184
      %v1187 = vcosq.f32.pop %v1185
      %v1188 = vsinq.f32.pop %v1185
      %vm1189 = vweird.f32 %v786
      %v1190 = vand.u32 %v1186, 3
      %vm1191 = vcmp.lt.s32.totalorder %v1190, 2
      %vm1192 = vcmp.eq.s32.totalorder %v1190, 0
      %v1193 = vxor.u32 %v1188, 2147483648
      %v1194 = vsel %vm1192, %v1187, %v1193
      %vm1195 = vcmp.eq.s32.totalorder %v1190, 2
      %v1196 = vxor.u32 %v1187, 2147483648
      %v1197 = vsel %vm1195, %v1196, %v1188
      %v1198 = vsel %vm1191, %v1194, %v1197
      %v1199 = vsel %vm1189, nan, %v1198
      %v1200 = vmul.f32 %v636, %v890
      %v1201 = vmul.f32 %v638, %v993
      %v1202 = vmul.f32 %v640, %v1096
      %v1203 = vmul.f32 %v642, %v1199
      %1204 = vst [vmem:[%s474] sm:$0xff] %v1200
      %1205 = vst.msk [vmem:[%s474 + $0x8] sm:$0xff] %vm518, %v1201
      %1206 = vst [vmem:[%s474 + $0x10] sm:$0xff] %v1202
      %1207 = vst.msk [vmem:[%s474 + $0x18] sm:$0xff] %vm518, %v1203
      %v1208 = vand.u32 2147483647, %v780
      %vm1209 = vcmp.le.f32.partialorder %v1208, 0.7853982
      %vm1210 = vcmp.lt.s32.totalorder %v780, 0
      %v1211 = vand.u32 %v780, 2139095040
      %v1212 = vshrl.u32 %v1211, 23
      %v1213 = vsub.s32 %v1212, 127
      %v1214 = vand.u32 2147483647, %v780
      %v1215 = vand.u32 %v1214, 8388607
      %v1216 = vor.u32 %v1215, 8388608
      %v1217 = vsub.s32 0, %v1216
      %v1218 = vadd.s32 %v1213, 1
      %vm1219 = vcmp.gt.s32.totalorder %v1218, 0
      %v1220 = vsel %vm1219, %v1218, 0
      %v1221 = vshrl.u32 %v1220, 5
      %v1222 = vand.u32 %v1220, 31
      %v1223 = vsub.s32 32, %v1222
      %v1224 = vshrl.u32 683565275, %v1223
      %v1225 = vshll.u32 683565275, %v1222
      %v1226 = vshrl.u32 2475754826, %v1223
      %v1227 = vor.u32 %v1225, %v1226
      %v1228 = vshll.u32 2475754826, %v1222
      %v1229 = vshrl.u32 2131351028, %v1223
      %v1230 = vor.u32 %v1228, %v1229
      %v1231 = vshll.u32 2131351028, %v1222
      %v1232 = vshrl.u32 2102212464, %v1223
      %v1233 = vor.u32 %v1231, %v1232
      %v1234 = vshll.u32 2102212464, %v1222
      %v1235 = vshrl.u32 920167782, %v1223
      %v1236 = vor.u32 %v1234, %v1235
      %v1237 = vshll.u32 920167782, %v1222
      %v1238 = vshrl.u32 1326507024, %v1223
      %v1239 = vor.u32 %v1237, %v1238
      %vm1240 = vcmp.lt.s32.totalorder %v1221, 1
      %vm1241 = vcmp.lt.s32.totalorder %v1221, 2
      %vm1242 = vcmp.lt.s32.totalorder %v1221, 3
      %vm1243 = vcmp.lt.s32.totalorder %v1221, 4
      %v1244 = vsel %vm1240, %v1224, %v1227
      %v1245 = vsel %vm1243, %v1233, 2102212464
      %v1246 = vsel %vm1242, %v1230, %v1245
      %v1247 = vsel %vm1241, %v1244, %v1246
      %v1248 = vsel %vm1240, %v1227, %v1230
      %v1249 = vsel %vm1243, %v1236, 920167782
      %v1250 = vsel %vm1242, %v1233, %v1249
      %v1251 = vsel %vm1241, %v1248, %v1250
      %v1252 = vsel %vm1240, %v1230, %v1233
      %v1253 = vsel %vm1243, %v1239, 1326507024
      %v1254 = vsel %vm1242, %v1236, %v1253
      %v1255 = vsel %vm1241, %v1252, %v1254
      %v1256 = vshll.u32 %v1216, 8
      %v1257 = vmul.u32.u64.compose %v1256, %v1255
      %v1258 = vextract.low.u32 %v1257
      %v1259 = vextract.high.u32 %v1257
      %v1260 = vmul.u32.u64.compose %v1256, %v1251
      %v1261 = vextract.low.u32 %v1260
      %v1262 = vextract.high.u32 %v1260
      %v1263 = vmul.u32 %v1256, %v1247
      %v1264 = vadd.s32 %v1259, %v1261
      %vm1265 = vc.u32 %v1259, %v1261
      %v1266 = vadd.s32 %v1262, 1
      %v1267 = vsel %vm1265, %v1266, %v1262
      %v1268 = vadd.s32 %v1263, %v1267
      %v1269 = vadd.s32 %v1268, 536870912
      %v1270 = vshrl.u32 %v1269, 30
      %v1271 = vshll.u32 %v1270, 30
      %v1272 = vsub.s32 %v1268, %v1271
      %vm1273 = vcmp.lt.s32.totalorder %v1272, 0
      %v1274 = vsub.s32 0, %v1272
      %v1275 = vsel %vm1273, %v1274, %v1272
      %v1276 = vclz %v1275
      %v1277 = vsub.s32 %v1276, 2
      %vm1278 = vcmp.gt.s32.totalorder 0, %v1277
      %v1279 = vsel %vm1278, 0, %v1277
      %v1280 = vsub.s32 32, %v1279
      %v1281 = vshll.u32 %v1272, %v1279
      %v1282 = vshrl.u32 %v1264, %v1280
      %v1283 = vor.u32 %v1281, %v1282
      %v1284 = vsub.s32 4294967266, %v1279
      %v1285 = vadd.s32 %v1284, 127
      %v1286 = vshll.u32 %v1285, 23
      %v1287 = vor.u32 4788187, %v1286
      %v1288 = vand.u32 2147483647, %v1287
      %v1290 = vcvt.s32.f32 %v1283
      %v1291 = vmul.f32 %v1290, %v1288
      %v1292 = vxor.u32 %v1291, 2147483648
      %v1293 = vsel %vm1210, %v1292, %v1291
      %v1294 = vsub.s32 4, %v1270
      %v1295 = vsel %vm1210, %v1294, %v1270
      %v1296 = vsel %vm1209, %v780, %v1293
      %v1297 = vsel %vm1209, 0, %v1295
      %v1298 = vcosq.f32.pop %v1296
      %v1299 = vsinq.f32.pop %v1296
      %vm1300 = vweird.f32 %v780
      %v1301 = vadd.s32 %v1297, 3
      %v1302 = vand.u32 %v1301, 3
      %vm1303 = vcmp.lt.s32.totalorder %v1302, 2
      %vm1304 = vcmp.eq.s32.totalorder %v1302, 0
      %v1305 = vxor.u32 %v1299, 2147483648
      %v1306 = vsel %vm1304, %v1298, %v1305
      %vm1307 = vcmp.eq.s32.totalorder %v1302, 2
      %v1308 = vxor.u32 %v1298, 2147483648
      %v1309 = vsel %vm1307, %v1308, %v1299
      %v1310 = vsel %vm1303, %v1306, %v1309
      %v1311 = vsel %vm1300, nan, %v1310
      %v1312 = vand.u32 2147483647, %v782
      %vm1313 = vcmp.le.f32.partialorder %v1312, 0.7853982
      %vm1314 = vcmp.lt.s32.totalorder %v782, 0
      %v1315 = vand.u32 %v782, 2139095040
      %v1316 = vshrl.u32 %v1315, 23
      %v1317 = vsub.s32 %v1316, 127
      %v1318 = vand.u32 2147483647, %v782
      %v1319 = vand.u32 %v1318, 8388607
      %v1320 = vor.u32 %v1319, 8388608
      %v1321 = vsub.s32 0, %v1320
      %v1322 = vadd.s32 %v1317, 1
      %vm1323 = vcmp.gt.s32.totalorder %v1322, 0
      %v1324 = vsel %vm1323, %v1322, 0
      %v1325 = vshrl.u32 %v1324, 5
      %v1326 = vand.u32 %v1324, 31
      %v1327 = vsub.s32 32, %v1326
      %v1328 = vshrl.u32 683565275, %v1327
      %v1329 = vshll.u32 683565275, %v1326
      %v1330 = vshrl.u32 2475754826, %v1327
      %v1331 = vor.u32 %v1329, %v1330
      %v1332 = vshll.u32 2475754826, %v1326
      %v1333 = vshrl.u32 2131351028, %v1327
      %v1334 = vor.u32 %v1332, %v1333
      %v1335 = vshll.u32 2131351028, %v1326
      %v1336 = vshrl.u32 2102212464, %v1327
      %v1337 = vor.u32 %v1335, %v1336
      %v1338 = vshll.u32 2102212464, %v1326
      %v1339 = vshrl.u32 920167782, %v1327
      %v1340 = vor.u32 %v1338, %v1339
      %v1341 = vshll.u32 920167782, %v1326
      %v1342 = vshrl.u32 1326507024, %v1327
      %v1343 = vor.u32 %v1341, %v1342
      %vm1344 = vcmp.lt.s32.totalorder %v1325, 1
      %vm1345 = vcmp.lt.s32.totalorder %v1325, 2
      %vm1346 = vcmp.lt.s32.totalorder %v1325, 3
      %vm1347 = vcmp.lt.s32.totalorder %v1325, 4
      %v1348 = vsel %vm1344, %v1328, %v1331
      %v1349 = vsel %vm1347, %v1337, 2102212464
      %v1350 = vsel %vm1346, %v1334, %v1349
      %v1351 = vsel %vm1345, %v1348, %v1350
      %v1352 = vsel %vm1344, %v1331, %v1334
      %v1353 = vsel %vm1347, %v1340, 920167782
      %v1354 = vsel %vm1346, %v1337, %v1353
      %v1355 = vsel %vm1345, %v1352, %v1354
      %v1356 = vsel %vm1344, %v1334, %v1337
      %v1357 = vsel %vm1347, %v1343, 1326507024
      %v1358 = vsel %vm1346, %v1340, %v1357
      %v1359 = vsel %vm1345, %v1356, %v1358
      %v1360 = vshll.u32 %v1320, 8
      %v1361 = vmul.u32.u64.compose %v1360, %v1359
      %v1362 = vextract.low.u32 %v1361
      %v1363 = vextract.high.u32 %v1361
      %v1364 = vmul.u32.u64.compose %v1360, %v1355
      %v1365 = vextract.low.u32 %v1364
      %v1366 = vextract.high.u32 %v1364
      %v1367 = vmul.u32 %v1360, %v1351
      %v1368 = vadd.s32 %v1363, %v1365
      %vm1369 = vc.u32 %v1363, %v1365
      %v1370 = vadd.s32 %v1366, 1
      %v1371 = vsel %vm1369, %v1370, %v1366
      %v1372 = vadd.s32 %v1367, %v1371
      %v1373 = vadd.s32 %v1372, 536870912
      %v1374 = vshrl.u32 %v1373, 30
      %v1375 = vshll.u32 %v1374, 30
      %v1376 = vsub.s32 %v1372, %v1375
      %vm1377 = vcmp.lt.s32.totalorder %v1376, 0
      %v1378 = vsub.s32 0, %v1376
      %v1379 = vsel %vm1377, %v1378, %v1376
      %v1380 = vclz %v1379
      %v1381 = vsub.s32 %v1380, 2
      %vm1382 = vcmp.gt.s32.totalorder 0, %v1381
      %v1383 = vsel %vm1382, 0, %v1381
      %v1384 = vsub.s32 32, %v1383
      %v1385 = vshll.u32 %v1376, %v1383
      %v1386 = vshrl.u32 %v1368, %v1384
      %v1387 = vor.u32 %v1385, %v1386
      %v1388 = vsub.s32 4294967266, %v1383
      %v1389 = vadd.s32 %v1388, 127
      %v1390 = vshll.u32 %v1389, 23
      %v1391 = vor.u32 4788187, %v1390
      %v1392 = vand.u32 2147483647, %v1391
      %v1394 = vcvt.s32.f32 %v1387
      %v1395 = vmul.f32 %v1394, %v1392
      %v1396 = vxor.u32 %v1395, 2147483648
      %v1397 = vsel %vm1314, %v1396, %v1395
      %v1398 = vsub.s32 4, %v1374
      %v1399 = vsel %vm1314, %v1398, %v1374
      %v1400 = vsel %vm1313, %v782, %v1397
      %v1401 = vsel %vm1313, 0, %v1399
      %v1402 = vcosq.f32.pop %v1400
      %v1403 = vsinq.f32.pop %v1400
      %vm1404 = vweird.f32 %v782
      %v1405 = vadd.s32 %v1401, 3
      %v1406 = vand.u32 %v1405, 3
      %vm1407 = vcmp.lt.s32.totalorder %v1406, 2
      %vm1408 = vcmp.eq.s32.totalorder %v1406, 0
      %v1409 = vxor.u32 %v1403, 2147483648
      %v1410 = vsel %vm1408, %v1402, %v1409
      %vm1411 = vcmp.eq.s32.totalorder %v1406, 2
      %v1412 = vxor.u32 %v1402, 2147483648
      %v1413 = vsel %vm1411, %v1412, %v1403
      %v1414 = vsel %vm1407, %v1410, %v1413
      %v1415 = vsel %vm1404, nan, %v1414
      %v1416 = vand.u32 2147483647, %v784
      %vm1417 = vcmp.le.f32.partialorder %v1416, 0.7853982
      %vm1418 = vcmp.lt.s32.totalorder %v784, 0
      %v1419 = vand.u32 %v784, 2139095040
      %v1420 = vshrl.u32 %v1419, 23
      %v1421 = vsub.s32 %v1420, 127
      %v1422 = vand.u32 2147483647, %v784
      %v1423 = vand.u32 %v1422, 8388607
      %v1424 = vor.u32 %v1423, 8388608
      %v1425 = vsub.s32 0, %v1424
      %v1426 = vadd.s32 %v1421, 1
      %vm1427 = vcmp.gt.s32.totalorder %v1426, 0
      %v1428 = vsel %vm1427, %v1426, 0
      %v1429 = vshrl.u32 %v1428, 5
      %v1430 = vand.u32 %v1428, 31
      %v1431 = vsub.s32 32, %v1430
      %v1432 = vshrl.u32 683565275, %v1431
      %v1433 = vshll.u32 683565275, %v1430
      %v1434 = vshrl.u32 2475754826, %v1431
      %v1435 = vor.u32 %v1433, %v1434
      %v1436 = vshll.u32 2475754826, %v1430
      %v1437 = vshrl.u32 2131351028, %v1431
      %v1438 = vor.u32 %v1436, %v1437
      %v1439 = vshll.u32 2131351028, %v1430
      %v1440 = vshrl.u32 2102212464, %v1431
      %v1441 = vor.u32 %v1439, %v1440
      %v1442 = vshll.u32 2102212464, %v1430
      %v1443 = vshrl.u32 920167782, %v1431
      %v1444 = vor.u32 %v1442, %v1443
      %v1445 = vshll.u32 920167782, %v1430
      %v1446 = vshrl.u32 1326507024, %v1431
      %v1447 = vor.u32 %v1445, %v1446
      %vm1448 = vcmp.lt.s32.totalorder %v1429, 1
      %vm1449 = vcmp.lt.s32.totalorder %v1429, 2
      %vm1450 = vcmp.lt.s32.totalorder %v1429, 3
      %vm1451 = vcmp.lt.s32.totalorder %v1429, 4
      %v1452 = vsel %vm1448, %v1432, %v1435
      %v1453 = vsel %vm1451, %v1441, 2102212464
      %v1454 = vsel %vm1450, %v1438, %v1453
      %v1455 = vsel %vm1449, %v1452, %v1454
      %v1456 = vsel %vm1448, %v1435, %v1438
      %v1457 = vsel %vm1451, %v1444, 920167782
      %v1458 = vsel %vm1450, %v1441, %v1457
      %v1459 = vsel %vm1449, %v1456, %v1458
      %v1460 = vsel %vm1448, %v1438, %v1441
      %v1461 = vsel %vm1451, %v1447, 1326507024
      %v1462 = vsel %vm1450, %v1444, %v1461
      %v1463 = vsel %vm1449, %v1460, %v1462
      %v1464 = vshll.u32 %v1424, 8
      %v1465 = vmul.u32.u64.compose %v1464, %v1463
      %v1466 = vextract.low.u32 %v1465
      %v1467 = vextract.high.u32 %v1465
      %v1468 = vmul.u32.u64.compose %v1464, %v1459
      %v1469 = vextract.low.u32 %v1468
      %v1470 = vextract.high.u32 %v1468
      %v1471 = vmul.u32 %v1464, %v1455
      %v1472 = vadd.s32 %v1467, %v1469
      %vm1473 = vc.u32 %v1467, %v1469
      %v1474 = vadd.s32 %v1470, 1
      %v1475 = vsel %vm1473, %v1474, %v1470
      %v1476 = vadd.s32 %v1471, %v1475
      %v1477 = vadd.s32 %v1476, 536870912
      %v1478 = vshrl.u32 %v1477, 30
      %v1479 = vshll.u32 %v1478, 30
      %v1480 = vsub.s32 %v1476, %v1479
      %vm1481 = vcmp.lt.s32.totalorder %v1480, 0
      %v1482 = vsub.s32 0, %v1480
      %v1483 = vsel %vm1481, %v1482, %v1480
      %v1484 = vclz %v1483
      %v1485 = vsub.s32 %v1484, 2
      %vm1486 = vcmp.gt.s32.totalorder 0, %v1485
      %v1487 = vsel %vm1486, 0, %v1485
      %v1488 = vsub.s32 32, %v1487
      %v1489 = vshll.u32 %v1480, %v1487
      %v1490 = vshrl.u32 %v1472, %v1488
      %v1491 = vor.u32 %v1489, %v1490
      %v1492 = vsub.s32 4294967266, %v1487
      %v1493 = vadd.s32 %v1492, 127
      %v1494 = vshll.u32 %v1493, 23
      %v1495 = vor.u32 4788187, %v1494
      %v1496 = vand.u32 2147483647, %v1495
      %v1498 = vcvt.s32.f32 %v1491
      %v1499 = vmul.f32 %v1498, %v1496
      %v1500 = vxor.u32 %v1499, 2147483648
      %v1501 = vsel %vm1418, %v1500, %v1499
      %v1502 = vsub.s32 4, %v1478
      %v1503 = vsel %vm1418, %v1502, %v1478
      %v1504 = vsel %vm1417, %v784, %v1501
      %v1505 = vsel %vm1417, 0, %v1503
      %v1506 = vcosq.f32.pop %v1504
      %v1507 = vsinq.f32.pop %v1504
      %vm1508 = vweird.f32 %v784
      %v1509 = vadd.s32 %v1505, 3
      %v1510 = vand.u32 %v1509, 3
      %vm1511 = vcmp.lt.s32.totalorder %v1510, 2
      %vm1512 = vcmp.eq.s32.totalorder %v1510, 0
      %v1513 = vxor.u32 %v1507, 2147483648
      %v1514 = vsel %vm1512, %v1506, %v1513
      %vm1515 = vcmp.eq.s32.totalorder %v1510, 2
      %v1516 = vxor.u32 %v1506, 2147483648
      %v1517 = vsel %vm1515, %v1516, %v1507
      %v1518 = vsel %vm1511, %v1514, %v1517
      %v1519 = vsel %vm1508, nan, %v1518
      %v1520 = vand.u32 2147483647, %v786
      %vm1521 = vcmp.le.f32.partialorder %v1520, 0.7853982
      %vm1522 = vcmp.lt.s32.totalorder %v786, 0
      %v1523 = vand.u32 %v786, 2139095040
      %v1524 = vshrl.u32 %v1523, 23
      %v1525 = vsub.s32 %v1524, 127
      %v1526 = vand.u32 2147483647, %v786
      %v1527 = vand.u32 %v1526, 8388607
      %v1528 = vor.u32 %v1527, 8388608
      %v1529 = vsub.s32 0, %v1528
      %v1530 = vadd.s32 %v1525, 1
      %vm1531 = vcmp.gt.s32.totalorder %v1530, 0
      %v1532 = vsel %vm1531, %v1530, 0
      %v1533 = vshrl.u32 %v1532, 5
      %v1534 = vand.u32 %v1532, 31
      %v1535 = vsub.s32 32, %v1534
      %v1536 = vshrl.u32 683565275, %v1535
      %v1537 = vshll.u32 683565275, %v1534
      %v1538 = vshrl.u32 2475754826, %v1535
      %v1539 = vor.u32 %v1537, %v1538
      %v1540 = vshll.u32 2475754826, %v1534
      %v1541 = vshrl.u32 2131351028, %v1535
      %v1542 = vor.u32 %v1540, %v1541
      %v1543 = vshll.u32 2131351028, %v1534
      %v1544 = vshrl.u32 2102212464, %v1535
      %v1545 = vor.u32 %v1543, %v1544
      %v1546 = vshll.u32 2102212464, %v1534
      %v1547 = vshrl.u32 920167782, %v1535
      %v1548 = vor.u32 %v1546, %v1547
      %v1549 = vshll.u32 920167782, %v1534
      %v1550 = vshrl.u32 1326507024, %v1535
      %v1551 = vor.u32 %v1549, %v1550
      %vm1552 = vcmp.lt.s32.totalorder %v1533, 1
      %vm1553 = vcmp.lt.s32.totalorder %v1533, 2
      %vm1554 = vcmp.lt.s32.totalorder %v1533, 3
      %vm1555 = vcmp.lt.s32.totalorder %v1533, 4
      %v1556 = vsel %vm1552, %v1536, %v1539
      %v1557 = vsel %vm1555, %v1545, 2102212464
      %v1558 = vsel %vm1554, %v1542, %v1557
      %v1559 = vsel %vm1553, %v1556, %v1558
      %v1560 = vsel %vm1552, %v1539, %v1542
      %v1561 = vsel %vm1555, %v1548, 920167782
      %v1562 = vsel %vm1554, %v1545, %v1561
      %v1563 = vsel %vm1553, %v1560, %v1562
      %v1564 = vsel %vm1552, %v1542, %v1545
      %v1565 = vsel %vm1555, %v1551, 1326507024
      %v1566 = vsel %vm1554, %v1548, %v1565
      %v1567 = vsel %vm1553, %v1564, %v1566
      %v1568 = vshll.u32 %v1528, 8
      %v1569 = vmul.u32.u64.compose %v1568, %v1567
      %v1570 = vextract.low.u32 %v1569
      %v1571 = vextract.high.u32 %v1569
      %v1572 = vmul.u32.u64.compose %v1568, %v1563
      %v1573 = vextract.low.u32 %v1572
      %v1574 = vextract.high.u32 %v1572
      %v1575 = vmul.u32 %v1568, %v1559
      %v1576 = vadd.s32 %v1571, %v1573
      %vm1577 = vc.u32 %v1571, %v1573
      %v1578 = vadd.s32 %v1574, 1
      %v1579 = vsel %vm1577, %v1578, %v1574
      %v1580 = vadd.s32 %v1575, %v1579
      %v1581 = vadd.s32 %v1580, 536870912
      %v1582 = vshrl.u32 %v1581, 30
      %v1583 = vshll.u32 %v1582, 30
      %v1584 = vsub.s32 %v1580, %v1583
      %vm1585 = vcmp.lt.s32.totalorder %v1584, 0
      %v1586 = vsub.s32 0, %v1584
      %v1587 = vsel %vm1585, %v1586, %v1584
      %v1588 = vclz %v1587
      %v1589 = vsub.s32 %v1588, 2
      %vm1590 = vcmp.gt.s32.totalorder 0, %v1589
      %v1591 = vsel %vm1590, 0, %v1589
      %v1592 = vsub.s32 32, %v1591
      %v1593 = vshll.u32 %v1584, %v1591
      %v1594 = vshrl.u32 %v1576, %v1592
      %v1595 = vor.u32 %v1593, %v1594
      %v1596 = vsub.s32 4294967266, %v1591
      %v1597 = vadd.s32 %v1596, 127
      %v1598 = vshll.u32 %v1597, 23
      %v1599 = vor.u32 4788187, %v1598
      %v1600 = vand.u32 2147483647, %v1599
      %v1602 = vcvt.s32.f32 %v1595
      %v1603 = vmul.f32 %v1602, %v1600
      %v1604 = vxor.u32 %v1603, 2147483648
      %v1605 = vsel %vm1522, %v1604, %v1603
      %v1606 = vsub.s32 4, %v1582
      %v1607 = vsel %vm1522, %v1606, %v1582
      %v1608 = vsel %vm1521, %v786, %v1605
      %v1609 = vsel %vm1521, 0, %v1607
      %v1610 = vcosq.f32.pop %v1608
      %v1611 = vsinq.f32.pop %v1608
      %vm1612 = vweird.f32 %v786
      %v1613 = vadd.s32 %v1609, 3
      %v1614 = vand.u32 %v1613, 3
      %vm1615 = vcmp.lt.s32.totalorder %v1614, 2
      %vm1616 = vcmp.eq.s32.totalorder %v1614, 0
      %v1617 = vxor.u32 %v1611, 2147483648
      %v1618 = vsel %vm1616, %v1610, %v1617
      %vm1619 = vcmp.eq.s32.totalorder %v1614, 2
      %v1620 = vxor.u32 %v1610, 2147483648
      %v1621 = vsel %vm1619, %v1620, %v1611
      %v1622 = vsel %vm1615, %v1618, %v1621
      %v1623 = vsel %vm1612, nan, %v1622
      %v1624 = vmul.f32 %v636, %v1311
      %v1625 = vmul.f32 %v638, %v1415
      %v1626 = vmul.f32 %v640, %v1519
      %v1627 = vmul.f32 %v642, %v1623
      %1628 = vst [vmem:[%s484] sm:$0xff] %v1624
      %1629 = vst.msk [vmem:[%s484 + $0x8] sm:$0xff] %vm518, %v1625
      %1630 = vst [vmem:[%s484 + $0x10] sm:$0xff] %v1626
      %1631 = vst.msk [vmem:[%s484 + $0x18] sm:$0xff] %vm518, %v1627
      %s1632 = smul.u32 2, %s28
      %p1633 = scmp.lt.s32.totalorder %s27, 1
      %s1634 = scalar_select %p1633, %s27, 1
      %p1635 = scmp.lt.s32.totalorder %s1632, 1
      %s1636 = scalar_select %p1635, %s1632, 1
      %s1637 = smul.addr %s1634, 4
      %s1638 = sadd.s32 %s1636, %s1637
      %s1639 = smul.addr %s1638, 8
      %s1640 = scalar_lea.vmem %s10, %s1639
      %s1641 = smul.u32 2, %s28
      %p1642 = scmp.lt.s32.totalorder %s27, 1
      %s1643 = scalar_select %p1642, %s27, 1
      %p1644 = scmp.lt.s32.totalorder %s1641, 1
      %s1645 = scalar_select %p1644, %s1641, 1
      %s1646 = smul.addr %s1643, 4
      %s1647 = sadd.s32 %s1645, %s1646
      %s1648 = smul.addr %s1647, 8
      %s1649 = scalar_lea.vmem %s11, %s1648
      // Predicated region
      $region61: #{mixer_forward.6} parent=59 // pred_check
        %p1650 = pneg %p279
      $region62: #{mixer_forward.6} parent=59 // pred_check_branch
        %1652 = sbr.rel (%p1650) target = $region64
      $region63: #{mixer_forward.6} parent=59 // pred_region
        %s1653 = smul.u32 2, %s28
      $region64: #{mixer_forward.6} parent=59 // pred_fallthru
        _
      // Predicated region
      $region65: #{mixer_forward.6} parent=59 // pred_check
        %p1654 = pneg %p307
      $region66: #{mixer_forward.6} parent=59 // pred_check_branch
        %1656 = sbr.rel (%p1654) target = $region68
      $region67: #{mixer_forward.6} parent=59 // pred_region
        %s1657 = smul.u32 2, %s28
      $region68: #{mixer_forward.6} parent=59 // pred_fallthru
        _
    $region60: #{mixer_forward.6} parent=5 // pred_fallthru
      _
    %p1658 = scmp.le.s32.totalorder 2, %s18
    // Predicated region
    $region69: #{mixer_forward.6} parent=5 // pred_check
      %p1659 = pneg %p1658
    $region70: #{mixer_forward.6} parent=5 // pred_check_branch
      %1661 = sbr.rel (%p1659) target = $region72
    $region71: #{mixer_forward.6} parent=5 // pred_region
      %s1662 = ssub.s32 %s18, 2
      // Predicated region
      $region73: #{mixer_forward.6} parent=71 // pred_check
        %p1663 = pneg %p285
      $region74: #{mixer_forward.6} parent=71 // pred_check_branch
        %1665 = sbr.rel (%p1663) target = $region76
      $region75: #{mixer_forward.6} parent=71 // pred_region
        %s1666 = smul.u32 2, %s30
        %p1667 = scmp.lt.s32.totalorder %s29, 1
        %s1668 = scalar_select %p1667, %s29, 1
        %p1669 = scmp.lt.s32.totalorder %s1666, 1
        %s1670 = scalar_select %p1669, %s1666, 1
        %s1671 = smul.addr %s1668, 4
        %s1672 = sadd.s32 %s1670, %s1671
        %s1673 = smul.addr %s1672, 8
        %s1674 = scalar_lea.vmem %s10, %s1673
      $region76: #{mixer_forward.6} parent=71 // pred_fallthru
        _
      // Predicated region
      $region77: #{mixer_forward.6} parent=71 // pred_check
        %p1675 = pneg %p313
      $region78: #{mixer_forward.6} parent=71 // pred_check_branch
        %1677 = sbr.rel (%p1675) target = $region80
      $region79: #{mixer_forward.6} parent=71 // pred_region
        %s1678 = smul.u32 2, %s30
        %p1679 = scmp.lt.s32.totalorder %s29, 1
        %s1680 = scalar_select %p1679, %s29, 1
        %p1681 = scmp.lt.s32.totalorder %s1678, 1
        %s1682 = scalar_select %p1681, %s1678, 1
        %s1683 = smul.addr %s1680, 4
        %s1684 = sadd.s32 %s1682, %s1683
        %s1685 = smul.addr %s1684, 8
        %s1686 = scalar_lea.vmem %s11, %s1685
      $region80: #{mixer_forward.6} parent=71 // pred_fallthru
        _
    $region72: #{mixer_forward.6} parent=5 // pred_fallthru
      _
  $region6: #{mixer_forward.6} parent=0 // loop_footer
    %s22 = sadd.s32 1, %s18
  $region7: #{mixer_forward.6} parent=0 // loop_footer_branch
    %17 = sbr.rel target = $region3
  $region8: #{mixer_forward.6} parent=0 // loop_exit
    _

// kernel: reverse.1
$region0: #{reverse.1}
  #allocation0 [shape = 's32[1]{0}', space=sflag, size = 0x4, scoped, tag = 'scoped memory for reverse.1']
  %s0 = inlined_call_operand.vmem [shape: f32[2,16,16,7], index: 0, kind: input, shape index: {}]
  %s1 = inlined_call_operand.vmem [shape: f32[2,16,16,7], index: 1, kind: output, shape index: {}]
  %s2 = scalar_lea.vmem %s0, 96
  %v3 = vld [vmem:[%s2] sm:$0xff]
  %4 = vst [vmem:[%s1] sm:$0xff] %v3
  %s5 = scalar_lea.vmem %s0, 208
  %v6 = vld [vmem:[%s5] sm:$0xff]
  %s7 = scalar_lea.vmem %s1, 112
  %8 = vst [vmem:[%s7] sm:$0xff] %v6
  %s9 = scalar_lea.vmem %s0, 80
  %v10 = vld [vmem:[%s9] sm:$0xff]
  %s11 = scalar_lea.vmem %s1, 16
  %12 = vst [vmem:[%s11] sm:$0xff] %v10
  %s13 = scalar_lea.vmem %s0, 192
  %v14 = vld [vmem:[%s13] sm:$0xff]
  %s15 = scalar_lea.vmem %s1, 128
  %16 = vst [vmem:[%s15] sm:$0xff] %v14
  %s17 = scalar_lea.vmem %s0, 64
  %v18 = vld [vmem:[%s17] sm:$0xff]
  %s19 = scalar_lea.vmem %s1, 32
  %20 = vst [vmem:[%s19] sm:$0xff] %v18
  %s21 = scalar_lea.vmem %s0, 176
  %v22 = vld [vmem:[%s21] sm:$0xff]
  %s23 = scalar_lea.vmem %s1, 144
  %24 = vst [vmem:[%s23] sm:$0xff] %v22
  %s25 = scalar_lea.vmem %s0, 48
  %v26 = vld [vmem:[%s25] sm:$0xff]
  %s27 = scalar_lea.vmem %s1, 48
  %28 = vst [vmem:[%s27] sm:$0xff] %v26
  %s29 = scalar_lea.vmem %s0, 160
  %v30 = vld [vmem:[%s29] sm:$0xff]
  %s31 = scalar_lea.vmem %s1, 160
  %32 = vst [vmem:[%s31] sm:$0xff] %v30
  %s33 = scalar_lea.vmem %s0, 32
  %v34 = vld [vmem:[%s33] sm:$0xff]
  %s35 = scalar_lea.vmem %s1, 64
  %36 = vst [vmem:[%s35] sm:$0xff] %v34
  %s37 = scalar_lea.vmem %s0, 144
  %v38 = vld [vmem:[%s37] sm:$0xff]
  %s39 = scalar_lea.vmem %s1, 176
  %40 = vst [vmem:[%s39] sm:$0xff] %v38
  %s41 = scalar_lea.vmem %s0, 16
  %v42 = vld [vmem:[%s41] sm:$0xff]
  %s43 = scalar_lea.vmem %s1, 80
  %44 = vst [vmem:[%s43] sm:$0xff] %v42
  %s45 = scalar_lea.vmem %s0, 128
  %v46 = vld [vmem:[%s45] sm:$0xff]
  %s47 = scalar_lea.vmem %s1, 192
  %48 = vst [vmem:[%s47] sm:$0xff] %v46
  %v49 = vld [vmem:[%s0] sm:$0xff]
  %s50 = scalar_lea.vmem %s1, 96
  %51 = vst [vmem:[%s50] sm:$0xff] %v49
  %s52 = scalar_lea.vmem %s0, 112
  %v53 = vld [vmem:[%s52] sm:$0xff]
  %s54 = scalar_lea.vmem %s1, 208
  %55 = vst [vmem:[%s54] sm:$0xff] %v53
  %s56 = scalar_lea.vmem %s0, 104
  %v57 = vld [vmem:[%s56] sm:$0xff]
  %s58 = scalar_lea.vmem %s1, 8
  %59 = vst [vmem:[%s58] sm:$0xff] %v57
  %s60 = scalar_lea.vmem %s0, 216
  %v61 = vld [vmem:[%s60] sm:$0xff]
  %s62 = scalar_lea.vmem %s1, 120
  %63 = vst [vmem:[%s62] sm:$0xff] %v61
  %s64 = scalar_lea.vmem %s0, 88
  %v65 = vld [vmem:[%s64] sm:$0xff]
  %s66 = scalar_lea.vmem %s1, 24
  %67 = vst [vmem:[%s66] sm:$0xff] %v65
  %s68 = scalar_lea.vmem %s0, 200
  %v69 = vld [vmem:[%s68] sm:$0xff]
  %s70 = scalar_lea.vmem %s1, 136
  %71 = vst [vmem:[%s70] sm:$0xff] %v69
  %s72 = scalar_lea.vmem %s0, 72
  %v73 = vld [vmem:[%s72] sm:$0xff]
  %s74 = scalar_lea.vmem %s1, 40
  %75 = vst [vmem:[%s74] sm:$0xff] %v73
  %s76 = scalar_lea.vmem %s0, 184
  %v77 = vld [vmem:[%s76] sm:$0xff]
  %s78 = scalar_lea.vmem %s1, 152
  %79 = vst [vmem:[%s78] sm:$0xff] %v77
  %s80 = scalar_lea.vmem %s0, 56
  %v81 = vld [vmem:[%s80] sm:$0xff]
  %s82 = scalar_lea.vmem %s1, 56
  %83 = vst [vmem:[%s82] sm:$0xff] %v81
  %s84 = scalar_lea.vmem %s0, 168
  %v85 = vld [vmem:[%s84] sm:$0xff]
  %s86 = scalar_lea.vmem %s1, 168
  %87 = vst [vmem:[%s86] sm:$0xff] %v85
  %s88 = scalar_lea.vmem %s0, 40
  %v89 = vld [vmem:[%s88] sm:$0xff]
  %s90 = scalar_lea.vmem %s1, 72
  %91 = vst [vmem:[%s90] sm:$0xff] %v89
  %s92 = scalar_lea.vmem %s0, 152
  %v93 = vld [vmem:[%s92] sm:$0xff]
  %s94 = scalar_lea.vmem %s1, 184
  %95 = vst [vmem:[%s94] sm:$0xff] %v93
  %s96 = scalar_lea.vmem %s0, 24
  %v97 = vld [vmem:[%s96] sm:$0xff]
  %s98 = scalar_lea.vmem %s1, 88
  %99 = vst [vmem:[%s98] sm:$0xff] %v97
  %s100 = scalar_lea.vmem %s0, 136
  %v101 = vld [vmem:[%s100] sm:$0xff]
  %s102 = scalar_lea.vmem %s1, 200
  %103 = vst [vmem:[%s102] sm:$0xff] %v101
  %s104 = scalar_lea.vmem %s0, 8
  %v105 = vld [vmem:[%s104] sm:$0xff]
  %s106 = scalar_lea.vmem %s1, 104
  %107 = vst [vmem:[%s106] sm:$0xff] %v105
  %s108 = scalar_lea.vmem %s0, 120
  %v109 = vld [vmem:[%s108] sm:$0xff]
  %s110 = scalar_lea.vmem %s1, 216
  %111 = vst [vmem:[%s110] sm:$0xff] %v109

// kernel: mixer_forward.7
$region0: #{mixer_forward.7}
  #allocation0 [shape = 'u32[]', space=smem, size = 0x4, offset = 0x4, fixed_abs, tag = 'smem constant byte address 0x4 - core index']
  #allocation1 [shape = 'u32[144,128]{1,0:T(1,128)}', space=vmem, size = 0x12000, scoped, tag = 'internal scratch']
  %s0 = inlined_call_operand.vmem [shape: bf16[2,16,256], index: 0, kind: input, shape index: {}]
  %s1 = inlined_call_operand.vmem [shape: f32[2,16,256], index: 1, kind: input, shape index: {}]
  %s2 = inlined_call_operand.vmem [shape: f32[2,16,256], index: 2, kind: input, shape index: {}]
  %s3 = inlined_call_operand.vmem [shape: bf16[16,16], index: 3, kind: input, shape index: {}]
  %s4 = inlined_call_operand.vmem [shape: bf16[16,16], index: 4, kind: input, shape index: {}]
  %s5 = inlined_call_operand.vmem [shape: f32[16,1], index: 5, kind: input, shape index: {}]
  %s6 = inlined_call_operand.vmem [shape: f32[2,16,256], index: 6, kind: output, shape index: {}]
  %s7 = sld [smem:[#allocation0]]
  $region57: #{mixer_forward.7} parent=0
    _
  %s9 = ssub.s32 1, %s7
  %s10 = scalar_select 0, %s9, %s7
  loop: start=0, step=1, limit=4
  $region2: #{mixer_forward.7} parent=0 // loop_pre_header
    _
  $region3: #{mixer_forward.7} parent=0 // loop_header
    %s12 = sphi 0, %s16
    %p13 = scmp.ge.s32.totalorder %s12, 4
    %s19 = sphi 0, %s31
    %s20 = sphi 0, %s27
    %s21 = sphi 0, %s19
    %s22 = sphi 0, %s20
    %s23 = sphi 0, %s21
    %s24 = sphi 0, %s22
    %s36 = sphi 0, %s38
    %s39 = sphi 0, %s36
    %s40 = sphi 0, %s39
    %s56 = sphi 0, %s40
    %s64 = sphi 0, %s66
    %s67 = sphi 0, %s64
    %s68 = sphi 0, %s67
    %s84 = sphi 0, %s68
    %s92 = sphi 0, %s94
    %s95 = sphi 0, %s92
    %s96 = sphi 0, %s95
    %s112 = sphi 0, %s96
    %s116 = sphi 0, %s116
    %s118 = sphi 0, %s116
    %s119 = sphi 0, %s118
    %s133 = sphi 0, %s119
    %s137 = sphi 0, %s137
    %s139 = sphi 0, %s137
    %s140 = sphi 0, %s139
    %s154 = sphi 0, %s140
    %s158 = sphi 0, %s158
    %s160 = sphi 0, %s158
    %s161 = sphi 0, %s160
    %s175 = sphi 0, %s161
    %s183 = sphi 0, %s185
    %s186 = sphi 0, %s183
    %s187 = sphi 0, %s186
    %s203 = sphi 0, %s187
  $region4: #{mixer_forward.7} parent=0 // loop_header_branch
    %15 = sbr.rel (%p13) target = $region8
  $region5: #{mixer_forward.7} parent=0 // loop_body
    %s17 = ssub.s32 %s12, 1
    %s18 = ssub.s32 %s12, 2
    %s25 = sadd.s32 1, %s20
    %p26 = scmp.ge.s32.totalorder %s25, 1
    %s27 = scalar_select %p26, 0, %s25
    %s28 = sadd.s32 1, %s19
    %s29 = scalar_select %p26, %s28, %s19
    %p30 = scmp.ge.s32.totalorder %s29, 2
    %s31 = scalar_select %p30, 0, %s29
    %s32 = ssub.s32 %s19, %s31
    %s33 = ssub.s32 %s20, %s27
    %s34 = sor.u32 %s32, %s33
    %p35 = scmp.eq.s32.totalorder %s34, 0
    %s37 = sadd.s32 %s36, 1
    %s38 = scalar_select %p35, %s36, %s37
    %p41 = pneg %p35
    %p42 = scmp.eq.s32.totalorder %s12, 1
    %p43 = por %p41, %p42
    %p44 = scmp.ne.s32.totalorder %s36, %s39
    %p45 = scmp.eq.s32.totalorder %s12, 0
    %p46 = por %p44, %p45
    %p47 = scmp.ne.s32.totalorder %s36, %s39
    %p48 = scmp.eq.s32.totalorder %s17, 1
    %p49 = por %p47, %p48
    %p50 = scmp.ne.s32.totalorder %s39, %s40
    %p51 = scmp.eq.s32.totalorder %s17, 0
    %p52 = por %p50, %p51
    %p53 = scmp.ne.s32.totalorder %s39, %s40
    %p54 = scmp.eq.s32.totalorder %s18, 1
    %p55 = por %p53, %p54
    %p57 = scmp.ne.s32.totalorder %s40, %s56
    %p58 = scmp.eq.s32.totalorder %s18, 0
    %p59 = por %p57, %p58
    %s60 = ssub.s32 %s19, %s31
    %s61 = ssub.s32 %s20, %s27
    %s62 = sor.u32 %s60, %s61
    %p63 = scmp.eq.s32.totalorder %s62, 0
    %s65 = sadd.s32 %s64, 1
    %s66 = scalar_select %p63, %s64, %s65
    %p69 = pneg %p63
    %p70 = scmp.eq.s32.totalorder %s12, 1
    %p71 = por %p69, %p70
    %p72 = scmp.ne.s32.totalorder %s64, %s67
    %p73 = scmp.eq.s32.totalorder %s12, 0
    %p74 = por %p72, %p73
    %p75 = scmp.ne.s32.totalorder %s64, %s67
    %p76 = scmp.eq.s32.totalorder %s17, 1
    %p77 = por %p75, %p76
    %p78 = scmp.ne.s32.totalorder %s67, %s68
    %p79 = scmp.eq.s32.totalorder %s17, 0
    %p80 = por %p78, %p79
    %p81 = scmp.ne.s32.totalorder %s67, %s68
    %p82 = scmp.eq.s32.totalorder %s18, 1
    %p83 = por %p81, %p82
    %p85 = scmp.ne.s32.totalorder %s68, %s84
    %p86 = scmp.eq.s32.totalorder %s18, 0
    %p87 = por %p85, %p86
    %s88 = ssub.s32 %s19, %s31
    %s89 = ssub.s32 %s20, %s27
    %s90 = sor.u32 %s88, %s89
    %p91 = scmp.eq.s32.totalorder %s90, 0
    %s93 = sadd.s32 %s92, 1
    %s94 = scalar_select %p91, %s92, %s93
    %p97 = pneg %p91
    %p98 = scmp.eq.s32.totalorder %s12, 1
    %p99 = por %p97, %p98
    %p100 = scmp.ne.s32.totalorder %s92, %s95
    %p101 = scmp.eq.s32.totalorder %s12, 0
    %p102 = por %p100, %p101
    %p103 = scmp.ne.s32.totalorder %s92, %s95
    %p104 = scmp.eq.s32.totalorder %s17, 1
    %p105 = por %p103, %p104
    %p106 = scmp.ne.s32.totalorder %s95, %s96
    %p107 = scmp.eq.s32.totalorder %s17, 0
    %p108 = por %p106, %p107
    %p109 = scmp.ne.s32.totalorder %s95, %s96
    %p110 = scmp.eq.s32.totalorder %s18, 1
    %p111 = por %p109, %p110
    %p113 = scmp.ne.s32.totalorder %s96, %s112
    %p114 = scmp.eq.s32.totalorder %s18, 0
    %p115 = por %p113, %p114
    %s117 = sadd.s32 %s116, 1
    %p120 = scmp.eq.s32.totalorder %s12, 1
    %p121 = scmp.ne.s32.totalorder %s116, %s118
    %p122 = scmp.eq.s32.totalorder %s12, 0
    %p123 = por %p121, %p122
    %p124 = scmp.ne.s32.totalorder %s116, %s118
    %p125 = scmp.eq.s32.totalorder %s17, 1
    %p126 = por %p124, %p125
    %p127 = scmp.ne.s32.totalorder %s118, %s119
    %p128 = scmp.eq.s32.totalorder %s17, 0
    %p129 = por %p127, %p128
    %p130 = scmp.ne.s32.totalorder %s118, %s119
    %p131 = scmp.eq.s32.totalorder %s18, 1
    %p132 = por %p130, %p131
    %p134 = scmp.ne.s32.totalorder %s119, %s133
    %p135 = scmp.eq.s32.totalorder %s18, 0
    %p136 = por %p134, %p135
    %s138 = sadd.s32 %s137, 1
    %p141 = scmp.eq.s32.totalorder %s12, 1
    %p142 = scmp.ne.s32.totalorder %s137, %s139
    %p143 = scmp.eq.s32.totalorder %s12, 0
    %p144 = por %p142, %p143
    %p145 = scmp.ne.s32.totalorder %s137, %s139
    %p146 = scmp.eq.s32.totalorder %s17, 1
    %p147 = por %p145, %p146
    %p148 = scmp.ne.s32.totalorder %s139, %s140
    %p149 = scmp.eq.s32.totalorder %s17, 0
    %p150 = por %p148, %p149
    %p151 = scmp.ne.s32.totalorder %s139, %s140
    %p152 = scmp.eq.s32.totalorder %s18, 1
    %p153 = por %p151, %p152
    %p155 = scmp.ne.s32.totalorder %s140, %s154
    %p156 = scmp.eq.s32.totalorder %s18, 0
    %p157 = por %p155, %p156
    %s159 = sadd.s32 %s158, 1
    %p162 = scmp.eq.s32.totalorder %s12, 1
    %p163 = scmp.ne.s32.totalorder %s158, %s160
    %p164 = scmp.eq.s32.totalorder %s12, 0
    %p165 = por %p163, %p164
    %p166 = scmp.ne.s32.totalorder %s158, %s160
    %p167 = scmp.eq.s32.totalorder %s17, 1
    %p168 = por %p166, %p167
    %p169 = scmp.ne.s32.totalorder %s160, %s161
    %p170 = scmp.eq.s32.totalorder %s17, 0
    %p171 = por %p169, %p170
    %p172 = scmp.ne.s32.totalorder %s160, %s161
    %p173 = scmp.eq.s32.totalorder %s18, 1
    %p174 = por %p172, %p173
    %p176 = scmp.ne.s32.totalorder %s161, %s175
    %p177 = scmp.eq.s32.totalorder %s18, 0
    %p178 = por %p176, %p177
    %s179 = ssub.s32 %s19, %s31
    %s180 = ssub.s32 %s20, %s27
    %s181 = sor.u32 %s179, %s180
    %p182 = scmp.eq.s32.totalorder %s181, 0
    %s184 = sadd.s32 %s183, 1
    %s185 = scalar_select %p182, %s183, %s184
    %p188 = pneg %p182
    %p189 = scmp.eq.s32.totalorder %s12, 1
    %p190 = por %p188, %p189
    %p191 = scmp.ne.s32.totalorder %s183, %s186
    %p192 = scmp.eq.s32.totalorder %s12, 0
    %p193 = por %p191, %p192
    %p194 = scmp.ne.s32.totalorder %s183, %s186
    %p195 = scmp.eq.s32.totalorder %s17, 1
    %p196 = por %p194, %p195
    %p197 = scmp.ne.s32.totalorder %s186, %s187
    %p198 = scmp.eq.s32.totalorder %s17, 0
    %p199 = por %p197, %p198
    %p200 = scmp.ne.s32.totalorder %s186, %s187
    %p201 = scmp.eq.s32.totalorder %s18, 1
    %p202 = por %p200, %p201
    %p204 = scmp.ne.s32.totalorder %s187, %s203
    %p205 = scmp.eq.s32.totalorder %s18, 0
    %p206 = por %p204, %p205
    %p207 = scmp.le.s32.totalorder 1, %s12
    %p208 = scmp.lt.s32.totalorder %s12, 3
    %p209 = pnand %p207, %p208
    %p210 = pneg %p209
    // Predicated region
    $region9: #{mixer_forward.7} parent=5 // pred_check
      _
    $region10: #{mixer_forward.7} parent=5 // pred_check_branch
      %212 = sbr.rel (%p209) target = $region12
    $region11: #{mixer_forward.7} parent=5 // pred_region
      %s213 = ssub.s32 %s12, 1
      // Predicated region
      $region13: #{mixer_forward.7} parent=11 // pred_check
        %p214 = pneg %p129
      $region14: #{mixer_forward.7} parent=11 // pred_check_branch
        %216 = sbr.rel (%p214) target = $region16
      $region15: #{mixer_forward.7} parent=11 // pred_region
        _
      $region16: #{mixer_forward.7} parent=11 // pred_fallthru
        _
      // Predicated region
      $region17: #{mixer_forward.7} parent=11 // pred_check
        %p217 = pneg %p150
      $region18: #{mixer_forward.7} parent=11 // pred_check_branch
        %219 = sbr.rel (%p217) target = $region20
      $region19: #{mixer_forward.7} parent=11 // pred_region
        _
      $region20: #{mixer_forward.7} parent=11 // pred_fallthru
        _
      // Predicated region
      $region21: #{mixer_forward.7} parent=11 // pred_check
        %p220 = pneg %p171
      $region22: #{mixer_forward.7} parent=11 // pred_check_branch
        %222 = sbr.rel (%p220) target = $region24
      $region23: #{mixer_forward.7} parent=11 // pred_region
        _
      $region24: #{mixer_forward.7} parent=11 // pred_fallthru
        _
    $region12: #{mixer_forward.7} parent=5 // pred_fallthru
      _
    %p223 = scmp.lt.s32.totalorder %s12, 2
    // Predicated region
    $region25: #{mixer_forward.7} parent=5 // pred_check
      %p224 = pneg %p223
    $region26: #{mixer_forward.7} parent=5 // pred_check_branch
      %226 = sbr.rel (%p224) target = $region28
    $region27: #{mixer_forward.7} parent=5 // pred_region
      // Predicated region
      $region29: #{mixer_forward.7} parent=27 // pred_check
        %p227 = pneg %p46
      $region30: #{mixer_forward.7} parent=27 // pred_check_branch
        %229 = sbr.rel (%p227) target = $region32
      $region31: #{mixer_forward.7} parent=27 // pred_region
        %s230 = smul.u32 2, %s20
        %p231 = scmp.lt.s32.totalorder %s19, 1
        %s232 = scalar_select %p231, %s19, 1
        %p233 = scmp.lt.s32.totalorder %s230, 1
        %s234 = scalar_select %p233, %s230, 1
        %s235 = smul.addr %s232, 4
        %s236 = sadd.s32 %s234, %s235
        %s237 = smul.addr %s236, 4
        %s238 = scalar_lea.vmem %s0, %s237
        %s239 = smul.u32 2, %s20
      $region32: #{mixer_forward.7} parent=27 // pred_fallthru
        _
      // Predicated region
      $region33: #{mixer_forward.7} parent=27 // pred_check
        %p240 = pneg %p74
      $region34: #{mixer_forward.7} parent=27 // pred_check_branch
        %242 = sbr.rel (%p240) target = $region36
      $region35: #{mixer_forward.7} parent=27 // pred_region
        %s243 = smul.u32 2, %s20
        %p244 = scmp.lt.s32.totalorder %s19, 1
        %s245 = scalar_select %p244, %s19, 1
        %p246 = scmp.lt.s32.totalorder %s243, 1
        %s247 = scalar_select %p246, %s243, 1
        %s248 = smul.addr %s245, 4
        %s249 = sadd.s32 %s247, %s248
        %s250 = smul.addr %s249, 8
        %s251 = scalar_lea.vmem %s1, %s250
        %s252 = smul.u32 2, %s20
      $region36: #{mixer_forward.7} parent=27 // pred_fallthru
        _
      // Predicated region
      $region37: #{mixer_forward.7} parent=27 // pred_check
        %p253 = pneg %p102
      $region38: #{mixer_forward.7} parent=27 // pred_check_branch
        %255 = sbr.rel (%p253) target = $region40
      $region39: #{mixer_forward.7} parent=27 // pred_region
        %s256 = smul.u32 2, %s20
        %p257 = scmp.lt.s32.totalorder %s19, 1
        %s258 = scalar_select %p257, %s19, 1
        %p259 = scmp.lt.s32.totalorder %s256, 1
        %s260 = scalar_select %p259, %s256, 1
        %s261 = smul.addr %s258, 4
        %s262 = sadd.s32 %s260, %s261
        %s263 = smul.addr %s262, 8
        %s264 = scalar_lea.vmem %s2, %s263
        %s265 = smul.u32 2, %s20
      $region40: #{mixer_forward.7} parent=27 // pred_fallthru
        _
    $region28: #{mixer_forward.7} parent=5 // pred_fallthru
      _
    %p266 = scmp.le.s32.totalorder 1, %s12
    %p267 = scmp.lt.s32.totalorder %s12, 3
    %p268 = pnand %p266, %p267
    %p269 = pneg %p268
    // Predicated region
    $region41: #{mixer_forward.7} parent=5 // pred_check
      _
    $region42: #{mixer_forward.7} parent=5 // pred_check_branch
      %271 = sbr.rel (%p268) target = $region44
    $region43: #{mixer_forward.7} parent=5 // pred_region
      %s272 = ssub.s32 %s12, 1
      %s273 = smul.u32 2, %s22
      %p274 = scmp.lt.s32.totalorder %s21, 1
      %s275 = scalar_select %p274, %s21, 1
      %p276 = scmp.lt.s32.totalorder %s273, 1
      %s277 = scalar_select %p276, %s273, 1
      %s278 = smul.addr %s275, 4
      %s279 = sadd.s32 %s277, %s278
      %s280 = smul.addr %s279, 4
      %s281 = scalar_lea.vmem %s0, %s280
      %p282 = pneg %p52
      %p283 = pneg %p49
      %s284 = smul.u32 2, %s22
      %p285 = scmp.lt.s32.totalorder %s21, 1
      %s286 = scalar_select %p285, %s21, 1
      %p287 = scmp.lt.s32.totalorder %s284, 1
      %s288 = scalar_select %p287, %s284, 1
      %s289 = smul.addr %s286, 4
      %s290 = sadd.s32 %s288, %s289
      %s291 = smul.addr %s290, 8
      %s292 = scalar_lea.vmem %s1, %s291
      %p293 = pneg %p80
      %p294 = pneg %p77
      %s295 = smul.u32 2, %s22
      %p296 = scmp.lt.s32.totalorder %s21, 1
      %s297 = scalar_select %p296, %s21, 1
      %p298 = scmp.lt.s32.totalorder %s295, 1
      %s299 = scalar_select %p298, %s295, 1
      %s300 = smul.addr %s297, 4
      %s301 = sadd.s32 %s299, %s300
      %s302 = smul.addr %s301, 8
      %s303 = scalar_lea.vmem %s2, %s302
      %p304 = pneg %p108
      %p305 = pneg %p105
      %p306 = pneg %p129
      %p307 = pneg %p126
      %p308 = pneg %p150
      %p309 = pneg %p147
      %p310 = pneg %p171
      %p311 = pneg %p168
      %p312 = pneg %p199
      %p313 = pneg %p196
      %s314 = smul.u32 2, %s22
      %p315 = scmp.lt.s32.totalorder %s21, 1
      %s316 = scalar_select %p315, %s21, 1
      %p317 = scmp.lt.s32.totalorder %s314, 1
      %s318 = scalar_select %p317, %s314, 1
      %s319 = smul.addr %s316, 4
      %s320 = sadd.s32 %s318, %s319
      %s321 = smul.addr %s320, 8
      %s322 = scalar_lea.vmem %s6, %s321
      %s323 = smul.u32 2, %s22
      %p324 = scmp.lt.s32.totalorder %s21, 1
      %s325 = scalar_select %p324, %s21, 1
      %p326 = scmp.lt.s32.totalorder %s323, 1
      %s327 = scalar_select %p326, %s323, 1
      %s328 = smul.addr %s325, 4
      %s329 = sadd.s32 %s327, %s328
      %s330 = smul.addr %s329, 4
      %s331 = scalar_lea.vmem %s0, %s330
      %s332 = smul.u32 2, %s22
      %s333 = smul.u32 2, %s22
      %p334 = scmp.lt.s32.totalorder %s21, 1
      %s335 = scalar_select %p334, %s21, 1
      %p336 = scmp.lt.s32.totalorder %s333, 1
      %s337 = scalar_select %p336, %s333, 1
      %s338 = smul.addr %s335, 4
      %s339 = sadd.s32 %s337, %s338
      %s340 = smul.addr %s339, 8
      %s341 = scalar_lea.vmem %s1, %s340
      %s342 = smul.u32 2, %s22
      %s343 = smul.u32 2, %s22
      %p344 = scmp.lt.s32.totalorder %s21, 1
      %s345 = scalar_select %p344, %s21, 1
      %p346 = scmp.lt.s32.totalorder %s343, 1
      %s347 = scalar_select %p346, %s343, 1
      %s348 = smul.addr %s345, 4
      %s349 = sadd.s32 %s347, %s348
      %s350 = smul.addr %s349, 8
      %s351 = scalar_lea.vmem %s2, %s350
      %s352 = smul.u32 2, %s22
      %s353 = smul.u32 2, %s22
      %p354 = scmp.lt.s32.totalorder %s21, 1
      %s355 = scalar_select %p354, %s21, 1
      %p356 = scmp.lt.s32.totalorder %s353, 1
      %s357 = scalar_select %p356, %s353, 1
      %s358 = smul.addr %s355, 4
      %s359 = sadd.s32 %s357, %s358
      %s360 = smul.addr %s359, 8
      %s361 = scalar_lea.vmem %s6, %s360
      %s362 = smul.u32 2, %s22
      %v364 = vld [vmem:[%s331] sm:$0xff]
      %v365 = vld [vmem:[%s331 + $0x8] sm:$0xff]
      %v366 = vld [vmem:[%s341] sm:$0xff]
      %v367 = vld [vmem:[%s341 + $0x8] sm:$0xff]
      %v368 = vld [vmem:[%s341 + $0x10] sm:$0xff]
      %v369 = vld [vmem:[%s341 + $0x18] sm:$0xff]
      %v370 = vpack.c.bf16 %v368, %v366
      %v371 = vpack.c.bf16 %v369, %v367
      %v372 = vld [vmem:[%s3] sm:$0xf]
      %v373 = vld [vmem:[%s3 + $0x4] sm:$0xf]
      %v374 = vld [vmem:[%s4] sm:$0xf]
      %v375 = vld [vmem:[%s4 + $0x4] sm:$0xf]
      %v378 = vunpack.c.l.b16 %v374
      %v379 = vunpack.c.l.b16 %v375
      %v380 = vpack.c.b16 %v379, %v378
      %vm381 = vcmask 130048
      %v383 = vsel %vm381, %v380, 0
      %385 = vmatprep.subr.bf16.mxu0 0
      %386 = vmatpush1.bf16.msra.mxu0 0
      %387 = vmatprep.subr.bf16.mxu0 0
      %388 = vmatpush1.bf16.msra.mxu0 0
      %389 = vmatprep.subr.bf16.mxu0 0
      %390 = vmatpush1.bf16.msra.mxu0 0
      %391 = vmatprep.subr.bf16.mxu0 0
      %392 = vmatpush1.bf16.msra.mxu0 0
      %393 = vmatprep.subr.bf16.mxu0 0
      %394 = vmatpush1.bf16.msra.mxu0 0
      %395 = vmatprep.subr.bf16.mxu0 0
      %396 = vmatpush1.bf16.msra.mxu0 0
      %397 = vmatprep.subr.bf16.mxu0 0
      %398 = vmatpush1.bf16.msra.mxu0 0
      %399 = vmatprep.subr.bf16.mxu0 %v371
      %400 = vmatpush1.bf16.msra.mxu0 %v370
      %401 = vmatprep.subr.bf16.mxu0 0
      %402 = vmatpush2.bf16.msra.mxu0 0
      %403 = vmatprep.subr.bf16.mxu0 0
      %404 = vmatpush2.bf16.msra.mxu0 0
      %405 = vmatprep.subr.bf16.mxu0 0
      %406 = vmatpush2.bf16.msra.mxu0 0
      %407 = vmatprep.subr.bf16.mxu0 0
      %408 = vmatpush2.bf16.msra.mxu0 0
      %409 = vmatprep.subr.bf16.mxu0 0
      %410 = vmatpush2.bf16.msra.mxu0 0
      %411 = vmatprep.subr.bf16.mxu0 0
      %412 = vmatpush2.bf16.msra.mxu0 0
      %413 = vmatprep.subr.bf16.mxu0 0
      %414 = vmatpush2.bf16.msra.mxu0 0
      %415 = vmatprep.subr.bf16.mxu0 0
      %416 = vmatpush2.bf16.msra.mxu0 0
      %417 = vmatprep.mubr.bf16.mxu0 0
      %418 = vmatmul.mubr.bf16.gmra.mxu0 %v383
      %v419 = vpop.f32.mrf.mxu0
      %v420 = vadd.f32 0.0, %v419
      %v421 = vpop.f32.mrf.mxu0
      %v422 = vadd.f32 0.0, %v421
      %v423 = vpop.f32.mrf.mxu0
      %v424 = vadd.f32 0.0, %v423
      %v425 = vpop.f32.mrf.mxu0
      %v426 = vadd.f32 0.0, %v425
      %427 = vdwg.mxu0
      %v430 = vunpack.c.l.b16 %v372
      %v431 = vunpack.c.l.b16 %v373
      %v432 = vpack.c.b16 %v431, %v430
      %v435 = vunpack.c.l.b16 %v364
      %v436 = vunpack.c.h.b16 %v364
      %v437 = vunpack.c.l.b16 %v365
      %v438 = vunpack.c.h.b16 %v365
      %v439 = vpack.c.b16 %v437, %v435
      %v440 = vpack.c.b16 %v438, %v436
      %v444 = vsel %vm381, %v432, 0
      %446 = vmatprep.subr.bf16.mxu0 0
      %447 = vmatpush1.bf16.msra.mxu0 0
      %448 = vmatprep.subr.bf16.mxu0 0
      %449 = vmatpush1.bf16.msra.mxu0 0
      %450 = vmatprep.subr.bf16.mxu0 0
      %451 = vmatpush1.bf16.msra.mxu0 0
      %452 = vmatprep.subr.bf16.mxu0 0
      %453 = vmatpush1.bf16.msra.mxu0 0
      %454 = vmatprep.subr.bf16.mxu0 0
      %455 = vmatpush1.bf16.msra.mxu0 0
      %456 = vmatprep.subr.bf16.mxu0 0
      %457 = vmatpush1.bf16.msra.mxu0 0
      %458 = vmatprep.subr.bf16.mxu0 0
      %459 = vmatpush1.bf16.msra.mxu0 0
      %460 = vmatprep.subr.bf16.mxu0 %v440
      %461 = vmatpush1.bf16.msra.mxu0 %v439
      %462 = vmatprep.subr.bf16.mxu0 0
      %463 = vmatpush2.bf16.msra.mxu0 0
      %464 = vmatprep.subr.bf16.mxu0 0
      %465 = vmatpush2.bf16.msra.mxu0 0
      %466 = vmatprep.subr.bf16.mxu0 0
      %467 = vmatpush2.bf16.msra.mxu0 0
      %468 = vmatprep.subr.bf16.mxu0 0
      %469 = vmatpush2.bf16.msra.mxu0 0
      %470 = vmatprep.subr.bf16.mxu0 0
      %471 = vmatpush2.bf16.msra.mxu0 0
      %472 = vmatprep.subr.bf16.mxu0 0
      %473 = vmatpush2.bf16.msra.mxu0 0
      %474 = vmatprep.subr.bf16.mxu0 0
      %475 = vmatpush2.bf16.msra.mxu0 0
      %476 = vmatprep.subr.bf16.mxu0 0
      %477 = vmatpush2.bf16.msra.mxu0 0
      %478 = vmatprep.mubr.bf16.mxu0 0
      %479 = vmatmul.mubr.bf16.gmra.mxu0 %v444
      %v480 = vpop.f32.mrf.mxu0
      %v481 = vadd.f32 %v420, %v480
      %v482 = vpop.f32.mrf.mxu0
      %v483 = vadd.f32 %v422, %v482
      %v484 = vpop.f32.mrf.mxu0
      %v485 = vadd.f32 %v424, %v484
      %v486 = vpop.f32.mrf.mxu0
      %v487 = vadd.f32 %v426, %v486
      %488 = vdwg.mxu0
      %v489 = vld [vmem:[%s5] sm:$0xff]
      %v490 = vld [vmem:[%s5 + $0x8] sm:$0xff]
      %492 = vset.pattern.permute.xlu0 0
      %493 = vperm.xlu0 %492, %v489
      %v494 = vpop.permute.xlu0 %493
      %497 = vset.pattern.permute.xlu0 0
      %498 = vperm.xlu0 %497, %v490
      %v499 = vpop.permute.xlu0 %498
      %v501 = vadd.f32 %v481, %v494
      %v502 = vadd.f32 %v483, %v494
      %v503 = vadd.f32 %v485, %v499
      %v504 = vadd.f32 %v487, %v499
      %v505 = vld [vmem:[%s351] sm:$0xff]
      %v506 = vld [vmem:[%s351 + $0x8] sm:$0xff]
      %v507 = vld [vmem:[%s351 + $0x10] sm:$0xff]
      %v508 = vld [vmem:[%s351 + $0x18] sm:$0xff]
      %v509 = vadd.f32 %v501, %v505
      %v510 = vadd.f32 %v502, %v506
      %v511 = vadd.f32 %v503, %v507
      %v512 = vadd.f32 %v504, %v508
      %513 = vst [vmem:[%s361] sm:$0xff] %v509
      %514 = vst [vmem:[%s361 + $0x8] sm:$0xff] %v510
      %515 = vst [vmem:[%s361 + $0x10] sm:$0xff] %v511
      %516 = vst [vmem:[%s361 + $0x18] sm:$0xff] %v512
      %s517 = smul.u32 2, %s22
      %p518 = scmp.lt.s32.totalorder %s21, 1
      %s519 = scalar_select %p518, %s21, 1
      %p520 = scmp.lt.s32.totalorder %s517, 1
      %s521 = scalar_select %p520, %s517, 1
      %s522 = smul.addr %s519, 4
      %s523 = sadd.s32 %s521, %s522
      %s524 = smul.addr %s523, 8
      %s525 = scalar_lea.vmem %s6, %s524
      // Predicated region
      $region45: #{mixer_forward.7} parent=43 // pred_check
        %p526 = pneg %p196
      $region46: #{mixer_forward.7} parent=43 // pred_check_branch
        %528 = sbr.rel (%p526) target = $region48
      $region47: #{mixer_forward.7} parent=43 // pred_region
        %s529 = smul.u32 2, %s22
      $region48: #{mixer_forward.7} parent=43 // pred_fallthru
        _
    $region44: #{mixer_forward.7} parent=5 // pred_fallthru
      _
    %p530 = scmp.le.s32.totalorder 2, %s12
    // Predicated region
    $region49: #{mixer_forward.7} parent=5 // pred_check
      %p531 = pneg %p530
    $region50: #{mixer_forward.7} parent=5 // pred_check_branch
      %533 = sbr.rel (%p531) target = $region52
    $region51: #{mixer_forward.7} parent=5 // pred_region
      %s534 = ssub.s32 %s12, 2
      // Predicated region
      $region53: #{mixer_forward.7} parent=51 // pred_check
        %p535 = pneg %p202
      $region54: #{mixer_forward.7} parent=51 // pred_check_branch
        %537 = sbr.rel (%p535) target = $region56
      $region55: #{mixer_forward.7} parent=51 // pred_region
        %s538 = smul.u32 2, %s24
        %p539 = scmp.lt.s32.totalorder %s23, 1
        %s540 = scalar_select %p539, %s23, 1
        %p541 = scmp.lt.s32.totalorder %s538, 1
        %s542 = scalar_select %p541, %s538, 1
        %s543 = smul.addr %s540, 4
        %s544 = sadd.s32 %s542, %s543
        %s545 = smul.addr %s544, 8
        %s546 = scalar_lea.vmem %s6, %s545
      $region56: #{mixer_forward.7} parent=51 // pred_fallthru
        _
    $region52: #{mixer_forward.7} parent=5 // pred_fallthru
      _
  $region6: #{mixer_forward.7} parent=0 // loop_footer
    %s16 = sadd.s32 1, %s12
  $region7: #{mixer_forward.7} parent=0 // loop_footer_branch
    %11 = sbr.rel target = $region3
  $region8: #{mixer_forward.7} parent=0 // loop_exit
    _

// kernel: mixer_forward.4
$region0: #{mixer_forward.4}
  #allocation0 [shape = 'u32[]', space=smem, size = 0x4, offset = 0x4, fixed_abs, tag = 'smem constant byte address 0x4 - core index']
  #allocation1 [shape = 'u32[144,128]{1,0:T(1,128)}', space=vmem, size = 0x12000, scoped, tag = 'internal scratch']
  %s0 = inlined_call_operand.vmem [shape: f32[2,16,16,16], index: 0, kind: input, shape index: {}]
  %s1 = inlined_call_operand.vmem [shape: bf16[8,8], index: 1, kind: input, shape index: {}]
  %s2 = inlined_call_operand.vmem [shape: bf16[8,8], index: 2, kind: input, shape index: {}]
  %s3 = inlined_call_operand.vmem [shape: bf16[8,8], index: 3, kind: input, shape index: {}]
  %s4 = inlined_call_operand.vmem [shape: f32[2,8,8,8], index: 4, kind: output, shape index: {}]
  %s5 = sld [smem:[#allocation0]]
  $region49: #{mixer_forward.4} parent=0
    _
  %s7 = ssub.s32 1, %s5
  %s8 = scalar_select 0, %s7, %s5
  loop: start=0, step=1, limit=4
  $region2: #{mixer_forward.4} parent=0 // loop_pre_header
    _
  $region3: #{mixer_forward.4} parent=0 // loop_header
    %s10 = sphi 0, %s14
    %p11 = scmp.ge.s32.totalorder %s10, 4
    %s20 = sphi 0, %s22
    %s23 = sphi 0, %s20
    %s24 = sphi 0, %s23
    %s40 = sphi 0, %s24
    %s44 = sphi 0, %s44
    %s46 = sphi 0, %s44
    %s47 = sphi 0, %s46
    %s61 = sphi 0, %s47
    %s65 = sphi 0, %s65
    %s67 = sphi 0, %s65
    %s68 = sphi 0, %s67
    %s82 = sphi 0, %s68
    %s86 = sphi 0, %s86
    %s88 = sphi 0, %s86
    %s89 = sphi 0, %s88
    %s103 = sphi 0, %s89
    %s109 = sphi 0, %s111
    %s112 = sphi 0, %s109
    %s113 = sphi 0, %s112
    %s129 = sphi 0, %s113
  $region4: #{mixer_forward.4} parent=0 // loop_header_branch
    %13 = sbr.rel (%p11) target = $region8
  $region5: #{mixer_forward.4} parent=0 // loop_body
    %s15 = ssub.s32 %s10, 1
    %s16 = ssub.s32 %s10, 2
    %s17 = sadd.s32 %s10, 1
    %s18 = ssub.s32 %s10, %s17
    %p19 = scmp.eq.s32.totalorder %s18, 0
    %s21 = sadd.s32 %s20, 1
    %s22 = scalar_select %p19, %s20, %s21
    %p25 = pneg %p19
    %p26 = scmp.eq.s32.totalorder %s10, 1
    %p27 = por %p25, %p26
    %p28 = scmp.ne.s32.totalorder %s20, %s23
    %p29 = scmp.eq.s32.totalorder %s10, 0
    %p30 = por %p28, %p29
    %p31 = scmp.ne.s32.totalorder %s20, %s23
    %p32 = scmp.eq.s32.totalorder %s15, 1
    %p33 = por %p31, %p32
    %p34 = scmp.ne.s32.totalorder %s23, %s24
    %p35 = scmp.eq.s32.totalorder %s15, 0
    %p36 = por %p34, %p35
    %p37 = scmp.ne.s32.totalorder %s23, %s24
    %p38 = scmp.eq.s32.totalorder %s16, 1
    %p39 = por %p37, %p38
    %p41 = scmp.ne.s32.totalorder %s24, %s40
    %p42 = scmp.eq.s32.totalorder %s16, 0
    %p43 = por %p41, %p42
    %s45 = sadd.s32 %s44, 1
    %p48 = scmp.eq.s32.totalorder %s10, 1
    %p49 = scmp.ne.s32.totalorder %s44, %s46
    %p50 = scmp.eq.s32.totalorder %s10, 0
    %p51 = por %p49, %p50
    %p52 = scmp.ne.s32.totalorder %s44, %s46
    %p53 = scmp.eq.s32.totalorder %s15, 1
    %p54 = por %p52, %p53
    %p55 = scmp.ne.s32.totalorder %s46, %s47
    %p56 = scmp.eq.s32.totalorder %s15, 0
    %p57 = por %p55, %p56
    %p58 = scmp.ne.s32.totalorder %s46, %s47
    %p59 = scmp.eq.s32.totalorder %s16, 1
    %p60 = por %p58, %p59
    %p62 = scmp.ne.s32.totalorder %s47, %s61
    %p63 = scmp.eq.s32.totalorder %s16, 0
    %p64 = por %p62, %p63
    %s66 = sadd.s32 %s65, 1
    %p69 = scmp.eq.s32.totalorder %s10, 1
    %p70 = scmp.ne.s32.totalorder %s65, %s67
    %p71 = scmp.eq.s32.totalorder %s10, 0
    %p72 = por %p70, %p71
    %p73 = scmp.ne.s32.totalorder %s65, %s67
    %p74 = scmp.eq.s32.totalorder %s15, 1
    %p75 = por %p73, %p74
    %p76 = scmp.ne.s32.totalorder %s67, %s68
    %p77 = scmp.eq.s32.totalorder %s15, 0
    %p78 = por %p76, %p77
    %p79 = scmp.ne.s32.totalorder %s67, %s68
    %p80 = scmp.eq.s32.totalorder %s16, 1
    %p81 = por %p79, %p80
    %p83 = scmp.ne.s32.totalorder %s68, %s82
    %p84 = scmp.eq.s32.totalorder %s16, 0
    %p85 = por %p83, %p84
    %s87 = sadd.s32 %s86, 1
    %p90 = scmp.eq.s32.totalorder %s10, 1
    %p91 = scmp.ne.s32.totalorder %s86, %s88
    %p92 = scmp.eq.s32.totalorder %s10, 0
    %p93 = por %p91, %p92
    %p94 = scmp.ne.s32.totalorder %s86, %s88
    %p95 = scmp.eq.s32.totalorder %s15, 1
    %p96 = por %p94, %p95
    %p97 = scmp.ne.s32.totalorder %s88, %s89
    %p98 = scmp.eq.s32.totalorder %s15, 0
    %p99 = por %p97, %p98
    %p100 = scmp.ne.s32.totalorder %s88, %s89
    %p101 = scmp.eq.s32.totalorder %s16, 1
    %p102 = por %p100, %p101
    %p104 = scmp.ne.s32.totalorder %s89, %s103
    %p105 = scmp.eq.s32.totalorder %s16, 0
    %p106 = por %p104, %p105
    %s107 = ssub.s32 %s10, %s17
    %p108 = scmp.eq.s32.totalorder %s107, 0
    %s110 = sadd.s32 %s109, 1
    %s111 = scalar_select %p108, %s109, %s110
    %p114 = pneg %p108
    %p115 = scmp.eq.s32.totalorder %s10, 1
    %p116 = por %p114, %p115
    %p117 = scmp.ne.s32.totalorder %s109, %s112
    %p118 = scmp.eq.s32.totalorder %s10, 0
    %p119 = por %p117, %p118
    %p120 = scmp.ne.s32.totalorder %s109, %s112
    %p121 = scmp.eq.s32.totalorder %s15, 1
    %p122 = por %p120, %p121
    %p123 = scmp.ne.s32.totalorder %s112, %s113
    %p124 = scmp.eq.s32.totalorder %s15, 0
    %p125 = por %p123, %p124
    %p126 = scmp.ne.s32.totalorder %s112, %s113
    %p127 = scmp.eq.s32.totalorder %s16, 1
    %p128 = por %p126, %p127
    %p130 = scmp.ne.s32.totalorder %s113, %s129
    %p131 = scmp.eq.s32.totalorder %s16, 0
    %p132 = por %p130, %p131
    %p133 = scmp.le.s32.totalorder 1, %s10
    %p134 = scmp.lt.s32.totalorder %s10, 3
    %p135 = pnand %p133, %p134
    %p136 = pneg %p135
    // Predicated region
    $region9: #{mixer_forward.4} parent=5 // pred_check
      _
    $region10: #{mixer_forward.4} parent=5 // pred_check_branch
      %138 = sbr.rel (%p135) target = $region12
    $region11: #{mixer_forward.4} parent=5 // pred_region
      %s139 = ssub.s32 %s10, 1
      // Predicated region
      $region13: #{mixer_forward.4} parent=11 // pred_check
        %p140 = pneg %p57
      $region14: #{mixer_forward.4} parent=11 // pred_check_branch
        %142 = sbr.rel (%p140) target = $region16
      $region15: #{mixer_forward.4} parent=11 // pred_region
        _
      $region16: #{mixer_forward.4} parent=11 // pred_fallthru
        _
      // Predicated region
      $region17: #{mixer_forward.4} parent=11 // pred_check
        %p143 = pneg %p78
      $region18: #{mixer_forward.4} parent=11 // pred_check_branch
        %145 = sbr.rel (%p143) target = $region20
      $region19: #{mixer_forward.4} parent=11 // pred_region
        _
      $region20: #{mixer_forward.4} parent=11 // pred_fallthru
        _
      // Predicated region
      $region21: #{mixer_forward.4} parent=11 // pred_check
        %p146 = pneg %p99
      $region22: #{mixer_forward.4} parent=11 // pred_check_branch
        %148 = sbr.rel (%p146) target = $region24
      $region23: #{mixer_forward.4} parent=11 // pred_region
        _
      $region24: #{mixer_forward.4} parent=11 // pred_fallthru
        _
    $region12: #{mixer_forward.4} parent=5 // pred_fallthru
      _
    %p149 = scmp.lt.s32.totalorder %s10, 2
    // Predicated region
    $region25: #{mixer_forward.4} parent=5 // pred_check
      %p150 = pneg %p149
    $region26: #{mixer_forward.4} parent=5 // pred_check_branch
      %152 = sbr.rel (%p150) target = $region28
    $region27: #{mixer_forward.4} parent=5 // pred_region
      // Predicated region
      $region29: #{mixer_forward.4} parent=27 // pred_check
        %p153 = pneg %p30
      $region30: #{mixer_forward.4} parent=27 // pred_check_branch
        %155 = sbr.rel (%p153) target = $region32
      $region31: #{mixer_forward.4} parent=27 // pred_region
        %p156 = scmp.lt.s32.totalorder %s10, 1
        %s157 = scalar_select %p156, %s10, 1
        %s158 = smul.addr %s157, 32
        %s159 = smul.addr %s158, 8
        %s160 = scalar_lea.vmem %s0, %s159
      $region32: #{mixer_forward.4} parent=27 // pred_fallthru
        _
    $region28: #{mixer_forward.4} parent=5 // pred_fallthru
      _
    %p161 = scmp.le.s32.totalorder 1, %s10
    %p162 = scmp.lt.s32.totalorder %s10, 3
    %p163 = pnand %p161, %p162
    %p164 = pneg %p163
    // Predicated region
    $region33: #{mixer_forward.4} parent=5 // pred_check
      _
    $region34: #{mixer_forward.4} parent=5 // pred_check_branch
      %166 = sbr.rel (%p163) target = $region36
    $region35: #{mixer_forward.4} parent=5 // pred_region
      %s167 = ssub.s32 %s10, 1
      %p168 = scmp.lt.s32.totalorder %s15, 1
      %s169 = scalar_select %p168, %s15, 1
      %s170 = smul.addr %s169, 32
      %s171 = smul.addr %s170, 8
      %s172 = scalar_lea.vmem %s0, %s171
      %p173 = pneg %p36
      %p174 = pneg %p33
      %p175 = pneg %p57
      %p176 = pneg %p54
      %p177 = pneg %p78
      %p178 = pneg %p75
      %p179 = pneg %p99
      %p180 = pneg %p96
      %p181 = pneg %p125
      %p182 = pneg %p122
      %p183 = scmp.lt.s32.totalorder %s15, 1
      %s184 = scalar_select %p183, %s15, 1
      %s185 = smul.addr %s184, 8
      %s186 = smul.addr %s185, 8
      %s187 = scalar_lea.vmem %s4, %s186
      %p188 = scmp.lt.s32.totalorder %s15, 1
      %s189 = scalar_select %p188, %s15, 1
      %s190 = smul.addr %s189, 32
      %s191 = smul.addr %s190, 8
      %s192 = scalar_lea.vmem %s0, %s191
      %p193 = scmp.lt.s32.totalorder %s15, 1
      %s194 = scalar_select %p193, %s15, 1
      %s195 = smul.addr %s194, 8
      %s196 = smul.addr %s195, 8
      %s197 = scalar_lea.vmem %s4, %s196
      %v199 = vld [vmem:[%s192] sm:$0xff]
      %v200 = vld [vmem:[%s192 + $0x8] sm:$0xff]
      %v201 = vld [vmem:[%s192 + $0x10] sm:$0xff]
      %v202 = vld [vmem:[%s192 + $0x18] sm:$0xff]
      %v203 = vld [vmem:[%s192 + $0x20] sm:$0xff]
      %v204 = vld [vmem:[%s192 + $0x28] sm:$0xff]
      %v205 = vld [vmem:[%s192 + $0x30] sm:$0xff]
      %v206 = vld [vmem:[%s192 + $0x38] sm:$0xff]
      %v207 = vld [vmem:[%s192 + $0x40] sm:$0xff]
      %v208 = vld [vmem:[%s192 + $0x48] sm:$0xff]
      %v209 = vld [vmem:[%s192 + $0x50] sm:$0xff]
      %v210 = vld [vmem:[%s192 + $0x58] sm:$0xff]
      %v211 = vld [vmem:[%s192 + $0x60] sm:$0xff]
      %v212 = vld [vmem:[%s192 + $0x68] sm:$0xff]
      %v213 = vld [vmem:[%s192 + $0x70] sm:$0xff]
      %v214 = vld [vmem:[%s192 + $0x78] sm:$0xff]
      %v215 = vld [vmem:[%s192 + $0x80] sm:$0xff]
      %v216 = vld [vmem:[%s192 + $0x88] sm:$0xff]
      %v217 = vld [vmem:[%s192 + $0x90] sm:$0xff]
      %v218 = vld [vmem:[%s192 + $0x98] sm:$0xff]
      %v219 = vld [vmem:[%s192 + $0xa0] sm:$0xff]
      %v220 = vld [vmem:[%s192 + $0xa8] sm:$0xff]
      %v221 = vld [vmem:[%s192 + $0xb0] sm:$0xff]
      %v222 = vld [vmem:[%s192 + $0xb8] sm:$0xff]
      %v223 = vld [vmem:[%s192 + $0xc0] sm:$0xff]
      %v224 = vld [vmem:[%s192 + $0xc8] sm:$0xff]
      %v225 = vld [vmem:[%s192 + $0xd0] sm:$0xff]
      %v226 = vld [vmem:[%s192 + $0xd8] sm:$0xff]
      %v227 = vld [vmem:[%s192 + $0xe0] sm:$0xff]
      %v228 = vld [vmem:[%s192 + $0xe8] sm:$0xff]
      %v229 = vld [vmem:[%s192 + $0xf0] sm:$0xff]
      %v230 = vld [vmem:[%s192 + $0xf8] sm:$0xff]
      %vm231 = vcmask 130112
      %v232 = vsel %vm231, %v199, 0.0
      %v233 = vsel %vm231, %v201, 0.0
      %v234 = vadd.f32 %v232, %v233
      %v235 = vsel %vm231, %v200, 0.0
      %v236 = vsel %vm231, %v202, 0.0
      %v237 = vadd.f32 %v235, %v236
      %v238 = vsel %vm231, %v203, 0.0
      %v239 = vsel %vm231, %v205, 0.0
      %v240 = vadd.f32 %v238, %v239
      %v241 = vsel %vm231, %v204, 0.0
      %v242 = vsel %vm231, %v206, 0.0
      %v243 = vadd.f32 %v241, %v242
      %v244 = vsel %vm231, %v207, 0.0
      %v245 = vsel %vm231, %v209, 0.0
      %v246 = vadd.f32 %v244, %v245
      %v247 = vsel %vm231, %v208, 0.0
      %v248 = vsel %vm231, %v210, 0.0
      %v249 = vadd.f32 %v247, %v248
      %v250 = vsel %vm231, %v211, 0.0
      %v251 = vsel %vm231, %v213, 0.0
      %v252 = vadd.f32 %v250, %v251
      %v253 = vsel %vm231, %v212, 0.0
      %v254 = vsel %vm231, %v214, 0.0
      %v255 = vadd.f32 %v253, %v254
      %v256 = vsel %vm231, %v215, 0.0
      %v257 = vsel %vm231, %v217, 0.0
      %v258 = vadd.f32 %v256, %v257
      %v259 = vsel %vm231, %v216, 0.0
      %v260 = vsel %vm231, %v218, 0.0
      %v261 = vadd.f32 %v259, %v260
      %v262 = vsel %vm231, %v219, 0.0
      %v263 = vsel %vm231, %v221, 0.0
      %v264 = vadd.f32 %v262, %v263
      %v265 = vsel %vm231, %v220, 0.0
      %v266 = vsel %vm231, %v222, 0.0
      %v267 = vadd.f32 %v265, %v266
      %v268 = vsel %vm231, %v223, 0.0
      %v269 = vsel %vm231, %v225, 0.0
      %v270 = vadd.f32 %v268, %v269
      %v271 = vsel %vm231, %v224, 0.0
      %v272 = vsel %vm231, %v226, 0.0
      %v273 = vadd.f32 %v271, %v272
      %v274 = vsel %vm231, %v227, 0.0
      %v275 = vsel %vm231, %v229, 0.0
      %v276 = vadd.f32 %v274, %v275
      %v277 = vsel %vm231, %v228, 0.0
      %v278 = vsel %vm231, %v230, 0.0
      %v279 = vadd.f32 %v277, %v278
      %v280 = vrcp.pop 2.0
      %v281 = vmul.f32 %v234, %v280
      %v282 = vmul.f32 %v237, %v280
      %v283 = vmul.f32 %v240, %v280
      %v284 = vmul.f32 %v243, %v280
      %v285 = vmul.f32 %v246, %v280
      %v286 = vmul.f32 %v249, %v280
      %v287 = vmul.f32 %v252, %v280
      %v288 = vmul.f32 %v255, %v280
      %v289 = vmul.f32 %v258, %v280
      %v290 = vmul.f32 %v261, %v280
      %v291 = vmul.f32 %v264, %v280
      %v292 = vmul.f32 %v267, %v280
      %v293 = vmul.f32 %v270, %v280
      %v294 = vmul.f32 %v273, %v280
      %v295 = vmul.f32 %v276, %v280
      %v296 = vmul.f32 %v279, %v280
      %v313 = vcombine.high %v281, %v281
      %v315 = vunpack.c.l.s4 1983009808
      %v316 = vunpack.c.0.s8 %v315
      %v317 = vlaneseq
      %v318 = vshrl.u32 %v317, 7
      %v319 = vsub.s32 %v316, %v318
      %v320 = vrot.slane %v281, %v319
      %v322 = vunpack.c.l.s4 1983009808
      %v323 = vunpack.c.0.s8 %v322
      %v324 = vlaneseq
      %v325 = vshrl.u32 %v324, 7
      %v326 = vsub.s32 %v323, %v325
      %v327 = vrot.slane %v313, %v326
      %v328 = vcombine.high %v320, %v320
      %v329 = vcombine.high %v327, %v327
      %v330 = vcombine.high %v282, %v282
      %v332 = vunpack.c.l.s4 1983009808
      %v333 = vunpack.c.0.s8 %v332
      %v334 = vlaneseq
      %v335 = vshrl.u32 %v334, 7
      %v336 = vsub.s32 %v333, %v335
      %v337 = vrot.slane %v282, %v336
      %v339 = vunpack.c.l.s4 1983009808
      %v340 = vunpack.c.0.s8 %v339
      %v341 = vlaneseq
      %v342 = vshrl.u32 %v341, 7
      %v343 = vsub.s32 %v340, %v342
      %v344 = vrot.slane %v330, %v343
      %v345 = vcombine.high %v337, %v337
      %v346 = vcombine.high %v344, %v344
      %v347 = vcombine.high %v283, %v283
      %v349 = vunpack.c.l.s4 1983009808
      %v350 = vunpack.c.0.s8 %v349
      %v351 = vlaneseq
      %v352 = vshrl.u32 %v351, 7
      %v353 = vsub.s32 %v350, %v352
      %v354 = vrot.slane %v283, %v353
      %v356 = vunpack.c.l.s4 1983009808
      %v357 = vunpack.c.0.s8 %v356
      %v358 = vlaneseq
      %v359 = vshrl.u32 %v358, 7
      %v360 = vsub.s32 %v357, %v359
      %v361 = vrot.slane %v347, %v360
      %v362 = vcombine.high %v354, %v354
      %v363 = vcombine.high %v361, %v361
      %v364 = vcombine.high %v284, %v284
      %v366 = vunpack.c.l.s4 1983009808
      %v367 = vunpack.c.0.s8 %v366
      %v368 = vlaneseq
      %v369 = vshrl.u32 %v368, 7
      %v370 = vsub.s32 %v367, %v369
      %v371 = vrot.slane %v284, %v370
      %v373 = vunpack.c.l.s4 1983009808
      %v374 = vunpack.c.0.s8 %v373
      %v375 = vlaneseq
      %v376 = vshrl.u32 %v375, 7
      %v377 = vsub.s32 %v374, %v376
      %v378 = vrot.slane %v364, %v377
      %v379 = vcombine.high %v371, %v371
      %v380 = vcombine.high %v378, %v378
      %v381 = vcombine.high %v285, %v285
      %v383 = vunpack.c.l.s4 1983009808
      %v384 = vunpack.c.0.s8 %v383
      %v385 = vlaneseq
      %v386 = vshrl.u32 %v385, 7
      %v387 = vsub.s32 %v384, %v386
      %v388 = vrot.slane %v285, %v387
      %v390 = vunpack.c.l.s4 1983009808
      %v391 = vunpack.c.0.s8 %v390
      %v392 = vlaneseq
      %v393 = vshrl.u32 %v392, 7
      %v394 = vsub.s32 %v391, %v393
      %v395 = vrot.slane %v381, %v394
      %v396 = vcombine.high %v388, %v388
      %v397 = vcombine.high %v395, %v395
      %v398 = vcombine.high %v286, %v286
      %v400 = vunpack.c.l.s4 1983009808
      %v401 = vunpack.c.0.s8 %v400
      %v402 = vlaneseq
      %v403 = vshrl.u32 %v402, 7
      %v404 = vsub.s32 %v401, %v403
      %v405 = vrot.slane %v286, %v404
      %v407 = vunpack.c.l.s4 1983009808
      %v408 = vunpack.c.0.s8 %v407
      %v409 = vlaneseq
      %v410 = vshrl.u32 %v409, 7
      %v411 = vsub.s32 %v408, %v410
      %v412 = vrot.slane %v398, %v411
      %v413 = vcombine.high %v405, %v405
      %v414 = vcombine.high %v412, %v412
      %v415 = vcombine.high %v287, %v287
      %v417 = vunpack.c.l.s4 1983009808
      %v418 = vunpack.c.0.s8 %v417
      %v419 = vlaneseq
      %v420 = vshrl.u32 %v419, 7
      %v421 = vsub.s32 %v418, %v420
      %v422 = vrot.slane %v287, %v421
      %v424 = vunpack.c.l.s4 1983009808
      %v425 = vunpack.c.0.s8 %v424
      %v426 = vlaneseq
      %v427 = vshrl.u32 %v426, 7
      %v428 = vsub.s32 %v425, %v427
      %v429 = vrot.slane %v415, %v428
      %v430 = vcombine.high %v422, %v422
      %v431 = vcombine.high %v429, %v429
      %v432 = vcombine.high %v288, %v288
      %v434 = vunpack.c.l.s4 1983009808
      %v435 = vunpack.c.0.s8 %v434
      %v436 = vlaneseq
      %v437 = vshrl.u32 %v436, 7
      %v438 = vsub.s32 %v435, %v437
      %v439 = vrot.slane %v288, %v438
      %v441 = vunpack.c.l.s4 1983009808
      %v442 = vunpack.c.0.s8 %v441
      %v443 = vlaneseq
      %v444 = vshrl.u32 %v443, 7
      %v445 = vsub.s32 %v442, %v444
      %v446 = vrot.slane %v432, %v445
      %v447 = vcombine.high %v439, %v439
      %v448 = vcombine.high %v446, %v446
      %v449 = vcombine.high %v289, %v289
      %v451 = vunpack.c.l.s4 1983009808
      %v452 = vunpack.c.0.s8 %v451
      %v453 = vlaneseq
      %v454 = vshrl.u32 %v453, 7
      %v455 = vsub.s32 %v452, %v454
      %v456 = vrot.slane %v289, %v455
      %v458 = vunpack.c.l.s4 1983009808
      %v459 = vunpack.c.0.s8 %v458
      %v460 = vlaneseq
      %v461 = vshrl.u32 %v460, 7
      %v462 = vsub.s32 %v459, %v461
      %v463 = vrot.slane %v449, %v462
      %v464 = vcombine.high %v456, %v456
      %v465 = vcombine.high %v463, %v463
      %v466 = vcombine.high %v290, %v290
      %v468 = vunpack.c.l.s4 1983009808
      %v469 = vunpack.c.0.s8 %v468
      %v470 = vlaneseq
      %v471 = vshrl.u32 %v470, 7
      %v472 = vsub.s32 %v469, %v471
      %v473 = vrot.slane %v290, %v472
      %v475 = vunpack.c.l.s4 1983009808
      %v476 = vunpack.c.0.s8 %v475
      %v477 = vlaneseq
      %v478 = vshrl.u32 %v477, 7
      %v479 = vsub.s32 %v476, %v478
      %v480 = vrot.slane %v466, %v479
      %v481 = vcombine.high %v473, %v473
      %v482 = vcombine.high %v480, %v480
      %v483 = vcombine.high %v291, %v291
      %v485 = vunpack.c.l.s4 1983009808
      %v486 = vunpack.c.0.s8 %v485
      %v487 = vlaneseq
      %v488 = vshrl.u32 %v487, 7
      %v489 = vsub.s32 %v486, %v488
      %v490 = vrot.slane %v291, %v489
      %v492 = vunpack.c.l.s4 1983009808
      %v493 = vunpack.c.0.s8 %v492
      %v494 = vlaneseq
      %v495 = vshrl.u32 %v494, 7
      %v496 = vsub.s32 %v493, %v495
      %v497 = vrot.slane %v483, %v496
      %v498 = vcombine.high %v490, %v490
      %v499 = vcombine.high %v497, %v497
      %v500 = vcombine.high %v292, %v292
      %v502 = vunpack.c.l.s4 1983009808
      %v503 = vunpack.c.0.s8 %v502
      %v504 = vlaneseq
      %v505 = vshrl.u32 %v504, 7
      %v506 = vsub.s32 %v503, %v505
      %v507 = vrot.slane %v292, %v506
      %v509 = vunpack.c.l.s4 1983009808
      %v510 = vunpack.c.0.s8 %v509
      %v511 = vlaneseq
      %v512 = vshrl.u32 %v511, 7
      %v513 = vsub.s32 %v510, %v512
      %v514 = vrot.slane %v500, %v513
      %v515 = vcombine.high %v507, %v507
      %v516 = vcombine.high %v514, %v514
      %v517 = vcombine.high %v293, %v293
      %v519 = vunpack.c.l.s4 1983009808
      %v520 = vunpack.c.0.s8 %v519
      %v521 = vlaneseq
      %v522 = vshrl.u32 %v521, 7
      %v523 = vsub.s32 %v520, %v522
      %v524 = vrot.slane %v293, %v523
      %v526 = vunpack.c.l.s4 1983009808
      %v527 = vunpack.c.0.s8 %v526
      %v528 = vlaneseq
      %v529 = vshrl.u32 %v528, 7
      %v530 = vsub.s32 %v527, %v529
      %v531 = vrot.slane %v517, %v530
      %v532 = vcombine.high %v524, %v524
      %v533 = vcombine.high %v531, %v531
      %v534 = vcombine.high %v294, %v294
      %v536 = vunpack.c.l.s4 1983009808
      %v537 = vunpack.c.0.s8 %v536
      %v538 = vlaneseq
      %v539 = vshrl.u32 %v538, 7
      %v540 = vsub.s32 %v537, %v539
      %v541 = vrot.slane %v294, %v540
      %v543 = vunpack.c.l.s4 1983009808
      %v544 = vunpack.c.0.s8 %v543
      %v545 = vlaneseq
      %v546 = vshrl.u32 %v545, 7
      %v547 = vsub.s32 %v544, %v546
      %v548 = vrot.slane %v534, %v547
      %v549 = vcombine.high %v541, %v541
      %v550 = vcombine.high %v548, %v548
      %v551 = vcombine.high %v295, %v295
      %v553 = vunpack.c.l.s4 1983009808
      %v554 = vunpack.c.0.s8 %v553
      %v555 = vlaneseq
      %v556 = vshrl.u32 %v555, 7
      %v557 = vsub.s32 %v554, %v556
      %v558 = vrot.slane %v295, %v557
      %v560 = vunpack.c.l.s4 1983009808
      %v561 = vunpack.c.0.s8 %v560
      %v562 = vlaneseq
      %v563 = vshrl.u32 %v562, 7
      %v564 = vsub.s32 %v561, %v563
      %v565 = vrot.slane %v551, %v564
      %v566 = vcombine.high %v558, %v558
      %v567 = vcombine.high %v565, %v565
      %v568 = vcombine.high %v296, %v296
      %v570 = vunpack.c.l.s4 1983009808
      %v571 = vunpack.c.0.s8 %v570
      %v572 = vlaneseq
      %v573 = vshrl.u32 %v572, 7
      %v574 = vsub.s32 %v571, %v573
      %v575 = vrot.slane %v296, %v574
      %v577 = vunpack.c.l.s4 1983009808
      %v578 = vunpack.c.0.s8 %v577
      %v579 = vlaneseq
      %v580 = vshrl.u32 %v579, 7
      %v581 = vsub.s32 %v578, %v580
      %v582 = vrot.slane %v568, %v581
      %v583 = vcombine.high %v575, %v575
      %v584 = vcombine.high %v582, %v582
      %vm649 = vcmask 123968
      %v650 = vsel %vm649, %v320, 0.0
      %v651 = vrot.slane %v650, 4
      %v652 = vadd.f32 %v650, %v651
      %v653 = vrot.slane %v652, 2
      %v654 = vadd.f32 %v652, %v653
      %v655 = vrot.slane %v654, 1
      %v656 = vadd.f32 %v654, %v655
      %v657 = vsel %vm649, %v328, 0.0
      %v658 = vrot.slane %v657, 4
      %v659 = vadd.f32 %v657, %v658
      %v660 = vrot.slane %v659, 2
      %v661 = vadd.f32 %v659, %v660
      %v662 = vrot.slane %v661, 1
      %v663 = vadd.f32 %v661, %v662
      %v664 = vsel %vm649, %v327, 0.0
      %v665 = vrot.slane %v664, 4
      %v666 = vadd.f32 %v664, %v665
      %v667 = vrot.slane %v666, 2
      %v668 = vadd.f32 %v666, %v667
      %v669 = vrot.slane %v668, 1
      %v670 = vadd.f32 %v668, %v669
      %v671 = vsel %vm649, %v329, 0.0
      %v672 = vrot.slane %v671, 4
      %v673 = vadd.f32 %v671, %v672
      %v674 = vrot.slane %v673, 2
      %v675 = vadd.f32 %v673, %v674
      %v676 = vrot.slane %v675, 1
      %v677 = vadd.f32 %v675, %v676
      %v678 = vsel %vm649, %v337, 0.0
      %v679 = vrot.slane %v678, 4
      %v680 = vadd.f32 %v678, %v679
      %v681 = vrot.slane %v680, 2
      %v682 = vadd.f32 %v680, %v681
      %v683 = vrot.slane %v682, 1
      %v684 = vadd.f32 %v682, %v683
      %v685 = vsel %vm649, %v345, 0.0
      %v686 = vrot.slane %v685, 4
      %v687 = vadd.f32 %v685, %v686
      %v688 = vrot.slane %v687, 2
      %v689 = vadd.f32 %v687, %v688
      %v690 = vrot.slane %v689, 1
      %v691 = vadd.f32 %v689, %v690
      %v692 = vsel %vm649, %v344, 0.0
      %v693 = vrot.slane %v692, 4
      %v694 = vadd.f32 %v692, %v693
      %v695 = vrot.slane %v694, 2
      %v696 = vadd.f32 %v694, %v695
      %v697 = vrot.slane %v696, 1
      %v698 = vadd.f32 %v696, %v697
      %v699 = vsel %vm649, %v346, 0.0
      %v700 = vrot.slane %v699, 4
      %v701 = vadd.f32 %v699, %v700
      %v702 = vrot.slane %v701, 2
      %v703 = vadd.f32 %v701, %v702
      %v704 = vrot.slane %v703, 1
      %v705 = vadd.f32 %v703, %v704
      %v706 = vsel %vm649, %v354, 0.0
      %v707 = vrot.slane %v706, 4
      %v708 = vadd.f32 %v706, %v707
      %v709 = vrot.slane %v708, 2
      %v710 = vadd.f32 %v708, %v709
      %v711 = vrot.slane %v710, 1
      %v712 = vadd.f32 %v710, %v711
      %v713 = vsel %vm649, %v362, 0.0
      %v714 = vrot.slane %v713, 4
      %v715 = vadd.f32 %v713, %v714
      %v716 = vrot.slane %v715, 2
      %v717 = vadd.f32 %v715, %v716
      %v718 = vrot.slane %v717, 1
      %v719 = vadd.f32 %v717, %v718
      %v720 = vsel %vm649, %v361, 0.0
      %v721 = vrot.slane %v720, 4
      %v722 = vadd.f32 %v720, %v721
      %v723 = vrot.slane %v722, 2
      %v724 = vadd.f32 %v722, %v723
      %v725 = vrot.slane %v724, 1
      %v726 = vadd.f32 %v724, %v725
      %v727 = vsel %vm649, %v363, 0.0
      %v728 = vrot.slane %v727, 4
      %v729 = vadd.f32 %v727, %v728
      %v730 = vrot.slane %v729, 2
      %v731 = vadd.f32 %v729, %v730
      %v732 = vrot.slane %v731, 1
      %v733 = vadd.f32 %v731, %v732
      %v734 = vsel %vm649, %v371, 0.0
      %v735 = vrot.slane %v734, 4
      %v736 = vadd.f32 %v734, %v735
      %v737 = vrot.slane %v736, 2
      %v738 = vadd.f32 %v736, %v737
      %v739 = vrot.slane %v738, 1
      %v740 = vadd.f32 %v738, %v739
      %v741 = vsel %vm649, %v379, 0.0
      %v742 = vrot.slane %v741, 4
      %v743 = vadd.f32 %v741, %v742
      %v744 = vrot.slane %v743, 2
      %v745 = vadd.f32 %v743, %v744
      %v746 = vrot.slane %v745, 1
      %v747 = vadd.f32 %v745, %v746
      %v748 = vsel %vm649, %v378, 0.0
      %v749 = vrot.slane %v748, 4
      %v750 = vadd.f32 %v748, %v749
      %v751 = vrot.slane %v750, 2
      %v752 = vadd.f32 %v750, %v751
      %v753 = vrot.slane %v752, 1
      %v754 = vadd.f32 %v752, %v753
      %v755 = vsel %vm649, %v380, 0.0
      %v756 = vrot.slane %v755, 4
      %v757 = vadd.f32 %v755, %v756
      %v758 = vrot.slane %v757, 2
      %v759 = vadd.f32 %v757, %v758
      %v760 = vrot.slane %v759, 1
      %v761 = vadd.f32 %v759, %v760
      %v762 = vsel %vm649, %v388, 0.0
      %v763 = vrot.slane %v762, 4
      %v764 = vadd.f32 %v762, %v763
      %v765 = vrot.slane %v764, 2
      %v766 = vadd.f32 %v764, %v765
      %v767 = vrot.slane %v766, 1
      %v768 = vadd.f32 %v766, %v767
      %v769 = vsel %vm649, %v396, 0.0
      %v770 = vrot.slane %v769, 4
      %v771 = vadd.f32 %v769, %v770
      %v772 = vrot.slane %v771, 2
      %v773 = vadd.f32 %v771, %v772
      %v774 = vrot.slane %v773, 1
      %v775 = vadd.f32 %v773, %v774
      %v776 = vsel %vm649, %v395, 0.0
      %v777 = vrot.slane %v776, 4
      %v778 = vadd.f32 %v776, %v777
      %v779 = vrot.slane %v778, 2
      %v780 = vadd.f32 %v778, %v779
      %v781 = vrot.slane %v780, 1
      %v782 = vadd.f32 %v780, %v781
      %v783 = vsel %vm649, %v397, 0.0
      %v784 = vrot.slane %v783, 4
      %v785 = vadd.f32 %v783, %v784
      %v786 = vrot.slane %v785, 2
      %v787 = vadd.f32 %v785, %v786
      %v788 = vrot.slane %v787, 1
      %v789 = vadd.f32 %v787, %v788
      %v790 = vsel %vm649, %v405, 0.0
      %v791 = vrot.slane %v790, 4
      %v792 = vadd.f32 %v790, %v791
      %v793 = vrot.slane %v792, 2
      %v794 = vadd.f32 %v792, %v793
      %v795 = vrot.slane %v794, 1
      %v796 = vadd.f32 %v794, %v795
      %v797 = vsel %vm649, %v413, 0.0
      %v798 = vrot.slane %v797, 4
      %v799 = vadd.f32 %v797, %v798
      %v800 = vrot.slane %v799, 2
      %v801 = vadd.f32 %v799, %v800
      %v802 = vrot.slane %v801, 1
      %v803 = vadd.f32 %v801, %v802
      %v804 = vsel %vm649, %v412, 0.0
      %v805 = vrot.slane %v804, 4
      %v806 = vadd.f32 %v804, %v805
      %v807 = vrot.slane %v806, 2
      %v808 = vadd.f32 %v806, %v807
      %v809 = vrot.slane %v808, 1
      %v810 = vadd.f32 %v808, %v809
      %v811 = vsel %vm649, %v414, 0.0
      %v812 = vrot.slane %v811, 4
      %v813 = vadd.f32 %v811, %v812
      %v814 = vrot.slane %v813, 2
      %v815 = vadd.f32 %v813, %v814
      %v816 = vrot.slane %v815, 1
      %v817 = vadd.f32 %v815, %v816
      %v818 = vsel %vm649, %v422, 0.0
      %v819 = vrot.slane %v818, 4
      %v820 = vadd.f32 %v818, %v819
      %v821 = vrot.slane %v820, 2
      %v822 = vadd.f32 %v820, %v821
      %v823 = vrot.slane %v822, 1
      %v824 = vadd.f32 %v822, %v823
      %v825 = vsel %vm649, %v430, 0.0
      %v826 = vrot.slane %v825, 4
      %v827 = vadd.f32 %v825, %v826
      %v828 = vrot.slane %v827, 2
      %v829 = vadd.f32 %v827, %v828
      %v830 = vrot.slane %v829, 1
      %v831 = vadd.f32 %v829, %v830
      %v832 = vsel %vm649, %v429, 0.0
      %v833 = vrot.slane %v832, 4
      %v834 = vadd.f32 %v832, %v833
      %v835 = vrot.slane %v834, 2
      %v836 = vadd.f32 %v834, %v835
      %v837 = vrot.slane %v836, 1
      %v838 = vadd.f32 %v836, %v837
      %v839 = vsel %vm649, %v431, 0.0
      %v840 = vrot.slane %v839, 4
      %v841 = vadd.f32 %v839, %v840
      %v842 = vrot.slane %v841, 2
      %v843 = vadd.f32 %v841, %v842
      %v844 = vrot.slane %v843, 1
      %v845 = vadd.f32 %v843, %v844
      %v846 = vsel %vm649, %v439, 0.0
      %v847 = vrot.slane %v846, 4
      %v848 = vadd.f32 %v846, %v847
      %v849 = vrot.slane %v848, 2
      %v850 = vadd.f32 %v848, %v849
      %v851 = vrot.slane %v850, 1
      %v852 = vadd.f32 %v850, %v851
      %v853 = vsel %vm649, %v447, 0.0
      %v854 = vrot.slane %v853, 4
      %v855 = vadd.f32 %v853, %v854
      %v856 = vrot.slane %v855, 2
      %v857 = vadd.f32 %v855, %v856
      %v858 = vrot.slane %v857, 1
      %v859 = vadd.f32 %v857, %v858
      %v860 = vsel %vm649, %v446, 0.0
      %v861 = vrot.slane %v860, 4
      %v862 = vadd.f32 %v860, %v861
      %v863 = vrot.slane %v862, 2
      %v864 = vadd.f32 %v862, %v863
      %v865 = vrot.slane %v864, 1
      %v866 = vadd.f32 %v864, %v865
      %v867 = vsel %vm649, %v448, 0.0
      %v868 = vrot.slane %v867, 4
      %v869 = vadd.f32 %v867, %v868
      %v870 = vrot.slane %v869, 2
      %v871 = vadd.f32 %v869, %v870
      %v872 = vrot.slane %v871, 1
      %v873 = vadd.f32 %v871, %v872
      %v874 = vsel %vm649, %v456, 0.0
      %v875 = vrot.slane %v874, 4
      %v876 = vadd.f32 %v874, %v875
      %v877 = vrot.slane %v876, 2
      %v878 = vadd.f32 %v876, %v877
      %v879 = vrot.slane %v878, 1
      %v880 = vadd.f32 %v878, %v879
      %v881 = vsel %vm649, %v464, 0.0
      %v882 = vrot.slane %v881, 4
      %v883 = vadd.f32 %v881, %v882
      %v884 = vrot.slane %v883, 2
      %v885 = vadd.f32 %v883, %v884
      %v886 = vrot.slane %v885, 1
      %v887 = vadd.f32 %v885, %v886
      %v888 = vsel %vm649, %v463, 0.0
      %v889 = vrot.slane %v888, 4
      %v890 = vadd.f32 %v888, %v889
      %v891 = vrot.slane %v890, 2
      %v892 = vadd.f32 %v890, %v891
      %v893 = vrot.slane %v892, 1
      %v894 = vadd.f32 %v892, %v893
      %v895 = vsel %vm649, %v465, 0.0
      %v896 = vrot.slane %v895, 4
      %v897 = vadd.f32 %v895, %v896
      %v898 = vrot.slane %v897, 2
      %v899 = vadd.f32 %v897, %v898
      %v900 = vrot.slane %v899, 1
      %v901 = vadd.f32 %v899, %v900
      %v902 = vsel %vm649, %v473, 0.0
      %v903 = vrot.slane %v902, 4
      %v904 = vadd.f32 %v902, %v903
      %v905 = vrot.slane %v904, 2
      %v906 = vadd.f32 %v904, %v905
      %v907 = vrot.slane %v906, 1
      %v908 = vadd.f32 %v906, %v907
      %v909 = vsel %vm649, %v481, 0.0
      %v910 = vrot.slane %v909, 4
      %v911 = vadd.f32 %v909, %v910
      %v912 = vrot.slane %v911, 2
      %v913 = vadd.f32 %v911, %v912
      %v914 = vrot.slane %v913, 1
      %v915 = vadd.f32 %v913, %v914
      %v916 = vsel %vm649, %v480, 0.0
      %v917 = vrot.slane %v916, 4
      %v918 = vadd.f32 %v916, %v917
      %v919 = vrot.slane %v918, 2
      %v920 = vadd.f32 %v918, %v919
      %v921 = vrot.slane %v920, 1
      %v922 = vadd.f32 %v920, %v921
      %v923 = vsel %vm649, %v482, 0.0
      %v924 = vrot.slane %v923, 4
      %v925 = vadd.f32 %v923, %v924
      %v926 = vrot.slane %v925, 2
      %v927 = vadd.f32 %v925, %v926
      %v928 = vrot.slane %v927, 1
      %v929 = vadd.f32 %v927, %v928
      %v930 = vsel %vm649, %v490, 0.0
      %v931 = vrot.slane %v930, 4
      %v932 = vadd.f32 %v930, %v931
      %v933 = vrot.slane %v932, 2
      %v934 = vadd.f32 %v932, %v933
      %v935 = vrot.slane %v934, 1
      %v936 = vadd.f32 %v934, %v935
      %v937 = vsel %vm649, %v498, 0.0
      %v938 = vrot.slane %v937, 4
      %v939 = vadd.f32 %v937, %v938
      %v940 = vrot.slane %v939, 2
      %v941 = vadd.f32 %v939, %v940
      %v942 = vrot.slane %v941, 1
      %v943 = vadd.f32 %v941, %v942
      %v944 = vsel %vm649, %v497, 0.0
      %v945 = vrot.slane %v944, 4
      %v946 = vadd.f32 %v944, %v945
      %v947 = vrot.slane %v946, 2
      %v948 = vadd.f32 %v946, %v947
      %v949 = vrot.slane %v948, 1
      %v950 = vadd.f32 %v948, %v949
      %v951 = vsel %vm649, %v499, 0.0
      %v952 = vrot.slane %v951, 4
      %v953 = vadd.f32 %v951, %v952
      %v954 = vrot.slane %v953, 2
      %v955 = vadd.f32 %v953, %v954
      %v956 = vrot.slane %v955, 1
      %v957 = vadd.f32 %v955, %v956
      %v958 = vsel %vm649, %v507, 0.0
      %v959 = vrot.slane %v958, 4
      %v960 = vadd.f32 %v958, %v959
      %v961 = vrot.slane %v960, 2
      %v962 = vadd.f32 %v960, %v961
      %v963 = vrot.slane %v962, 1
      %v964 = vadd.f32 %v962, %v963
      %v965 = vsel %vm649, %v515, 0.0
      %v966 = vrot.slane %v965, 4
      %v967 = vadd.f32 %v965, %v966
      %v968 = vrot.slane %v967, 2
      %v969 = vadd.f32 %v967, %v968
      %v970 = vrot.slane %v969, 1
      %v971 = vadd.f32 %v969, %v970
      %v972 = vsel %vm649, %v514, 0.0
      %v973 = vrot.slane %v972, 4
      %v974 = vadd.f32 %v972, %v973
      %v975 = vrot.slane %v974, 2
      %v976 = vadd.f32 %v974, %v975
      %v977 = vrot.slane %v976, 1
      %v978 = vadd.f32 %v976, %v977
      %v979 = vsel %vm649, %v516, 0.0
      %v980 = vrot.slane %v979, 4
      %v981 = vadd.f32 %v979, %v980
      %v982 = vrot.slane %v981, 2
      %v983 = vadd.f32 %v981, %v982
      %v984 = vrot.slane %v983, 1
      %v985 = vadd.f32 %v983, %v984
      %v986 = vsel %vm649, %v524, 0.0
      %v987 = vrot.slane %v986, 4
      %v988 = vadd.f32 %v986, %v987
      %v989 = vrot.slane %v988, 2
      %v990 = vadd.f32 %v988, %v989
      %v991 = vrot.slane %v990, 1
      %v992 = vadd.f32 %v990, %v991
      %v993 = vsel %vm649, %v532, 0.0
      %v994 = vrot.slane %v993, 4
      %v995 = vadd.f32 %v993, %v994
      %v996 = vrot.slane %v995, 2
      %v997 = vadd.f32 %v995, %v996
      %v998 = vrot.slane %v997, 1
      %v999 = vadd.f32 %v997, %v998
      %v1000 = vsel %vm649, %v531, 0.0
      %v1001 = vrot.slane %v1000, 4
      %v1002 = vadd.f32 %v1000, %v1001
      %v1003 = vrot.slane %v1002, 2
      %v1004 = vadd.f32 %v1002, %v1003
      %v1005 = vrot.slane %v1004, 1
      %v1006 = vadd.f32 %v1004, %v1005
      %v1007 = vsel %vm649, %v533, 0.0
      %v1008 = vrot.slane %v1007, 4
      %v1009 = vadd.f32 %v1007, %v1008
      %v1010 = vrot.slane %v1009, 2
      %v1011 = vadd.f32 %v1009, %v1010
      %v1012 = vrot.slane %v1011, 1
      %v1013 = vadd.f32 %v1011, %v1012
      %v1014 = vsel %vm649, %v541, 0.0
      %v1015 = vrot.slane %v1014, 4
      %v1016 = vadd.f32 %v1014, %v1015
      %v1017 = vrot.slane %v1016, 2
      %v1018 = vadd.f32 %v1016, %v1017
      %v1019 = vrot.slane %v1018, 1
      %v1020 = vadd.f32 %v1018, %v1019
      %v1021 = vsel %vm649, %v549, 0.0
      %v1022 = vrot.slane %v1021, 4
      %v1023 = vadd.f32 %v1021, %v1022
      %v1024 = vrot.slane %v1023, 2
      %v1025 = vadd.f32 %v1023, %v1024
      %v1026 = vrot.slane %v1025, 1
      %v1027 = vadd.f32 %v1025, %v1026
      %v1028 = vsel %vm649, %v548, 0.0
      %v1029 = vrot.slane %v1028, 4
      %v1030 = vadd.f32 %v1028, %v1029
      %v1031 = vrot.slane %v1030, 2
      %v1032 = vadd.f32 %v1030, %v1031
      %v1033 = vrot.slane %v1032, 1
      %v1034 = vadd.f32 %v1032, %v1033
      %v1035 = vsel %vm649, %v550, 0.0
      %v1036 = vrot.slane %v1035, 4
      %v1037 = vadd.f32 %v1035, %v1036
      %v1038 = vrot.slane %v1037, 2
      %v1039 = vadd.f32 %v1037, %v1038
      %v1040 = vrot.slane %v1039, 1
      %v1041 = vadd.f32 %v1039, %v1040
      %v1042 = vsel %vm649, %v558, 0.0
      %v1043 = vrot.slane %v1042, 4
      %v1044 = vadd.f32 %v1042, %v1043
      %v1045 = vrot.slane %v1044, 2
      %v1046 = vadd.f32 %v1044, %v1045
      %v1047 = vrot.slane %v1046, 1
      %v1048 = vadd.f32 %v1046, %v1047
      %v1049 = vsel %vm649, %v566, 0.0
      %v1050 = vrot.slane %v1049, 4
      %v1051 = vadd.f32 %v1049, %v1050
      %v1052 = vrot.slane %v1051, 2
      %v1053 = vadd.f32 %v1051, %v1052
      %v1054 = vrot.slane %v1053, 1
      %v1055 = vadd.f32 %v1053, %v1054
      %v1056 = vsel %vm649, %v565, 0.0
      %v1057 = vrot.slane %v1056, 4
      %v1058 = vadd.f32 %v1056, %v1057
      %v1059 = vrot.slane %v1058, 2
      %v1060 = vadd.f32 %v1058, %v1059
      %v1061 = vrot.slane %v1060, 1
      %v1062 = vadd.f32 %v1060, %v1061
      %v1063 = vsel %vm649, %v567, 0.0
      %v1064 = vrot.slane %v1063, 4
      %v1065 = vadd.f32 %v1063, %v1064
      %v1066 = vrot.slane %v1065, 2
      %v1067 = vadd.f32 %v1065, %v1066
      %v1068 = vrot.slane %v1067, 1
      %v1069 = vadd.f32 %v1067, %v1068
      %v1070 = vsel %vm649, %v575, 0.0
      %v1071 = vrot.slane %v1070, 4
      %v1072 = vadd.f32 %v1070, %v1071
      %v1073 = vrot.slane %v1072, 2
      %v1074 = vadd.f32 %v1072, %v1073
      %v1075 = vrot.slane %v1074, 1
      %v1076 = vadd.f32 %v1074, %v1075
      %v1077 = vsel %vm649, %v583, 0.0
      %v1078 = vrot.slane %v1077, 4
      %v1079 = vadd.f32 %v1077, %v1078
      %v1080 = vrot.slane %v1079, 2
      %v1081 = vadd.f32 %v1079, %v1080
      %v1082 = vrot.slane %v1081, 1
      %v1083 = vadd.f32 %v1081, %v1082
      %v1084 = vsel %vm649, %v582, 0.0
      %v1085 = vrot.slane %v1084, 4
      %v1086 = vadd.f32 %v1084, %v1085
      %v1087 = vrot.slane %v1086, 2
      %v1088 = vadd.f32 %v1086, %v1087
      %v1089 = vrot.slane %v1088, 1
      %v1090 = vadd.f32 %v1088, %v1089
      %v1091 = vsel %vm649, %v584, 0.0
      %v1092 = vrot.slane %v1091, 4
      %v1093 = vadd.f32 %v1091, %v1092
      %v1094 = vrot.slane %v1093, 2
      %v1095 = vadd.f32 %v1093, %v1094
      %v1096 = vrot.slane %v1095, 1
      %v1097 = vadd.f32 %v1095, %v1096
      %v1098 = vmul.f32 %v656, %v280
      %v1099 = vmul.f32 %v663, %v280
      %v1100 = vmul.f32 %v670, %v280
      %v1101 = vmul.f32 %v677, %v280
      %v1102 = vmul.f32 %v684, %v280
      %v1103 = vmul.f32 %v691, %v280
      %v1104 = vmul.f32 %v698, %v280
      %v1105 = vmul.f32 %v705, %v280
      %v1106 = vmul.f32 %v712, %v280
      %v1107 = vmul.f32 %v719, %v280
      %v1108 = vmul.f32 %v726, %v280
      %v1109 = vmul.f32 %v733, %v280
      %v1110 = vmul.f32 %v740, %v280
      %v1111 = vmul.f32 %v747, %v280
      %v1112 = vmul.f32 %v754, %v280
      %v1113 = vmul.f32 %v761, %v280
      %v1114 = vmul.f32 %v768, %v280
      %v1115 = vmul.f32 %v775, %v280
      %v1116 = vmul.f32 %v782, %v280
      %v1117 = vmul.f32 %v789, %v280
      %v1118 = vmul.f32 %v796, %v280
      %v1119 = vmul.f32 %v803, %v280
      %v1120 = vmul.f32 %v810, %v280
      %v1121 = vmul.f32 %v817, %v280
      %v1122 = vmul.f32 %v824, %v280
      %v1123 = vmul.f32 %v831, %v280
      %v1124 = vmul.f32 %v838, %v280
      %v1125 = vmul.f32 %v845, %v280
      %v1126 = vmul.f32 %v852, %v280
      %v1127 = vmul.f32 %v859, %v280
      %v1128 = vmul.f32 %v866, %v280
      %v1129 = vmul.f32 %v873, %v280
      %v1130 = vmul.f32 %v880, %v280
      %v1131 = vmul.f32 %v887, %v280
      %v1132 = vmul.f32 %v894, %v280
      %v1133 = vmul.f32 %v901, %v280
      %v1134 = vmul.f32 %v908, %v280
      %v1135 = vmul.f32 %v915, %v280
      %v1136 = vmul.f32 %v922, %v280
      %v1137 = vmul.f32 %v929, %v280
      %v1138 = vmul.f32 %v936, %v280
      %v1139 = vmul.f32 %v943, %v280
      %v1140 = vmul.f32 %v950, %v280
      %v1141 = vmul.f32 %v957, %v280
      %v1142 = vmul.f32 %v964, %v280
      %v1143 = vmul.f32 %v971, %v280
      %v1144 = vmul.f32 %v978, %v280
      %v1145 = vmul.f32 %v985, %v280
      %v1146 = vmul.f32 %v992, %v280
      %v1147 = vmul.f32 %v999, %v280
      %v1148 = vmul.f32 %v1006, %v280
      %v1149 = vmul.f32 %v1013, %v280
      %v1150 = vmul.f32 %v1020, %v280
      %v1151 = vmul.f32 %v1027, %v280
      %v1152 = vmul.f32 %v1034, %v280
      %v1153 = vmul.f32 %v1041, %v280
      %v1154 = vmul.f32 %v1048, %v280
      %v1155 = vmul.f32 %v1055, %v280
      %v1156 = vmul.f32 %v1062, %v280
      %v1157 = vmul.f32 %v1069, %v280
      %v1158 = vmul.f32 %v1076, %v280
      %v1159 = vmul.f32 %v1083, %v280
      %v1160 = vmul.f32 %v1090, %v280
      %v1161 = vmul.f32 %v1097, %v280
      %v1162 = vpack.c.bf16 %v1098, %v1098
      %v1163 = vpack.c.bf16 %v1099, %v1099
      %v1164 = vpack.c.bf16 %v1100, %v1100
      %v1165 = vpack.c.bf16 %v1101, %v1101
      %v1166 = vpack.c.bf16 %v1102, %v1102
      %v1167 = vpack.c.bf16 %v1103, %v1103
      %v1168 = vpack.c.bf16 %v1104, %v1104
      %v1169 = vpack.c.bf16 %v1105, %v1105
      %v1170 = vpack.c.bf16 %v1106, %v1106
      %v1171 = vpack.c.bf16 %v1107, %v1107
      %v1172 = vpack.c.bf16 %v1108, %v1108
      %v1173 = vpack.c.bf16 %v1109, %v1109
      %v1174 = vpack.c.bf16 %v1110, %v1110
      %v1175 = vpack.c.bf16 %v1111, %v1111
      %v1176 = vpack.c.bf16 %v1112, %v1112
      %v1177 = vpack.c.bf16 %v1113, %v1113
      %v1178 = vpack.c.bf16 %v1114, %v1114
      %v1179 = vpack.c.bf16 %v1115, %v1115
      %v1180 = vpack.c.bf16 %v1116, %v1116
      %v1181 = vpack.c.bf16 %v1117, %v1117
      %v1182 = vpack.c.bf16 %v1118, %v1118
      %v1183 = vpack.c.bf16 %v1119, %v1119
      %v1184 = vpack.c.bf16 %v1120, %v1120
      %v1185 = vpack.c.bf16 %v1121, %v1121
      %v1186 = vpack.c.bf16 %v1122, %v1122
      %v1187 = vpack.c.bf16 %v1123, %v1123
      %v1188 = vpack.c.bf16 %v1124, %v1124
      %v1189 = vpack.c.bf16 %v1125, %v1125
      %v1190 = vpack.c.bf16 %v1126, %v1126
      %v1191 = vpack.c.bf16 %v1127, %v1127
      %v1192 = vpack.c.bf16 %v1128, %v1128
      %v1193 = vpack.c.bf16 %v1129, %v1129
      %v1194 = vpack.c.bf16 %v1130, %v1130
      %v1195 = vpack.c.bf16 %v1131, %v1131
      %v1196 = vpack.c.bf16 %v1132, %v1132
      %v1197 = vpack.c.bf16 %v1133, %v1133
      %v1198 = vpack.c.bf16 %v1134, %v1134
      %v1199 = vpack.c.bf16 %v1135, %v1135
      %v1200 = vpack.c.bf16 %v1136, %v1136
      %v1201 = vpack.c.bf16 %v1137, %v1137
      %v1202 = vpack.c.bf16 %v1138, %v1138
      %v1203 = vpack.c.bf16 %v1139, %v1139
      %v1204 = vpack.c.bf16 %v1140, %v1140
      %v1205 = vpack.c.bf16 %v1141, %v1141
      %v1206 = vpack.c.bf16 %v1142, %v1142
      %v1207 = vpack.c.bf16 %v1143, %v1143
      %v1208 = vpack.c.bf16 %v1144, %v1144
      %v1209 = vpack.c.bf16 %v1145, %v1145
      %v1210 = vpack.c.bf16 %v1146, %v1146
      %v1211 = vpack.c.bf16 %v1147, %v1147
      %v1212 = vpack.c.bf16 %v1148, %v1148
      %v1213 = vpack.c.bf16 %v1149, %v1149
      %v1214 = vpack.c.bf16 %v1150, %v1150
      %v1215 = vpack.c.bf16 %v1151, %v1151
      %v1216 = vpack.c.bf16 %v1152, %v1152
      %v1217 = vpack.c.bf16 %v1153, %v1153
      %v1218 = vpack.c.bf16 %v1154, %v1154
      %v1219 = vpack.c.bf16 %v1155, %v1155
      %v1220 = vpack.c.bf16 %v1156, %v1156
      %v1221 = vpack.c.bf16 %v1157, %v1157
      %v1222 = vpack.c.bf16 %v1158, %v1158
      %v1223 = vpack.c.bf16 %v1159, %v1159
      %v1224 = vpack.c.bf16 %v1160, %v1160
      %v1225 = vpack.c.bf16 %v1161, %v1161
      %v1226 = vld [vmem:[%s1] sm:$0xf]
      %v1291 = vunpack.c.l.b16 %v1162
      %v1292 = vunpack.c.l.b16 %v1163
      %v1293 = vunpack.c.l.b16 %v1164
      %v1294 = vunpack.c.l.b16 %v1165
      %v1295 = vunpack.c.l.b16 %v1166
      %v1296 = vunpack.c.l.b16 %v1167
      %v1297 = vunpack.c.l.b16 %v1168
      %v1298 = vunpack.c.l.b16 %v1169
      %v1299 = vunpack.c.l.b16 %v1170
      %v1300 = vunpack.c.l.b16 %v1171
      %v1301 = vunpack.c.l.b16 %v1172
      %v1302 = vunpack.c.l.b16 %v1173
      %v1303 = vunpack.c.l.b16 %v1174
      %v1304 = vunpack.c.l.b16 %v1175
      %v1305 = vunpack.c.l.b16 %v1176
      %v1306 = vunpack.c.l.b16 %v1177
      %v1307 = vunpack.c.l.b16 %v1178
      %v1308 = vunpack.c.l.b16 %v1179
      %v1309 = vunpack.c.l.b16 %v1180
      %v1310 = vunpack.c.l.b16 %v1181
      %v1311 = vunpack.c.l.b16 %v1182
      %v1312 = vunpack.c.l.b16 %v1183
      %v1313 = vunpack.c.l.b16 %v1184
      %v1314 = vunpack.c.l.b16 %v1185
      %v1315 = vunpack.c.l.b16 %v1186
      %v1316 = vunpack.c.l.b16 %v1187
      %v1317 = vunpack.c.l.b16 %v1188
      %v1318 = vunpack.c.l.b16 %v1189
      %v1319 = vunpack.c.l.b16 %v1190
      %v1320 = vunpack.c.l.b16 %v1191
      %v1321 = vunpack.c.l.b16 %v1192
      %v1322 = vunpack.c.l.b16 %v1193
      %v1323 = vunpack.c.l.b16 %v1194
      %v1324 = vunpack.c.l.b16 %v1195
      %v1325 = vunpack.c.l.b16 %v1196
      %v1326 = vunpack.c.l.b16 %v1197
      %v1327 = vunpack.c.l.b16 %v1198
      %v1328 = vunpack.c.l.b16 %v1199
      %v1329 = vunpack.c.l.b16 %v1200
      %v1330 = vunpack.c.l.b16 %v1201
      %v1331 = vunpack.c.l.b16 %v1202
      %v1332 = vunpack.c.l.b16 %v1203
      %v1333 = vunpack.c.l.b16 %v1204
      %v1334 = vunpack.c.l.b16 %v1205
      %v1335 = vunpack.c.l.b16 %v1206
      %v1336 = vunpack.c.l.b16 %v1207
      %v1337 = vunpack.c.l.b16 %v1208
      %v1338 = vunpack.c.l.b16 %v1209
      %v1339 = vunpack.c.l.b16 %v1210
      %v1340 = vunpack.c.l.b16 %v1211
      %v1341 = vunpack.c.l.b16 %v1212
      %v1342 = vunpack.c.l.b16 %v1213
      %v1343 = vunpack.c.l.b16 %v1214
      %v1344 = vunpack.c.l.b16 %v1215
      %v1345 = vunpack.c.l.b16 %v1216
      %v1346 = vunpack.c.l.b16 %v1217
      %v1347 = vunpack.c.l.b16 %v1218
      %v1348 = vunpack.c.l.b16 %v1219
      %v1349 = vunpack.c.l.b16 %v1220
      %v1350 = vunpack.c.l.b16 %v1221
      %v1351 = vunpack.c.l.b16 %v1222
      %v1352 = vunpack.c.l.b16 %v1223
      %v1353 = vunpack.c.l.b16 %v1224
      %v1354 = vunpack.c.l.b16 %v1225
      %vm1355 = vcmask 1041409
      %v1356 = vsel %vm1355, %v1292, %v1291
      %vm1357 = vcmask 1042434
      %v1358 = vsel %vm1357, %v1293, %v1356
      %vm1359 = vcmask 1043459
      %v1360 = vsel %vm1359, %v1294, %v1358
      %vm1361 = vcmask 1044484
      %v1362 = vsel %vm1361, %v1295, %v1360
      %vm1363 = vcmask 1045509
      %v1364 = vsel %vm1363, %v1296, %v1362
      %vm1365 = vcmask 1046534
      %v1366 = vsel %vm1365, %v1297, %v1364
      %vm1367 = vcmask 1047559
      %v1368 = vsel %vm1367, %v1298, %v1366
      %v1369 = vsel %vm1355, %v1300, %v1299
      %v1370 = vsel %vm1357, %v1301, %v1369
      %v1371 = vsel %vm1359, %v1302, %v1370
      %v1372 = vsel %vm1361, %v1303, %v1371
      %v1373 = vsel %vm1363, %v1304, %v1372
      %v1374 = vsel %vm1365, %v1305, %v1373
      %v1375 = vsel %vm1367, %v1306, %v1374
      %v1376 = vsel %vm1355, %v1308, %v1307
      %v1377 = vsel %vm1357, %v1309, %v1376
      %v1378 = vsel %vm1359, %v1310, %v1377
      %v1379 = vsel %vm1361, %v1311, %v1378
      %v1380 = vsel %vm1363, %v1312, %v1379
      %v1381 = vsel %vm1365, %v1313, %v1380
      %v1382 = vsel %vm1367, %v1314, %v1381
      %v1383 = vsel %vm1355, %v1316, %v1315
      %v1384 = vsel %vm1357, %v1317, %v1383
      %v1385 = vsel %vm1359, %v1318, %v1384
      %v1386 = vsel %vm1361, %v1319, %v1385
      %v1387 = vsel %vm1363, %v1320, %v1386
      %v1388 = vsel %vm1365, %v1321, %v1387
      %v1389 = vsel %vm1367, %v1322, %v1388
      %v1390 = vsel %vm1355, %v1324, %v1323
      %v1391 = vsel %vm1357, %v1325, %v1390
      %v1392 = vsel %vm1359, %v1326, %v1391
      %v1393 = vsel %vm1361, %v1327, %v1392
      %v1394 = vsel %vm1363, %v1328, %v1393
      %v1395 = vsel %vm1365, %v1329, %v1394
      %v1396 = vsel %vm1367, %v1330, %v1395
      %v1397 = vsel %vm1355, %v1332, %v1331
      %v1398 = vsel %vm1357, %v1333, %v1397
      %v1399 = vsel %vm1359, %v1334, %v1398
      %v1400 = vsel %vm1361, %v1335, %v1399
      %v1401 = vsel %vm1363, %v1336, %v1400
      %v1402 = vsel %vm1365, %v1337, %v1401
      %v1403 = vsel %vm1367, %v1338, %v1402
      %v1404 = vsel %vm1355, %v1340, %v1339
      %v1405 = vsel %vm1357, %v1341, %v1404
      %v1406 = vsel %vm1359, %v1342, %v1405
      %v1407 = vsel %vm1361, %v1343, %v1406
      %v1408 = vsel %vm1363, %v1344, %v1407
      %v1409 = vsel %vm1365, %v1345, %v1408
      %v1410 = vsel %vm1367, %v1346, %v1409
      %v1411 = vsel %vm1355, %v1348, %v1347
      %v1412 = vsel %vm1357, %v1349, %v1411
      %v1413 = vsel %vm1359, %v1350, %v1412
      %v1414 = vsel %vm1361, %v1351, %v1413
      %v1415 = vsel %vm1363, %v1352, %v1414
      %v1416 = vsel %vm1365, %v1353, %v1415
      %v1417 = vsel %vm1367, %v1354, %v1416
      %v1418 = vpack.c.b16 %v1375, %v1368
      %v1419 = vpack.c.b16 %v1389, %v1382
      %v1420 = vpack.c.b16 %v1403, %v1396
      %v1421 = vpack.c.b16 %v1417, %v1410
      %1422 = vrot.lane.b32.xlu0 %v1418, 120
      %v1423 = vpop.permute.xlu0 %1422
      %1424 = vrot.lane.b32.xlu0 %v1419, 120
      %v1425 = vpop.permute.xlu0 %1424
      %1426 = vrot.lane.b32.xlu0 %v1420, 120
      %v1427 = vpop.permute.xlu0 %1426
      %1428 = vrot.lane.b32.xlu0 %v1421, 120
      %v1429 = vpop.permute.xlu0 %1428
      %vm1430 = vcmask 64512
      %v1432 = vsel %vm1430, %v1423, 0
      %v1435 = vsel %vm1430, %v1425, 0
      %v1438 = vsel %vm1430, %v1427, 0
      %v1441 = vsel %vm1430, %v1429, 0
      %vm1443 = vcmask 1043456
      %v1445 = vsel %vm1443, %v1226, 0
      %1447 = vmatprep.subr.bf16.mxu0 0
      %1448 = vmatpush1.bf16.msra.mxu0 0
      %1449 = vmatprep.subr.bf16.mxu0 0
      %1450 = vmatpush1.bf16.msra.mxu0 0
      %1451 = vmatprep.subr.bf16.mxu0 0
      %1452 = vmatpush1.bf16.msra.mxu0 0
      %1453 = vmatprep.subr.bf16.mxu0 0
      %1454 = vmatpush1.bf16.msra.mxu0 0
      %1455 = vmatprep.subr.bf16.mxu0 0
      %1456 = vmatpush1.bf16.msra.mxu0 0
      %1457 = vmatprep.subr.bf16.mxu0 0
      %1458 = vmatpush1.bf16.msra.mxu0 0
      %1459 = vmatprep.subr.bf16.mxu0 0
      %1460 = vmatpush1.bf16.msra.mxu0 0
      %1461 = vmatprep.subr.bf16.mxu0 0
      %1462 = vmatpush1.bf16.msra.mxu0 %v1445
      %1463 = vmatprep.subr.bf16.mxu0 0
      %1464 = vmatpush2.bf16.msra.mxu0 0
      %1465 = vmatprep.subr.bf16.mxu0 0
      %1466 = vmatpush2.bf16.msra.mxu0 0
      %1467 = vmatprep.subr.bf16.mxu0 0
      %1468 = vmatpush2.bf16.msra.mxu0 0
      %1469 = vmatprep.subr.bf16.mxu0 0
      %1470 = vmatpush2.bf16.msra.mxu0 0
      %1471 = vmatprep.subr.bf16.mxu0 0
      %1472 = vmatpush2.bf16.msra.mxu0 0
      %1473 = vmatprep.subr.bf16.mxu0 0
      %1474 = vmatpush2.bf16.msra.mxu0 0
      %1475 = vmatprep.subr.bf16.mxu0 0
      %1476 = vmatpush2.bf16.msra.mxu0 0
      %1477 = vmatprep.subr.bf16.mxu0 0
      %1478 = vmatpush2.bf16.msra.mxu0 0
      %1479 = vmatprep.mubr.bf16.mxu0 0
      %1480 = vmatmul.mubr.bf16.gmra.mxu0 %v1432
      %v1481 = vpop.f32.mrf.mxu0
      %v1482 = vadd.f32 0.0, %v1481
      %v1483 = vpop.f32.mrf.mxu0
      %v1484 = vpop.f32.mrf.mxu0
      %v1485 = vadd.f32 0.0, %v1484
      %v1486 = vpop.f32.mrf.mxu0
      %1487 = vmatprep.mubr.bf16.mxu0 0
      %1488 = vmatmul.mubr.bf16.gmra.mxu0 %v1435
      %v1489 = vpop.f32.mrf.mxu0
      %v1490 = vadd.f32 0.0, %v1489
      %v1491 = vpop.f32.mrf.mxu0
      %v1492 = vpop.f32.mrf.mxu0
      %v1493 = vadd.f32 0.0, %v1492
      %v1494 = vpop.f32.mrf.mxu0
      %1495 = vmatprep.mubr.bf16.mxu0 0
      %1496 = vmatmul.mubr.bf16.gmra.mxu0 %v1438
      %v1497 = vpop.f32.mrf.mxu0
      %v1498 = vadd.f32 0.0, %v1497
      %v1499 = vpop.f32.mrf.mxu0
      %v1500 = vpop.f32.mrf.mxu0
      %v1501 = vadd.f32 0.0, %v1500
      %v1502 = vpop.f32.mrf.mxu0
      %1503 = vmatprep.mubr.bf16.mxu0 0
      %1504 = vmatmul.mubr.bf16.gmra.mxu0 %v1441
      %v1505 = vpop.f32.mrf.mxu0
      %v1506 = vadd.f32 0.0, %v1505
      %v1507 = vpop.f32.mrf.mxu0
      %v1508 = vpop.f32.mrf.mxu0
      %v1509 = vadd.f32 0.0, %v1508
      %v1510 = vpop.f32.mrf.mxu0
      %1511 = vdwg.mxu0
      %v1512 = vld [vmem:[%s2] sm:$0xf]
      %v1514 = vsel %vm1443, %v1512, 0
      %1516 = vmatprep.subr.bf16.mxu0 0
      %1517 = vmatpush1.bf16.msra.mxu0 0
      %1518 = vmatprep.subr.bf16.mxu0 0
      %1519 = vmatpush1.bf16.msra.mxu0 0
      %1520 = vmatprep.subr.bf16.mxu0 0
      %1521 = vmatpush1.bf16.msra.mxu0 0
      %1522 = vmatprep.subr.bf16.mxu0 0
      %1523 = vmatpush1.bf16.msra.mxu0 0
      %1524 = vmatprep.subr.bf16.mxu0 0
      %1525 = vmatpush1.bf16.msra.mxu0 0
      %1526 = vmatprep.subr.bf16.mxu0 0
      %1527 = vmatpush1.bf16.msra.mxu0 0
      %1528 = vmatprep.subr.bf16.mxu0 0
      %1529 = vmatpush1.bf16.msra.mxu0 0
      %1530 = vmatprep.subr.bf16.mxu0 0
      %1531 = vmatpush1.bf16.msra.mxu0 %v1514
      %1532 = vmatprep.subr.bf16.mxu0 0
      %1533 = vmatpush2.bf16.msra.mxu0 0
      %1534 = vmatprep.subr.bf16.mxu0 0
      %1535 = vmatpush2.bf16.msra.mxu0 0
      %1536 = vmatprep.subr.bf16.mxu0 0
      %1537 = vmatpush2.bf16.msra.mxu0 0
      %1538 = vmatprep.subr.bf16.mxu0 0
      %1539 = vmatpush2.bf16.msra.mxu0 0
      %1540 = vmatprep.subr.bf16.mxu0 0
      %1541 = vmatpush2.bf16.msra.mxu0 0
      %1542 = vmatprep.subr.bf16.mxu0 0
      %1543 = vmatpush2.bf16.msra.mxu0 0
      %1544 = vmatprep.subr.bf16.mxu0 0
      %1545 = vmatpush2.bf16.msra.mxu0 0
      %1546 = vmatprep.subr.bf16.mxu0 0
      %1547 = vmatpush2.bf16.msra.mxu0 0
      %1548 = vmatprep.mubr.bf16.mxu0 0
      %1549 = vmatmul.mubr.bf16.gmra.mxu0 %v1432
      %v1550 = vpop.f32.mrf.mxu0
      %v1551 = vadd.f32 0.0, %v1550
      %v1552 = vpop.f32.mrf.mxu0
      %v1553 = vpop.f32.mrf.mxu0
      %v1554 = vadd.f32 0.0, %v1553
      %v1555 = vpop.f32.mrf.mxu0
      %1556 = vmatprep.mubr.bf16.mxu0 0
      %1557 = vmatmul.mubr.bf16.gmra.mxu0 %v1435
      %v1558 = vpop.f32.mrf.mxu0
      %v1559 = vadd.f32 0.0, %v1558
      %v1560 = vpop.f32.mrf.mxu0
      %v1561 = vpop.f32.mrf.mxu0
      %v1562 = vadd.f32 0.0, %v1561
      %v1563 = vpop.f32.mrf.mxu0
      %1564 = vmatprep.mubr.bf16.mxu0 0
      %1565 = vmatmul.mubr.bf16.gmra.mxu0 %v1438
      %v1566 = vpop.f32.mrf.mxu0
      %v1567 = vadd.f32 0.0, %v1566
      %v1568 = vpop.f32.mrf.mxu0
      %v1569 = vpop.f32.mrf.mxu0
      %v1570 = vadd.f32 0.0, %v1569
      %v1571 = vpop.f32.mrf.mxu0
      %1572 = vmatprep.mubr.bf16.mxu0 0
      %1573 = vmatmul.mubr.bf16.gmra.mxu0 %v1441
      %v1574 = vpop.f32.mrf.mxu0
      %v1575 = vadd.f32 0.0, %v1574
      %v1576 = vpop.f32.mrf.mxu0
      %v1577 = vpop.f32.mrf.mxu0
      %v1578 = vadd.f32 0.0, %v1577
      %v1579 = vpop.f32.mrf.mxu0
      %1580 = vdwg.mxu0
      %v1581 = vld [vmem:[%s3] sm:$0xf]
      %v1583 = vsel %vm1443, %v1581, 0
      %1585 = vmatprep.subr.bf16.mxu0 0
      %1586 = vmatpush1.bf16.msra.mxu0 0
      %1587 = vmatprep.subr.bf16.mxu0 0
      %1588 = vmatpush1.bf16.msra.mxu0 0
      %1589 = vmatprep.subr.bf16.mxu0 0
      %1590 = vmatpush1.bf16.msra.mxu0 0
      %1591 = vmatprep.subr.bf16.mxu0 0
      %1592 = vmatpush1.bf16.msra.mxu0 0
      %1593 = vmatprep.subr.bf16.mxu0 0
      %1594 = vmatpush1.bf16.msra.mxu0 0
      %1595 = vmatprep.subr.bf16.mxu0 0
      %1596 = vmatpush1.bf16.msra.mxu0 0
      %1597 = vmatprep.subr.bf16.mxu0 0
      %1598 = vmatpush1.bf16.msra.mxu0 0
      %1599 = vmatprep.subr.bf16.mxu0 0
      %1600 = vmatpush1.bf16.msra.mxu0 %v1583
      %1601 = vmatprep.subr.bf16.mxu0 0
      %1602 = vmatpush2.bf16.msra.mxu0 0
      %1603 = vmatprep.subr.bf16.mxu0 0
      %1604 = vmatpush2.bf16.msra.mxu0 0
      %1605 = vmatprep.subr.bf16.mxu0 0
      %1606 = vmatpush2.bf16.msra.mxu0 0
      %1607 = vmatprep.subr.bf16.mxu0 0
      %1608 = vmatpush2.bf16.msra.mxu0 0
      %1609 = vmatprep.subr.bf16.mxu0 0
      %1610 = vmatpush2.bf16.msra.mxu0 0
      %1611 = vmatprep.subr.bf16.mxu0 0
      %1612 = vmatpush2.bf16.msra.mxu0 0
      %1613 = vmatprep.subr.bf16.mxu0 0
      %1614 = vmatpush2.bf16.msra.mxu0 0
      %1615 = vmatprep.subr.bf16.mxu0 0
      %1616 = vmatpush2.bf16.msra.mxu0 0
      %1617 = vmatprep.mubr.bf16.mxu0 0
      %1618 = vmatmul.mubr.bf16.gmra.mxu0 %v1432
      %v1619 = vpop.f32.mrf.mxu0
      %v1620 = vadd.f32 0.0, %v1619
      %v1621 = vpop.f32.mrf.mxu0
      %v1622 = vpop.f32.mrf.mxu0
      %v1623 = vadd.f32 0.0, %v1622
      %v1624 = vpop.f32.mrf.mxu0
      %1625 = vmatprep.mubr.bf16.mxu0 0
      %1626 = vmatmul.mubr.bf16.gmra.mxu0 %v1435
      %v1627 = vpop.f32.mrf.mxu0
      %v1628 = vadd.f32 0.0, %v1627
      %v1629 = vpop.f32.mrf.mxu0
      %v1630 = vpop.f32.mrf.mxu0
      %v1631 = vadd.f32 0.0, %v1630
      %v1632 = vpop.f32.mrf.mxu0
      %1633 = vmatprep.mubr.bf16.mxu0 0
      %1634 = vmatmul.mubr.bf16.gmra.mxu0 %v1438
      %v1635 = vpop.f32.mrf.mxu0
      %v1636 = vadd.f32 0.0, %v1635
      %v1637 = vpop.f32.mrf.mxu0
      %v1638 = vpop.f32.mrf.mxu0
      %v1639 = vadd.f32 0.0, %v1638
      %v1640 = vpop.f32.mrf.mxu0
      %1641 = vmatprep.mubr.bf16.mxu0 0
      %1642 = vmatmul.mubr.bf16.gmra.mxu0 %v1441
      %v1643 = vpop.f32.mrf.mxu0
      %v1644 = vadd.f32 0.0, %v1643
      %v1645 = vpop.f32.mrf.mxu0
      %v1646 = vpop.f32.mrf.mxu0
      %v1647 = vadd.f32 0.0, %v1646
      %v1648 = vpop.f32.mrf.mxu0
      %1649 = vdwg.mxu0
      %v1650 = vpack.c.bf16 %v1485, %v1482
      %v1651 = vpack.c.bf16 %v1493, %v1490
      %v1652 = vpack.c.bf16 %v1501, %v1498
      %v1653 = vpack.c.bf16 %v1509, %v1506
      %v1654 = vpack.c.bf16 %v1554, %v1551
      %v1655 = vpack.c.bf16 %v1562, %v1559
      %v1656 = vpack.c.bf16 %v1570, %v1567
      %v1657 = vpack.c.bf16 %v1578, %v1575
      %v1659 = vsel %vm1430, %v1650, 0
      %v1662 = vsel %vm1430, %v1651, 0
      %v1665 = vsel %vm1430, %v1652, 0
      %v1668 = vsel %vm1430, %v1653, 0
      %v1671 = vsel %vm1430, %v1654, 0
      %v1674 = vsel %vm1430, %v1655, 0
      %v1677 = vsel %vm1430, %v1656, 0
      %v1680 = vsel %vm1430, %v1657, 0
      %1682 = vmatprep.subr.bf16.mxu0 0
      %1683 = vmatpush1.bf16.xpose.msra.mxu0 0
      %1684 = vmatprep.subr.bf16.mxu0 0
      %1685 = vmatpush1.bf16.xpose.msra.mxu0 0
      %1686 = vmatprep.subr.bf16.mxu0 0
      %1687 = vmatpush1.bf16.xpose.msra.mxu0 0
      %1688 = vmatprep.subr.bf16.mxu0 0
      %1689 = vmatpush1.bf16.xpose.msra.mxu0 0
      %1690 = vmatprep.subr.bf16.mxu0 0
      %1691 = vmatpush1.bf16.xpose.msra.mxu0 %v1680
      %1692 = vmatprep.subr.bf16.mxu0 0
      %1693 = vmatpush1.bf16.xpose.msra.mxu0 %v1677
      %1694 = vmatprep.subr.bf16.mxu0 0
      %1695 = vmatpush1.bf16.xpose.msra.mxu0 %v1674
      %1696 = vmatprep.subr.bf16.mxu0 0
      %1697 = vmatpush1.bf16.xpose.msra.mxu0 %v1671
      %1698 = vmatprep.subr.bf16.mxu0 0
      %1699 = vmatpush2.bf16.xpose.msra.mxu0 0
      %1700 = vmatprep.subr.bf16.mxu0 0
      %1701 = vmatpush2.bf16.xpose.msra.mxu0 0
      %1702 = vmatprep.subr.bf16.mxu0 0
      %1703 = vmatpush2.bf16.xpose.msra.mxu0 0
      %1704 = vmatprep.subr.bf16.mxu0 0
      %1705 = vmatpush2.bf16.xpose.msra.mxu0 0
      %1706 = vmatprep.subr.bf16.mxu0 0
      %1707 = vmatpush2.bf16.xpose.msra.mxu0 0
      %1708 = vmatprep.subr.bf16.mxu0 0
      %1709 = vmatpush2.bf16.xpose.msra.mxu0 0
      %1710 = vmatprep.subr.bf16.mxu0 0
      %1711 = vmatpush2.bf16.xpose.msra.mxu0 0
      %1712 = vmatprep.subr.bf16.mxu0 0
      %1713 = vmatpush2.bf16.xpose.msra.mxu0 0
      %1714 = vmatprep.mubr.bf16.mxu0 0
      %1715 = vmatmul.mubr.bf16.gmra.mxu0 %v1659
      %v1716 = vpop.f32.mrf.mxu0
      %v1717 = vadd.f32 0.0, %v1716
      %v1718 = vpop.f32.mrf.mxu0
      %v1719 = vpop.f32.mrf.mxu0
      %v1720 = vadd.f32 0.0, %v1719
      %v1721 = vpop.f32.mrf.mxu0
      %1722 = vmatprep.mubr.bf16.mxu0 0
      %1723 = vmatmul.mubr.bf16.gmra.mxu0 %v1662
      %v1724 = vpop.f32.mrf.mxu0
      %v1725 = vadd.f32 0.0, %v1724
      %v1726 = vpop.f32.mrf.mxu0
      %v1727 = vpop.f32.mrf.mxu0
      %v1728 = vadd.f32 0.0, %v1727
      %v1729 = vpop.f32.mrf.mxu0
      %1730 = vmatprep.mubr.bf16.mxu0 0
      %1731 = vmatmul.mubr.bf16.gmra.mxu0 %v1665
      %v1732 = vpop.f32.mrf.mxu0
      %v1733 = vadd.f32 0.0, %v1732
      %v1734 = vpop.f32.mrf.mxu0
      %v1735 = vpop.f32.mrf.mxu0
      %v1736 = vadd.f32 0.0, %v1735
      %v1737 = vpop.f32.mrf.mxu0
      %1738 = vmatprep.mubr.bf16.mxu0 0
      %1739 = vmatmul.mubr.bf16.gmra.mxu0 %v1668
      %v1740 = vpop.f32.mrf.mxu0
      %v1741 = vadd.f32 0.0, %v1740
      %v1742 = vpop.f32.mrf.mxu0
      %v1743 = vpop.f32.mrf.mxu0
      %v1744 = vadd.f32 0.0, %v1743
      %v1745 = vpop.f32.mrf.mxu0
      %1746 = vdwg.mxu0
      %vm1747 = vcmask 523264
      %v1748 = vsel %vm1747, %v1717, -inf
      %1749 = vmax.xlane.f32.xlu0 %v1748
      %v1750 = vpop.xlane.xlu0 %1749
      %v1751 = vsel %vm1747, %v1720, -inf
      %1752 = vmax.xlane.f32.xlu0 %v1751
      %v1753 = vpop.xlane.xlu0 %1752
      %v1754 = vsel %vm1747, %v1725, -inf
      %1755 = vmax.xlane.f32.xlu0 %v1754
      %v1756 = vpop.xlane.xlu0 %1755
      %v1757 = vsel %vm1747, %v1728, -inf
      %1758 = vmax.xlane.f32.xlu0 %v1757
      %v1759 = vpop.xlane.xlu0 %1758
      %v1760 = vsel %vm1747, %v1733, -inf
      %1761 = vmax.xlane.f32.xlu0 %v1760
      %v1762 = vpop.xlane.xlu0 %1761
      %v1763 = vsel %vm1747, %v1736, -inf
      %1764 = vmax.xlane.f32.xlu0 %v1763
      %v1765 = vpop.xlane.xlu0 %1764
      %v1766 = vsel %vm1747, %v1741, -inf
      %1767 = vmax.xlane.f32.xlu0 %v1766
      %v1768 = vpop.xlane.xlu0 %1767
      %v1769 = vsel %vm1747, %v1744, -inf
      %1770 = vmax.xlane.f32.xlu0 %v1769
      %v1771 = vpop.xlane.xlu0 %1770
      %v1772 = vsub.f32 %v1717, %v1750
      %v1773 = vsub.f32 %v1720, %v1753
      %v1774 = vsub.f32 %v1725, %v1756
      %v1775 = vsub.f32 %v1728, %v1759
      %v1776 = vsub.f32 %v1733, %v1762
      %v1777 = vsub.f32 %v1736, %v1765
      %v1778 = vsub.f32 %v1741, %v1768
      %v1779 = vsub.f32 %v1744, %v1771
      %v1780 = vmul.f32 %v1772, 1.442695
      %v1781 = vpow.pop %v1780
      %v1782 = vmul.f32 %v1773, 1.442695
      %v1783 = vpow.pop %v1782
      %v1784 = vmul.f32 %v1774, 1.442695
      %v1785 = vpow.pop %v1784
      %v1786 = vmul.f32 %v1775, 1.442695
      %v1787 = vpow.pop %v1786
      %v1788 = vmul.f32 %v1776, 1.442695
      %v1789 = vpow.pop %v1788
      %v1790 = vmul.f32 %v1777, 1.442695
      %v1791 = vpow.pop %v1790
      %v1792 = vmul.f32 %v1778, 1.442695
      %v1793 = vpow.pop %v1792
      %v1794 = vmul.f32 %v1779, 1.442695
      %v1795 = vpow.pop %v1794
      %v1796 = vsel %vm1747, %v1781, 0.0
      %1797 = vadd.xlane.f32.xlu0 %v1796
      %v1798 = vpop.xlane.xlu0 %1797
      %v1799 = vsel %vm1747, %v1783, 0.0
      %1800 = vadd.xlane.f32.xlu0 %v1799
      %v1801 = vpop.xlane.xlu0 %1800
      %v1802 = vsel %vm1747, %v1785, 0.0
      %1803 = vadd.xlane.f32.xlu0 %v1802
      %v1804 = vpop.xlane.xlu0 %1803
      %v1805 = vsel %vm1747, %v1787, 0.0
      %1806 = vadd.xlane.f32.xlu0 %v1805
      %v1807 = vpop.xlane.xlu0 %1806
      %v1808 = vsel %vm1747, %v1789, 0.0
      %1809 = vadd.xlane.f32.xlu0 %v1808
      %v1810 = vpop.xlane.xlu0 %1809
      %v1811 = vsel %vm1747, %v1791, 0.0
      %1812 = vadd.xlane.f32.xlu0 %v1811
      %v1813 = vpop.xlane.xlu0 %1812
      %v1814 = vsel %vm1747, %v1793, 0.0
      %1815 = vadd.xlane.f32.xlu0 %v1814
      %v1816 = vpop.xlane.xlu0 %1815
      %v1817 = vsel %vm1747, %v1795, 0.0
      %1818 = vadd.xlane.f32.xlu0 %v1817
      %v1819 = vpop.xlane.xlu0 %1818
      %v1820 = vrcp.pop %v1798
      %v1821 = vrcp.pop %v1801
      %v1822 = vrcp.pop %v1804
      %v1823 = vrcp.pop %v1807
      %v1824 = vrcp.pop %v1810
      %v1825 = vrcp.pop %v1813
      %v1826 = vrcp.pop %v1816
      %v1827 = vrcp.pop %v1819
      %v1828 = vmul.f32 %v1781, %v1820
      %v1829 = vmul.f32 %v1783, %v1821
      %v1830 = vmul.f32 %v1785, %v1822
      %v1831 = vmul.f32 %v1787, %v1823
      %v1832 = vmul.f32 %v1789, %v1824
      %v1833 = vmul.f32 %v1791, %v1825
      %v1834 = vmul.f32 %v1793, %v1826
      %v1835 = vmul.f32 %v1795, %v1827
      %v1836 = vpack.c.bf16 %v1829, %v1828
      %v1837 = vpack.c.bf16 %v1831, %v1830
      %v1838 = vpack.c.bf16 %v1833, %v1832
      %v1839 = vpack.c.bf16 %v1835, %v1834
      %v1840 = vpack.c.bf16 %v1623, %v1620
      %v1841 = vpack.c.bf16 %v1631, %v1628
      %v1842 = vpack.c.bf16 %v1639, %v1636
      %v1843 = vpack.c.bf16 %v1647, %v1644
      %v1845 = vsel %vm1747, %v1836, 0
      %v1848 = vsel %vm1747, %v1837, 0
      %v1851 = vsel %vm1747, %v1838, 0
      %v1854 = vsel %vm1747, %v1839, 0
      %1856 = vmatprep.subr.bf16.mxu0 0
      %1857 = vmatpush1.bf16.msra.mxu0 0
      %1858 = vmatprep.subr.bf16.mxu0 0
      %1859 = vmatpush1.bf16.msra.mxu0 0
      %1860 = vmatprep.subr.bf16.mxu0 0
      %1861 = vmatpush1.bf16.msra.mxu0 0
      %1862 = vmatprep.subr.bf16.mxu0 0
      %1863 = vmatpush1.bf16.msra.mxu0 0
      %1864 = vmatprep.subr.bf16.mxu0 0
      %1865 = vmatpush1.bf16.msra.mxu0 %v1843
      %1866 = vmatprep.subr.bf16.mxu0 0
      %1867 = vmatpush1.bf16.msra.mxu0 %v1842
      %1868 = vmatprep.subr.bf16.mxu0 0
      %1869 = vmatpush1.bf16.msra.mxu0 %v1841
      %1870 = vmatprep.subr.bf16.mxu0 0
      %1871 = vmatpush1.bf16.msra.mxu0 %v1840
      %1872 = vmatprep.subr.bf16.mxu0 0
      %1873 = vmatpush2.bf16.msra.mxu0 0
      %1874 = vmatprep.subr.bf16.mxu0 0
      %1875 = vmatpush2.bf16.msra.mxu0 0
      %1876 = vmatprep.subr.bf16.mxu0 0
      %1877 = vmatpush2.bf16.msra.mxu0 0
      %1878 = vmatprep.subr.bf16.mxu0 0
      %1879 = vmatpush2.bf16.msra.mxu0 0
      %1880 = vmatprep.subr.bf16.mxu0 0
      %1881 = vmatpush2.bf16.msra.mxu0 0
      %1882 = vmatprep.subr.bf16.mxu0 0
      %1883 = vmatpush2.bf16.msra.mxu0 0
      %1884 = vmatprep.subr.bf16.mxu0 0
      %1885 = vmatpush2.bf16.msra.mxu0 0
      %1886 = vmatprep.subr.bf16.mxu0 0
      %1887 = vmatpush2.bf16.msra.mxu0 0
      %1888 = vmatprep.mubr.bf16.mxu0 0
      %1889 = vmatmul.mubr.bf16.gmra.mxu0 %v1845
      %v1890 = vpop.f32.mrf.mxu0
      %v1891 = vadd.f32 0.0, %v1890
      %v1892 = vpop.f32.mrf.mxu0
      %v1893 = vpop.f32.mrf.mxu0
      %v1894 = vadd.f32 0.0, %v1893
      %v1895 = vpop.f32.mrf.mxu0
      %1896 = vmatprep.mubr.bf16.mxu0 0
      %1897 = vmatmul.mubr.bf16.gmra.mxu0 %v1848
      %v1898 = vpop.f32.mrf.mxu0
      %v1899 = vadd.f32 0.0, %v1898
      %v1900 = vpop.f32.mrf.mxu0
      %v1901 = vpop.f32.mrf.mxu0
      %v1902 = vadd.f32 0.0, %v1901
      %v1903 = vpop.f32.mrf.mxu0
      %1904 = vmatprep.mubr.bf16.mxu0 0
      %1905 = vmatmul.mubr.bf16.gmra.mxu0 %v1851
      %v1906 = vpop.f32.mrf.mxu0
      %v1907 = vadd.f32 0.0, %v1906
      %v1908 = vpop.f32.mrf.mxu0
      %v1909 = vpop.f32.mrf.mxu0
      %v1910 = vadd.f32 0.0, %v1909
      %v1911 = vpop.f32.mrf.mxu0
      %1912 = vmatprep.mubr.bf16.mxu0 0
      %1913 = vmatmul.mubr.bf16.gmra.mxu0 %v1854
      %v1914 = vpop.f32.mrf.mxu0
      %v1915 = vadd.f32 0.0, %v1914
      %v1916 = vpop.f32.mrf.mxu0
      %v1917 = vpop.f32.mrf.mxu0
      %v1918 = vadd.f32 0.0, %v1917
      %v1919 = vpop.f32.mrf.mxu0
      %1920 = vdwg.mxu0
      %1921 = vst.msk [vmem:[%s197] sm:$0xff] %vm1430, %v1891
      %1922 = vst.msk [vmem:[%s197 + $0x8] sm:$0xff] %vm1430, %v1894
      %1923 = vst.msk [vmem:[%s197 + $0x10] sm:$0xff] %vm1430, %v1899
      %1924 = vst.msk [vmem:[%s197 + $0x18] sm:$0xff] %vm1430, %v1902
      %1925 = vst.msk [vmem:[%s197 + $0x20] sm:$0xff] %vm1430, %v1907
      %1926 = vst.msk [vmem:[%s197 + $0x28] sm:$0xff] %vm1430, %v1910
      %1927 = vst.msk [vmem:[%s197 + $0x30] sm:$0xff] %vm1430, %v1915
      %1928 = vst.msk [vmem:[%s197 + $0x38] sm:$0xff] %vm1430, %v1918
      %p1929 = scmp.lt.s32.totalorder %s15, 1
      %s1930 = scalar_select %p1929, %s15, 1
      %s1931 = smul.addr %s1930, 8
      %s1932 = smul.addr %s1931, 8
      %s1933 = scalar_lea.vmem %s4, %s1932
      // Predicated region
      $region37: #{mixer_forward.4} parent=35 // pred_check
        %p1934 = pneg %p122
      $region38: #{mixer_forward.4} parent=35 // pred_check_branch
        %1936 = sbr.rel (%p1934) target = $region40
      $region39: #{mixer_forward.4} parent=35 // pred_region
        _
      $region40: #{mixer_forward.4} parent=35 // pred_fallthru
        _
    $region36: #{mixer_forward.4} parent=5 // pred_fallthru
      _
    %p1937 = scmp.le.s32.totalorder 2, %s10
    // Predicated region
    $region41: #{mixer_forward.4} parent=5 // pred_check
      %p1938 = pneg %p1937
    $region42: #{mixer_forward.4} parent=5 // pred_check_branch
      %1940 = sbr.rel (%p1938) target = $region44
    $region43: #{mixer_forward.4} parent=5 // pred_region
      %s1941 = ssub.s32 %s10, 2
      // Predicated region
      $region45: #{mixer_forward.4} parent=43 // pred_check
        %p1942 = pneg %p128
      $region46: #{mixer_forward.4} parent=43 // pred_check_branch
        %1944 = sbr.rel (%p1942) target = $region48
      $region47: #{mixer_forward.4} parent=43 // pred_region
        %p1945 = scmp.lt.s32.totalorder %s16, 1
        %s1946 = scalar_select %p1945, %s16, 1
        %s1947 = smul.addr %s1946, 8
        %s1948 = smul.addr %s1947, 8
        %s1949 = scalar_lea.vmem %s4, %s1948
      $region48: #{mixer_forward.4} parent=43 // pred_fallthru
        _
    $region44: #{mixer_forward.4} parent=5 // pred_fallthru
      _
  $region6: #{mixer_forward.4} parent=0 // loop_footer
    %s14 = sadd.s32 1, %s10
  $region7: #{mixer_forward.4} parent=0 // loop_footer_branch
    %9 = sbr.rel target = $region3
  $region8: #{mixer_forward.4} parent=0 // loop_exit
    _

// kernel: mixer_forward.5
$region0: #{mixer_forward.5}
  #allocation0 [shape = 'u32[]', space=smem, size = 0x4, offset = 0x4, fixed_abs, tag = 'smem constant byte address 0x4 - core index']
  #allocation1 [shape = 'u32[144,128]{1,0:T(1,128)}', space=vmem, size = 0x12000, scoped, tag = 'internal scratch']
  #allocation2 [shape = 'f32[18,18,16]{2,1,0:T(8,128)}', space=vmem, size = 0x36000, scoped, tag = 'scratch operand']
  %s0 = inlined_call_operand.vmem [shape: f32[2,16,16,16], index: 0, kind: input, shape index: {}]
  %s1 = inlined_call_operand.vmem [shape: f32[2,8,8,8], index: 1, kind: input, shape index: {}]
  %s2 = inlined_call_operand.vmem [shape: bf16[8,8], index: 2, kind: input, shape index: {}]
  %s3 = inlined_call_operand.vmem [shape: f32[3,3,8], index: 3, kind: input, shape index: {}]
  %s4 = inlined_call_operand.vmem [shape: f32[3,3,16], index: 4, kind: input, shape index: {}]
  %s5 = inlined_call_operand.vmem [shape: bf16[16,16], index: 5, kind: input, shape index: {}]
  %s6 = inlined_call_operand.vmem [shape: f32[16,1], index: 6, kind: input, shape index: {}]
  %s7 = inlined_call_operand.vmem [shape: bf16[2,16,256], index: 7, kind: output, shape index: {}]
  %s8 = sld [smem:[#allocation0]]
  $region61: #{mixer_forward.5} parent=0
    _
  %s10 = ssub.s32 1, %s8
  %s11 = scalar_select 0, %s10, %s8
  loop: start=0, step=1, limit=4
  $region2: #{mixer_forward.5} parent=0 // loop_pre_header
    _
  $region3: #{mixer_forward.5} parent=0 // loop_header
    %s13 = sphi 0, %s17
    %p14 = scmp.ge.s32.totalorder %s13, 4
    %s23 = sphi 0, %s25
    %s26 = sphi 0, %s23
    %s27 = sphi 0, %s26
    %s43 = sphi 0, %s27
    %s49 = sphi 0, %s51
    %s52 = sphi 0, %s49
    %s53 = sphi 0, %s52
    %s69 = sphi 0, %s53
    %s73 = sphi 0, %s73
    %s75 = sphi 0, %s73
    %s76 = sphi 0, %s75
    %s90 = sphi 0, %s76
    %s94 = sphi 0, %s94
    %s96 = sphi 0, %s94
    %s97 = sphi 0, %s96
    %s111 = sphi 0, %s97
    %s115 = sphi 0, %s115
    %s117 = sphi 0, %s115
    %s118 = sphi 0, %s117
    %s132 = sphi 0, %s118
    %s136 = sphi 0, %s136
    %s138 = sphi 0, %s136
    %s139 = sphi 0, %s138
    %s153 = sphi 0, %s139
    %s157 = sphi 0, %s157
    %s159 = sphi 0, %s157
    %s160 = sphi 0, %s159
    %s174 = sphi 0, %s160
    %s180 = sphi 0, %s182
    %s183 = sphi 0, %s180
    %s184 = sphi 0, %s183
    %s200 = sphi 0, %s184
  $region4: #{mixer_forward.5} parent=0 // loop_header_branch
    %16 = sbr.rel (%p14) target = $region8
  $region5: #{mixer_forward.5} parent=0 // loop_body
    %s18 = ssub.s32 %s13, 1
    %s19 = ssub.s32 %s13, 2
    %s20 = sadd.s32 %s13, 1
    %s21 = ssub.s32 %s13, %s20
    %p22 = scmp.eq.s32.totalorder %s21, 0
    %s24 = sadd.s32 %s23, 1
    %s25 = scalar_select %p22, %s23, %s24
    %p28 = pneg %p22
    %p29 = scmp.eq.s32.totalorder %s13, 1
    %p30 = por %p28, %p29
    %p31 = scmp.ne.s32.totalorder %s23, %s26
    %p32 = scmp.eq.s32.totalorder %s13, 0
    %p33 = por %p31, %p32
    %p34 = scmp.ne.s32.totalorder %s23, %s26
    %p35 = scmp.eq.s32.totalorder %s18, 1
    %p36 = por %p34, %p35
    %p37 = scmp.ne.s32.totalorder %s26, %s27
    %p38 = scmp.eq.s32.totalorder %s18, 0
    %p39 = por %p37, %p38
    %p40 = scmp.ne.s32.totalorder %s26, %s27
    %p41 = scmp.eq.s32.totalorder %s19, 1
    %p42 = por %p40, %p41
    %p44 = scmp.ne.s32.totalorder %s27, %s43
    %p45 = scmp.eq.s32.totalorder %s19, 0
    %p46 = por %p44, %p45
    %s47 = ssub.s32 %s13, %s20
    %p48 = scmp.eq.s32.totalorder %s47, 0
    %s50 = sadd.s32 %s49, 1
    %s51 = scalar_select %p48, %s49, %s50
    %p54 = pneg %p48
    %p55 = scmp.eq.s32.totalorder %s13, 1
    %p56 = por %p54, %p55
    %p57 = scmp.ne.s32.totalorder %s49, %s52
    %p58 = scmp.eq.s32.totalorder %s13, 0
    %p59 = por %p57, %p58
    %p60 = scmp.ne.s32.totalorder %s49, %s52
    %p61 = scmp.eq.s32.totalorder %s18, 1
    %p62 = por %p60, %p61
    %p63 = scmp.ne.s32.totalorder %s52, %s53
    %p64 = scmp.eq.s32.totalorder %s18, 0
    %p65 = por %p63, %p64
    %p66 = scmp.ne.s32.totalorder %s52, %s53
    %p67 = scmp.eq.s32.totalorder %s19, 1
    %p68 = por %p66, %p67
    %p70 = scmp.ne.s32.totalorder %s53, %s69
    %p71 = scmp.eq.s32.totalorder %s19, 0
    %p72 = por %p70, %p71
    %s74 = sadd.s32 %s73, 1
    %p77 = scmp.eq.s32.totalorder %s13, 1
    %p78 = scmp.ne.s32.totalorder %s73, %s75
    %p79 = scmp.eq.s32.totalorder %s13, 0
    %p80 = por %p78, %p79
    %p81 = scmp.ne.s32.totalorder %s73, %s75
    %p82 = scmp.eq.s32.totalorder %s18, 1
    %p83 = por %p81, %p82
    %p84 = scmp.ne.s32.totalorder %s75, %s76
    %p85 = scmp.eq.s32.totalorder %s18, 0
    %p86 = por %p84, %p85
    %p87 = scmp.ne.s32.totalorder %s75, %s76
    %p88 = scmp.eq.s32.totalorder %s19, 1
    %p89 = por %p87, %p88
    %p91 = scmp.ne.s32.totalorder %s76, %s90
    %p92 = scmp.eq.s32.totalorder %s19, 0
    %p93 = por %p91, %p92
    %s95 = sadd.s32 %s94, 1
    %p98 = scmp.eq.s32.totalorder %s13, 1
    %p99 = scmp.ne.s32.totalorder %s94, %s96
    %p100 = scmp.eq.s32.totalorder %s13, 0
    %p101 = por %p99, %p100
    %p102 = scmp.ne.s32.totalorder %s94, %s96
    %p103 = scmp.eq.s32.totalorder %s18, 1
    %p104 = por %p102, %p103
    %p105 = scmp.ne.s32.totalorder %s96, %s97
    %p106 = scmp.eq.s32.totalorder %s18, 0
    %p107 = por %p105, %p106
    %p108 = scmp.ne.s32.totalorder %s96, %s97
    %p109 = scmp.eq.s32.totalorder %s19, 1
    %p110 = por %p108, %p109
    %p112 = scmp.ne.s32.totalorder %s97, %s111
    %p113 = scmp.eq.s32.totalorder %s19, 0
    %p114 = por %p112, %p113
    %s116 = sadd.s32 %s115, 1
    %p119 = scmp.eq.s32.totalorder %s13, 1
    %p120 = scmp.ne.s32.totalorder %s115, %s117
    %p121 = scmp.eq.s32.totalorder %s13, 0
    %p122 = por %p120, %p121
    %p123 = scmp.ne.s32.totalorder %s115, %s117
    %p124 = scmp.eq.s32.totalorder %s18, 1
    %p125 = por %p123, %p124
    %p126 = scmp.ne.s32.totalorder %s117, %s118
    %p127 = scmp.eq.s32.totalorder %s18, 0
    %p128 = por %p126, %p127
    %p129 = scmp.ne.s32.totalorder %s117, %s118
    %p130 = scmp.eq.s32.totalorder %s19, 1
    %p131 = por %p129, %p130
    %p133 = scmp.ne.s32.totalorder %s118, %s132
    %p134 = scmp.eq.s32.totalorder %s19, 0
    %p135 = por %p133, %p134
    %s137 = sadd.s32 %s136, 1
    %p140 = scmp.eq.s32.totalorder %s13, 1
    %p141 = scmp.ne.s32.totalorder %s136, %s138
    %p142 = scmp.eq.s32.totalorder %s13, 0
    %p143 = por %p141, %p142
    %p144 = scmp.ne.s32.totalorder %s136, %s138
    %p145 = scmp.eq.s32.totalorder %s18, 1
    %p146 = por %p144, %p145
    %p147 = scmp.ne.s32.totalorder %s138, %s139
    %p148 = scmp.eq.s32.totalorder %s18, 0
    %p149 = por %p147, %p148
    %p150 = scmp.ne.s32.totalorder %s138, %s139
    %p151 = scmp.eq.s32.totalorder %s19, 1
    %p152 = por %p150, %p151
    %p154 = scmp.ne.s32.totalorder %s139, %s153
    %p155 = scmp.eq.s32.totalorder %s19, 0
    %p156 = por %p154, %p155
    %s158 = sadd.s32 %s157, 1
    %p161 = scmp.eq.s32.totalorder %s13, 1
    %p162 = scmp.ne.s32.totalorder %s157, %s159
    %p163 = scmp.eq.s32.totalorder %s13, 0
    %p164 = por %p162, %p163
    %p165 = scmp.ne.s32.totalorder %s157, %s159
    %p166 = scmp.eq.s32.totalorder %s18, 1
    %p167 = por %p165, %p166
    %p168 = scmp.ne.s32.totalorder %s159, %s160
    %p169 = scmp.eq.s32.totalorder %s18, 0
    %p170 = por %p168, %p169
    %p171 = scmp.ne.s32.totalorder %s159, %s160
    %p172 = scmp.eq.s32.totalorder %s19, 1
    %p173 = por %p171, %p172
    %p175 = scmp.ne.s32.totalorder %s160, %s174
    %p176 = scmp.eq.s32.totalorder %s19, 0
    %p177 = por %p175, %p176
    %s178 = ssub.s32 %s13, %s20
    %p179 = scmp.eq.s32.totalorder %s178, 0
    %s181 = sadd.s32 %s180, 1
    %s182 = scalar_select %p179, %s180, %s181
    %p185 = pneg %p179
    %p186 = scmp.eq.s32.totalorder %s13, 1
    %p187 = por %p185, %p186
    %p188 = scmp.ne.s32.totalorder %s180, %s183
    %p189 = scmp.eq.s32.totalorder %s13, 0
    %p190 = por %p188, %p189
    %p191 = scmp.ne.s32.totalorder %s180, %s183
    %p192 = scmp.eq.s32.totalorder %s18, 1
    %p193 = por %p191, %p192
    %p194 = scmp.ne.s32.totalorder %s183, %s184
    %p195 = scmp.eq.s32.totalorder %s18, 0
    %p196 = por %p194, %p195
    %p197 = scmp.ne.s32.totalorder %s183, %s184
    %p198 = scmp.eq.s32.totalorder %s19, 1
    %p199 = por %p197, %p198
    %p201 = scmp.ne.s32.totalorder %s184, %s200
    %p202 = scmp.eq.s32.totalorder %s19, 0
    %p203 = por %p201, %p202
    %p204 = scmp.le.s32.totalorder 1, %s13
    %p205 = scmp.lt.s32.totalorder %s13, 3
    %p206 = pnand %p204, %p205
    %p207 = pneg %p206
    // Predicated region
    $region9: #{mixer_forward.5} parent=5 // pred_check
      _
    $region10: #{mixer_forward.5} parent=5 // pred_check_branch
      %209 = sbr.rel (%p206) target = $region12
    $region11: #{mixer_forward.5} parent=5 // pred_region
      %s210 = ssub.s32 %s13, 1
      // Predicated region
      $region13: #{mixer_forward.5} parent=11 // pred_check
        %p211 = pneg %p86
      $region14: #{mixer_forward.5} parent=11 // pred_check_branch
        %213 = sbr.rel (%p211) target = $region16
      $region15: #{mixer_forward.5} parent=11 // pred_region
        _
      $region16: #{mixer_forward.5} parent=11 // pred_fallthru
        _
      // Predicated region
      $region17: #{mixer_forward.5} parent=11 // pred_check
        %p214 = pneg %p107
      $region18: #{mixer_forward.5} parent=11 // pred_check_branch
        %216 = sbr.rel (%p214) target = $region20
      $region19: #{mixer_forward.5} parent=11 // pred_region
        _
      $region20: #{mixer_forward.5} parent=11 // pred_fallthru
        _
      // Predicated region
      $region21: #{mixer_forward.5} parent=11 // pred_check
        %p217 = pneg %p128
      $region22: #{mixer_forward.5} parent=11 // pred_check_branch
        %219 = sbr.rel (%p217) target = $region24
      $region23: #{mixer_forward.5} parent=11 // pred_region
        _
      $region24: #{mixer_forward.5} parent=11 // pred_fallthru
        _
      // Predicated region
      $region25: #{mixer_forward.5} parent=11 // pred_check
        %p220 = pneg %p149
      $region26: #{mixer_forward.5} parent=11 // pred_check_branch
        %222 = sbr.rel (%p220) target = $region28
      $region27: #{mixer_forward.5} parent=11 // pred_region
        _
      $region28: #{mixer_forward.5} parent=11 // pred_fallthru
        _
      // Predicated region
      $region29: #{mixer_forward.5} parent=11 // pred_check
        %p223 = pneg %p170
      $region30: #{mixer_forward.5} parent=11 // pred_check_branch
        %225 = sbr.rel (%p223) target = $region32
      $region31: #{mixer_forward.5} parent=11 // pred_region
        _
      $region32: #{mixer_forward.5} parent=11 // pred_fallthru
        _
    $region12: #{mixer_forward.5} parent=5 // pred_fallthru
      _
    %p226 = scmp.lt.s32.totalorder %s13, 2
    // Predicated region
    $region33: #{mixer_forward.5} parent=5 // pred_check
      %p227 = pneg %p226
    $region34: #{mixer_forward.5} parent=5 // pred_check_branch
      %229 = sbr.rel (%p227) target = $region36
    $region35: #{mixer_forward.5} parent=5 // pred_region
      // Predicated region
      $region37: #{mixer_forward.5} parent=35 // pred_check
        %p230 = pneg %p33
      $region38: #{mixer_forward.5} parent=35 // pred_check_branch
        %232 = sbr.rel (%p230) target = $region40
      $region39: #{mixer_forward.5} parent=35 // pred_region
        %p233 = scmp.lt.s32.totalorder %s13, 1
        %s234 = scalar_select %p233, %s13, 1
        %s235 = smul.addr %s234, 32
        %s236 = smul.addr %s235, 8
        %s237 = scalar_lea.vmem %s0, %s236
      $region40: #{mixer_forward.5} parent=35 // pred_fallthru
        _
      // Predicated region
      $region41: #{mixer_forward.5} parent=35 // pred_check
        %p238 = pneg %p59
      $region42: #{mixer_forward.5} parent=35 // pred_check_branch
        %240 = sbr.rel (%p238) target = $region44
      $region43: #{mixer_forward.5} parent=35 // pred_region
        %p241 = scmp.lt.s32.totalorder %s13, 1
        %s242 = scalar_select %p241, %s13, 1
        %s243 = smul.addr %s242, 8
        %s244 = smul.addr %s243, 8
        %s245 = scalar_lea.vmem %s1, %s244
      $region44: #{mixer_forward.5} parent=35 // pred_fallthru
        _
    $region36: #{mixer_forward.5} parent=5 // pred_fallthru
      _
    %p246 = scmp.le.s32.totalorder 1, %s13
    %p247 = scmp.lt.s32.totalorder %s13, 3
    %p248 = pnand %p246, %p247
    %p249 = pneg %p248
    // Predicated region
    $region45: #{mixer_forward.5} parent=5 // pred_check
      _
    $region46: #{mixer_forward.5} parent=5 // pred_check_branch
      %251 = sbr.rel (%p248) target = $region48
    $region47: #{mixer_forward.5} parent=5 // pred_region
      %s252 = ssub.s32 %s13, 1
      %p253 = scmp.lt.s32.totalorder %s18, 1
      %s254 = scalar_select %p253, %s18, 1
      %s255 = smul.addr %s254, 32
      %s256 = smul.addr %s255, 8
      %s257 = scalar_lea.vmem %s0, %s256
      %p258 = pneg %p39
      %p259 = pneg %p36
      %p260 = scmp.lt.s32.totalorder %s18, 1
      %s261 = scalar_select %p260, %s18, 1
      %s262 = smul.addr %s261, 8
      %s263 = smul.addr %s262, 8
      %s264 = scalar_lea.vmem %s1, %s263
      %p265 = pneg %p65
      %p266 = pneg %p62
      %p267 = pneg %p86
      %p268 = pneg %p83
      %p269 = pneg %p107
      %p270 = pneg %p104
      %p271 = pneg %p128
      %p272 = pneg %p125
      %p273 = pneg %p149
      %p274 = pneg %p146
      %p275 = pneg %p170
      %p276 = pneg %p167
      %p277 = pneg %p196
      %p278 = pneg %p193
      %p279 = scmp.lt.s32.totalorder %s18, 1
      %s280 = scalar_select %p279, %s18, 1
      %s281 = smul.addr %s280, 4
      %s282 = smul.addr %s281, 4
      %s283 = scalar_lea.vmem %s7, %s282
      %p284 = scmp.lt.s32.totalorder %s18, 1
      %s285 = scalar_select %p284, %s18, 1
      %s286 = smul.addr %s285, 32
      %s287 = smul.addr %s286, 8
      %s288 = scalar_lea.vmem %s0, %s287
      %p289 = scmp.lt.s32.totalorder %s18, 1
      %s290 = scalar_select %p289, %s18, 1
      %s291 = smul.addr %s290, 8
      %s292 = smul.addr %s291, 8
      %s293 = scalar_lea.vmem %s1, %s292
      %p294 = scmp.lt.s32.totalorder %s18, 1
      %s295 = scalar_select %p294, %s18, 1
      %s296 = smul.addr %s295, 4
      %s297 = smul.addr %s296, 4
      %s298 = scalar_lea.vmem %s7, %s297
      %vm300 = vcmask 130048
      %301 = vst.msk [vmem:[#allocation2] sm:$0xff] %vm300, 0.0
      %302 = vst.msk [vmem:[#allocation2 + $0x8] sm:$0xff] %vm300, 0.0
      %vm303 = vcmask 123904
      %304 = vst.msk [vmem:[#allocation2 + $0x10] sm:$0x3] %vm303, 0.0
      %s305 = scalar_lea.vmem [#allocation2], 408
      %306 = vst.msk [vmem:[%s305] sm:$0xff] %vm300, 0.0
      %307 = vst.msk [vmem:[%s305 + $0x8] sm:$0xff] %vm300, 0.0
      %308 = vst.msk [vmem:[%s305 + $0x10] sm:$0x3] %vm303, 0.0
      %vm309 = vcmask 122880
      %310 = vst.msk [vmem:[#allocation2] sm:$0x1] %vm309, 0.0
      %311 = vst.msk [vmem:[#allocation2 + $0x18] sm:$0x1] %vm309, 0.0
      %312 = vst.msk [vmem:[#allocation2 + $0x30] sm:$0x1] %vm309, 0.0
      %313 = vst.msk [vmem:[#allocation2 + $0x48] sm:$0x1] %vm309, 0.0
      %314 = vst.msk [vmem:[#allocation2 + $0x60] sm:$0x1] %vm309, 0.0
      %315 = vst.msk [vmem:[#allocation2 + $0x78] sm:$0x1] %vm309, 0.0
      %316 = vst.msk [vmem:[#allocation2 + $0x90] sm:$0x1] %vm309, 0.0
      %317 = vst.msk [vmem:[#allocation2 + $0xa8] sm:$0x1] %vm309, 0.0
      %318 = vst.msk [vmem:[#allocation2 + $0xc0] sm:$0x1] %vm309, 0.0
      %319 = vst.msk [vmem:[#allocation2 + $0xd8] sm:$0x1] %vm309, 0.0
      %320 = vst.msk [vmem:[#allocation2 + $0xf0] sm:$0x1] %vm309, 0.0
      %321 = vst.msk [vmem:[#allocation2 + $0x108] sm:$0x1] %vm309, 0.0
      %322 = vst.msk [vmem:[#allocation2 + $0x120] sm:$0x1] %vm309, 0.0
      %323 = vst.msk [vmem:[#allocation2 + $0x138] sm:$0x1] %vm309, 0.0
      %324 = vst.msk [vmem:[#allocation2 + $0x150] sm:$0x1] %vm309, 0.0
      %325 = vst.msk [vmem:[#allocation2 + $0x168] sm:$0x1] %vm309, 0.0
      %326 = vst.msk [vmem:[#allocation2 + $0x180] sm:$0x1] %vm309, 0.0
      %327 = vst.msk [vmem:[#allocation2 + $0x198] sm:$0x1] %vm309, 0.0
      %328 = vst.msk [vmem:[#allocation2 + $0x11] sm:$0x1] %vm309, 0.0
      %329 = vst.msk [vmem:[#allocation2 + $0x29] sm:$0x1] %vm309, 0.0
      %330 = vst.msk [vmem:[#allocation2 + $0x41] sm:$0x1] %vm309, 0.0
      %331 = vst.msk [vmem:[#allocation2 + $0x59] sm:$0x1] %vm309, 0.0
      %332 = vst.msk [vmem:[#allocation2 + $0x71] sm:$0x1] %vm309, 0.0
      %333 = vst.msk [vmem:[#allocation2 + $0x89] sm:$0x1] %vm309, 0.0
      %334 = vst.msk [vmem:[#allocation2 + $0xa1] sm:$0x1] %vm309, 0.0
      %335 = vst.msk [vmem:[#allocation2 + $0xb9] sm:$0x1] %vm309, 0.0
      %336 = vst.msk [vmem:[#allocation2 + $0xd1] sm:$0x1] %vm309, 0.0
      %337 = vst.msk [vmem:[#allocation2 + $0xe9] sm:$0x1] %vm309, 0.0
      %338 = vst.msk [vmem:[#allocation2 + $0x101] sm:$0x1] %vm309, 0.0
      %339 = vst.msk [vmem:[#allocation2 + $0x119] sm:$0x1] %vm309, 0.0
      %340 = vst.msk [vmem:[#allocation2 + $0x131] sm:$0x1] %vm309, 0.0
      %341 = vst.msk [vmem:[#allocation2 + $0x149] sm:$0x1] %vm309, 0.0
      %342 = vst.msk [vmem:[#allocation2 + $0x161] sm:$0x1] %vm309, 0.0
      %343 = vst.msk [vmem:[#allocation2 + $0x179] sm:$0x1] %vm309, 0.0
      %344 = vst.msk [vmem:[#allocation2 + $0x191] sm:$0x1] %vm309, 0.0
      %345 = vst.msk [vmem:[#allocation2 + $0x1a9] sm:$0x1] %vm309, 0.0
      %v346 = vld [vmem:[%s288] sm:$0xff]
      %v347 = vld [vmem:[%s288 + $0x8] sm:$0xff]
      %v348 = vld [vmem:[%s288 + $0x10] sm:$0xff]
      %v349 = vld [vmem:[%s288 + $0x18] sm:$0xff]
      %v350 = vld [vmem:[%s288 + $0x20] sm:$0xff]
      %v351 = vld [vmem:[%s288 + $0x28] sm:$0xff]
      %v352 = vld [vmem:[%s288 + $0x30] sm:$0xff]
      %v353 = vld [vmem:[%s288 + $0x38] sm:$0xff]
      %v354 = vld [vmem:[%s288 + $0x40] sm:$0xff]
      %v355 = vld [vmem:[%s288 + $0x48] sm:$0xff]
      %v356 = vld [vmem:[%s288 + $0x50] sm:$0xff]
      %v357 = vld [vmem:[%s288 + $0x58] sm:$0xff]
      %v358 = vld [vmem:[%s288 + $0x60] sm:$0xff]
      %v359 = vld [vmem:[%s288 + $0x68] sm:$0xff]
      %v360 = vld [vmem:[%s288 + $0x70] sm:$0xff]
      %v361 = vld [vmem:[%s288 + $0x78] sm:$0xff]
      %v362 = vld [vmem:[%s288 + $0x80] sm:$0xff]
      %v363 = vld [vmem:[%s288 + $0x88] sm:$0xff]
      %v364 = vld [vmem:[%s288 + $0x90] sm:$0xff]
      %v365 = vld [vmem:[%s288 + $0x98] sm:$0xff]
      %v366 = vld [vmem:[%s288 + $0xa0] sm:$0xff]
      %v367 = vld [vmem:[%s288 + $0xa8] sm:$0xff]
      %v368 = vld [vmem:[%s288 + $0xb0] sm:$0xff]
      %v369 = vld [vmem:[%s288 + $0xb8] sm:$0xff]
      %v370 = vld [vmem:[%s288 + $0xc0] sm:$0xff]
      %v371 = vld [vmem:[%s288 + $0xc8] sm:$0xff]
      %v372 = vld [vmem:[%s288 + $0xd0] sm:$0xff]
      %v373 = vld [vmem:[%s288 + $0xd8] sm:$0xff]
      %v374 = vld [vmem:[%s288 + $0xe0] sm:$0xff]
      %v375 = vld [vmem:[%s288 + $0xe8] sm:$0xff]
      %v376 = vld [vmem:[%s288 + $0xf0] sm:$0xff]
      %v377 = vld [vmem:[%s288 + $0xf8] sm:$0xff]
      %v378 = vpack.c.bf16 %v347, %v346
      %v379 = vpack.c.bf16 %v349, %v348
      %v380 = vpack.c.bf16 %v351, %v350
      %v381 = vpack.c.bf16 %v353, %v352
      %v382 = vpack.c.bf16 %v355, %v354
      %v383 = vpack.c.bf16 %v357, %v356
      %v384 = vpack.c.bf16 %v359, %v358
      %v385 = vpack.c.bf16 %v361, %v360
      %v386 = vpack.c.bf16 %v363, %v362
      %v387 = vpack.c.bf16 %v365, %v364
      %v388 = vpack.c.bf16 %v367, %v366
      %v389 = vpack.c.bf16 %v369, %v368
      %v390 = vpack.c.bf16 %v371, %v370
      %v391 = vpack.c.bf16 %v373, %v372
      %v392 = vpack.c.bf16 %v375, %v374
      %v393 = vpack.c.bf16 %v377, %v376
      %v394 = vld [vmem:[%s2] sm:$0xf]
      %vm395 = vcmask 64512
      %v397 = vsel %vm395, %v378, 0
      %v400 = vsel %vm395, %v379, 0
      %v403 = vsel %vm395, %v380, 0
      %v406 = vsel %vm395, %v381, 0
      %v409 = vsel %vm395, %v382, 0
      %v412 = vsel %vm395, %v383, 0
      %v415 = vsel %vm395, %v384, 0
      %v418 = vsel %vm395, %v385, 0
      %v421 = vsel %vm395, %v386, 0
      %v424 = vsel %vm395, %v387, 0
      %v427 = vsel %vm395, %v388, 0
      %v430 = vsel %vm395, %v389, 0
      %v433 = vsel %vm395, %v390, 0
      %v436 = vsel %vm395, %v391, 0
      %v439 = vsel %vm395, %v392, 0
      %v442 = vsel %vm395, %v393, 0
      %vm444 = vcmask 1043456
      %v446 = vsel %vm444, %v394, 0
      %448 = vmatprep.subr.bf16.mxu0 0
      %449 = vmatpush1.bf16.msra.mxu0 0
      %450 = vmatprep.subr.bf16.mxu0 0
      %451 = vmatpush1.bf16.msra.mxu0 0
      %452 = vmatprep.subr.bf16.mxu0 0
      %453 = vmatpush1.bf16.msra.mxu0 0
      %454 = vmatprep.subr.bf16.mxu0 0
      %455 = vmatpush1.bf16.msra.mxu0 0
      %456 = vmatprep.subr.bf16.mxu0 0
      %457 = vmatpush1.bf16.msra.mxu0 0
      %458 = vmatprep.subr.bf16.mxu0 0
      %459 = vmatpush1.bf16.msra.mxu0 0
      %460 = vmatprep.subr.bf16.mxu0 0
      %461 = vmatpush1.bf16.msra.mxu0 0
      %462 = vmatprep.subr.bf16.mxu0 0
      %463 = vmatpush1.bf16.msra.mxu0 %v446
      %464 = vmatprep.subr.bf16.mxu0 0
      %465 = vmatpush2.bf16.msra.mxu0 0
      %466 = vmatprep.subr.bf16.mxu0 0
      %467 = vmatpush2.bf16.msra.mxu0 0
      %468 = vmatprep.subr.bf16.mxu0 0
      %469 = vmatpush2.bf16.msra.mxu0 0
      %470 = vmatprep.subr.bf16.mxu0 0
      %471 = vmatpush2.bf16.msra.mxu0 0
      %472 = vmatprep.subr.bf16.mxu0 0
      %473 = vmatpush2.bf16.msra.mxu0 0
      %474 = vmatprep.subr.bf16.mxu0 0
      %475 = vmatpush2.bf16.msra.mxu0 0
      %476 = vmatprep.subr.bf16.mxu0 0
      %477 = vmatpush2.bf16.msra.mxu0 0
      %478 = vmatprep.subr.bf16.mxu0 0
      %479 = vmatpush2.bf16.msra.mxu0 0
      %480 = vmatprep.mubr.bf16.mxu0 0
      %481 = vmatmul.mubr.bf16.gmra.mxu0 %v397
      %v482 = vpop.f32.mrf.mxu0
      %v483 = vadd.f32 0.0, %v482
      %v484 = vpop.f32.mrf.mxu0
      %v485 = vpop.f32.mrf.mxu0
      %v486 = vadd.f32 0.0, %v485
      %v487 = vpop.f32.mrf.mxu0
      %488 = vmatprep.mubr.bf16.mxu0 0
      %489 = vmatmul.mubr.bf16.gmra.mxu0 %v400
      %v490 = vpop.f32.mrf.mxu0
      %v491 = vadd.f32 0.0, %v490
      %v492 = vpop.f32.mrf.mxu0
      %v493 = vpop.f32.mrf.mxu0
      %v494 = vadd.f32 0.0, %v493
      %v495 = vpop.f32.mrf.mxu0
      %496 = vmatprep.mubr.bf16.mxu0 0
      %497 = vmatmul.mubr.bf16.gmra.mxu0 %v403
      %v498 = vpop.f32.mrf.mxu0
      %v499 = vadd.f32 0.0, %v498
      %v500 = vpop.f32.mrf.mxu0
      %v501 = vpop.f32.mrf.mxu0
      %v502 = vadd.f32 0.0, %v501
      %v503 = vpop.f32.mrf.mxu0
      %504 = vmatprep.mubr.bf16.mxu0 0
      %505 = vmatmul.mubr.bf16.gmra.mxu0 %v406
      %v506 = vpop.f32.mrf.mxu0
      %v507 = vadd.f32 0.0, %v506
      %v508 = vpop.f32.mrf.mxu0
      %v509 = vpop.f32.mrf.mxu0
      %v510 = vadd.f32 0.0, %v509
      %v511 = vpop.f32.mrf.mxu0
      %512 = vmatprep.mubr.bf16.mxu0 0
      %513 = vmatmul.mubr.bf16.gmra.mxu0 %v409
      %v514 = vpop.f32.mrf.mxu0
      %v515 = vadd.f32 0.0, %v514
      %v516 = vpop.f32.mrf.mxu0
      %v517 = vpop.f32.mrf.mxu0
      %v518 = vadd.f32 0.0, %v517
      %v519 = vpop.f32.mrf.mxu0
      %520 = vmatprep.mubr.bf16.mxu0 0
      %521 = vmatmul.mubr.bf16.gmra.mxu0 %v412
      %v522 = vpop.f32.mrf.mxu0
      %v523 = vadd.f32 0.0, %v522
      %v524 = vpop.f32.mrf.mxu0
      %v525 = vpop.f32.mrf.mxu0
      %v526 = vadd.f32 0.0, %v525
      %v527 = vpop.f32.mrf.mxu0
      %528 = vmatprep.mubr.bf16.mxu0 0
      %529 = vmatmul.mubr.bf16.gmra.mxu0 %v415
      %v530 = vpop.f32.mrf.mxu0
      %v531 = vadd.f32 0.0, %v530
      %v532 = vpop.f32.mrf.mxu0
      %v533 = vpop.f32.mrf.mxu0
      %v534 = vadd.f32 0.0, %v533
      %v535 = vpop.f32.mrf.mxu0
      %536 = vmatprep.mubr.bf16.mxu0 0
      %537 = vmatmul.mubr.bf16.gmra.mxu0 %v418
      %v538 = vpop.f32.mrf.mxu0
      %v539 = vadd.f32 0.0, %v538
      %v540 = vpop.f32.mrf.mxu0
      %v541 = vpop.f32.mrf.mxu0
      %v542 = vadd.f32 0.0, %v541
      %v543 = vpop.f32.mrf.mxu0
      %544 = vmatprep.mubr.bf16.mxu0 0
      %545 = vmatmul.mubr.bf16.gmra.mxu0 %v421
      %v546 = vpop.f32.mrf.mxu0
      %v547 = vadd.f32 0.0, %v546
      %v548 = vpop.f32.mrf.mxu0
      %v549 = vpop.f32.mrf.mxu0
      %v550 = vadd.f32 0.0, %v549
      %v551 = vpop.f32.mrf.mxu0
      %552 = vmatprep.mubr.bf16.mxu0 0
      %553 = vmatmul.mubr.bf16.gmra.mxu0 %v424
      %v554 = vpop.f32.mrf.mxu0
      %v555 = vadd.f32 0.0, %v554
      %v556 = vpop.f32.mrf.mxu0
      %v557 = vpop.f32.mrf.mxu0
      %v558 = vadd.f32 0.0, %v557
      %v559 = vpop.f32.mrf.mxu0
      %560 = vmatprep.mubr.bf16.mxu0 0
      %561 = vmatmul.mubr.bf16.gmra.mxu0 %v427
      %v562 = vpop.f32.mrf.mxu0
      %v563 = vadd.f32 0.0, %v562
      %v564 = vpop.f32.mrf.mxu0
      %v565 = vpop.f32.mrf.mxu0
      %v566 = vadd.f32 0.0, %v565
      %v567 = vpop.f32.mrf.mxu0
      %568 = vmatprep.mubr.bf16.mxu0 0
      %569 = vmatmul.mubr.bf16.gmra.mxu0 %v430
      %v570 = vpop.f32.mrf.mxu0
      %v571 = vadd.f32 0.0, %v570
      %v572 = vpop.f32.mrf.mxu0
      %v573 = vpop.f32.mrf.mxu0
      %v574 = vadd.f32 0.0, %v573
      %v575 = vpop.f32.mrf.mxu0
      %576 = vmatprep.mubr.bf16.mxu0 0
      %577 = vmatmul.mubr.bf16.gmra.mxu0 %v433
      %v578 = vpop.f32.mrf.mxu0
      %v579 = vadd.f32 0.0, %v578
      %v580 = vpop.f32.mrf.mxu0
      %v581 = vpop.f32.mrf.mxu0
      %v582 = vadd.f32 0.0, %v581
      %v583 = vpop.f32.mrf.mxu0
      %584 = vmatprep.mubr.bf16.mxu0 0
      %585 = vmatmul.mubr.bf16.gmra.mxu0 %v436
      %v586 = vpop.f32.mrf.mxu0
      %v587 = vadd.f32 0.0, %v586
      %v588 = vpop.f32.mrf.mxu0
      %v589 = vpop.f32.mrf.mxu0
      %v590 = vadd.f32 0.0, %v589
      %v591 = vpop.f32.mrf.mxu0
      %592 = vmatprep.mubr.bf16.mxu0 0
      %593 = vmatmul.mubr.bf16.gmra.mxu0 %v439
      %v594 = vpop.f32.mrf.mxu0
      %v595 = vadd.f32 0.0, %v594
      %v596 = vpop.f32.mrf.mxu0
      %v597 = vpop.f32.mrf.mxu0
      %v598 = vadd.f32 0.0, %v597
      %v599 = vpop.f32.mrf.mxu0
      %600 = vmatprep.mubr.bf16.mxu0 0
      %601 = vmatmul.mubr.bf16.gmra.mxu0 %v442
      %v602 = vpop.f32.mrf.mxu0
      %v603 = vadd.f32 0.0, %v602
      %v604 = vpop.f32.mrf.mxu0
      %v605 = vpop.f32.mrf.mxu0
      %v606 = vadd.f32 0.0, %v605
      %v607 = vpop.f32.mrf.mxu0
      %608 = vdwg.mxu0
      %s609 = scalar_lea.vmem [#allocation2], 24
      %610 = vst.msk [vmem:[%s609 + $0x1] sm:$0xff] %vm395, %v483
      %611 = vst.msk [vmem:[%s609 + $0x9] sm:$0xff] %vm395, %v486
      %612 = vst.msk [vmem:[%s609 + $0x19] sm:$0xff] %vm395, %v491
      %613 = vst.msk [vmem:[%s609 + $0x21] sm:$0xff] %vm395, %v494
      %614 = vst.msk [vmem:[%s609 + $0x31] sm:$0xff] %vm395, %v499
      %615 = vst.msk [vmem:[%s609 + $0x39] sm:$0xff] %vm395, %v502
      %616 = vst.msk [vmem:[%s609 + $0x49] sm:$0xff] %vm395, %v507
      %617 = vst.msk [vmem:[%s609 + $0x51] sm:$0xff] %vm395, %v510
      %618 = vst.msk [vmem:[%s609 + $0x61] sm:$0xff] %vm395, %v515
      %619 = vst.msk [vmem:[%s609 + $0x69] sm:$0xff] %vm395, %v518
      %620 = vst.msk [vmem:[%s609 + $0x79] sm:$0xff] %vm395, %v523
      %621 = vst.msk [vmem:[%s609 + $0x81] sm:$0xff] %vm395, %v526
      %622 = vst.msk [vmem:[%s609 + $0x91] sm:$0xff] %vm395, %v531
      %623 = vst.msk [vmem:[%s609 + $0x99] sm:$0xff] %vm395, %v534
      %624 = vst.msk [vmem:[%s609 + $0xa9] sm:$0xff] %vm395, %v539
      %625 = vst.msk [vmem:[%s609 + $0xb1] sm:$0xff] %vm395, %v542
      %626 = vst.msk [vmem:[%s609 + $0xc1] sm:$0xff] %vm395, %v547
      %627 = vst.msk [vmem:[%s609 + $0xc9] sm:$0xff] %vm395, %v550
      %628 = vst.msk [vmem:[%s609 + $0xd9] sm:$0xff] %vm395, %v555
      %629 = vst.msk [vmem:[%s609 + $0xe1] sm:$0xff] %vm395, %v558
      %630 = vst.msk [vmem:[%s609 + $0xf1] sm:$0xff] %vm395, %v563
      %631 = vst.msk [vmem:[%s609 + $0xf9] sm:$0xff] %vm395, %v566
      %632 = vst.msk [vmem:[%s609 + $0x109] sm:$0xff] %vm395, %v571
      %633 = vst.msk [vmem:[%s609 + $0x111] sm:$0xff] %vm395, %v574
      %634 = vst.msk [vmem:[%s609 + $0x121] sm:$0xff] %vm395, %v579
      %635 = vst.msk [vmem:[%s609 + $0x129] sm:$0xff] %vm395, %v582
      %636 = vst.msk [vmem:[%s609 + $0x139] sm:$0xff] %vm395, %v587
      %637 = vst.msk [vmem:[%s609 + $0x141] sm:$0xff] %vm395, %v590
      %638 = vst.msk [vmem:[%s609 + $0x151] sm:$0xff] %vm395, %v595
      %639 = vst.msk [vmem:[%s609 + $0x159] sm:$0xff] %vm395, %v598
      %640 = vst.msk [vmem:[%s609 + $0x169] sm:$0xff] %vm395, %v603
      %641 = vst.msk [vmem:[%s609 + $0x171] sm:$0xff] %vm395, %v606
      %v642 = vld [vmem:[#allocation2] sm:$0xff]
      %v643 = vld [vmem:[#allocation2 + $0x8] sm:$0xff]
      %v644 = vld [vmem:[#allocation2 + $0x18] sm:$0xff]
      %v645 = vld [vmem:[#allocation2 + $0x20] sm:$0xff]
      %v646 = vld [vmem:[#allocation2 + $0x30] sm:$0xff]
      %v647 = vld [vmem:[#allocation2 + $0x38] sm:$0xff]
      %v648 = vld [vmem:[#allocation2 + $0x48] sm:$0xff]
      %v649 = vld [vmem:[#allocation2 + $0x50] sm:$0xff]
      %v650 = vld [vmem:[#allocation2 + $0x60] sm:$0xff]
      %v651 = vld [vmem:[#allocation2 + $0x68] sm:$0xff]
      %v652 = vld [vmem:[#allocation2 + $0x78] sm:$0xff]
      %v653 = vld [vmem:[#allocation2 + $0x80] sm:$0xff]
      %v654 = vld [vmem:[#allocation2 + $0x90] sm:$0xff]
      %v655 = vld [vmem:[#allocation2 + $0x98] sm:$0xff]
      %v656 = vld [vmem:[#allocation2 + $0xa8] sm:$0xff]
      %v657 = vld [vmem:[#allocation2 + $0xb0] sm:$0xff]
      %v658 = vld [vmem:[#allocation2 + $0xc0] sm:$0xff]
      %v659 = vld [vmem:[#allocation2 + $0xc8] sm:$0xff]
      %v660 = vld [vmem:[#allocation2 + $0xd8] sm:$0xff]
      %v661 = vld [vmem:[#allocation2 + $0xe0] sm:$0xff]
      %v662 = vld [vmem:[#allocation2 + $0xf0] sm:$0xff]
      %v663 = vld [vmem:[#allocation2 + $0xf8] sm:$0xff]
      %v664 = vld [vmem:[#allocation2 + $0x108] sm:$0xff]
      %v665 = vld [vmem:[#allocation2 + $0x110] sm:$0xff]
      %v666 = vld [vmem:[#allocation2 + $0x120] sm:$0xff]
      %v667 = vld [vmem:[#allocation2 + $0x128] sm:$0xff]
      %v668 = vld [vmem:[#allocation2 + $0x138] sm:$0xff]
      %v669 = vld [vmem:[#allocation2 + $0x140] sm:$0xff]
      %v670 = vld [vmem:[#allocation2 + $0x150] sm:$0xff]
      %v671 = vld [vmem:[#allocation2 + $0x158] sm:$0xff]
      %v672 = vld [vmem:[#allocation2 + $0x168] sm:$0xff]
      %v673 = vld [vmem:[#allocation2 + $0x170] sm:$0xff]
      %v674 = vld [vmem:[%s3] sm:$0x1]
      %v675 = vlaneseq
      %v676 = vshrl.u32 %v675, 7
      %v677 = vsub.s32 0, %v676
      %v678 = vrot.slane %v674, %v677
      %v679 = vmul.f32 %v642, %v678
      %v680 = vmul.f32 %v643, %v678
      %v681 = vmul.f32 %v644, %v678
      %v682 = vmul.f32 %v645, %v678
      %v683 = vmul.f32 %v646, %v678
      %v684 = vmul.f32 %v647, %v678
      %v685 = vmul.f32 %v648, %v678
      %v686 = vmul.f32 %v649, %v678
      %v687 = vmul.f32 %v650, %v678
      %v688 = vmul.f32 %v651, %v678
      %v689 = vmul.f32 %v652, %v678
      %v690 = vmul.f32 %v653, %v678
      %v691 = vmul.f32 %v654, %v678
      %v692 = vmul.f32 %v655, %v678
      %v693 = vmul.f32 %v656, %v678
      %v694 = vmul.f32 %v657, %v678
      %v695 = vmul.f32 %v658, %v678
      %v696 = vmul.f32 %v659, %v678
      %v697 = vmul.f32 %v660, %v678
      %v698 = vmul.f32 %v661, %v678
      %v699 = vmul.f32 %v662, %v678
      %v700 = vmul.f32 %v663, %v678
      %v701 = vmul.f32 %v664, %v678
      %v702 = vmul.f32 %v665, %v678
      %v703 = vmul.f32 %v666, %v678
      %v704 = vmul.f32 %v667, %v678
      %v705 = vmul.f32 %v668, %v678
      %v706 = vmul.f32 %v669, %v678
      %v707 = vmul.f32 %v670, %v678
      %v708 = vmul.f32 %v671, %v678
      %v709 = vmul.f32 %v672, %v678
      %v710 = vmul.f32 %v673, %v678
      %v711 = vld [vmem:[#allocation2 + $0x1] sm:$0xff]
      %v712 = vld [vmem:[#allocation2 + $0x9] sm:$0xff]
      %v713 = vld [vmem:[#allocation2 + $0x19] sm:$0xff]
      %v714 = vld [vmem:[#allocation2 + $0x21] sm:$0xff]
      %v715 = vld [vmem:[#allocation2 + $0x31] sm:$0xff]
      %v716 = vld [vmem:[#allocation2 + $0x39] sm:$0xff]
      %v717 = vld [vmem:[#allocation2 + $0x49] sm:$0xff]
      %v718 = vld [vmem:[#allocation2 + $0x51] sm:$0xff]
      %v719 = vld [vmem:[#allocation2 + $0x61] sm:$0xff]
      %v720 = vld [vmem:[#allocation2 + $0x69] sm:$0xff]
      %v721 = vld [vmem:[#allocation2 + $0x79] sm:$0xff]
      %v722 = vld [vmem:[#allocation2 + $0x81] sm:$0xff]
      %v723 = vld [vmem:[#allocation2 + $0x91] sm:$0xff]
      %v724 = vld [vmem:[#allocation2 + $0x99] sm:$0xff]
      %v725 = vld [vmem:[#allocation2 + $0xa9] sm:$0xff]
      %v726 = vld [vmem:[#allocation2 + $0xb1] sm:$0xff]
      %v727 = vld [vmem:[#allocation2 + $0xc1] sm:$0xff]
      %v728 = vld [vmem:[#allocation2 + $0xc9] sm:$0xff]
      %v729 = vld [vmem:[#allocation2 + $0xd9] sm:$0xff]
      %v730 = vld [vmem:[#allocation2 + $0xe1] sm:$0xff]
      %v731 = vld [vmem:[#allocation2 + $0xf1] sm:$0xff]
      %v732 = vld [vmem:[#allocation2 + $0xf9] sm:$0xff]
      %v733 = vld [vmem:[#allocation2 + $0x109] sm:$0xff]
      %v734 = vld [vmem:[#allocation2 + $0x111] sm:$0xff]
      %v735 = vld [vmem:[#allocation2 + $0x121] sm:$0xff]
      %v736 = vld [vmem:[#allocation2 + $0x129] sm:$0xff]
      %v737 = vld [vmem:[#allocation2 + $0x139] sm:$0xff]
      %v738 = vld [vmem:[#allocation2 + $0x141] sm:$0xff]
      %v739 = vld [vmem:[#allocation2 + $0x151] sm:$0xff]
      %v740 = vld [vmem:[#allocation2 + $0x159] sm:$0xff]
      %v741 = vld [vmem:[#allocation2 + $0x169] sm:$0xff]
      %v742 = vld [vmem:[#allocation2 + $0x171] sm:$0xff]
      %v743 = vld [vmem:[%s3 + $0x1] sm:$0x1]
      %v744 = vlaneseq
      %v745 = vshrl.u32 %v744, 7
      %v746 = vsub.s32 0, %v745
      %v747 = vrot.slane %v743, %v746
      %v748 = vmul.f32 %v711, %v747
      %v749 = vmul.f32 %v712, %v747
      %v750 = vmul.f32 %v713, %v747
      %v751 = vmul.f32 %v714, %v747
      %v752 = vmul.f32 %v715, %v747
      %v753 = vmul.f32 %v716, %v747
      %v754 = vmul.f32 %v717, %v747
      %v755 = vmul.f32 %v718, %v747
      %v756 = vmul.f32 %v719, %v747
      %v757 = vmul.f32 %v720, %v747
      %v758 = vmul.f32 %v721, %v747
      %v759 = vmul.f32 %v722, %v747
      %v760 = vmul.f32 %v723, %v747
      %v761 = vmul.f32 %v724, %v747
      %v762 = vmul.f32 %v725, %v747
      %v763 = vmul.f32 %v726, %v747
      %v764 = vmul.f32 %v727, %v747
      %v765 = vmul.f32 %v728, %v747
      %v766 = vmul.f32 %v729, %v747
      %v767 = vmul.f32 %v730, %v747
      %v768 = vmul.f32 %v731, %v747
      %v769 = vmul.f32 %v732, %v747
      %v770 = vmul.f32 %v733, %v747
      %v771 = vmul.f32 %v734, %v747
      %v772 = vmul.f32 %v735, %v747
      %v773 = vmul.f32 %v736, %v747
      %v774 = vmul.f32 %v737, %v747
      %v775 = vmul.f32 %v738, %v747
      %v776 = vmul.f32 %v739, %v747
      %v777 = vmul.f32 %v740, %v747
      %v778 = vmul.f32 %v741, %v747
      %v779 = vmul.f32 %v742, %v747
      %v780 = vadd.f32 %v679, %v748
      %v781 = vadd.f32 %v680, %v749
      %v782 = vadd.f32 %v681, %v750
      %v783 = vadd.f32 %v682, %v751
      %v784 = vadd.f32 %v683, %v752
      %v785 = vadd.f32 %v684, %v753
      %v786 = vadd.f32 %v685, %v754
      %v787 = vadd.f32 %v686, %v755
      %v788 = vadd.f32 %v687, %v756
      %v789 = vadd.f32 %v688, %v757
      %v790 = vadd.f32 %v689, %v758
      %v791 = vadd.f32 %v690, %v759
      %v792 = vadd.f32 %v691, %v760
      %v793 = vadd.f32 %v692, %v761
      %v794 = vadd.f32 %v693, %v762
      %v795 = vadd.f32 %v694, %v763
      %v796 = vadd.f32 %v695, %v764
      %v797 = vadd.f32 %v696, %v765
      %v798 = vadd.f32 %v697, %v766
      %v799 = vadd.f32 %v698, %v767
      %v800 = vadd.f32 %v699, %v768
      %v801 = vadd.f32 %v700, %v769
      %v802 = vadd.f32 %v701, %v770
      %v803 = vadd.f32 %v702, %v771
      %v804 = vadd.f32 %v703, %v772
      %v805 = vadd.f32 %v704, %v773
      %v806 = vadd.f32 %v705, %v774
      %v807 = vadd.f32 %v706, %v775
      %v808 = vadd.f32 %v707, %v776
      %v809 = vadd.f32 %v708, %v777
      %v810 = vadd.f32 %v709, %v778
      %v811 = vadd.f32 %v710, %v779
      %v812 = vld [vmem:[#allocation2 + $0x2] sm:$0xff]
      %v813 = vld [vmem:[#allocation2 + $0xa] sm:$0xff]
      %v814 = vld [vmem:[#allocation2 + $0x1a] sm:$0xff]
      %v815 = vld [vmem:[#allocation2 + $0x22] sm:$0xff]
      %v816 = vld [vmem:[#allocation2 + $0x32] sm:$0xff]
      %v817 = vld [vmem:[#allocation2 + $0x3a] sm:$0xff]
      %v818 = vld [vmem:[#allocation2 + $0x4a] sm:$0xff]
      %v819 = vld [vmem:[#allocation2 + $0x52] sm:$0xff]
      %v820 = vld [vmem:[#allocation2 + $0x62] sm:$0xff]
      %v821 = vld [vmem:[#allocation2 + $0x6a] sm:$0xff]
      %v822 = vld [vmem:[#allocation2 + $0x7a] sm:$0xff]
      %v823 = vld [vmem:[#allocation2 + $0x82] sm:$0xff]
      %v824 = vld [vmem:[#allocation2 + $0x92] sm:$0xff]
      %v825 = vld [vmem:[#allocation2 + $0x9a] sm:$0xff]
      %v826 = vld [vmem:[#allocation2 + $0xaa] sm:$0xff]
      %v827 = vld [vmem:[#allocation2 + $0xb2] sm:$0xff]
      %v828 = vld [vmem:[#allocation2 + $0xc2] sm:$0xff]
      %v829 = vld [vmem:[#allocation2 + $0xca] sm:$0xff]
      %v830 = vld [vmem:[#allocation2 + $0xda] sm:$0xff]
      %v831 = vld [vmem:[#allocation2 + $0xe2] sm:$0xff]
      %v832 = vld [vmem:[#allocation2 + $0xf2] sm:$0xff]
      %v833 = vld [vmem:[#allocation2 + $0xfa] sm:$0xff]
      %v834 = vld [vmem:[#allocation2 + $0x10a] sm:$0xff]
      %v835 = vld [vmem:[#allocation2 + $0x112] sm:$0xff]
      %v836 = vld [vmem:[#allocation2 + $0x122] sm:$0xff]
      %v837 = vld [vmem:[#allocation2 + $0x12a] sm:$0xff]
      %v838 = vld [vmem:[#allocation2 + $0x13a] sm:$0xff]
      %v839 = vld [vmem:[#allocation2 + $0x142] sm:$0xff]
      %v840 = vld [vmem:[#allocation2 + $0x152] sm:$0xff]
      %v841 = vld [vmem:[#allocation2 + $0x15a] sm:$0xff]
      %v842 = vld [vmem:[#allocation2 + $0x16a] sm:$0xff]
      %v843 = vld [vmem:[#allocation2 + $0x172] sm:$0xff]
      %v844 = vld [vmem:[%s3 + $0x2] sm:$0x1]
      %v845 = vlaneseq
      %v846 = vshrl.u32 %v845, 7
      %v847 = vsub.s32 0, %v846
      %v848 = vrot.slane %v844, %v847
      %v849 = vmul.f32 %v812, %v848
      %v850 = vmul.f32 %v813, %v848
      %v851 = vmul.f32 %v814, %v848
      %v852 = vmul.f32 %v815, %v848
      %v853 = vmul.f32 %v816, %v848
      %v854 = vmul.f32 %v817, %v848
      %v855 = vmul.f32 %v818, %v848
      %v856 = vmul.f32 %v819, %v848
      %v857 = vmul.f32 %v820, %v848
      %v858 = vmul.f32 %v821, %v848
      %v859 = vmul.f32 %v822, %v848
      %v860 = vmul.f32 %v823, %v848
      %v861 = vmul.f32 %v824, %v848
      %v862 = vmul.f32 %v825, %v848
      %v863 = vmul.f32 %v826, %v848
      %v864 = vmul.f32 %v827, %v848
      %v865 = vmul.f32 %v828, %v848
      %v866 = vmul.f32 %v829, %v848
      %v867 = vmul.f32 %v830, %v848
      %v868 = vmul.f32 %v831, %v848
      %v869 = vmul.f32 %v832, %v848
      %v870 = vmul.f32 %v833, %v848
      %v871 = vmul.f32 %v834, %v848
      %v872 = vmul.f32 %v835, %v848
      %v873 = vmul.f32 %v836, %v848
      %v874 = vmul.f32 %v837, %v848
      %v875 = vmul.f32 %v838, %v848
      %v876 = vmul.f32 %v839, %v848
      %v877 = vmul.f32 %v840, %v848
      %v878 = vmul.f32 %v841, %v848
      %v879 = vmul.f32 %v842, %v848
      %v880 = vmul.f32 %v843, %v848
      %v881 = vadd.f32 %v780, %v849
      %v882 = vadd.f32 %v781, %v850
      %v883 = vadd.f32 %v782, %v851
      %v884 = vadd.f32 %v783, %v852
      %v885 = vadd.f32 %v784, %v853
      %v886 = vadd.f32 %v785, %v854
      %v887 = vadd.f32 %v786, %v855
      %v888 = vadd.f32 %v787, %v856
      %v889 = vadd.f32 %v788, %v857
      %v890 = vadd.f32 %v789, %v858
      %v891 = vadd.f32 %v790, %v859
      %v892 = vadd.f32 %v791, %v860
      %v893 = vadd.f32 %v792, %v861
      %v894 = vadd.f32 %v793, %v862
      %v895 = vadd.f32 %v794, %v863
      %v896 = vadd.f32 %v795, %v864
      %v897 = vadd.f32 %v796, %v865
      %v898 = vadd.f32 %v797, %v866
      %v899 = vadd.f32 %v798, %v867
      %v900 = vadd.f32 %v799, %v868
      %v901 = vadd.f32 %v800, %v869
      %v902 = vadd.f32 %v801, %v870
      %v903 = vadd.f32 %v802, %v871
      %v904 = vadd.f32 %v803, %v872
      %v905 = vadd.f32 %v804, %v873
      %v906 = vadd.f32 %v805, %v874
      %v907 = vadd.f32 %v806, %v875
      %v908 = vadd.f32 %v807, %v876
      %v909 = vadd.f32 %v808, %v877
      %v910 = vadd.f32 %v809, %v878
      %v911 = vadd.f32 %v810, %v879
      %v912 = vadd.f32 %v811, %v880
      %v913 = vld [vmem:[%s609] sm:$0xff]
      %v914 = vld [vmem:[%s609 + $0x8] sm:$0xff]
      %v915 = vld [vmem:[%s609 + $0x18] sm:$0xff]
      %v916 = vld [vmem:[%s609 + $0x20] sm:$0xff]
      %v917 = vld [vmem:[%s609 + $0x30] sm:$0xff]
      %v918 = vld [vmem:[%s609 + $0x38] sm:$0xff]
      %v919 = vld [vmem:[%s609 + $0x48] sm:$0xff]
      %v920 = vld [vmem:[%s609 + $0x50] sm:$0xff]
      %v921 = vld [vmem:[%s609 + $0x60] sm:$0xff]
      %v922 = vld [vmem:[%s609 + $0x68] sm:$0xff]
      %v923 = vld [vmem:[%s609 + $0x78] sm:$0xff]
      %v924 = vld [vmem:[%s609 + $0x80] sm:$0xff]
      %v925 = vld [vmem:[%s609 + $0x90] sm:$0xff]
      %v926 = vld [vmem:[%s609 + $0x98] sm:$0xff]
      %v927 = vld [vmem:[%s609 + $0xa8] sm:$0xff]
      %v928 = vld [vmem:[%s609 + $0xb0] sm:$0xff]
      %v929 = vld [vmem:[%s609 + $0xc0] sm:$0xff]
      %v930 = vld [vmem:[%s609 + $0xc8] sm:$0xff]
      %v931 = vld [vmem:[%s609 + $0xd8] sm:$0xff]
      %v932 = vld [vmem:[%s609 + $0xe0] sm:$0xff]
      %v933 = vld [vmem:[%s609 + $0xf0] sm:$0xff]
      %v934 = vld [vmem:[%s609 + $0xf8] sm:$0xff]
      %v935 = vld [vmem:[%s609 + $0x108] sm:$0xff]
      %v936 = vld [vmem:[%s609 + $0x110] sm:$0xff]
      %v937 = vld [vmem:[%s609 + $0x120] sm:$0xff]
      %v938 = vld [vmem:[%s609 + $0x128] sm:$0xff]
      %v939 = vld [vmem:[%s609 + $0x138] sm:$0xff]
      %v940 = vld [vmem:[%s609 + $0x140] sm:$0xff]
      %v941 = vld [vmem:[%s609 + $0x150] sm:$0xff]
      %v942 = vld [vmem:[%s609 + $0x158] sm:$0xff]
      %v943 = vld [vmem:[%s609 + $0x168] sm:$0xff]
      %v944 = vld [vmem:[%s609 + $0x170] sm:$0xff]
      %s945 = scalar_lea.vmem %s3, 4
      %v946 = vld [vmem:[%s945] sm:$0x1]
      %v947 = vlaneseq
      %v948 = vshrl.u32 %v947, 7
      %v949 = vsub.s32 0, %v948
      %v950 = vrot.slane %v946, %v949
      %v951 = vmul.f32 %v913, %v950
      %v952 = vmul.f32 %v914, %v950
      %v953 = vmul.f32 %v915, %v950
      %v954 = vmul.f32 %v916, %v950
      %v955 = vmul.f32 %v917, %v950
      %v956 = vmul.f32 %v918, %v950
      %v957 = vmul.f32 %v919, %v950
      %v958 = vmul.f32 %v920, %v950
      %v959 = vmul.f32 %v921, %v950
      %v960 = vmul.f32 %v922, %v950
      %v961 = vmul.f32 %v923, %v950
      %v962 = vmul.f32 %v924, %v950
      %v963 = vmul.f32 %v925, %v950
      %v964 = vmul.f32 %v926, %v950
      %v965 = vmul.f32 %v927, %v950
      %v966 = vmul.f32 %v928, %v950
      %v967 = vmul.f32 %v929, %v950
      %v968 = vmul.f32 %v930, %v950
      %v969 = vmul.f32 %v931, %v950
      %v970 = vmul.f32 %v932, %v950
      %v971 = vmul.f32 %v933, %v950
      %v972 = vmul.f32 %v934, %v950
      %v973 = vmul.f32 %v935, %v950
      %v974 = vmul.f32 %v936, %v950
      %v975 = vmul.f32 %v937, %v950
      %v976 = vmul.f32 %v938, %v950
      %v977 = vmul.f32 %v939, %v950
      %v978 = vmul.f32 %v940, %v950
      %v979 = vmul.f32 %v941, %v950
      %v980 = vmul.f32 %v942, %v950
      %v981 = vmul.f32 %v943, %v950
      %v982 = vmul.f32 %v944, %v950
      %v983 = vadd.f32 %v881, %v951
      %v984 = vadd.f32 %v882, %v952
      %v985 = vadd.f32 %v883, %v953
      %v986 = vadd.f32 %v884, %v954
      %v987 = vadd.f32 %v885, %v955
      %v988 = vadd.f32 %v886, %v956
      %v989 = vadd.f32 %v887, %v957
      %v990 = vadd.f32 %v888, %v958
      %v991 = vadd.f32 %v889, %v959
      %v992 = vadd.f32 %v890, %v960
      %v993 = vadd.f32 %v891, %v961
      %v994 = vadd.f32 %v892, %v962
      %v995 = vadd.f32 %v893, %v963
      %v996 = vadd.f32 %v894, %v964
      %v997 = vadd.f32 %v895, %v965
      %v998 = vadd.f32 %v896, %v966
      %v999 = vadd.f32 %v897, %v967
      %v1000 = vadd.f32 %v898, %v968
      %v1001 = vadd.f32 %v899, %v969
      %v1002 = vadd.f32 %v900, %v970
      %v1003 = vadd.f32 %v901, %v971
      %v1004 = vadd.f32 %v902, %v972
      %v1005 = vadd.f32 %v903, %v973
      %v1006 = vadd.f32 %v904, %v974
      %v1007 = vadd.f32 %v905, %v975
      %v1008 = vadd.f32 %v906, %v976
      %v1009 = vadd.f32 %v907, %v977
      %v1010 = vadd.f32 %v908, %v978
      %v1011 = vadd.f32 %v909, %v979
      %v1012 = vadd.f32 %v910, %v980
      %v1013 = vadd.f32 %v911, %v981
      %v1014 = vadd.f32 %v912, %v982
      %v1015 = vld [vmem:[%s609 + $0x1] sm:$0xff]
      %v1016 = vld [vmem:[%s609 + $0x9] sm:$0xff]
      %v1017 = vld [vmem:[%s609 + $0x19] sm:$0xff]
      %v1018 = vld [vmem:[%s609 + $0x21] sm:$0xff]
      %v1019 = vld [vmem:[%s609 + $0x31] sm:$0xff]
      %v1020 = vld [vmem:[%s609 + $0x39] sm:$0xff]
      %v1021 = vld [vmem:[%s609 + $0x49] sm:$0xff]
      %v1022 = vld [vmem:[%s609 + $0x51] sm:$0xff]
      %v1023 = vld [vmem:[%s609 + $0x61] sm:$0xff]
      %v1024 = vld [vmem:[%s609 + $0x69] sm:$0xff]
      %v1025 = vld [vmem:[%s609 + $0x79] sm:$0xff]
      %v1026 = vld [vmem:[%s609 + $0x81] sm:$0xff]
      %v1027 = vld [vmem:[%s609 + $0x91] sm:$0xff]
      %v1028 = vld [vmem:[%s609 + $0x99] sm:$0xff]
      %v1029 = vld [vmem:[%s609 + $0xa9] sm:$0xff]
      %v1030 = vld [vmem:[%s609 + $0xb1] sm:$0xff]
      %v1031 = vld [vmem:[%s609 + $0xc1] sm:$0xff]
      %v1032 = vld [vmem:[%s609 + $0xc9] sm:$0xff]
      %v1033 = vld [vmem:[%s609 + $0xd9] sm:$0xff]
      %v1034 = vld [vmem:[%s609 + $0xe1] sm:$0xff]
      %v1035 = vld [vmem:[%s609 + $0xf1] sm:$0xff]
      %v1036 = vld [vmem:[%s609 + $0xf9] sm:$0xff]
      %v1037 = vld [vmem:[%s609 + $0x109] sm:$0xff]
      %v1038 = vld [vmem:[%s609 + $0x111] sm:$0xff]
      %v1039 = vld [vmem:[%s609 + $0x121] sm:$0xff]
      %v1040 = vld [vmem:[%s609 + $0x129] sm:$0xff]
      %v1041 = vld [vmem:[%s609 + $0x139] sm:$0xff]
      %v1042 = vld [vmem:[%s609 + $0x141] sm:$0xff]
      %v1043 = vld [vmem:[%s609 + $0x151] sm:$0xff]
      %v1044 = vld [vmem:[%s609 + $0x159] sm:$0xff]
      %v1045 = vld [vmem:[%s609 + $0x169] sm:$0xff]
      %v1046 = vld [vmem:[%s609 + $0x171] sm:$0xff]
      %v1047 = vld [vmem:[%s945 + $0x1] sm:$0x1]
      %v1048 = vlaneseq
      %v1049 = vshrl.u32 %v1048, 7
      %v1050 = vsub.s32 0, %v1049
      %v1051 = vrot.slane %v1047, %v1050
      %v1052 = vmul.f32 %v1015, %v1051
      %v1053 = vmul.f32 %v1016, %v1051
      %v1054 = vmul.f32 %v1017, %v1051
      %v1055 = vmul.f32 %v1018, %v1051
      %v1056 = vmul.f32 %v1019, %v1051
      %v1057 = vmul.f32 %v1020, %v1051
      %v1058 = vmul.f32 %v1021, %v1051
      %v1059 = vmul.f32 %v1022, %v1051
      %v1060 = vmul.f32 %v1023, %v1051
      %v1061 = vmul.f32 %v1024, %v1051
      %v1062 = vmul.f32 %v1025, %v1051
      %v1063 = vmul.f32 %v1026, %v1051
      %v1064 = vmul.f32 %v1027, %v1051
      %v1065 = vmul.f32 %v1028, %v1051
      %v1066 = vmul.f32 %v1029, %v1051
      %v1067 = vmul.f32 %v1030, %v1051
      %v1068 = vmul.f32 %v1031, %v1051
      %v1069 = vmul.f32 %v1032, %v1051
      %v1070 = vmul.f32 %v1033, %v1051
      %v1071 = vmul.f32 %v1034, %v1051
      %v1072 = vmul.f32 %v1035, %v1051
      %v1073 = vmul.f32 %v1036, %v1051
      %v1074 = vmul.f32 %v1037, %v1051
      %v1075 = vmul.f32 %v1038, %v1051
      %v1076 = vmul.f32 %v1039, %v1051
      %v1077 = vmul.f32 %v1040, %v1051
      %v1078 = vmul.f32 %v1041, %v1051
      %v1079 = vmul.f32 %v1042, %v1051
      %v1080 = vmul.f32 %v1043, %v1051
      %v1081 = vmul.f32 %v1044, %v1051
      %v1082 = vmul.f32 %v1045, %v1051
      %v1083 = vmul.f32 %v1046, %v1051
      %v1084 = vadd.f32 %v983, %v1052
      %v1085 = vadd.f32 %v984, %v1053
      %v1086 = vadd.f32 %v985, %v1054
      %v1087 = vadd.f32 %v986, %v1055
      %v1088 = vadd.f32 %v987, %v1056
      %v1089 = vadd.f32 %v988, %v1057
      %v1090 = vadd.f32 %v989, %v1058
      %v1091 = vadd.f32 %v990, %v1059
      %v1092 = vadd.f32 %v991, %v1060
      %v1093 = vadd.f32 %v992, %v1061
      %v1094 = vadd.f32 %v993, %v1062
      %v1095 = vadd.f32 %v994, %v1063
      %v1096 = vadd.f32 %v995, %v1064
      %v1097 = vadd.f32 %v996, %v1065
      %v1098 = vadd.f32 %v997, %v1066
      %v1099 = vadd.f32 %v998, %v1067
      %v1100 = vadd.f32 %v999, %v1068
      %v1101 = vadd.f32 %v1000, %v1069
      %v1102 = vadd.f32 %v1001, %v1070
      %v1103 = vadd.f32 %v1002, %v1071
      %v1104 = vadd.f32 %v1003, %v1072
      %v1105 = vadd.f32 %v1004, %v1073
      %v1106 = vadd.f32 %v1005, %v1074
      %v1107 = vadd.f32 %v1006, %v1075
      %v1108 = vadd.f32 %v1007, %v1076
      %v1109 = vadd.f32 %v1008, %v1077
      %v1110 = vadd.f32 %v1009, %v1078
      %v1111 = vadd.f32 %v1010, %v1079
      %v1112 = vadd.f32 %v1011, %v1080
      %v1113 = vadd.f32 %v1012, %v1081
      %v1114 = vadd.f32 %v1013, %v1082
      %v1115 = vadd.f32 %v1014, %v1083
      %v1116 = vld [vmem:[%s609 + $0x2] sm:$0xff]
      %v1117 = vld [vmem:[%s609 + $0xa] sm:$0xff]
      %v1118 = vld [vmem:[%s609 + $0x1a] sm:$0xff]
      %v1119 = vld [vmem:[%s609 + $0x22] sm:$0xff]
      %v1120 = vld [vmem:[%s609 + $0x32] sm:$0xff]
      %v1121 = vld [vmem:[%s609 + $0x3a] sm:$0xff]
      %v1122 = vld [vmem:[%s609 + $0x4a] sm:$0xff]
      %v1123 = vld [vmem:[%s609 + $0x52] sm:$0xff]
      %v1124 = vld [vmem:[%s609 + $0x62] sm:$0xff]
      %v1125 = vld [vmem:[%s609 + $0x6a] sm:$0xff]
      %v1126 = vld [vmem:[%s609 + $0x7a] sm:$0xff]
      %v1127 = vld [vmem:[%s609 + $0x82] sm:$0xff]
      %v1128 = vld [vmem:[%s609 + $0x92] sm:$0xff]
      %v1129 = vld [vmem:[%s609 + $0x9a] sm:$0xff]
      %v1130 = vld [vmem:[%s609 + $0xaa] sm:$0xff]
      %v1131 = vld [vmem:[%s609 + $0xb2] sm:$0xff]
      %v1132 = vld [vmem:[%s609 + $0xc2] sm:$0xff]
      %v1133 = vld [vmem:[%s609 + $0xca] sm:$0xff]
      %v1134 = vld [vmem:[%s609 + $0xda] sm:$0xff]
      %v1135 = vld [vmem:[%s609 + $0xe2] sm:$0xff]
      %v1136 = vld [vmem:[%s609 + $0xf2] sm:$0xff]
      %v1137 = vld [vmem:[%s609 + $0xfa] sm:$0xff]
      %v1138 = vld [vmem:[%s609 + $0x10a] sm:$0xff]
      %v1139 = vld [vmem:[%s609 + $0x112] sm:$0xff]
      %v1140 = vld [vmem:[%s609 + $0x122] sm:$0xff]
      %v1141 = vld [vmem:[%s609 + $0x12a] sm:$0xff]
      %v1142 = vld [vmem:[%s609 + $0x13a] sm:$0xff]
      %v1143 = vld [vmem:[%s609 + $0x142] sm:$0xff]
      %v1144 = vld [vmem:[%s609 + $0x152] sm:$0xff]
      %v1145 = vld [vmem:[%s609 + $0x15a] sm:$0xff]
      %v1146 = vld [vmem:[%s609 + $0x16a] sm:$0xff]
      %v1147 = vld [vmem:[%s609 + $0x172] sm:$0xff]
      %v1148 = vld [vmem:[%s945 + $0x2] sm:$0x1]
      %v1149 = vlaneseq
      %v1150 = vshrl.u32 %v1149, 7
      %v1151 = vsub.s32 0, %v1150
      %v1152 = vrot.slane %v1148, %v1151
      %v1153 = vmul.f32 %v1116, %v1152
      %v1154 = vmul.f32 %v1117, %v1152
      %v1155 = vmul.f32 %v1118, %v1152
      %v1156 = vmul.f32 %v1119, %v1152
      %v1157 = vmul.f32 %v1120, %v1152
      %v1158 = vmul.f32 %v1121, %v1152
      %v1159 = vmul.f32 %v1122, %v1152
      %v1160 = vmul.f32 %v1123, %v1152
      %v1161 = vmul.f32 %v1124, %v1152
      %v1162 = vmul.f32 %v1125, %v1152
      %v1163 = vmul.f32 %v1126, %v1152
      %v1164 = vmul.f32 %v1127, %v1152
      %v1165 = vmul.f32 %v1128, %v1152
      %v1166 = vmul.f32 %v1129, %v1152
      %v1167 = vmul.f32 %v1130, %v1152
      %v1168 = vmul.f32 %v1131, %v1152
      %v1169 = vmul.f32 %v1132, %v1152
      %v1170 = vmul.f32 %v1133, %v1152
      %v1171 = vmul.f32 %v1134, %v1152
      %v1172 = vmul.f32 %v1135, %v1152
      %v1173 = vmul.f32 %v1136, %v1152
      %v1174 = vmul.f32 %v1137, %v1152
      %v1175 = vmul.f32 %v1138, %v1152
      %v1176 = vmul.f32 %v1139, %v1152
      %v1177 = vmul.f32 %v1140, %v1152
      %v1178 = vmul.f32 %v1141, %v1152
      %v1179 = vmul.f32 %v1142, %v1152
      %v1180 = vmul.f32 %v1143, %v1152
      %v1181 = vmul.f32 %v1144, %v1152
      %v1182 = vmul.f32 %v1145, %v1152
      %v1183 = vmul.f32 %v1146, %v1152
      %v1184 = vmul.f32 %v1147, %v1152
      %v1185 = vadd.f32 %v1084, %v1153
      %v1186 = vadd.f32 %v1085, %v1154
      %v1187 = vadd.f32 %v1086, %v1155
      %v1188 = vadd.f32 %v1087, %v1156
      %v1189 = vadd.f32 %v1088, %v1157
      %v1190 = vadd.f32 %v1089, %v1158
      %v1191 = vadd.f32 %v1090, %v1159
      %v1192 = vadd.f32 %v1091, %v1160
      %v1193 = vadd.f32 %v1092, %v1161
      %v1194 = vadd.f32 %v1093, %v1162
      %v1195 = vadd.f32 %v1094, %v1163
      %v1196 = vadd.f32 %v1095, %v1164
      %v1197 = vadd.f32 %v1096, %v1165
      %v1198 = vadd.f32 %v1097, %v1166
      %v1199 = vadd.f32 %v1098, %v1167
      %v1200 = vadd.f32 %v1099, %v1168
      %v1201 = vadd.f32 %v1100, %v1169
      %v1202 = vadd.f32 %v1101, %v1170
      %v1203 = vadd.f32 %v1102, %v1171
      %v1204 = vadd.f32 %v1103, %v1172
      %v1205 = vadd.f32 %v1104, %v1173
      %v1206 = vadd.f32 %v1105, %v1174
      %v1207 = vadd.f32 %v1106, %v1175
      %v1208 = vadd.f32 %v1107, %v1176
      %v1209 = vadd.f32 %v1108, %v1177
      %v1210 = vadd.f32 %v1109, %v1178
      %v1211 = vadd.f32 %v1110, %v1179
      %v1212 = vadd.f32 %v1111, %v1180
      %v1213 = vadd.f32 %v1112, %v1181
      %v1214 = vadd.f32 %v1113, %v1182
      %v1215 = vadd.f32 %v1114, %v1183
      %v1216 = vadd.f32 %v1115, %v1184
      %s1217 = scalar_lea.vmem [#allocation2], 48
      %v1218 = vld [vmem:[%s1217] sm:$0xff]
      %v1219 = vld [vmem:[%s1217 + $0x8] sm:$0xff]
      %v1220 = vld [vmem:[%s1217 + $0x18] sm:$0xff]
      %v1221 = vld [vmem:[%s1217 + $0x20] sm:$0xff]
      %v1222 = vld [vmem:[%s1217 + $0x30] sm:$0xff]
      %v1223 = vld [vmem:[%s1217 + $0x38] sm:$0xff]
      %v1224 = vld [vmem:[%s1217 + $0x48] sm:$0xff]
      %v1225 = vld [vmem:[%s1217 + $0x50] sm:$0xff]
      %v1226 = vld [vmem:[%s1217 + $0x60] sm:$0xff]
      %v1227 = vld [vmem:[%s1217 + $0x68] sm:$0xff]
      %v1228 = vld [vmem:[%s1217 + $0x78] sm:$0xff]
      %v1229 = vld [vmem:[%s1217 + $0x80] sm:$0xff]
      %v1230 = vld [vmem:[%s1217 + $0x90] sm:$0xff]
      %v1231 = vld [vmem:[%s1217 + $0x98] sm:$0xff]
      %v1232 = vld [vmem:[%s1217 + $0xa8] sm:$0xff]
      %v1233 = vld [vmem:[%s1217 + $0xb0] sm:$0xff]
      %v1234 = vld [vmem:[%s1217 + $0xc0] sm:$0xff]
      %v1235 = vld [vmem:[%s1217 + $0xc8] sm:$0xff]
      %v1236 = vld [vmem:[%s1217 + $0xd8] sm:$0xff]
      %v1237 = vld [vmem:[%s1217 + $0xe0] sm:$0xff]
      %v1238 = vld [vmem:[%s1217 + $0xf0] sm:$0xff]
      %v1239 = vld [vmem:[%s1217 + $0xf8] sm:$0xff]
      %v1240 = vld [vmem:[%s1217 + $0x108] sm:$0xff]
      %v1241 = vld [vmem:[%s1217 + $0x110] sm:$0xff]
      %v1242 = vld [vmem:[%s1217 + $0x120] sm:$0xff]
      %v1243 = vld [vmem:[%s1217 + $0x128] sm:$0xff]
      %v1244 = vld [vmem:[%s1217 + $0x138] sm:$0xff]
      %v1245 = vld [vmem:[%s1217 + $0x140] sm:$0xff]
      %v1246 = vld [vmem:[%s1217 + $0x150] sm:$0xff]
      %v1247 = vld [vmem:[%s1217 + $0x158] sm:$0xff]
      %v1248 = vld [vmem:[%s1217 + $0x168] sm:$0xff]
      %v1249 = vld [vmem:[%s1217 + $0x170] sm:$0xff]
      %s1250 = scalar_lea.vmem %s3, 8
      %v1251 = vld [vmem:[%s1250] sm:$0x1]
      %v1252 = vlaneseq
      %v1253 = vshrl.u32 %v1252, 7
      %v1254 = vsub.s32 0, %v1253
      %v1255 = vrot.slane %v1251, %v1254
      %v1256 = vmul.f32 %v1218, %v1255
      %v1257 = vmul.f32 %v1219, %v1255
      %v1258 = vmul.f32 %v1220, %v1255
      %v1259 = vmul.f32 %v1221, %v1255
      %v1260 = vmul.f32 %v1222, %v1255
      %v1261 = vmul.f32 %v1223, %v1255
      %v1262 = vmul.f32 %v1224, %v1255
      %v1263 = vmul.f32 %v1225, %v1255
      %v1264 = vmul.f32 %v1226, %v1255
      %v1265 = vmul.f32 %v1227, %v1255
      %v1266 = vmul.f32 %v1228, %v1255
      %v1267 = vmul.f32 %v1229, %v1255
      %v1268 = vmul.f32 %v1230, %v1255
      %v1269 = vmul.f32 %v1231, %v1255
      %v1270 = vmul.f32 %v1232, %v1255
      %v1271 = vmul.f32 %v1233, %v1255
      %v1272 = vmul.f32 %v1234, %v1255
      %v1273 = vmul.f32 %v1235, %v1255
      %v1274 = vmul.f32 %v1236, %v1255
      %v1275 = vmul.f32 %v1237, %v1255
      %v1276 = vmul.f32 %v1238, %v1255
      %v1277 = vmul.f32 %v1239, %v1255
      %v1278 = vmul.f32 %v1240, %v1255
      %v1279 = vmul.f32 %v1241, %v1255
      %v1280 = vmul.f32 %v1242, %v1255
      %v1281 = vmul.f32 %v1243, %v1255
      %v1282 = vmul.f32 %v1244, %v1255
      %v1283 = vmul.f32 %v1245, %v1255
      %v1284 = vmul.f32 %v1246, %v1255
      %v1285 = vmul.f32 %v1247, %v1255
      %v1286 = vmul.f32 %v1248, %v1255
      %v1287 = vmul.f32 %v1249, %v1255
      %v1288 = vadd.f32 %v1185, %v1256
      %v1289 = vadd.f32 %v1186, %v1257
      %v1290 = vadd.f32 %v1187, %v1258
      %v1291 = vadd.f32 %v1188, %v1259
      %v1292 = vadd.f32 %v1189, %v1260
      %v1293 = vadd.f32 %v1190, %v1261
      %v1294 = vadd.f32 %v1191, %v1262
      %v1295 = vadd.f32 %v1192, %v1263
      %v1296 = vadd.f32 %v1193, %v1264
      %v1297 = vadd.f32 %v1194, %v1265
      %v1298 = vadd.f32 %v1195, %v1266
      %v1299 = vadd.f32 %v1196, %v1267
      %v1300 = vadd.f32 %v1197, %v1268
      %v1301 = vadd.f32 %v1198, %v1269
      %v1302 = vadd.f32 %v1199, %v1270
      %v1303 = vadd.f32 %v1200, %v1271
      %v1304 = vadd.f32 %v1201, %v1272
      %v1305 = vadd.f32 %v1202, %v1273
      %v1306 = vadd.f32 %v1203, %v1274
      %v1307 = vadd.f32 %v1204, %v1275
      %v1308 = vadd.f32 %v1205, %v1276
      %v1309 = vadd.f32 %v1206, %v1277
      %v1310 = vadd.f32 %v1207, %v1278
      %v1311 = vadd.f32 %v1208, %v1279
      %v1312 = vadd.f32 %v1209, %v1280
      %v1313 = vadd.f32 %v1210, %v1281
      %v1314 = vadd.f32 %v1211, %v1282
      %v1315 = vadd.f32 %v1212, %v1283
      %v1316 = vadd.f32 %v1213, %v1284
      %v1317 = vadd.f32 %v1214, %v1285
      %v1318 = vadd.f32 %v1215, %v1286
      %v1319 = vadd.f32 %v1216, %v1287
      %v1320 = vld [vmem:[%s1217 + $0x1] sm:$0xff]
      %v1321 = vld [vmem:[%s1217 + $0x9] sm:$0xff]
      %v1322 = vld [vmem:[%s1217 + $0x19] sm:$0xff]
      %v1323 = vld [vmem:[%s1217 + $0x21] sm:$0xff]
      %v1324 = vld [vmem:[%s1217 + $0x31] sm:$0xff]
      %v1325 = vld [vmem:[%s1217 + $0x39] sm:$0xff]
      %v1326 = vld [vmem:[%s1217 + $0x49] sm:$0xff]
      %v1327 = vld [vmem:[%s1217 + $0x51] sm:$0xff]
      %v1328 = vld [vmem:[%s1217 + $0x61] sm:$0xff]
      %v1329 = vld [vmem:[%s1217 + $0x69] sm:$0xff]
      %v1330 = vld [vmem:[%s1217 + $0x79] sm:$0xff]
      %v1331 = vld [vmem:[%s1217 + $0x81] sm:$0xff]
      %v1332 = vld [vmem:[%s1217 + $0x91] sm:$0xff]
      %v1333 = vld [vmem:[%s1217 + $0x99] sm:$0xff]
      %v1334 = vld [vmem:[%s1217 + $0xa9] sm:$0xff]
      %v1335 = vld [vmem:[%s1217 + $0xb1] sm:$0xff]
      %v1336 = vld [vmem:[%s1217 + $0xc1] sm:$0xff]
      %v1337 = vld [vmem:[%s1217 + $0xc9] sm:$0xff]
      %v1338 = vld [vmem:[%s1217 + $0xd9] sm:$0xff]
      %v1339 = vld [vmem:[%s1217 + $0xe1] sm:$0xff]
      %v1340 = vld [vmem:[%s1217 + $0xf1] sm:$0xff]
      %v1341 = vld [vmem:[%s1217 + $0xf9] sm:$0xff]
      %v1342 = vld [vmem:[%s1217 + $0x109] sm:$0xff]
      %v1343 = vld [vmem:[%s1217 + $0x111] sm:$0xff]
      %v1344 = vld [vmem:[%s1217 + $0x121] sm:$0xff]
      %v1345 = vld [vmem:[%s1217 + $0x129] sm:$0xff]
      %v1346 = vld [vmem:[%s1217 + $0x139] sm:$0xff]
      %v1347 = vld [vmem:[%s1217 + $0x141] sm:$0xff]
      %v1348 = vld [vmem:[%s1217 + $0x151] sm:$0xff]
      %v1349 = vld [vmem:[%s1217 + $0x159] sm:$0xff]
      %v1350 = vld [vmem:[%s1217 + $0x169] sm:$0xff]
      %v1351 = vld [vmem:[%s1217 + $0x171] sm:$0xff]
      %v1352 = vld [vmem:[%s1250 + $0x1] sm:$0x1]
      %v1353 = vlaneseq
      %v1354 = vshrl.u32 %v1353, 7
      %v1355 = vsub.s32 0, %v1354
      %v1356 = vrot.slane %v1352, %v1355
      %v1357 = vmul.f32 %v1320, %v1356
      %v1358 = vmul.f32 %v1321, %v1356
      %v1359 = vmul.f32 %v1322, %v1356
      %v1360 = vmul.f32 %v1323, %v1356
      %v1361 = vmul.f32 %v1324, %v1356
      %v1362 = vmul.f32 %v1325, %v1356
      %v1363 = vmul.f32 %v1326, %v1356
      %v1364 = vmul.f32 %v1327, %v1356
      %v1365 = vmul.f32 %v1328, %v1356
      %v1366 = vmul.f32 %v1329, %v1356
      %v1367 = vmul.f32 %v1330, %v1356
      %v1368 = vmul.f32 %v1331, %v1356
      %v1369 = vmul.f32 %v1332, %v1356
      %v1370 = vmul.f32 %v1333, %v1356
      %v1371 = vmul.f32 %v1334, %v1356
      %v1372 = vmul.f32 %v1335, %v1356
      %v1373 = vmul.f32 %v1336, %v1356
      %v1374 = vmul.f32 %v1337, %v1356
      %v1375 = vmul.f32 %v1338, %v1356
      %v1376 = vmul.f32 %v1339, %v1356
      %v1377 = vmul.f32 %v1340, %v1356
      %v1378 = vmul.f32 %v1341, %v1356
      %v1379 = vmul.f32 %v1342, %v1356
      %v1380 = vmul.f32 %v1343, %v1356
      %v1381 = vmul.f32 %v1344, %v1356
      %v1382 = vmul.f32 %v1345, %v1356
      %v1383 = vmul.f32 %v1346, %v1356
      %v1384 = vmul.f32 %v1347, %v1356
      %v1385 = vmul.f32 %v1348, %v1356
      %v1386 = vmul.f32 %v1349, %v1356
      %v1387 = vmul.f32 %v1350, %v1356
      %v1388 = vmul.f32 %v1351, %v1356
      %v1389 = vadd.f32 %v1288, %v1357
      %v1390 = vadd.f32 %v1289, %v1358
      %v1391 = vadd.f32 %v1290, %v1359
      %v1392 = vadd.f32 %v1291, %v1360
      %v1393 = vadd.f32 %v1292, %v1361
      %v1394 = vadd.f32 %v1293, %v1362
      %v1395 = vadd.f32 %v1294, %v1363
      %v1396 = vadd.f32 %v1295, %v1364
      %v1397 = vadd.f32 %v1296, %v1365
      %v1398 = vadd.f32 %v1297, %v1366
      %v1399 = vadd.f32 %v1298, %v1367
      %v1400 = vadd.f32 %v1299, %v1368
      %v1401 = vadd.f32 %v1300, %v1369
      %v1402 = vadd.f32 %v1301, %v1370
      %v1403 = vadd.f32 %v1302, %v1371
      %v1404 = vadd.f32 %v1303, %v1372
      %v1405 = vadd.f32 %v1304, %v1373
      %v1406 = vadd.f32 %v1305, %v1374
      %v1407 = vadd.f32 %v1306, %v1375
      %v1408 = vadd.f32 %v1307, %v1376
      %v1409 = vadd.f32 %v1308, %v1377
      %v1410 = vadd.f32 %v1309, %v1378
      %v1411 = vadd.f32 %v1310, %v1379
      %v1412 = vadd.f32 %v1311, %v1380
      %v1413 = vadd.f32 %v1312, %v1381
      %v1414 = vadd.f32 %v1313, %v1382
      %v1415 = vadd.f32 %v1314, %v1383
      %v1416 = vadd.f32 %v1315, %v1384
      %v1417 = vadd.f32 %v1316, %v1385
      %v1418 = vadd.f32 %v1317, %v1386
      %v1419 = vadd.f32 %v1318, %v1387
      %v1420 = vadd.f32 %v1319, %v1388
      %v1421 = vld [vmem:[%s1217 + $0x2] sm:$0xff]
      %v1422 = vld [vmem:[%s1217 + $0xa] sm:$0xff]
      %v1423 = vld [vmem:[%s1217 + $0x1a] sm:$0xff]
      %v1424 = vld [vmem:[%s1217 + $0x22] sm:$0xff]
      %v1425 = vld [vmem:[%s1217 + $0x32] sm:$0xff]
      %v1426 = vld [vmem:[%s1217 + $0x3a] sm:$0xff]
      %v1427 = vld [vmem:[%s1217 + $0x4a] sm:$0xff]
      %v1428 = vld [vmem:[%s1217 + $0x52] sm:$0xff]
      %v1429 = vld [vmem:[%s1217 + $0x62] sm:$0xff]
      %v1430 = vld [vmem:[%s1217 + $0x6a] sm:$0xff]
      %v1431 = vld [vmem:[%s1217 + $0x7a] sm:$0xff]
      %v1432 = vld [vmem:[%s1217 + $0x82] sm:$0xff]
      %v1433 = vld [vmem:[%s1217 + $0x92] sm:$0xff]
      %v1434 = vld [vmem:[%s1217 + $0x9a] sm:$0xff]
      %v1435 = vld [vmem:[%s1217 + $0xaa] sm:$0xff]
      %v1436 = vld [vmem:[%s1217 + $0xb2] sm:$0xff]
      %v1437 = vld [vmem:[%s1217 + $0xc2] sm:$0xff]
      %v1438 = vld [vmem:[%s1217 + $0xca] sm:$0xff]
      %v1439 = vld [vmem:[%s1217 + $0xda] sm:$0xff]
      %v1440 = vld [vmem:[%s1217 + $0xe2] sm:$0xff]
      %v1441 = vld [vmem:[%s1217 + $0xf2] sm:$0xff]
      %v1442 = vld [vmem:[%s1217 + $0xfa] sm:$0xff]
      %v1443 = vld [vmem:[%s1217 + $0x10a] sm:$0xff]
      %v1444 = vld [vmem:[%s1217 + $0x112] sm:$0xff]
      %v1445 = vld [vmem:[%s1217 + $0x122] sm:$0xff]
      %v1446 = vld [vmem:[%s1217 + $0x12a] sm:$0xff]
      %v1447 = vld [vmem:[%s1217 + $0x13a] sm:$0xff]
      %v1448 = vld [vmem:[%s1217 + $0x142] sm:$0xff]
      %v1449 = vld [vmem:[%s1217 + $0x152] sm:$0xff]
      %v1450 = vld [vmem:[%s1217 + $0x15a] sm:$0xff]
      %v1451 = vld [vmem:[%s1217 + $0x16a] sm:$0xff]
      %v1452 = vld [vmem:[%s1217 + $0x172] sm:$0xff]
      %v1453 = vld [vmem:[%s1250 + $0x2] sm:$0x1]
      %v1454 = vlaneseq
      %v1455 = vshrl.u32 %v1454, 7
      %v1456 = vsub.s32 0, %v1455
      %v1457 = vrot.slane %v1453, %v1456
      %v1458 = vmul.f32 %v1421, %v1457
      %v1459 = vmul.f32 %v1422, %v1457
      %v1460 = vmul.f32 %v1423, %v1457
      %v1461 = vmul.f32 %v1424, %v1457
      %v1462 = vmul.f32 %v1425, %v1457
      %v1463 = vmul.f32 %v1426, %v1457
      %v1464 = vmul.f32 %v1427, %v1457
      %v1465 = vmul.f32 %v1428, %v1457
      %v1466 = vmul.f32 %v1429, %v1457
      %v1467 = vmul.f32 %v1430, %v1457
      %v1468 = vmul.f32 %v1431, %v1457
      %v1469 = vmul.f32 %v1432, %v1457
      %v1470 = vmul.f32 %v1433, %v1457
      %v1471 = vmul.f32 %v1434, %v1457
      %v1472 = vmul.f32 %v1435, %v1457
      %v1473 = vmul.f32 %v1436, %v1457
      %v1474 = vmul.f32 %v1437, %v1457
      %v1475 = vmul.f32 %v1438, %v1457
      %v1476 = vmul.f32 %v1439, %v1457
      %v1477 = vmul.f32 %v1440, %v1457
      %v1478 = vmul.f32 %v1441, %v1457
      %v1479 = vmul.f32 %v1442, %v1457
      %v1480 = vmul.f32 %v1443, %v1457
      %v1481 = vmul.f32 %v1444, %v1457
      %v1482 = vmul.f32 %v1445, %v1457
      %v1483 = vmul.f32 %v1446, %v1457
      %v1484 = vmul.f32 %v1447, %v1457
      %v1485 = vmul.f32 %v1448, %v1457
      %v1486 = vmul.f32 %v1449, %v1457
      %v1487 = vmul.f32 %v1450, %v1457
      %v1488 = vmul.f32 %v1451, %v1457
      %v1489 = vmul.f32 %v1452, %v1457
      %v1490 = vadd.f32 %v1389, %v1458
      %v1491 = vadd.f32 %v1390, %v1459
      %v1492 = vadd.f32 %v1391, %v1460
      %v1493 = vadd.f32 %v1392, %v1461
      %v1494 = vadd.f32 %v1393, %v1462
      %v1495 = vadd.f32 %v1394, %v1463
      %v1496 = vadd.f32 %v1395, %v1464
      %v1497 = vadd.f32 %v1396, %v1465
      %v1498 = vadd.f32 %v1397, %v1466
      %v1499 = vadd.f32 %v1398, %v1467
      %v1500 = vadd.f32 %v1399, %v1468
      %v1501 = vadd.f32 %v1400, %v1469
      %v1502 = vadd.f32 %v1401, %v1470
      %v1503 = vadd.f32 %v1402, %v1471
      %v1504 = vadd.f32 %v1403, %v1472
      %v1505 = vadd.f32 %v1404, %v1473
      %v1506 = vadd.f32 %v1405, %v1474
      %v1507 = vadd.f32 %v1406, %v1475
      %v1508 = vadd.f32 %v1407, %v1476
      %v1509 = vadd.f32 %v1408, %v1477
      %v1510 = vadd.f32 %v1409, %v1478
      %v1511 = vadd.f32 %v1410, %v1479
      %v1512 = vadd.f32 %v1411, %v1480
      %v1513 = vadd.f32 %v1412, %v1481
      %v1514 = vadd.f32 %v1413, %v1482
      %v1515 = vadd.f32 %v1414, %v1483
      %v1516 = vadd.f32 %v1415, %v1484
      %v1517 = vadd.f32 %v1416, %v1485
      %v1518 = vadd.f32 %v1417, %v1486
      %v1519 = vadd.f32 %v1418, %v1487
      %v1520 = vadd.f32 %v1419, %v1488
      %v1521 = vadd.f32 %v1420, %v1489
      %v1522 = vmul.f32 %v1490, %v1490
      %v1523 = vmul.f32 %v1491, %v1491
      %v1524 = vmul.f32 %v1492, %v1492
      %v1525 = vmul.f32 %v1493, %v1493
      %v1526 = vmul.f32 %v1494, %v1494
      %v1527 = vmul.f32 %v1495, %v1495
      %v1528 = vmul.f32 %v1496, %v1496
      %v1529 = vmul.f32 %v1497, %v1497
      %v1530 = vmul.f32 %v1498, %v1498
      %v1531 = vmul.f32 %v1499, %v1499
      %v1532 = vmul.f32 %v1500, %v1500
      %v1533 = vmul.f32 %v1501, %v1501
      %v1534 = vmul.f32 %v1502, %v1502
      %v1535 = vmul.f32 %v1503, %v1503
      %v1536 = vmul.f32 %v1504, %v1504
      %v1537 = vmul.f32 %v1505, %v1505
      %v1538 = vmul.f32 %v1506, %v1506
      %v1539 = vmul.f32 %v1507, %v1507
      %v1540 = vmul.f32 %v1508, %v1508
      %v1541 = vmul.f32 %v1509, %v1509
      %v1542 = vmul.f32 %v1510, %v1510
      %v1543 = vmul.f32 %v1511, %v1511
      %v1544 = vmul.f32 %v1512, %v1512
      %v1545 = vmul.f32 %v1513, %v1513
      %v1546 = vmul.f32 %v1514, %v1514
      %v1547 = vmul.f32 %v1515, %v1515
      %v1548 = vmul.f32 %v1516, %v1516
      %v1549 = vmul.f32 %v1517, %v1517
      %v1550 = vmul.f32 %v1518, %v1518
      %v1551 = vmul.f32 %v1519, %v1519
      %v1552 = vmul.f32 %v1520, %v1520
      %v1553 = vmul.f32 %v1521, %v1521
      %v1554 = vmul.f32 %v1490, %v1522
      %v1555 = vmul.f32 %v1491, %v1523
      %v1556 = vmul.f32 %v1492, %v1524
      %v1557 = vmul.f32 %v1493, %v1525
      %v1558 = vmul.f32 %v1494, %v1526
      %v1559 = vmul.f32 %v1495, %v1527
      %v1560 = vmul.f32 %v1496, %v1528
      %v1561 = vmul.f32 %v1497, %v1529
      %v1562 = vmul.f32 %v1498, %v1530
      %v1563 = vmul.f32 %v1499, %v1531
      %v1564 = vmul.f32 %v1500, %v1532
      %v1565 = vmul.f32 %v1501, %v1533
      %v1566 = vmul.f32 %v1502, %v1534
      %v1567 = vmul.f32 %v1503, %v1535
      %v1568 = vmul.f32 %v1504, %v1536
      %v1569 = vmul.f32 %v1505, %v1537
      %v1570 = vmul.f32 %v1506, %v1538
      %v1571 = vmul.f32 %v1507, %v1539
      %v1572 = vmul.f32 %v1508, %v1540
      %v1573 = vmul.f32 %v1509, %v1541
      %v1574 = vmul.f32 %v1510, %v1542
      %v1575 = vmul.f32 %v1511, %v1543
      %v1576 = vmul.f32 %v1512, %v1544
      %v1577 = vmul.f32 %v1513, %v1545
      %v1578 = vmul.f32 %v1514, %v1546
      %v1579 = vmul.f32 %v1515, %v1547
      %v1580 = vmul.f32 %v1516, %v1548
      %v1581 = vmul.f32 %v1517, %v1549
      %v1582 = vmul.f32 %v1518, %v1550
      %v1583 = vmul.f32 %v1519, %v1551
      %v1584 = vmul.f32 %v1520, %v1552
      %v1585 = vmul.f32 %v1521, %v1553
      %v1586 = vmul.f32 %v1554, 0.044715
      %v1587 = vmul.f32 %v1555, 0.044715
      %v1588 = vmul.f32 %v1556, 0.044715
      %v1589 = vmul.f32 %v1557, 0.044715
      %v1590 = vmul.f32 %v1558, 0.044715
      %v1591 = vmul.f32 %v1559, 0.044715
      %v1592 = vmul.f32 %v1560, 0.044715
      %v1593 = vmul.f32 %v1561, 0.044715
      %v1594 = vmul.f32 %v1562, 0.044715
      %v1595 = vmul.f32 %v1563, 0.044715
      %v1596 = vmul.f32 %v1564, 0.044715
      %v1597 = vmul.f32 %v1565, 0.044715
      %v1598 = vmul.f32 %v1566, 0.044715
      %v1599 = vmul.f32 %v1567, 0.044715
      %v1600 = vmul.f32 %v1568, 0.044715
      %v1601 = vmul.f32 %v1569, 0.044715
      %v1602 = vmul.f32 %v1570, 0.044715
      %v1603 = vmul.f32 %v1571, 0.044715
      %v1604 = vmul.f32 %v1572, 0.044715
      %v1605 = vmul.f32 %v1573, 0.044715
      %v1606 = vmul.f32 %v1574, 0.044715
      %v1607 = vmul.f32 %v1575, 0.044715
      %v1608 = vmul.f32 %v1576, 0.044715
      %v1609 = vmul.f32 %v1577, 0.044715
      %v1610 = vmul.f32 %v1578, 0.044715
      %v1611 = vmul.f32 %v1579, 0.044715
      %v1612 = vmul.f32 %v1580, 0.044715
      %v1613 = vmul.f32 %v1581, 0.044715
      %v1614 = vmul.f32 %v1582, 0.044715
      %v1615 = vmul.f32 %v1583, 0.044715
      %v1616 = vmul.f32 %v1584, 0.044715
      %v1617 = vmul.f32 %v1585, 0.044715
      %v1618 = vadd.f32 %v1490, %v1586
      %v1619 = vadd.f32 %v1491, %v1587
      %v1620 = vadd.f32 %v1492, %v1588
      %v1621 = vadd.f32 %v1493, %v1589
      %v1622 = vadd.f32 %v1494, %v1590
      %v1623 = vadd.f32 %v1495, %v1591
      %v1624 = vadd.f32 %v1496, %v1592
      %v1625 = vadd.f32 %v1497, %v1593
      %v1626 = vadd.f32 %v1498, %v1594
      %v1627 = vadd.f32 %v1499, %v1595
      %v1628 = vadd.f32 %v1500, %v1596
      %v1629 = vadd.f32 %v1501, %v1597
      %v1630 = vadd.f32 %v1502, %v1598
      %v1631 = vadd.f32 %v1503, %v1599
      %v1632 = vadd.f32 %v1504, %v1600
      %v1633 = vadd.f32 %v1505, %v1601
      %v1634 = vadd.f32 %v1506, %v1602
      %v1635 = vadd.f32 %v1507, %v1603
      %v1636 = vadd.f32 %v1508, %v1604
      %v1637 = vadd.f32 %v1509, %v1605
      %v1638 = vadd.f32 %v1510, %v1606
      %v1639 = vadd.f32 %v1511, %v1607
      %v1640 = vadd.f32 %v1512, %v1608
      %v1641 = vadd.f32 %v1513, %v1609
      %v1642 = vadd.f32 %v1514, %v1610
      %v1643 = vadd.f32 %v1515, %v1611
      %v1644 = vadd.f32 %v1516, %v1612
      %v1645 = vadd.f32 %v1517, %v1613
      %v1646 = vadd.f32 %v1518, %v1614
      %v1647 = vadd.f32 %v1519, %v1615
      %v1648 = vadd.f32 %v1520, %v1616
      %v1649 = vadd.f32 %v1521, %v1617
      %v1650 = vmul.f32 %v1618, 0.7978846
      %v1651 = vmul.f32 %v1619, 0.7978846
      %v1652 = vmul.f32 %v1620, 0.7978846
      %v1653 = vmul.f32 %v1621, 0.7978846
      %v1654 = vmul.f32 %v1622, 0.7978846
      %v1655 = vmul.f32 %v1623, 0.7978846
      %v1656 = vmul.f32 %v1624, 0.7978846
      %v1657 = vmul.f32 %v1625, 0.7978846
      %v1658 = vmul.f32 %v1626, 0.7978846
      %v1659 = vmul.f32 %v1627, 0.7978846
      %v1660 = vmul.f32 %v1628, 0.7978846
      %v1661 = vmul.f32 %v1629, 0.7978846
      %v1662 = vmul.f32 %v1630, 0.7978846
      %v1663 = vmul.f32 %v1631, 0.7978846
      %v1664 = vmul.f32 %v1632, 0.7978846
      %v1665 = vmul.f32 %v1633, 0.7978846
      %v1666 = vmul.f32 %v1634, 0.7978846
      %v1667 = vmul.f32 %v1635, 0.7978846
      %v1668 = vmul.f32 %v1636, 0.7978846
      %v1669 = vmul.f32 %v1637, 0.7978846
      %v1670 = vmul.f32 %v1638, 0.7978846
      %v1671 = vmul.f32 %v1639, 0.7978846
      %v1672 = vmul.f32 %v1640, 0.7978846
      %v1673 = vmul.f32 %v1641, 0.7978846
      %v1674 = vmul.f32 %v1642, 0.7978846
      %v1675 = vmul.f32 %v1643, 0.7978846
      %v1676 = vmul.f32 %v1644, 0.7978846
      %v1677 = vmul.f32 %v1645, 0.7978846
      %v1678 = vmul.f32 %v1646, 0.7978846
      %v1679 = vmul.f32 %v1647, 0.7978846
      %v1680 = vmul.f32 %v1648, 0.7978846
      %v1681 = vmul.f32 %v1649, 0.7978846
      %v1682 = vtanh.pop %v1650
      %v1683 = vtanh.pop %v1651
      %v1684 = vtanh.pop %v1652
      %v1685 = vtanh.pop %v1653
      %v1686 = vtanh.pop %v1654
      %v1687 = vtanh.pop %v1655
      %v1688 = vtanh.pop %v1656
      %v1689 = vtanh.pop %v1657
      %v1690 = vtanh.pop %v1658
      %v1691 = vtanh.pop %v1659
      %v1692 = vtanh.pop %v1660
      %v1693 = vtanh.pop %v1661
      %v1694 = vtanh.pop %v1662
      %v1695 = vtanh.pop %v1663
      %v1696 = vtanh.pop %v1664
      %v1697 = vtanh.pop %v1665
      %v1698 = vtanh.pop %v1666
      %v1699 = vtanh.pop %v1667
      %v1700 = vtanh.pop %v1668
      %v1701 = vtanh.pop %v1669
      %v1702 = vtanh.pop %v1670
      %v1703 = vtanh.pop %v1671
      %v1704 = vtanh.pop %v1672
      %v1705 = vtanh.pop %v1673
      %v1706 = vtanh.pop %v1674
      %v1707 = vtanh.pop %v1675
      %v1708 = vtanh.pop %v1676
      %v1709 = vtanh.pop %v1677
      %v1710 = vtanh.pop %v1678
      %v1711 = vtanh.pop %v1679
      %v1712 = vtanh.pop %v1680
      %v1713 = vtanh.pop %v1681
      %v1714 = vadd.f32 %v1682, 1.0
      %v1715 = vadd.f32 %v1683, 1.0
      %v1716 = vadd.f32 %v1684, 1.0
      %v1717 = vadd.f32 %v1685, 1.0
      %v1718 = vadd.f32 %v1686, 1.0
      %v1719 = vadd.f32 %v1687, 1.0
      %v1720 = vadd.f32 %v1688, 1.0
      %v1721 = vadd.f32 %v1689, 1.0
      %v1722 = vadd.f32 %v1690, 1.0
      %v1723 = vadd.f32 %v1691, 1.0
      %v1724 = vadd.f32 %v1692, 1.0
      %v1725 = vadd.f32 %v1693, 1.0
      %v1726 = vadd.f32 %v1694, 1.0
      %v1727 = vadd.f32 %v1695, 1.0
      %v1728 = vadd.f32 %v1696, 1.0
      %v1729 = vadd.f32 %v1697, 1.0
      %v1730 = vadd.f32 %v1698, 1.0
      %v1731 = vadd.f32 %v1699, 1.0
      %v1732 = vadd.f32 %v1700, 1.0
      %v1733 = vadd.f32 %v1701, 1.0
      %v1734 = vadd.f32 %v1702, 1.0
      %v1735 = vadd.f32 %v1703, 1.0
      %v1736 = vadd.f32 %v1704, 1.0
      %v1737 = vadd.f32 %v1705, 1.0
      %v1738 = vadd.f32 %v1706, 1.0
      %v1739 = vadd.f32 %v1707, 1.0
      %v1740 = vadd.f32 %v1708, 1.0
      %v1741 = vadd.f32 %v1709, 1.0
      %v1742 = vadd.f32 %v1710, 1.0
      %v1743 = vadd.f32 %v1711, 1.0
      %v1744 = vadd.f32 %v1712, 1.0
      %v1745 = vadd.f32 %v1713, 1.0
      %v1746 = vmul.f32 %v1714, 0.5
      %v1747 = vmul.f32 %v1715, 0.5
      %v1748 = vmul.f32 %v1716, 0.5
      %v1749 = vmul.f32 %v1717, 0.5
      %v1750 = vmul.f32 %v1718, 0.5
      %v1751 = vmul.f32 %v1719, 0.5
      %v1752 = vmul.f32 %v1720, 0.5
      %v1753 = vmul.f32 %v1721, 0.5
      %v1754 = vmul.f32 %v1722, 0.5
      %v1755 = vmul.f32 %v1723, 0.5
      %v1756 = vmul.f32 %v1724, 0.5
      %v1757 = vmul.f32 %v1725, 0.5
      %v1758 = vmul.f32 %v1726, 0.5
      %v1759 = vmul.f32 %v1727, 0.5
      %v1760 = vmul.f32 %v1728, 0.5
      %v1761 = vmul.f32 %v1729, 0.5
      %v1762 = vmul.f32 %v1730, 0.5
      %v1763 = vmul.f32 %v1731, 0.5
      %v1764 = vmul.f32 %v1732, 0.5
      %v1765 = vmul.f32 %v1733, 0.5
      %v1766 = vmul.f32 %v1734, 0.5
      %v1767 = vmul.f32 %v1735, 0.5
      %v1768 = vmul.f32 %v1736, 0.5
      %v1769 = vmul.f32 %v1737, 0.5
      %v1770 = vmul.f32 %v1738, 0.5
      %v1771 = vmul.f32 %v1739, 0.5
      %v1772 = vmul.f32 %v1740, 0.5
      %v1773 = vmul.f32 %v1741, 0.5
      %v1774 = vmul.f32 %v1742, 0.5
      %v1775 = vmul.f32 %v1743, 0.5
      %v1776 = vmul.f32 %v1744, 0.5
      %v1777 = vmul.f32 %v1745, 0.5
      %v1778 = vmul.f32 %v1490, %v1746
      %v1779 = vmul.f32 %v1491, %v1747
      %v1780 = vmul.f32 %v1492, %v1748
      %v1781 = vmul.f32 %v1493, %v1749
      %v1782 = vmul.f32 %v1494, %v1750
      %v1783 = vmul.f32 %v1495, %v1751
      %v1784 = vmul.f32 %v1496, %v1752
      %v1785 = vmul.f32 %v1497, %v1753
      %v1786 = vmul.f32 %v1498, %v1754
      %v1787 = vmul.f32 %v1499, %v1755
      %v1788 = vmul.f32 %v1500, %v1756
      %v1789 = vmul.f32 %v1501, %v1757
      %v1790 = vmul.f32 %v1502, %v1758
      %v1791 = vmul.f32 %v1503, %v1759
      %v1792 = vmul.f32 %v1504, %v1760
      %v1793 = vmul.f32 %v1505, %v1761
      %v1794 = vmul.f32 %v1506, %v1762
      %v1795 = vmul.f32 %v1507, %v1763
      %v1796 = vmul.f32 %v1508, %v1764
      %v1797 = vmul.f32 %v1509, %v1765
      %v1798 = vmul.f32 %v1510, %v1766
      %v1799 = vmul.f32 %v1511, %v1767
      %v1800 = vmul.f32 %v1512, %v1768
      %v1801 = vmul.f32 %v1513, %v1769
      %v1802 = vmul.f32 %v1514, %v1770
      %v1803 = vmul.f32 %v1515, %v1771
      %v1804 = vmul.f32 %v1516, %v1772
      %v1805 = vmul.f32 %v1517, %v1773
      %v1806 = vmul.f32 %v1518, %v1774
      %v1807 = vmul.f32 %v1519, %v1775
      %v1808 = vmul.f32 %v1520, %v1776
      %v1809 = vmul.f32 %v1521, %v1777
      %v1810 = vld [vmem:[%s293] sm:$0xff]
      %v1811 = vld [vmem:[%s293 + $0x8] sm:$0xff]
      %v1812 = vld [vmem:[%s293 + $0x10] sm:$0xff]
      %v1813 = vld [vmem:[%s293 + $0x18] sm:$0xff]
      %v1814 = vld [vmem:[%s293 + $0x20] sm:$0xff]
      %v1815 = vld [vmem:[%s293 + $0x28] sm:$0xff]
      %v1816 = vld [vmem:[%s293 + $0x30] sm:$0xff]
      %v1817 = vld [vmem:[%s293 + $0x38] sm:$0xff]
      %v1826 = vcombine.high %v1810, %v1810
      %v1828 = vunpack.c.l.s4 1966171168
      %v1829 = vunpack.c.0.s8 %v1828
      %v1830 = vlaneseq
      %v1831 = vshrl.u32 %v1830, 7
      %v1832 = vsub.s32 %v1829, %v1831
      %v1833 = vrot.slane %v1810, %v1832
      %v1835 = vunpack.c.l.s4 1966171168
      %v1836 = vunpack.c.0.s8 %v1835
      %v1837 = vlaneseq
      %v1838 = vshrl.u32 %v1837, 7
      %v1839 = vsub.s32 %v1836, %v1838
      %v1840 = vrot.slane %v1826, %v1839
      %v1841 = vcombine.high %v1833, %v1833
      %v1842 = vcombine.high %v1840, %v1840
      %v1844 = vunpack.c.l.s4 1966171168
      %v1845 = vunpack.c.0.s8 %v1844
      %v1846 = vlaneseq
      %v1847 = vshrl.u32 %v1846, 7
      %v1848 = vsub.s32 %v1845, %v1847
      %v1849 = vrot.slane %v1833, %v1848
      %v1851 = vunpack.c.l.s4 1966171168
      %v1852 = vunpack.c.0.s8 %v1851
      %v1853 = vlaneseq
      %v1854 = vshrl.u32 %v1853, 7
      %v1855 = vsub.s32 %v1852, %v1854
      %v1856 = vrot.slane %v1840, %v1855
      %v1858 = vunpack.c.l.s4 1966171168
      %v1859 = vunpack.c.0.s8 %v1858
      %v1860 = vlaneseq
      %v1861 = vshrl.u32 %v1860, 7
      %v1862 = vsub.s32 %v1859, %v1861
      %v1863 = vrot.slane %v1841, %v1862
      %v1865 = vunpack.c.l.s4 1966171168
      %v1866 = vunpack.c.0.s8 %v1865
      %v1867 = vlaneseq
      %v1868 = vshrl.u32 %v1867, 7
      %v1869 = vsub.s32 %v1866, %v1868
      %v1870 = vrot.slane %v1842, %v1869
      %v1871 = vcombine.high %v1849, %v1849
      %v1872 = vcombine.high %v1856, %v1856
      %v1873 = vcombine.high %v1863, %v1863
      %v1874 = vcombine.high %v1870, %v1870
      %v1875 = vcombine.high %v1811, %v1811
      %v1877 = vunpack.c.l.s4 1966171168
      %v1878 = vunpack.c.0.s8 %v1877
      %v1879 = vlaneseq
      %v1880 = vshrl.u32 %v1879, 7
      %v1881 = vsub.s32 %v1878, %v1880
      %v1882 = vrot.slane %v1811, %v1881
      %v1884 = vunpack.c.l.s4 1966171168
      %v1885 = vunpack.c.0.s8 %v1884
      %v1886 = vlaneseq
      %v1887 = vshrl.u32 %v1886, 7
      %v1888 = vsub.s32 %v1885, %v1887
      %v1889 = vrot.slane %v1875, %v1888
      %v1890 = vcombine.high %v1882, %v1882
      %v1891 = vcombine.high %v1889, %v1889
      %v1893 = vunpack.c.l.s4 1966171168
      %v1894 = vunpack.c.0.s8 %v1893
      %v1895 = vlaneseq
      %v1896 = vshrl.u32 %v1895, 7
      %v1897 = vsub.s32 %v1894, %v1896
      %v1898 = vrot.slane %v1882, %v1897
      %v1900 = vunpack.c.l.s4 1966171168
      %v1901 = vunpack.c.0.s8 %v1900
      %v1902 = vlaneseq
      %v1903 = vshrl.u32 %v1902, 7
      %v1904 = vsub.s32 %v1901, %v1903
      %v1905 = vrot.slane %v1889, %v1904
      %v1907 = vunpack.c.l.s4 1966171168
      %v1908 = vunpack.c.0.s8 %v1907
      %v1909 = vlaneseq
      %v1910 = vshrl.u32 %v1909, 7
      %v1911 = vsub.s32 %v1908, %v1910
      %v1912 = vrot.slane %v1890, %v1911
      %v1914 = vunpack.c.l.s4 1966171168
      %v1915 = vunpack.c.0.s8 %v1914
      %v1916 = vlaneseq
      %v1917 = vshrl.u32 %v1916, 7
      %v1918 = vsub.s32 %v1915, %v1917
      %v1919 = vrot.slane %v1891, %v1918
      %v1920 = vcombine.high %v1898, %v1898
      %v1921 = vcombine.high %v1905, %v1905
      %v1922 = vcombine.high %v1912, %v1912
      %v1923 = vcombine.high %v1919, %v1919
      %v1924 = vcombine.high %v1812, %v1812
      %v1926 = vunpack.c.l.s4 1966171168
      %v1927 = vunpack.c.0.s8 %v1926
      %v1928 = vlaneseq
      %v1929 = vshrl.u32 %v1928, 7
      %v1930 = vsub.s32 %v1927, %v1929
      %v1931 = vrot.slane %v1812, %v1930
      %v1933 = vunpack.c.l.s4 1966171168
      %v1934 = vunpack.c.0.s8 %v1933
      %v1935 = vlaneseq
      %v1936 = vshrl.u32 %v1935, 7
      %v1937 = vsub.s32 %v1934, %v1936
      %v1938 = vrot.slane %v1924, %v1937
      %v1939 = vcombine.high %v1931, %v1931
      %v1940 = vcombine.high %v1938, %v1938
      %v1942 = vunpack.c.l.s4 1966171168
      %v1943 = vunpack.c.0.s8 %v1942
      %v1944 = vlaneseq
      %v1945 = vshrl.u32 %v1944, 7
      %v1946 = vsub.s32 %v1943, %v1945
      %v1947 = vrot.slane %v1931, %v1946
      %v1949 = vunpack.c.l.s4 1966171168
      %v1950 = vunpack.c.0.s8 %v1949
      %v1951 = vlaneseq
      %v1952 = vshrl.u32 %v1951, 7
      %v1953 = vsub.s32 %v1950, %v1952
      %v1954 = vrot.slane %v1938, %v1953
      %v1956 = vunpack.c.l.s4 1966171168
      %v1957 = vunpack.c.0.s8 %v1956
      %v1958 = vlaneseq
      %v1959 = vshrl.u32 %v1958, 7
      %v1960 = vsub.s32 %v1957, %v1959
      %v1961 = vrot.slane %v1939, %v1960
      %v1963 = vunpack.c.l.s4 1966171168
      %v1964 = vunpack.c.0.s8 %v1963
      %v1965 = vlaneseq
      %v1966 = vshrl.u32 %v1965, 7
      %v1967 = vsub.s32 %v1964, %v1966
      %v1968 = vrot.slane %v1940, %v1967
      %v1969 = vcombine.high %v1947, %v1947
      %v1970 = vcombine.high %v1954, %v1954
      %v1971 = vcombine.high %v1961, %v1961
      %v1972 = vcombine.high %v1968, %v1968
      %v1973 = vcombine.high %v1813, %v1813
      %v1975 = vunpack.c.l.s4 1966171168
      %v1976 = vunpack.c.0.s8 %v1975
      %v1977 = vlaneseq
      %v1978 = vshrl.u32 %v1977, 7
      %v1979 = vsub.s32 %v1976, %v1978
      %v1980 = vrot.slane %v1813, %v1979
      %v1982 = vunpack.c.l.s4 1966171168
      %v1983 = vunpack.c.0.s8 %v1982
      %v1984 = vlaneseq
      %v1985 = vshrl.u32 %v1984, 7
      %v1986 = vsub.s32 %v1983, %v1985
      %v1987 = vrot.slane %v1973, %v1986
      %v1988 = vcombine.high %v1980, %v1980
      %v1989 = vcombine.high %v1987, %v1987
      %v1991 = vunpack.c.l.s4 1966171168
      %v1992 = vunpack.c.0.s8 %v1991
      %v1993 = vlaneseq
      %v1994 = vshrl.u32 %v1993, 7
      %v1995 = vsub.s32 %v1992, %v1994
      %v1996 = vrot.slane %v1980, %v1995
      %v1998 = vunpack.c.l.s4 1966171168
      %v1999 = vunpack.c.0.s8 %v1998
      %v2000 = vlaneseq
      %v2001 = vshrl.u32 %v2000, 7
      %v2002 = vsub.s32 %v1999, %v2001
      %v2003 = vrot.slane %v1987, %v2002
      %v2005 = vunpack.c.l.s4 1966171168
      %v2006 = vunpack.c.0.s8 %v2005
      %v2007 = vlaneseq
      %v2008 = vshrl.u32 %v2007, 7
      %v2009 = vsub.s32 %v2006, %v2008
      %v2010 = vrot.slane %v1988, %v2009
      %v2012 = vunpack.c.l.s4 1966171168
      %v2013 = vunpack.c.0.s8 %v2012
      %v2014 = vlaneseq
      %v2015 = vshrl.u32 %v2014, 7
      %v2016 = vsub.s32 %v2013, %v2015
      %v2017 = vrot.slane %v1989, %v2016
      %v2018 = vcombine.high %v1996, %v1996
      %v2019 = vcombine.high %v2003, %v2003
      %v2020 = vcombine.high %v2010, %v2010
      %v2021 = vcombine.high %v2017, %v2017
      %v2022 = vcombine.high %v1814, %v1814
      %v2024 = vunpack.c.l.s4 1966171168
      %v2025 = vunpack.c.0.s8 %v2024
      %v2026 = vlaneseq
      %v2027 = vshrl.u32 %v2026, 7
      %v2028 = vsub.s32 %v2025, %v2027
      %v2029 = vrot.slane %v1814, %v2028
      %v2031 = vunpack.c.l.s4 1966171168
      %v2032 = vunpack.c.0.s8 %v2031
      %v2033 = vlaneseq
      %v2034 = vshrl.u32 %v2033, 7
      %v2035 = vsub.s32 %v2032, %v2034
      %v2036 = vrot.slane %v2022, %v2035
      %v2037 = vcombine.high %v2029, %v2029
      %v2038 = vcombine.high %v2036, %v2036
      %v2040 = vunpack.c.l.s4 1966171168
      %v2041 = vunpack.c.0.s8 %v2040
      %v2042 = vlaneseq
      %v2043 = vshrl.u32 %v2042, 7
      %v2044 = vsub.s32 %v2041, %v2043
      %v2045 = vrot.slane %v2029, %v2044
      %v2047 = vunpack.c.l.s4 1966171168
      %v2048 = vunpack.c.0.s8 %v2047
      %v2049 = vlaneseq
      %v2050 = vshrl.u32 %v2049, 7
      %v2051 = vsub.s32 %v2048, %v2050
      %v2052 = vrot.slane %v2036, %v2051
      %v2054 = vunpack.c.l.s4 1966171168
      %v2055 = vunpack.c.0.s8 %v2054
      %v2056 = vlaneseq
      %v2057 = vshrl.u32 %v2056, 7
      %v2058 = vsub.s32 %v2055, %v2057
      %v2059 = vrot.slane %v2037, %v2058
      %v2061 = vunpack.c.l.s4 1966171168
      %v2062 = vunpack.c.0.s8 %v2061
      %v2063 = vlaneseq
      %v2064 = vshrl.u32 %v2063, 7
      %v2065 = vsub.s32 %v2062, %v2064
      %v2066 = vrot.slane %v2038, %v2065
      %v2067 = vcombine.high %v2045, %v2045
      %v2068 = vcombine.high %v2052, %v2052
      %v2069 = vcombine.high %v2059, %v2059
      %v2070 = vcombine.high %v2066, %v2066
      %v2071 = vcombine.high %v1815, %v1815
      %v2073 = vunpack.c.l.s4 1966171168
      %v2074 = vunpack.c.0.s8 %v2073
      %v2075 = vlaneseq
      %v2076 = vshrl.u32 %v2075, 7
      %v2077 = vsub.s32 %v2074, %v2076
      %v2078 = vrot.slane %v1815, %v2077
      %v2080 = vunpack.c.l.s4 1966171168
      %v2081 = vunpack.c.0.s8 %v2080
      %v2082 = vlaneseq
      %v2083 = vshrl.u32 %v2082, 7
      %v2084 = vsub.s32 %v2081, %v2083
      %v2085 = vrot.slane %v2071, %v2084
      %v2086 = vcombine.high %v2078, %v2078
      %v2087 = vcombine.high %v2085, %v2085
      %v2089 = vunpack.c.l.s4 1966171168
      %v2090 = vunpack.c.0.s8 %v2089
      %v2091 = vlaneseq
      %v2092 = vshrl.u32 %v2091, 7
      %v2093 = vsub.s32 %v2090, %v2092
      %v2094 = vrot.slane %v2078, %v2093
      %v2096 = vunpack.c.l.s4 1966171168
      %v2097 = vunpack.c.0.s8 %v2096
      %v2098 = vlaneseq
      %v2099 = vshrl.u32 %v2098, 7
      %v2100 = vsub.s32 %v2097, %v2099
      %v2101 = vrot.slane %v2085, %v2100
      %v2103 = vunpack.c.l.s4 1966171168
      %v2104 = vunpack.c.0.s8 %v2103
      %v2105 = vlaneseq
      %v2106 = vshrl.u32 %v2105, 7
      %v2107 = vsub.s32 %v2104, %v2106
      %v2108 = vrot.slane %v2086, %v2107
      %v2110 = vunpack.c.l.s4 1966171168
      %v2111 = vunpack.c.0.s8 %v2110
      %v2112 = vlaneseq
      %v2113 = vshrl.u32 %v2112, 7
      %v2114 = vsub.s32 %v2111, %v2113
      %v2115 = vrot.slane %v2087, %v2114
      %v2116 = vcombine.high %v2094, %v2094
      %v2117 = vcombine.high %v2101, %v2101
      %v2118 = vcombine.high %v2108, %v2108
      %v2119 = vcombine.high %v2115, %v2115
      %v2120 = vcombine.high %v1816, %v1816
      %v2122 = vunpack.c.l.s4 1966171168
      %v2123 = vunpack.c.0.s8 %v2122
      %v2124 = vlaneseq
      %v2125 = vshrl.u32 %v2124, 7
      %v2126 = vsub.s32 %v2123, %v2125
      %v2127 = vrot.slane %v1816, %v2126
      %v2129 = vunpack.c.l.s4 1966171168
      %v2130 = vunpack.c.0.s8 %v2129
      %v2131 = vlaneseq
      %v2132 = vshrl.u32 %v2131, 7
      %v2133 = vsub.s32 %v2130, %v2132
      %v2134 = vrot.slane %v2120, %v2133
      %v2135 = vcombine.high %v2127, %v2127
      %v2136 = vcombine.high %v2134, %v2134
      %v2138 = vunpack.c.l.s4 1966171168
      %v2139 = vunpack.c.0.s8 %v2138
      %v2140 = vlaneseq
      %v2141 = vshrl.u32 %v2140, 7
      %v2142 = vsub.s32 %v2139, %v2141
      %v2143 = vrot.slane %v2127, %v2142
      %v2145 = vunpack.c.l.s4 1966171168
      %v2146 = vunpack.c.0.s8 %v2145
      %v2147 = vlaneseq
      %v2148 = vshrl.u32 %v2147, 7
      %v2149 = vsub.s32 %v2146, %v2148
      %v2150 = vrot.slane %v2134, %v2149
      %v2152 = vunpack.c.l.s4 1966171168
      %v2153 = vunpack.c.0.s8 %v2152
      %v2154 = vlaneseq
      %v2155 = vshrl.u32 %v2154, 7
      %v2156 = vsub.s32 %v2153, %v2155
      %v2157 = vrot.slane %v2135, %v2156
      %v2159 = vunpack.c.l.s4 1966171168
      %v2160 = vunpack.c.0.s8 %v2159
      %v2161 = vlaneseq
      %v2162 = vshrl.u32 %v2161, 7
      %v2163 = vsub.s32 %v2160, %v2162
      %v2164 = vrot.slane %v2136, %v2163
      %v2165 = vcombine.high %v2143, %v2143
      %v2166 = vcombine.high %v2150, %v2150
      %v2167 = vcombine.high %v2157, %v2157
      %v2168 = vcombine.high %v2164, %v2164
      %v2169 = vcombine.high %v1817, %v1817
      %v2171 = vunpack.c.l.s4 1966171168
      %v2172 = vunpack.c.0.s8 %v2171
      %v2173 = vlaneseq
      %v2174 = vshrl.u32 %v2173, 7
      %v2175 = vsub.s32 %v2172, %v2174
      %v2176 = vrot.slane %v1817, %v2175
      %v2178 = vunpack.c.l.s4 1966171168
      %v2179 = vunpack.c.0.s8 %v2178
      %v2180 = vlaneseq
      %v2181 = vshrl.u32 %v2180, 7
      %v2182 = vsub.s32 %v2179, %v2181
      %v2183 = vrot.slane %v2169, %v2182
      %v2184 = vcombine.high %v2176, %v2176
      %v2185 = vcombine.high %v2183, %v2183
      %v2187 = vunpack.c.l.s4 1966171168
      %v2188 = vunpack.c.0.s8 %v2187
      %v2189 = vlaneseq
      %v2190 = vshrl.u32 %v2189, 7
      %v2191 = vsub.s32 %v2188, %v2190
      %v2192 = vrot.slane %v2176, %v2191
      %v2194 = vunpack.c.l.s4 1966171168
      %v2195 = vunpack.c.0.s8 %v2194
      %v2196 = vlaneseq
      %v2197 = vshrl.u32 %v2196, 7
      %v2198 = vsub.s32 %v2195, %v2197
      %v2199 = vrot.slane %v2183, %v2198
      %v2201 = vunpack.c.l.s4 1966171168
      %v2202 = vunpack.c.0.s8 %v2201
      %v2203 = vlaneseq
      %v2204 = vshrl.u32 %v2203, 7
      %v2205 = vsub.s32 %v2202, %v2204
      %v2206 = vrot.slane %v2184, %v2205
      %v2208 = vunpack.c.l.s4 1966171168
      %v2209 = vunpack.c.0.s8 %v2208
      %v2210 = vlaneseq
      %v2211 = vshrl.u32 %v2210, 7
      %v2212 = vsub.s32 %v2209, %v2211
      %v2213 = vrot.slane %v2185, %v2212
      %v2214 = vcombine.high %v2192, %v2192
      %v2215 = vcombine.high %v2199, %v2199
      %v2216 = vcombine.high %v2206, %v2206
      %v2217 = vcombine.high %v2213, %v2213
      %v2218 = vlaneseq
      %v2219 = vshrl.u32 %v2218, 7
      %v2220 = vsub.s32 0, %v2219
      %v2221 = vrot.slane %v1849, %v2220
      %v2222 = vlaneseq
      %v2223 = vshrl.u32 %v2222, 7
      %v2224 = vsub.s32 0, %v2223
      %v2225 = vrot.slane %v1863, %v2224
      %v2226 = vlaneseq
      %v2227 = vshrl.u32 %v2226, 7
      %v2228 = vsub.s32 0, %v2227
      %v2229 = vrot.slane %v1871, %v2228
      %v2230 = vlaneseq
      %v2231 = vshrl.u32 %v2230, 7
      %v2232 = vsub.s32 0, %v2231
      %v2233 = vrot.slane %v1873, %v2232
      %v2234 = vlaneseq
      %v2235 = vshrl.u32 %v2234, 7
      %v2236 = vsub.s32 0, %v2235
      %v2237 = vrot.slane %v1856, %v2236
      %v2238 = vlaneseq
      %v2239 = vshrl.u32 %v2238, 7
      %v2240 = vsub.s32 0, %v2239
      %v2241 = vrot.slane %v1870, %v2240
      %v2242 = vlaneseq
      %v2243 = vshrl.u32 %v2242, 7
      %v2244 = vsub.s32 0, %v2243
      %v2245 = vrot.slane %v1872, %v2244
      %v2246 = vlaneseq
      %v2247 = vshrl.u32 %v2246, 7
      %v2248 = vsub.s32 0, %v2247
      %v2249 = vrot.slane %v1874, %v2248
      %v2250 = vlaneseq
      %v2251 = vshrl.u32 %v2250, 7
      %v2252 = vsub.s32 0, %v2251
      %v2253 = vrot.slane %v1898, %v2252
      %v2254 = vlaneseq
      %v2255 = vshrl.u32 %v2254, 7
      %v2256 = vsub.s32 0, %v2255
      %v2257 = vrot.slane %v1912, %v2256
      %v2258 = vlaneseq
      %v2259 = vshrl.u32 %v2258, 7
      %v2260 = vsub.s32 0, %v2259
      %v2261 = vrot.slane %v1920, %v2260
      %v2262 = vlaneseq
      %v2263 = vshrl.u32 %v2262, 7
      %v2264 = vsub.s32 0, %v2263
      %v2265 = vrot.slane %v1922, %v2264
      %v2266 = vlaneseq
      %v2267 = vshrl.u32 %v2266, 7
      %v2268 = vsub.s32 0, %v2267
      %v2269 = vrot.slane %v1905, %v2268
      %v2270 = vlaneseq
      %v2271 = vshrl.u32 %v2270, 7
      %v2272 = vsub.s32 0, %v2271
      %v2273 = vrot.slane %v1919, %v2272
      %v2274 = vlaneseq
      %v2275 = vshrl.u32 %v2274, 7
      %v2276 = vsub.s32 0, %v2275
      %v2277 = vrot.slane %v1921, %v2276
      %v2278 = vlaneseq
      %v2279 = vshrl.u32 %v2278, 7
      %v2280 = vsub.s32 0, %v2279
      %v2281 = vrot.slane %v1923, %v2280
      %v2282 = vlaneseq
      %v2283 = vshrl.u32 %v2282, 7
      %v2284 = vsub.s32 0, %v2283
      %v2285 = vrot.slane %v1947, %v2284
      %v2286 = vlaneseq
      %v2287 = vshrl.u32 %v2286, 7
      %v2288 = vsub.s32 0, %v2287
      %v2289 = vrot.slane %v1961, %v2288
      %v2290 = vlaneseq
      %v2291 = vshrl.u32 %v2290, 7
      %v2292 = vsub.s32 0, %v2291
      %v2293 = vrot.slane %v1969, %v2292
      %v2294 = vlaneseq
      %v2295 = vshrl.u32 %v2294, 7
      %v2296 = vsub.s32 0, %v2295
      %v2297 = vrot.slane %v1971, %v2296
      %v2298 = vlaneseq
      %v2299 = vshrl.u32 %v2298, 7
      %v2300 = vsub.s32 0, %v2299
      %v2301 = vrot.slane %v1954, %v2300
      %v2302 = vlaneseq
      %v2303 = vshrl.u32 %v2302, 7
      %v2304 = vsub.s32 0, %v2303
      %v2305 = vrot.slane %v1968, %v2304
      %v2306 = vlaneseq
      %v2307 = vshrl.u32 %v2306, 7
      %v2308 = vsub.s32 0, %v2307
      %v2309 = vrot.slane %v1970, %v2308
      %v2310 = vlaneseq
      %v2311 = vshrl.u32 %v2310, 7
      %v2312 = vsub.s32 0, %v2311
      %v2313 = vrot.slane %v1972, %v2312
      %v2314 = vlaneseq
      %v2315 = vshrl.u32 %v2314, 7
      %v2316 = vsub.s32 0, %v2315
      %v2317 = vrot.slane %v1996, %v2316
      %v2318 = vlaneseq
      %v2319 = vshrl.u32 %v2318, 7
      %v2320 = vsub.s32 0, %v2319
      %v2321 = vrot.slane %v2010, %v2320
      %v2322 = vlaneseq
      %v2323 = vshrl.u32 %v2322, 7
      %v2324 = vsub.s32 0, %v2323
      %v2325 = vrot.slane %v2018, %v2324
      %v2326 = vlaneseq
      %v2327 = vshrl.u32 %v2326, 7
      %v2328 = vsub.s32 0, %v2327
      %v2329 = vrot.slane %v2020, %v2328
      %v2330 = vlaneseq
      %v2331 = vshrl.u32 %v2330, 7
      %v2332 = vsub.s32 0, %v2331
      %v2333 = vrot.slane %v2003, %v2332
      %v2334 = vlaneseq
      %v2335 = vshrl.u32 %v2334, 7
      %v2336 = vsub.s32 0, %v2335
      %v2337 = vrot.slane %v2017, %v2336
      %v2338 = vlaneseq
      %v2339 = vshrl.u32 %v2338, 7
      %v2340 = vsub.s32 0, %v2339
      %v2341 = vrot.slane %v2019, %v2340
      %v2342 = vlaneseq
      %v2343 = vshrl.u32 %v2342, 7
      %v2344 = vsub.s32 0, %v2343
      %v2345 = vrot.slane %v2021, %v2344
      %v2346 = vlaneseq
      %v2347 = vshrl.u32 %v2346, 7
      %v2348 = vsub.s32 0, %v2347
      %v2349 = vrot.slane %v2045, %v2348
      %v2350 = vlaneseq
      %v2351 = vshrl.u32 %v2350, 7
      %v2352 = vsub.s32 0, %v2351
      %v2353 = vrot.slane %v2059, %v2352
      %v2354 = vlaneseq
      %v2355 = vshrl.u32 %v2354, 7
      %v2356 = vsub.s32 0, %v2355
      %v2357 = vrot.slane %v2067, %v2356
      %v2358 = vlaneseq
      %v2359 = vshrl.u32 %v2358, 7
      %v2360 = vsub.s32 0, %v2359
      %v2361 = vrot.slane %v2069, %v2360
      %v2362 = vlaneseq
      %v2363 = vshrl.u32 %v2362, 7
      %v2364 = vsub.s32 0, %v2363
      %v2365 = vrot.slane %v2052, %v2364
      %v2366 = vlaneseq
      %v2367 = vshrl.u32 %v2366, 7
      %v2368 = vsub.s32 0, %v2367
      %v2369 = vrot.slane %v2066, %v2368
      %v2370 = vlaneseq
      %v2371 = vshrl.u32 %v2370, 7
      %v2372 = vsub.s32 0, %v2371
      %v2373 = vrot.slane %v2068, %v2372
      %v2374 = vlaneseq
      %v2375 = vshrl.u32 %v2374, 7
      %v2376 = vsub.s32 0, %v2375
      %v2377 = vrot.slane %v2070, %v2376
      %v2378 = vlaneseq
      %v2379 = vshrl.u32 %v2378, 7
      %v2380 = vsub.s32 0, %v2379
      %v2381 = vrot.slane %v2094, %v2380
      %v2382 = vlaneseq
      %v2383 = vshrl.u32 %v2382, 7
      %v2384 = vsub.s32 0, %v2383
      %v2385 = vrot.slane %v2108, %v2384
      %v2386 = vlaneseq
      %v2387 = vshrl.u32 %v2386, 7
      %v2388 = vsub.s32 0, %v2387
      %v2389 = vrot.slane %v2116, %v2388
      %v2390 = vlaneseq
      %v2391 = vshrl.u32 %v2390, 7
      %v2392 = vsub.s32 0, %v2391
      %v2393 = vrot.slane %v2118, %v2392
      %v2394 = vlaneseq
      %v2395 = vshrl.u32 %v2394, 7
      %v2396 = vsub.s32 0, %v2395
      %v2397 = vrot.slane %v2101, %v2396
      %v2398 = vlaneseq
      %v2399 = vshrl.u32 %v2398, 7
      %v2400 = vsub.s32 0, %v2399
      %v2401 = vrot.slane %v2115, %v2400
      %v2402 = vlaneseq
      %v2403 = vshrl.u32 %v2402, 7
      %v2404 = vsub.s32 0, %v2403
      %v2405 = vrot.slane %v2117, %v2404
      %v2406 = vlaneseq
      %v2407 = vshrl.u32 %v2406, 7
      %v2408 = vsub.s32 0, %v2407
      %v2409 = vrot.slane %v2119, %v2408
      %v2410 = vlaneseq
      %v2411 = vshrl.u32 %v2410, 7
      %v2412 = vsub.s32 0, %v2411
      %v2413 = vrot.slane %v2143, %v2412
      %v2414 = vlaneseq
      %v2415 = vshrl.u32 %v2414, 7
      %v2416 = vsub.s32 0, %v2415
      %v2417 = vrot.slane %v2157, %v2416
      %v2418 = vlaneseq
      %v2419 = vshrl.u32 %v2418, 7
      %v2420 = vsub.s32 0, %v2419
      %v2421 = vrot.slane %v2165, %v2420
      %v2422 = vlaneseq
      %v2423 = vshrl.u32 %v2422, 7
      %v2424 = vsub.s32 0, %v2423
      %v2425 = vrot.slane %v2167, %v2424
      %v2426 = vlaneseq
      %v2427 = vshrl.u32 %v2426, 7
      %v2428 = vsub.s32 0, %v2427
      %v2429 = vrot.slane %v2150, %v2428
      %v2430 = vlaneseq
      %v2431 = vshrl.u32 %v2430, 7
      %v2432 = vsub.s32 0, %v2431
      %v2433 = vrot.slane %v2164, %v2432
      %v2434 = vlaneseq
      %v2435 = vshrl.u32 %v2434, 7
      %v2436 = vsub.s32 0, %v2435
      %v2437 = vrot.slane %v2166, %v2436
      %v2438 = vlaneseq
      %v2439 = vshrl.u32 %v2438, 7
      %v2440 = vsub.s32 0, %v2439
      %v2441 = vrot.slane %v2168, %v2440
      %v2442 = vlaneseq
      %v2443 = vshrl.u32 %v2442, 7
      %v2444 = vsub.s32 0, %v2443
      %v2445 = vrot.slane %v2192, %v2444
      %v2446 = vlaneseq
      %v2447 = vshrl.u32 %v2446, 7
      %v2448 = vsub.s32 0, %v2447
      %v2449 = vrot.slane %v2206, %v2448
      %v2450 = vlaneseq
      %v2451 = vshrl.u32 %v2450, 7
      %v2452 = vsub.s32 0, %v2451
      %v2453 = vrot.slane %v2214, %v2452
      %v2454 = vlaneseq
      %v2455 = vshrl.u32 %v2454, 7
      %v2456 = vsub.s32 0, %v2455
      %v2457 = vrot.slane %v2216, %v2456
      %v2458 = vlaneseq
      %v2459 = vshrl.u32 %v2458, 7
      %v2460 = vsub.s32 0, %v2459
      %v2461 = vrot.slane %v2199, %v2460
      %v2462 = vlaneseq
      %v2463 = vshrl.u32 %v2462, 7
      %v2464 = vsub.s32 0, %v2463
      %v2465 = vrot.slane %v2213, %v2464
      %v2466 = vlaneseq
      %v2467 = vshrl.u32 %v2466, 7
      %v2468 = vsub.s32 0, %v2467
      %v2469 = vrot.slane %v2215, %v2468
      %v2470 = vlaneseq
      %v2471 = vshrl.u32 %v2470, 7
      %v2472 = vsub.s32 0, %v2471
      %v2473 = vrot.slane %v2217, %v2472
      %v2474 = vcombine.low %v2221, %v2225
      %v2475 = vcombine.low %v2229, %v2233
      %v2477 = vunpack.c.l.s4 1983009808
      %v2478 = vunpack.c.0.s8 %v2477
      %v2479 = vlaneseq
      %v2480 = vshrl.u32 %v2479, 7
      %v2481 = vsub.s32 %v2478, %v2480
      %v2482 = vrot.slane %v2474, %v2481
      %v2484 = vunpack.c.l.s4 1983009808
      %v2485 = vunpack.c.0.s8 %v2484
      %v2486 = vlaneseq
      %v2487 = vshrl.u32 %v2486, 7
      %v2488 = vsub.s32 %v2485, %v2487
      %v2489 = vrot.slane %v2475, %v2488
      %v2490 = vcombine.low %v2482, %v2489
      %v2491 = vcombine.low %v2237, %v2241
      %v2492 = vcombine.low %v2245, %v2249
      %v2494 = vunpack.c.l.s4 1983009808
      %v2495 = vunpack.c.0.s8 %v2494
      %v2496 = vlaneseq
      %v2497 = vshrl.u32 %v2496, 7
      %v2498 = vsub.s32 %v2495, %v2497
      %v2499 = vrot.slane %v2491, %v2498
      %v2501 = vunpack.c.l.s4 1983009808
      %v2502 = vunpack.c.0.s8 %v2501
      %v2503 = vlaneseq
      %v2504 = vshrl.u32 %v2503, 7
      %v2505 = vsub.s32 %v2502, %v2504
      %v2506 = vrot.slane %v2492, %v2505
      %v2507 = vcombine.low %v2499, %v2506
      %v2508 = vcombine.low %v2253, %v2257
      %v2509 = vcombine.low %v2261, %v2265
      %v2511 = vunpack.c.l.s4 1983009808
      %v2512 = vunpack.c.0.s8 %v2511
      %v2513 = vlaneseq
      %v2514 = vshrl.u32 %v2513, 7
      %v2515 = vsub.s32 %v2512, %v2514
      %v2516 = vrot.slane %v2508, %v2515
      %v2518 = vunpack.c.l.s4 1983009808
      %v2519 = vunpack.c.0.s8 %v2518
      %v2520 = vlaneseq
      %v2521 = vshrl.u32 %v2520, 7
      %v2522 = vsub.s32 %v2519, %v2521
      %v2523 = vrot.slane %v2509, %v2522
      %v2524 = vcombine.low %v2516, %v2523
      %v2525 = vcombine.low %v2269, %v2273
      %v2526 = vcombine.low %v2277, %v2281
      %v2528 = vunpack.c.l.s4 1983009808
      %v2529 = vunpack.c.0.s8 %v2528
      %v2530 = vlaneseq
      %v2531 = vshrl.u32 %v2530, 7
      %v2532 = vsub.s32 %v2529, %v2531
      %v2533 = vrot.slane %v2525, %v2532
      %v2535 = vunpack.c.l.s4 1983009808
      %v2536 = vunpack.c.0.s8 %v2535
      %v2537 = vlaneseq
      %v2538 = vshrl.u32 %v2537, 7
      %v2539 = vsub.s32 %v2536, %v2538
      %v2540 = vrot.slane %v2526, %v2539
      %v2541 = vcombine.low %v2533, %v2540
      %v2542 = vcombine.low %v2285, %v2289
      %v2543 = vcombine.low %v2293, %v2297
      %v2545 = vunpack.c.l.s4 1983009808
      %v2546 = vunpack.c.0.s8 %v2545
      %v2547 = vlaneseq
      %v2548 = vshrl.u32 %v2547, 7
      %v2549 = vsub.s32 %v2546, %v2548
      %v2550 = vrot.slane %v2542, %v2549
      %v2552 = vunpack.c.l.s4 1983009808
      %v2553 = vunpack.c.0.s8 %v2552
      %v2554 = vlaneseq
      %v2555 = vshrl.u32 %v2554, 7
      %v2556 = vsub.s32 %v2553, %v2555
      %v2557 = vrot.slane %v2543, %v2556
      %v2558 = vcombine.low %v2550, %v2557
      %v2559 = vcombine.low %v2301, %v2305
      %v2560 = vcombine.low %v2309, %v2313
      %v2562 = vunpack.c.l.s4 1983009808
      %v2563 = vunpack.c.0.s8 %v2562
      %v2564 = vlaneseq
      %v2565 = vshrl.u32 %v2564, 7
      %v2566 = vsub.s32 %v2563, %v2565
      %v2567 = vrot.slane %v2559, %v2566
      %v2569 = vunpack.c.l.s4 1983009808
      %v2570 = vunpack.c.0.s8 %v2569
      %v2571 = vlaneseq
      %v2572 = vshrl.u32 %v2571, 7
      %v2573 = vsub.s32 %v2570, %v2572
      %v2574 = vrot.slane %v2560, %v2573
      %v2575 = vcombine.low %v2567, %v2574
      %v2576 = vcombine.low %v2317, %v2321
      %v2577 = vcombine.low %v2325, %v2329
      %v2579 = vunpack.c.l.s4 1983009808
      %v2580 = vunpack.c.0.s8 %v2579
      %v2581 = vlaneseq
      %v2582 = vshrl.u32 %v2581, 7
      %v2583 = vsub.s32 %v2580, %v2582
      %v2584 = vrot.slane %v2576, %v2583
      %v2586 = vunpack.c.l.s4 1983009808
      %v2587 = vunpack.c.0.s8 %v2586
      %v2588 = vlaneseq
      %v2589 = vshrl.u32 %v2588, 7
      %v2590 = vsub.s32 %v2587, %v2589
      %v2591 = vrot.slane %v2577, %v2590
      %v2592 = vcombine.low %v2584, %v2591
      %v2593 = vcombine.low %v2333, %v2337
      %v2594 = vcombine.low %v2341, %v2345
      %v2596 = vunpack.c.l.s4 1983009808
      %v2597 = vunpack.c.0.s8 %v2596
      %v2598 = vlaneseq
      %v2599 = vshrl.u32 %v2598, 7
      %v2600 = vsub.s32 %v2597, %v2599
      %v2601 = vrot.slane %v2593, %v2600
      %v2603 = vunpack.c.l.s4 1983009808
      %v2604 = vunpack.c.0.s8 %v2603
      %v2605 = vlaneseq
      %v2606 = vshrl.u32 %v2605, 7
      %v2607 = vsub.s32 %v2604, %v2606
      %v2608 = vrot.slane %v2594, %v2607
      %v2609 = vcombine.low %v2601, %v2608
      %v2610 = vcombine.low %v2349, %v2353
      %v2611 = vcombine.low %v2357, %v2361
      %v2613 = vunpack.c.l.s4 1983009808
      %v2614 = vunpack.c.0.s8 %v2613
      %v2615 = vlaneseq
      %v2616 = vshrl.u32 %v2615, 7
      %v2617 = vsub.s32 %v2614, %v2616
      %v2618 = vrot.slane %v2610, %v2617
      %v2620 = vunpack.c.l.s4 1983009808
      %v2621 = vunpack.c.0.s8 %v2620
      %v2622 = vlaneseq
      %v2623 = vshrl.u32 %v2622, 7
      %v2624 = vsub.s32 %v2621, %v2623
      %v2625 = vrot.slane %v2611, %v2624
      %v2626 = vcombine.low %v2618, %v2625
      %v2627 = vcombine.low %v2365, %v2369
      %v2628 = vcombine.low %v2373, %v2377
      %v2630 = vunpack.c.l.s4 1983009808
      %v2631 = vunpack.c.0.s8 %v2630
      %v2632 = vlaneseq
      %v2633 = vshrl.u32 %v2632, 7
      %v2634 = vsub.s32 %v2631, %v2633
      %v2635 = vrot.slane %v2627, %v2634
      %v2637 = vunpack.c.l.s4 1983009808
      %v2638 = vunpack.c.0.s8 %v2637
      %v2639 = vlaneseq
      %v2640 = vshrl.u32 %v2639, 7
      %v2641 = vsub.s32 %v2638, %v2640
      %v2642 = vrot.slane %v2628, %v2641
      %v2643 = vcombine.low %v2635, %v2642
      %v2644 = vcombine.low %v2381, %v2385
      %v2645 = vcombine.low %v2389, %v2393
      %v2647 = vunpack.c.l.s4 1983009808
      %v2648 = vunpack.c.0.s8 %v2647
      %v2649 = vlaneseq
      %v2650 = vshrl.u32 %v2649, 7
      %v2651 = vsub.s32 %v2648, %v2650
      %v2652 = vrot.slane %v2644, %v2651
      %v2654 = vunpack.c.l.s4 1983009808
      %v2655 = vunpack.c.0.s8 %v2654
      %v2656 = vlaneseq
      %v2657 = vshrl.u32 %v2656, 7
      %v2658 = vsub.s32 %v2655, %v2657
      %v2659 = vrot.slane %v2645, %v2658
      %v2660 = vcombine.low %v2652, %v2659
      %v2661 = vcombine.low %v2397, %v2401
      %v2662 = vcombine.low %v2405, %v2409
      %v2664 = vunpack.c.l.s4 1983009808
      %v2665 = vunpack.c.0.s8 %v2664
      %v2666 = vlaneseq
      %v2667 = vshrl.u32 %v2666, 7
      %v2668 = vsub.s32 %v2665, %v2667
      %v2669 = vrot.slane %v2661, %v2668
      %v2671 = vunpack.c.l.s4 1983009808
      %v2672 = vunpack.c.0.s8 %v2671
      %v2673 = vlaneseq
      %v2674 = vshrl.u32 %v2673, 7
      %v2675 = vsub.s32 %v2672, %v2674
      %v2676 = vrot.slane %v2662, %v2675
      %v2677 = vcombine.low %v2669, %v2676
      %v2678 = vcombine.low %v2413, %v2417
      %v2679 = vcombine.low %v2421, %v2425
      %v2681 = vunpack.c.l.s4 1983009808
      %v2682 = vunpack.c.0.s8 %v2681
      %v2683 = vlaneseq
      %v2684 = vshrl.u32 %v2683, 7
      %v2685 = vsub.s32 %v2682, %v2684
      %v2686 = vrot.slane %v2678, %v2685
      %v2688 = vunpack.c.l.s4 1983009808
      %v2689 = vunpack.c.0.s8 %v2688
      %v2690 = vlaneseq
      %v2691 = vshrl.u32 %v2690, 7
      %v2692 = vsub.s32 %v2689, %v2691
      %v2693 = vrot.slane %v2679, %v2692
      %v2694 = vcombine.low %v2686, %v2693
      %v2695 = vcombine.low %v2429, %v2433
      %v2696 = vcombine.low %v2437, %v2441
      %v2698 = vunpack.c.l.s4 1983009808
      %v2699 = vunpack.c.0.s8 %v2698
      %v2700 = vlaneseq
      %v2701 = vshrl.u32 %v2700, 7
      %v2702 = vsub.s32 %v2699, %v2701
      %v2703 = vrot.slane %v2695, %v2702
      %v2705 = vunpack.c.l.s4 1983009808
      %v2706 = vunpack.c.0.s8 %v2705
      %v2707 = vlaneseq
      %v2708 = vshrl.u32 %v2707, 7
      %v2709 = vsub.s32 %v2706, %v2708
      %v2710 = vrot.slane %v2696, %v2709
      %v2711 = vcombine.low %v2703, %v2710
      %v2712 = vcombine.low %v2445, %v2449
      %v2713 = vcombine.low %v2453, %v2457
      %v2715 = vunpack.c.l.s4 1983009808
      %v2716 = vunpack.c.0.s8 %v2715
      %v2717 = vlaneseq
      %v2718 = vshrl.u32 %v2717, 7
      %v2719 = vsub.s32 %v2716, %v2718
      %v2720 = vrot.slane %v2712, %v2719
      %v2722 = vunpack.c.l.s4 1983009808
      %v2723 = vunpack.c.0.s8 %v2722
      %v2724 = vlaneseq
      %v2725 = vshrl.u32 %v2724, 7
      %v2726 = vsub.s32 %v2723, %v2725
      %v2727 = vrot.slane %v2713, %v2726
      %v2728 = vcombine.low %v2720, %v2727
      %v2729 = vcombine.low %v2461, %v2465
      %v2730 = vcombine.low %v2469, %v2473
      %v2732 = vunpack.c.l.s4 1983009808
      %v2733 = vunpack.c.0.s8 %v2732
      %v2734 = vlaneseq
      %v2735 = vshrl.u32 %v2734, 7
      %v2736 = vsub.s32 %v2733, %v2735
      %v2737 = vrot.slane %v2729, %v2736
      %v2739 = vunpack.c.l.s4 1983009808
      %v2740 = vunpack.c.0.s8 %v2739
      %v2741 = vlaneseq
      %v2742 = vshrl.u32 %v2741, 7
      %v2743 = vsub.s32 %v2740, %v2742
      %v2744 = vrot.slane %v2730, %v2743
      %v2745 = vcombine.low %v2737, %v2744
      %2746 = vrot.lane.b32.xlu0 %v2490, 8
      %v2747 = vpop.permute.xlu0 %2746
      %2748 = vrot.lane.b32.xlu0 %v2507, 8
      %v2749 = vpop.permute.xlu0 %2748
      %2750 = vrot.lane.b32.xlu0 %v2524, 8
      %v2751 = vpop.permute.xlu0 %2750
      %2752 = vrot.lane.b32.xlu0 %v2541, 8
      %v2753 = vpop.permute.xlu0 %2752
      %2754 = vrot.lane.b32.xlu0 %v2558, 8
      %v2755 = vpop.permute.xlu0 %2754
      %2756 = vrot.lane.b32.xlu0 %v2575, 8
      %v2757 = vpop.permute.xlu0 %2756
      %2758 = vrot.lane.b32.xlu0 %v2592, 8
      %v2759 = vpop.permute.xlu0 %2758
      %2760 = vrot.lane.b32.xlu0 %v2609, 8
      %v2761 = vpop.permute.xlu0 %2760
      %2762 = vrot.lane.b32.xlu0 %v2626, 8
      %v2763 = vpop.permute.xlu0 %2762
      %2764 = vrot.lane.b32.xlu0 %v2643, 8
      %v2765 = vpop.permute.xlu0 %2764
      %2766 = vrot.lane.b32.xlu0 %v2660, 8
      %v2767 = vpop.permute.xlu0 %2766
      %2768 = vrot.lane.b32.xlu0 %v2677, 8
      %v2769 = vpop.permute.xlu0 %2768
      %2770 = vrot.lane.b32.xlu0 %v2694, 8
      %v2771 = vpop.permute.xlu0 %2770
      %2772 = vrot.lane.b32.xlu0 %v2711, 8
      %v2773 = vpop.permute.xlu0 %2772
      %2774 = vrot.lane.b32.xlu0 %v2728, 8
      %v2775 = vpop.permute.xlu0 %2774
      %2776 = vrot.lane.b32.xlu0 %v2745, 8
      %v2777 = vpop.permute.xlu0 %2776
      %v2794 = vsel %vm395, %v1778, %v2747
      %v2795 = vsel %vm395, %v1779, %v2749
      %v2796 = vsel %vm395, %v1780, %v2747
      %v2797 = vsel %vm395, %v1781, %v2749
      %v2798 = vsel %vm395, %v1782, %v2751
      %v2799 = vsel %vm395, %v1783, %v2753
      %v2800 = vsel %vm395, %v1784, %v2751
      %v2801 = vsel %vm395, %v1785, %v2753
      %v2802 = vsel %vm395, %v1786, %v2755
      %v2803 = vsel %vm395, %v1787, %v2757
      %v2804 = vsel %vm395, %v1788, %v2755
      %v2805 = vsel %vm395, %v1789, %v2757
      %v2806 = vsel %vm395, %v1790, %v2759
      %v2807 = vsel %vm395, %v1791, %v2761
      %v2808 = vsel %vm395, %v1792, %v2759
      %v2809 = vsel %vm395, %v1793, %v2761
      %v2810 = vsel %vm395, %v1794, %v2763
      %v2811 = vsel %vm395, %v1795, %v2765
      %v2812 = vsel %vm395, %v1796, %v2763
      %v2813 = vsel %vm395, %v1797, %v2765
      %v2814 = vsel %vm395, %v1798, %v2767
      %v2815 = vsel %vm395, %v1799, %v2769
      %v2816 = vsel %vm395, %v1800, %v2767
      %v2817 = vsel %vm395, %v1801, %v2769
      %v2818 = vsel %vm395, %v1802, %v2771
      %v2819 = vsel %vm395, %v1803, %v2773
      %v2820 = vsel %vm395, %v1804, %v2771
      %v2821 = vsel %vm395, %v1805, %v2773
      %v2822 = vsel %vm395, %v1806, %v2775
      %v2823 = vsel %vm395, %v1807, %v2777
      %v2824 = vsel %vm395, %v1808, %v2775
      %v2825 = vsel %vm395, %v1809, %v2777
      %2826 = vst.msk [vmem:[%s609 + $0x1] sm:$0xff] %vm300, %v2794
      %2827 = vst.msk [vmem:[%s609 + $0x9] sm:$0xff] %vm300, %v2795
      %2828 = vst.msk [vmem:[%s609 + $0x19] sm:$0xff] %vm300, %v2796
      %2829 = vst.msk [vmem:[%s609 + $0x21] sm:$0xff] %vm300, %v2797
      %2830 = vst.msk [vmem:[%s609 + $0x31] sm:$0xff] %vm300, %v2798
      %2831 = vst.msk [vmem:[%s609 + $0x39] sm:$0xff] %vm300, %v2799
      %2832 = vst.msk [vmem:[%s609 + $0x49] sm:$0xff] %vm300, %v2800
      %2833 = vst.msk [vmem:[%s609 + $0x51] sm:$0xff] %vm300, %v2801
      %2834 = vst.msk [vmem:[%s609 + $0x61] sm:$0xff] %vm300, %v2802
      %2835 = vst.msk [vmem:[%s609 + $0x69] sm:$0xff] %vm300, %v2803
      %2836 = vst.msk [vmem:[%s609 + $0x79] sm:$0xff] %vm300, %v2804
      %2837 = vst.msk [vmem:[%s609 + $0x81] sm:$0xff] %vm300, %v2805
      %2838 = vst.msk [vmem:[%s609 + $0x91] sm:$0xff] %vm300, %v2806
      %2839 = vst.msk [vmem:[%s609 + $0x99] sm:$0xff] %vm300, %v2807
      %2840 = vst.msk [vmem:[%s609 + $0xa9] sm:$0xff] %vm300, %v2808
      %2841 = vst.msk [vmem:[%s609 + $0xb1] sm:$0xff] %vm300, %v2809
      %2842 = vst.msk [vmem:[%s609 + $0xc1] sm:$0xff] %vm300, %v2810
      %2843 = vst.msk [vmem:[%s609 + $0xc9] sm:$0xff] %vm300, %v2811
      %2844 = vst.msk [vmem:[%s609 + $0xd9] sm:$0xff] %vm300, %v2812
      %2845 = vst.msk [vmem:[%s609 + $0xe1] sm:$0xff] %vm300, %v2813
      %2846 = vst.msk [vmem:[%s609 + $0xf1] sm:$0xff] %vm300, %v2814
      %2847 = vst.msk [vmem:[%s609 + $0xf9] sm:$0xff] %vm300, %v2815
      %2848 = vst.msk [vmem:[%s609 + $0x109] sm:$0xff] %vm300, %v2816
      %2849 = vst.msk [vmem:[%s609 + $0x111] sm:$0xff] %vm300, %v2817
      %2850 = vst.msk [vmem:[%s609 + $0x121] sm:$0xff] %vm300, %v2818
      %2851 = vst.msk [vmem:[%s609 + $0x129] sm:$0xff] %vm300, %v2819
      %2852 = vst.msk [vmem:[%s609 + $0x139] sm:$0xff] %vm300, %v2820
      %2853 = vst.msk [vmem:[%s609 + $0x141] sm:$0xff] %vm300, %v2821
      %2854 = vst.msk [vmem:[%s609 + $0x151] sm:$0xff] %vm300, %v2822
      %2855 = vst.msk [vmem:[%s609 + $0x159] sm:$0xff] %vm300, %v2823
      %2856 = vst.msk [vmem:[%s609 + $0x169] sm:$0xff] %vm300, %v2824
      %2857 = vst.msk [vmem:[%s609 + $0x171] sm:$0xff] %vm300, %v2825
      %s2858 = scalar_lea.vmem %s4, 4
      %v2859 = vld [vmem:[%s2858 + $0x1] sm:$0x1]
      %v2860 = vadd.f32 %v2859, 1.0
      %v2861 = vlaneseq
      %v2862 = vshrl.u32 %v2861, 7
      %v2863 = vsub.s32 0, %v2862
      %v2864 = vrot.slane %v2860, %v2863
      %v2865 = vmul.f32 %v2794, %v2864
      %v2866 = vmul.f32 %v2795, %v2864
      %v2867 = vmul.f32 %v2796, %v2864
      %v2868 = vmul.f32 %v2797, %v2864
      %v2869 = vmul.f32 %v2798, %v2864
      %v2870 = vmul.f32 %v2799, %v2864
      %v2871 = vmul.f32 %v2800, %v2864
      %v2872 = vmul.f32 %v2801, %v2864
      %v2873 = vmul.f32 %v2802, %v2864
      %v2874 = vmul.f32 %v2803, %v2864
      %v2875 = vmul.f32 %v2804, %v2864
      %v2876 = vmul.f32 %v2805, %v2864
      %v2877 = vmul.f32 %v2806, %v2864
      %v2878 = vmul.f32 %v2807, %v2864
      %v2879 = vmul.f32 %v2808, %v2864
      %v2880 = vmul.f32 %v2809, %v2864
      %v2881 = vmul.f32 %v2810, %v2864
      %v2882 = vmul.f32 %v2811, %v2864
      %v2883 = vmul.f32 %v2812, %v2864
      %v2884 = vmul.f32 %v2813, %v2864
      %v2885 = vmul.f32 %v2814, %v2864
      %v2886 = vmul.f32 %v2815, %v2864
      %v2887 = vmul.f32 %v2816, %v2864
      %v2888 = vmul.f32 %v2817, %v2864
      %v2889 = vmul.f32 %v2818, %v2864
      %v2890 = vmul.f32 %v2819, %v2864
      %v2891 = vmul.f32 %v2820, %v2864
      %v2892 = vmul.f32 %v2821, %v2864
      %v2893 = vmul.f32 %v2822, %v2864
      %v2894 = vmul.f32 %v2823, %v2864
      %v2895 = vmul.f32 %v2824, %v2864
      %v2896 = vmul.f32 %v2825, %v2864
      %v2897 = vld [vmem:[#allocation2] sm:$0xff]
      %v2898 = vld [vmem:[#allocation2 + $0x8] sm:$0xff]
      %v2899 = vld [vmem:[#allocation2 + $0x18] sm:$0xff]
      %v2900 = vld [vmem:[#allocation2 + $0x20] sm:$0xff]
      %v2901 = vld [vmem:[#allocation2 + $0x30] sm:$0xff]
      %v2902 = vld [vmem:[#allocation2 + $0x38] sm:$0xff]
      %v2903 = vld [vmem:[#allocation2 + $0x48] sm:$0xff]
      %v2904 = vld [vmem:[#allocation2 + $0x50] sm:$0xff]
      %v2905 = vld [vmem:[#allocation2 + $0x60] sm:$0xff]
      %v2906 = vld [vmem:[#allocation2 + $0x68] sm:$0xff]
      %v2907 = vld [vmem:[#allocation2 + $0x78] sm:$0xff]
      %v2908 = vld [vmem:[#allocation2 + $0x80] sm:$0xff]
      %v2909 = vld [vmem:[#allocation2 + $0x90] sm:$0xff]
      %v2910 = vld [vmem:[#allocation2 + $0x98] sm:$0xff]
      %v2911 = vld [vmem:[#allocation2 + $0xa8] sm:$0xff]
      %v2912 = vld [vmem:[#allocation2 + $0xb0] sm:$0xff]
      %v2913 = vld [vmem:[#allocation2 + $0xc0] sm:$0xff]
      %v2914 = vld [vmem:[#allocation2 + $0xc8] sm:$0xff]
      %v2915 = vld [vmem:[#allocation2 + $0xd8] sm:$0xff]
      %v2916 = vld [vmem:[#allocation2 + $0xe0] sm:$0xff]
      %v2917 = vld [vmem:[#allocation2 + $0xf0] sm:$0xff]
      %v2918 = vld [vmem:[#allocation2 + $0xf8] sm:$0xff]
      %v2919 = vld [vmem:[#allocation2 + $0x108] sm:$0xff]
      %v2920 = vld [vmem:[#allocation2 + $0x110] sm:$0xff]
      %v2921 = vld [vmem:[#allocation2 + $0x120] sm:$0xff]
      %v2922 = vld [vmem:[#allocation2 + $0x128] sm:$0xff]
      %v2923 = vld [vmem:[#allocation2 + $0x138] sm:$0xff]
      %v2924 = vld [vmem:[#allocation2 + $0x140] sm:$0xff]
      %v2925 = vld [vmem:[#allocation2 + $0x150] sm:$0xff]
      %v2926 = vld [vmem:[#allocation2 + $0x158] sm:$0xff]
      %v2927 = vld [vmem:[#allocation2 + $0x168] sm:$0xff]
      %v2928 = vld [vmem:[#allocation2 + $0x170] sm:$0xff]
      %v2929 = vld [vmem:[%s4] sm:$0x1]
      %v2930 = vlaneseq
      %v2931 = vshrl.u32 %v2930, 7
      %v2932 = vsub.s32 0, %v2931
      %v2933 = vrot.slane %v2929, %v2932
      %v2934 = vmul.f32 %v2897, %v2933
      %v2935 = vmul.f32 %v2898, %v2933
      %v2936 = vmul.f32 %v2899, %v2933
      %v2937 = vmul.f32 %v2900, %v2933
      %v2938 = vmul.f32 %v2901, %v2933
      %v2939 = vmul.f32 %v2902, %v2933
      %v2940 = vmul.f32 %v2903, %v2933
      %v2941 = vmul.f32 %v2904, %v2933
      %v2942 = vmul.f32 %v2905, %v2933
      %v2943 = vmul.f32 %v2906, %v2933
      %v2944 = vmul.f32 %v2907, %v2933
      %v2945 = vmul.f32 %v2908, %v2933
      %v2946 = vmul.f32 %v2909, %v2933
      %v2947 = vmul.f32 %v2910, %v2933
      %v2948 = vmul.f32 %v2911, %v2933
      %v2949 = vmul.f32 %v2912, %v2933
      %v2950 = vmul.f32 %v2913, %v2933
      %v2951 = vmul.f32 %v2914, %v2933
      %v2952 = vmul.f32 %v2915, %v2933
      %v2953 = vmul.f32 %v2916, %v2933
      %v2954 = vmul.f32 %v2917, %v2933
      %v2955 = vmul.f32 %v2918, %v2933
      %v2956 = vmul.f32 %v2919, %v2933
      %v2957 = vmul.f32 %v2920, %v2933
      %v2958 = vmul.f32 %v2921, %v2933
      %v2959 = vmul.f32 %v2922, %v2933
      %v2960 = vmul.f32 %v2923, %v2933
      %v2961 = vmul.f32 %v2924, %v2933
      %v2962 = vmul.f32 %v2925, %v2933
      %v2963 = vmul.f32 %v2926, %v2933
      %v2964 = vmul.f32 %v2927, %v2933
      %v2965 = vmul.f32 %v2928, %v2933
      %v2966 = vadd.f32 %v2865, %v2934
      %v2967 = vadd.f32 %v2866, %v2935
      %v2968 = vadd.f32 %v2867, %v2936
      %v2969 = vadd.f32 %v2868, %v2937
      %v2970 = vadd.f32 %v2869, %v2938
      %v2971 = vadd.f32 %v2870, %v2939
      %v2972 = vadd.f32 %v2871, %v2940
      %v2973 = vadd.f32 %v2872, %v2941
      %v2974 = vadd.f32 %v2873, %v2942
      %v2975 = vadd.f32 %v2874, %v2943
      %v2976 = vadd.f32 %v2875, %v2944
      %v2977 = vadd.f32 %v2876, %v2945
      %v2978 = vadd.f32 %v2877, %v2946
      %v2979 = vadd.f32 %v2878, %v2947
      %v2980 = vadd.f32 %v2879, %v2948
      %v2981 = vadd.f32 %v2880, %v2949
      %v2982 = vadd.f32 %v2881, %v2950
      %v2983 = vadd.f32 %v2882, %v2951
      %v2984 = vadd.f32 %v2883, %v2952
      %v2985 = vadd.f32 %v2884, %v2953
      %v2986 = vadd.f32 %v2885, %v2954
      %v2987 = vadd.f32 %v2886, %v2955
      %v2988 = vadd.f32 %v2887, %v2956
      %v2989 = vadd.f32 %v2888, %v2957
      %v2990 = vadd.f32 %v2889, %v2958
      %v2991 = vadd.f32 %v2890, %v2959
      %v2992 = vadd.f32 %v2891, %v2960
      %v2993 = vadd.f32 %v2892, %v2961
      %v2994 = vadd.f32 %v2893, %v2962
      %v2995 = vadd.f32 %v2894, %v2963
      %v2996 = vadd.f32 %v2895, %v2964
      %v2997 = vadd.f32 %v2896, %v2965
      %v2998 = vld [vmem:[#allocation2 + $0x1] sm:$0xff]
      %v2999 = vld [vmem:[#allocation2 + $0x9] sm:$0xff]
      %v3000 = vld [vmem:[#allocation2 + $0x19] sm:$0xff]
      %v3001 = vld [vmem:[#allocation2 + $0x21] sm:$0xff]
      %v3002 = vld [vmem:[#allocation2 + $0x31] sm:$0xff]
      %v3003 = vld [vmem:[#allocation2 + $0x39] sm:$0xff]
      %v3004 = vld [vmem:[#allocation2 + $0x49] sm:$0xff]
      %v3005 = vld [vmem:[#allocation2 + $0x51] sm:$0xff]
      %v3006 = vld [vmem:[#allocation2 + $0x61] sm:$0xff]
      %v3007 = vld [vmem:[#allocation2 + $0x69] sm:$0xff]
      %v3008 = vld [vmem:[#allocation2 + $0x79] sm:$0xff]
      %v3009 = vld [vmem:[#allocation2 + $0x81] sm:$0xff]
      %v3010 = vld [vmem:[#allocation2 + $0x91] sm:$0xff]
      %v3011 = vld [vmem:[#allocation2 + $0x99] sm:$0xff]
      %v3012 = vld [vmem:[#allocation2 + $0xa9] sm:$0xff]
      %v3013 = vld [vmem:[#allocation2 + $0xb1] sm:$0xff]
      %v3014 = vld [vmem:[#allocation2 + $0xc1] sm:$0xff]
      %v3015 = vld [vmem:[#allocation2 + $0xc9] sm:$0xff]
      %v3016 = vld [vmem:[#allocation2 + $0xd9] sm:$0xff]
      %v3017 = vld [vmem:[#allocation2 + $0xe1] sm:$0xff]
      %v3018 = vld [vmem:[#allocation2 + $0xf1] sm:$0xff]
      %v3019 = vld [vmem:[#allocation2 + $0xf9] sm:$0xff]
      %v3020 = vld [vmem:[#allocation2 + $0x109] sm:$0xff]
      %v3021 = vld [vmem:[#allocation2 + $0x111] sm:$0xff]
      %v3022 = vld [vmem:[#allocation2 + $0x121] sm:$0xff]
      %v3023 = vld [vmem:[#allocation2 + $0x129] sm:$0xff]
      %v3024 = vld [vmem:[#allocation2 + $0x139] sm:$0xff]
      %v3025 = vld [vmem:[#allocation2 + $0x141] sm:$0xff]
      %v3026 = vld [vmem:[#allocation2 + $0x151] sm:$0xff]
      %v3027 = vld [vmem:[#allocation2 + $0x159] sm:$0xff]
      %v3028 = vld [vmem:[#allocation2 + $0x169] sm:$0xff]
      %v3029 = vld [vmem:[#allocation2 + $0x171] sm:$0xff]
      %v3030 = vld [vmem:[%s4 + $0x1] sm:$0x1]
      %v3031 = vlaneseq
      %v3032 = vshrl.u32 %v3031, 7
      %v3033 = vsub.s32 0, %v3032
      %v3034 = vrot.slane %v3030, %v3033
      %v3035 = vmul.f32 %v2998, %v3034
      %v3036 = vmul.f32 %v2999, %v3034
      %v3037 = vmul.f32 %v3000, %v3034
      %v3038 = vmul.f32 %v3001, %v3034
      %v3039 = vmul.f32 %v3002, %v3034
      %v3040 = vmul.f32 %v3003, %v3034
      %v3041 = vmul.f32 %v3004, %v3034
      %v3042 = vmul.f32 %v3005, %v3034
      %v3043 = vmul.f32 %v3006, %v3034
      %v3044 = vmul.f32 %v3007, %v3034
      %v3045 = vmul.f32 %v3008, %v3034
      %v3046 = vmul.f32 %v3009, %v3034
      %v3047 = vmul.f32 %v3010, %v3034
      %v3048 = vmul.f32 %v3011, %v3034
      %v3049 = vmul.f32 %v3012, %v3034
      %v3050 = vmul.f32 %v3013, %v3034
      %v3051 = vmul.f32 %v3014, %v3034
      %v3052 = vmul.f32 %v3015, %v3034
      %v3053 = vmul.f32 %v3016, %v3034
      %v3054 = vmul.f32 %v3017, %v3034
      %v3055 = vmul.f32 %v3018, %v3034
      %v3056 = vmul.f32 %v3019, %v3034
      %v3057 = vmul.f32 %v3020, %v3034
      %v3058 = vmul.f32 %v3021, %v3034
      %v3059 = vmul.f32 %v3022, %v3034
      %v3060 = vmul.f32 %v3023, %v3034
      %v3061 = vmul.f32 %v3024, %v3034
      %v3062 = vmul.f32 %v3025, %v3034
      %v3063 = vmul.f32 %v3026, %v3034
      %v3064 = vmul.f32 %v3027, %v3034
      %v3065 = vmul.f32 %v3028, %v3034
      %v3066 = vmul.f32 %v3029, %v3034
      %v3067 = vadd.f32 %v2966, %v3035
      %v3068 = vadd.f32 %v2967, %v3036
      %v3069 = vadd.f32 %v2968, %v3037
      %v3070 = vadd.f32 %v2969, %v3038
      %v3071 = vadd.f32 %v2970, %v3039
      %v3072 = vadd.f32 %v2971, %v3040
      %v3073 = vadd.f32 %v2972, %v3041
      %v3074 = vadd.f32 %v2973, %v3042
      %v3075 = vadd.f32 %v2974, %v3043
      %v3076 = vadd.f32 %v2975, %v3044
      %v3077 = vadd.f32 %v2976, %v3045
      %v3078 = vadd.f32 %v2977, %v3046
      %v3079 = vadd.f32 %v2978, %v3047
      %v3080 = vadd.f32 %v2979, %v3048
      %v3081 = vadd.f32 %v2980, %v3049
      %v3082 = vadd.f32 %v2981, %v3050
      %v3083 = vadd.f32 %v2982, %v3051
      %v3084 = vadd.f32 %v2983, %v3052
      %v3085 = vadd.f32 %v2984, %v3053
      %v3086 = vadd.f32 %v2985, %v3054
      %v3087 = vadd.f32 %v2986, %v3055
      %v3088 = vadd.f32 %v2987, %v3056
      %v3089 = vadd.f32 %v2988, %v3057
      %v3090 = vadd.f32 %v2989, %v3058
      %v3091 = vadd.f32 %v2990, %v3059
      %v3092 = vadd.f32 %v2991, %v3060
      %v3093 = vadd.f32 %v2992, %v3061
      %v3094 = vadd.f32 %v2993, %v3062
      %v3095 = vadd.f32 %v2994, %v3063
      %v3096 = vadd.f32 %v2995, %v3064
      %v3097 = vadd.f32 %v2996, %v3065
      %v3098 = vadd.f32 %v2997, %v3066
      %v3099 = vld [vmem:[#allocation2 + $0x2] sm:$0xff]
      %v3100 = vld [vmem:[#allocation2 + $0xa] sm:$0xff]
      %v3101 = vld [vmem:[#allocation2 + $0x1a] sm:$0xff]
      %v3102 = vld [vmem:[#allocation2 + $0x22] sm:$0xff]
      %v3103 = vld [vmem:[#allocation2 + $0x32] sm:$0xff]
      %v3104 = vld [vmem:[#allocation2 + $0x3a] sm:$0xff]
      %v3105 = vld [vmem:[#allocation2 + $0x4a] sm:$0xff]
      %v3106 = vld [vmem:[#allocation2 + $0x52] sm:$0xff]
      %v3107 = vld [vmem:[#allocation2 + $0x62] sm:$0xff]
      %v3108 = vld [vmem:[#allocation2 + $0x6a] sm:$0xff]
      %v3109 = vld [vmem:[#allocation2 + $0x7a] sm:$0xff]
      %v3110 = vld [vmem:[#allocation2 + $0x82] sm:$0xff]
      %v3111 = vld [vmem:[#allocation2 + $0x92] sm:$0xff]
      %v3112 = vld [vmem:[#allocation2 + $0x9a] sm:$0xff]
      %v3113 = vld [vmem:[#allocation2 + $0xaa] sm:$0xff]
      %v3114 = vld [vmem:[#allocation2 + $0xb2] sm:$0xff]
      %v3115 = vld [vmem:[#allocation2 + $0xc2] sm:$0xff]
      %v3116 = vld [vmem:[#allocation2 + $0xca] sm:$0xff]
      %v3117 = vld [vmem:[#allocation2 + $0xda] sm:$0xff]
      %v3118 = vld [vmem:[#allocation2 + $0xe2] sm:$0xff]
      %v3119 = vld [vmem:[#allocation2 + $0xf2] sm:$0xff]
      %v3120 = vld [vmem:[#allocation2 + $0xfa] sm:$0xff]
      %v3121 = vld [vmem:[#allocation2 + $0x10a] sm:$0xff]
      %v3122 = vld [vmem:[#allocation2 + $0x112] sm:$0xff]
      %v3123 = vld [vmem:[#allocation2 + $0x122] sm:$0xff]
      %v3124 = vld [vmem:[#allocation2 + $0x12a] sm:$0xff]
      %v3125 = vld [vmem:[#allocation2 + $0x13a] sm:$0xff]
      %v3126 = vld [vmem:[#allocation2 + $0x142] sm:$0xff]
      %v3127 = vld [vmem:[#allocation2 + $0x152] sm:$0xff]
      %v3128 = vld [vmem:[#allocation2 + $0x15a] sm:$0xff]
      %v3129 = vld [vmem:[#allocation2 + $0x16a] sm:$0xff]
      %v3130 = vld [vmem:[#allocation2 + $0x172] sm:$0xff]
      %v3131 = vld [vmem:[%s4 + $0x2] sm:$0x1]
      %v3132 = vlaneseq
      %v3133 = vshrl.u32 %v3132, 7
      %v3134 = vsub.s32 0, %v3133
      %v3135 = vrot.slane %v3131, %v3134
      %v3136 = vmul.f32 %v3099, %v3135
      %v3137 = vmul.f32 %v3100, %v3135
      %v3138 = vmul.f32 %v3101, %v3135
      %v3139 = vmul.f32 %v3102, %v3135
      %v3140 = vmul.f32 %v3103, %v3135
      %v3141 = vmul.f32 %v3104, %v3135
      %v3142 = vmul.f32 %v3105, %v3135
      %v3143 = vmul.f32 %v3106, %v3135
      %v3144 = vmul.f32 %v3107, %v3135
      %v3145 = vmul.f32 %v3108, %v3135
      %v3146 = vmul.f32 %v3109, %v3135
      %v3147 = vmul.f32 %v3110, %v3135
      %v3148 = vmul.f32 %v3111, %v3135
      %v3149 = vmul.f32 %v3112, %v3135
      %v3150 = vmul.f32 %v3113, %v3135
      %v3151 = vmul.f32 %v3114, %v3135
      %v3152 = vmul.f32 %v3115, %v3135
      %v3153 = vmul.f32 %v3116, %v3135
      %v3154 = vmul.f32 %v3117, %v3135
      %v3155 = vmul.f32 %v3118, %v3135
      %v3156 = vmul.f32 %v3119, %v3135
      %v3157 = vmul.f32 %v3120, %v3135
      %v3158 = vmul.f32 %v3121, %v3135
      %v3159 = vmul.f32 %v3122, %v3135
      %v3160 = vmul.f32 %v3123, %v3135
      %v3161 = vmul.f32 %v3124, %v3135
      %v3162 = vmul.f32 %v3125, %v3135
      %v3163 = vmul.f32 %v3126, %v3135
      %v3164 = vmul.f32 %v3127, %v3135
      %v3165 = vmul.f32 %v3128, %v3135
      %v3166 = vmul.f32 %v3129, %v3135
      %v3167 = vmul.f32 %v3130, %v3135
      %v3168 = vadd.f32 %v3067, %v3136
      %v3169 = vadd.f32 %v3068, %v3137
      %v3170 = vadd.f32 %v3069, %v3138
      %v3171 = vadd.f32 %v3070, %v3139
      %v3172 = vadd.f32 %v3071, %v3140
      %v3173 = vadd.f32 %v3072, %v3141
      %v3174 = vadd.f32 %v3073, %v3142
      %v3175 = vadd.f32 %v3074, %v3143
      %v3176 = vadd.f32 %v3075, %v3144
      %v3177 = vadd.f32 %v3076, %v3145
      %v3178 = vadd.f32 %v3077, %v3146
      %v3179 = vadd.f32 %v3078, %v3147
      %v3180 = vadd.f32 %v3079, %v3148
      %v3181 = vadd.f32 %v3080, %v3149
      %v3182 = vadd.f32 %v3081, %v3150
      %v3183 = vadd.f32 %v3082, %v3151
      %v3184 = vadd.f32 %v3083, %v3152
      %v3185 = vadd.f32 %v3084, %v3153
      %v3186 = vadd.f32 %v3085, %v3154
      %v3187 = vadd.f32 %v3086, %v3155
      %v3188 = vadd.f32 %v3087, %v3156
      %v3189 = vadd.f32 %v3088, %v3157
      %v3190 = vadd.f32 %v3089, %v3158
      %v3191 = vadd.f32 %v3090, %v3159
      %v3192 = vadd.f32 %v3091, %v3160
      %v3193 = vadd.f32 %v3092, %v3161
      %v3194 = vadd.f32 %v3093, %v3162
      %v3195 = vadd.f32 %v3094, %v3163
      %v3196 = vadd.f32 %v3095, %v3164
      %v3197 = vadd.f32 %v3096, %v3165
      %v3198 = vadd.f32 %v3097, %v3166
      %v3199 = vadd.f32 %v3098, %v3167
      %v3200 = vld [vmem:[%s609] sm:$0xff]
      %v3201 = vld [vmem:[%s609 + $0x8] sm:$0xff]
      %v3202 = vld [vmem:[%s609 + $0x18] sm:$0xff]
      %v3203 = vld [vmem:[%s609 + $0x20] sm:$0xff]
      %v3204 = vld [vmem:[%s609 + $0x30] sm:$0xff]
      %v3205 = vld [vmem:[%s609 + $0x38] sm:$0xff]
      %v3206 = vld [vmem:[%s609 + $0x48] sm:$0xff]
      %v3207 = vld [vmem:[%s609 + $0x50] sm:$0xff]
      %v3208 = vld [vmem:[%s609 + $0x60] sm:$0xff]
      %v3209 = vld [vmem:[%s609 + $0x68] sm:$0xff]
      %v3210 = vld [vmem:[%s609 + $0x78] sm:$0xff]
      %v3211 = vld [vmem:[%s609 + $0x80] sm:$0xff]
      %v3212 = vld [vmem:[%s609 + $0x90] sm:$0xff]
      %v3213 = vld [vmem:[%s609 + $0x98] sm:$0xff]
      %v3214 = vld [vmem:[%s609 + $0xa8] sm:$0xff]
      %v3215 = vld [vmem:[%s609 + $0xb0] sm:$0xff]
      %v3216 = vld [vmem:[%s609 + $0xc0] sm:$0xff]
      %v3217 = vld [vmem:[%s609 + $0xc8] sm:$0xff]
      %v3218 = vld [vmem:[%s609 + $0xd8] sm:$0xff]
      %v3219 = vld [vmem:[%s609 + $0xe0] sm:$0xff]
      %v3220 = vld [vmem:[%s609 + $0xf0] sm:$0xff]
      %v3221 = vld [vmem:[%s609 + $0xf8] sm:$0xff]
      %v3222 = vld [vmem:[%s609 + $0x108] sm:$0xff]
      %v3223 = vld [vmem:[%s609 + $0x110] sm:$0xff]
      %v3224 = vld [vmem:[%s609 + $0x120] sm:$0xff]
      %v3225 = vld [vmem:[%s609 + $0x128] sm:$0xff]
      %v3226 = vld [vmem:[%s609 + $0x138] sm:$0xff]
      %v3227 = vld [vmem:[%s609 + $0x140] sm:$0xff]
      %v3228 = vld [vmem:[%s609 + $0x150] sm:$0xff]
      %v3229 = vld [vmem:[%s609 + $0x158] sm:$0xff]
      %v3230 = vld [vmem:[%s609 + $0x168] sm:$0xff]
      %v3231 = vld [vmem:[%s609 + $0x170] sm:$0xff]
      %v3232 = vld [vmem:[%s2858] sm:$0x1]
      %v3233 = vlaneseq
      %v3234 = vshrl.u32 %v3233, 7
      %v3235 = vsub.s32 0, %v3234
      %v3236 = vrot.slane %v3232, %v3235
      %v3237 = vmul.f32 %v3200, %v3236
      %v3238 = vmul.f32 %v3201, %v3236
      %v3239 = vmul.f32 %v3202, %v3236
      %v3240 = vmul.f32 %v3203, %v3236
      %v3241 = vmul.f32 %v3204, %v3236
      %v3242 = vmul.f32 %v3205, %v3236
      %v3243 = vmul.f32 %v3206, %v3236
      %v3244 = vmul.f32 %v3207, %v3236
      %v3245 = vmul.f32 %v3208, %v3236
      %v3246 = vmul.f32 %v3209, %v3236
      %v3247 = vmul.f32 %v3210, %v3236
      %v3248 = vmul.f32 %v3211, %v3236
      %v3249 = vmul.f32 %v3212, %v3236
      %v3250 = vmul.f32 %v3213, %v3236
      %v3251 = vmul.f32 %v3214, %v3236
      %v3252 = vmul.f32 %v3215, %v3236
      %v3253 = vmul.f32 %v3216, %v3236
      %v3254 = vmul.f32 %v3217, %v3236
      %v3255 = vmul.f32 %v3218, %v3236
      %v3256 = vmul.f32 %v3219, %v3236
      %v3257 = vmul.f32 %v3220, %v3236
      %v3258 = vmul.f32 %v3221, %v3236
      %v3259 = vmul.f32 %v3222, %v3236
      %v3260 = vmul.f32 %v3223, %v3236
      %v3261 = vmul.f32 %v3224, %v3236
      %v3262 = vmul.f32 %v3225, %v3236
      %v3263 = vmul.f32 %v3226, %v3236
      %v3264 = vmul.f32 %v3227, %v3236
      %v3265 = vmul.f32 %v3228, %v3236
      %v3266 = vmul.f32 %v3229, %v3236
      %v3267 = vmul.f32 %v3230, %v3236
      %v3268 = vmul.f32 %v3231, %v3236
      %v3269 = vadd.f32 %v3168, %v3237
      %v3270 = vadd.f32 %v3169, %v3238
      %v3271 = vadd.f32 %v3170, %v3239
      %v3272 = vadd.f32 %v3171, %v3240
      %v3273 = vadd.f32 %v3172, %v3241
      %v3274 = vadd.f32 %v3173, %v3242
      %v3275 = vadd.f32 %v3174, %v3243
      %v3276 = vadd.f32 %v3175, %v3244
      %v3277 = vadd.f32 %v3176, %v3245
      %v3278 = vadd.f32 %v3177, %v3246
      %v3279 = vadd.f32 %v3178, %v3247
      %v3280 = vadd.f32 %v3179, %v3248
      %v3281 = vadd.f32 %v3180, %v3249
      %v3282 = vadd.f32 %v3181, %v3250
      %v3283 = vadd.f32 %v3182, %v3251
      %v3284 = vadd.f32 %v3183, %v3252
      %v3285 = vadd.f32 %v3184, %v3253
      %v3286 = vadd.f32 %v3185, %v3254
      %v3287 = vadd.f32 %v3186, %v3255
      %v3288 = vadd.f32 %v3187, %v3256
      %v3289 = vadd.f32 %v3188, %v3257
      %v3290 = vadd.f32 %v3189, %v3258
      %v3291 = vadd.f32 %v3190, %v3259
      %v3292 = vadd.f32 %v3191, %v3260
      %v3293 = vadd.f32 %v3192, %v3261
      %v3294 = vadd.f32 %v3193, %v3262
      %v3295 = vadd.f32 %v3194, %v3263
      %v3296 = vadd.f32 %v3195, %v3264
      %v3297 = vadd.f32 %v3196, %v3265
      %v3298 = vadd.f32 %v3197, %v3266
      %v3299 = vadd.f32 %v3198, %v3267
      %v3300 = vadd.f32 %v3199, %v3268
      %v3301 = vld [vmem:[%s609 + $0x2] sm:$0xff]
      %v3302 = vld [vmem:[%s609 + $0xa] sm:$0xff]
      %v3303 = vld [vmem:[%s609 + $0x1a] sm:$0xff]
      %v3304 = vld [vmem:[%s609 + $0x22] sm:$0xff]
      %v3305 = vld [vmem:[%s609 + $0x32] sm:$0xff]
      %v3306 = vld [vmem:[%s609 + $0x3a] sm:$0xff]
      %v3307 = vld [vmem:[%s609 + $0x4a] sm:$0xff]
      %v3308 = vld [vmem:[%s609 + $0x52] sm:$0xff]
      %v3309 = vld [vmem:[%s609 + $0x62] sm:$0xff]
      %v3310 = vld [vmem:[%s609 + $0x6a] sm:$0xff]
      %v3311 = vld [vmem:[%s609 + $0x7a] sm:$0xff]
      %v3312 = vld [vmem:[%s609 + $0x82] sm:$0xff]
      %v3313 = vld [vmem:[%s609 + $0x92] sm:$0xff]
      %v3314 = vld [vmem:[%s609 + $0x9a] sm:$0xff]
      %v3315 = vld [vmem:[%s609 + $0xaa] sm:$0xff]
      %v3316 = vld [vmem:[%s609 + $0xb2] sm:$0xff]
      %v3317 = vld [vmem:[%s609 + $0xc2] sm:$0xff]
      %v3318 = vld [vmem:[%s609 + $0xca] sm:$0xff]
      %v3319 = vld [vmem:[%s609 + $0xda] sm:$0xff]
      %v3320 = vld [vmem:[%s609 + $0xe2] sm:$0xff]
      %v3321 = vld [vmem:[%s609 + $0xf2] sm:$0xff]
      %v3322 = vld [vmem:[%s609 + $0xfa] sm:$0xff]
      %v3323 = vld [vmem:[%s609 + $0x10a] sm:$0xff]
      %v3324 = vld [vmem:[%s609 + $0x112] sm:$0xff]
      %v3325 = vld [vmem:[%s609 + $0x122] sm:$0xff]
      %v3326 = vld [vmem:[%s609 + $0x12a] sm:$0xff]
      %v3327 = vld [vmem:[%s609 + $0x13a] sm:$0xff]
      %v3328 = vld [vmem:[%s609 + $0x142] sm:$0xff]
      %v3329 = vld [vmem:[%s609 + $0x152] sm:$0xff]
      %v3330 = vld [vmem:[%s609 + $0x15a] sm:$0xff]
      %v3331 = vld [vmem:[%s609 + $0x16a] sm:$0xff]
      %v3332 = vld [vmem:[%s609 + $0x172] sm:$0xff]
      %v3333 = vld [vmem:[%s2858 + $0x2] sm:$0x1]
      %v3334 = vlaneseq
      %v3335 = vshrl.u32 %v3334, 7
      %v3336 = vsub.s32 0, %v3335
      %v3337 = vrot.slane %v3333, %v3336
      %v3338 = vmul.f32 %v3301, %v3337
      %v3339 = vmul.f32 %v3302, %v3337
      %v3340 = vmul.f32 %v3303, %v3337
      %v3341 = vmul.f32 %v3304, %v3337
      %v3342 = vmul.f32 %v3305, %v3337
      %v3343 = vmul.f32 %v3306, %v3337
      %v3344 = vmul.f32 %v3307, %v3337
      %v3345 = vmul.f32 %v3308, %v3337
      %v3346 = vmul.f32 %v3309, %v3337
      %v3347 = vmul.f32 %v3310, %v3337
      %v3348 = vmul.f32 %v3311, %v3337
      %v3349 = vmul.f32 %v3312, %v3337
      %v3350 = vmul.f32 %v3313, %v3337
      %v3351 = vmul.f32 %v3314, %v3337
      %v3352 = vmul.f32 %v3315, %v3337
      %v3353 = vmul.f32 %v3316, %v3337
      %v3354 = vmul.f32 %v3317, %v3337
      %v3355 = vmul.f32 %v3318, %v3337
      %v3356 = vmul.f32 %v3319, %v3337
      %v3357 = vmul.f32 %v3320, %v3337
      %v3358 = vmul.f32 %v3321, %v3337
      %v3359 = vmul.f32 %v3322, %v3337
      %v3360 = vmul.f32 %v3323, %v3337
      %v3361 = vmul.f32 %v3324, %v3337
      %v3362 = vmul.f32 %v3325, %v3337
      %v3363 = vmul.f32 %v3326, %v3337
      %v3364 = vmul.f32 %v3327, %v3337
      %v3365 = vmul.f32 %v3328, %v3337
      %v3366 = vmul.f32 %v3329, %v3337
      %v3367 = vmul.f32 %v3330, %v3337
      %v3368 = vmul.f32 %v3331, %v3337
      %v3369 = vmul.f32 %v3332, %v3337
      %v3370 = vadd.f32 %v3269, %v3338
      %v3371 = vadd.f32 %v3270, %v3339
      %v3372 = vadd.f32 %v3271, %v3340
      %v3373 = vadd.f32 %v3272, %v3341
      %v3374 = vadd.f32 %v3273, %v3342
      %v3375 = vadd.f32 %v3274, %v3343
      %v3376 = vadd.f32 %v3275, %v3344
      %v3377 = vadd.f32 %v3276, %v3345
      %v3378 = vadd.f32 %v3277, %v3346
      %v3379 = vadd.f32 %v3278, %v3347
      %v3380 = vadd.f32 %v3279, %v3348
      %v3381 = vadd.f32 %v3280, %v3349
      %v3382 = vadd.f32 %v3281, %v3350
      %v3383 = vadd.f32 %v3282, %v3351
      %v3384 = vadd.f32 %v3283, %v3352
      %v3385 = vadd.f32 %v3284, %v3353
      %v3386 = vadd.f32 %v3285, %v3354
      %v3387 = vadd.f32 %v3286, %v3355
      %v3388 = vadd.f32 %v3287, %v3356
      %v3389 = vadd.f32 %v3288, %v3357
      %v3390 = vadd.f32 %v3289, %v3358
      %v3391 = vadd.f32 %v3290, %v3359
      %v3392 = vadd.f32 %v3291, %v3360
      %v3393 = vadd.f32 %v3292, %v3361
      %v3394 = vadd.f32 %v3293, %v3362
      %v3395 = vadd.f32 %v3294, %v3363
      %v3396 = vadd.f32 %v3295, %v3364
      %v3397 = vadd.f32 %v3296, %v3365
      %v3398 = vadd.f32 %v3297, %v3366
      %v3399 = vadd.f32 %v3298, %v3367
      %v3400 = vadd.f32 %v3299, %v3368
      %v3401 = vadd.f32 %v3300, %v3369
      %v3402 = vld [vmem:[%s1217] sm:$0xff]
      %v3403 = vld [vmem:[%s1217 + $0x8] sm:$0xff]
      %v3404 = vld [vmem:[%s1217 + $0x18] sm:$0xff]
      %v3405 = vld [vmem:[%s1217 + $0x20] sm:$0xff]
      %v3406 = vld [vmem:[%s1217 + $0x30] sm:$0xff]
      %v3407 = vld [vmem:[%s1217 + $0x38] sm:$0xff]
      %v3408 = vld [vmem:[%s1217 + $0x48] sm:$0xff]
      %v3409 = vld [vmem:[%s1217 + $0x50] sm:$0xff]
      %v3410 = vld [vmem:[%s1217 + $0x60] sm:$0xff]
      %v3411 = vld [vmem:[%s1217 + $0x68] sm:$0xff]
      %v3412 = vld [vmem:[%s1217 + $0x78] sm:$0xff]
      %v3413 = vld [vmem:[%s1217 + $0x80] sm:$0xff]
      %v3414 = vld [vmem:[%s1217 + $0x90] sm:$0xff]
      %v3415 = vld [vmem:[%s1217 + $0x98] sm:$0xff]
      %v3416 = vld [vmem:[%s1217 + $0xa8] sm:$0xff]
      %v3417 = vld [vmem:[%s1217 + $0xb0] sm:$0xff]
      %v3418 = vld [vmem:[%s1217 + $0xc0] sm:$0xff]
      %v3419 = vld [vmem:[%s1217 + $0xc8] sm:$0xff]
      %v3420 = vld [vmem:[%s1217 + $0xd8] sm:$0xff]
      %v3421 = vld [vmem:[%s1217 + $0xe0] sm:$0xff]
      %v3422 = vld [vmem:[%s1217 + $0xf0] sm:$0xff]
      %v3423 = vld [vmem:[%s1217 + $0xf8] sm:$0xff]
      %v3424 = vld [vmem:[%s1217 + $0x108] sm:$0xff]
      %v3425 = vld [vmem:[%s1217 + $0x110] sm:$0xff]
      %v3426 = vld [vmem:[%s1217 + $0x120] sm:$0xff]
      %v3427 = vld [vmem:[%s1217 + $0x128] sm:$0xff]
      %v3428 = vld [vmem:[%s1217 + $0x138] sm:$0xff]
      %v3429 = vld [vmem:[%s1217 + $0x140] sm:$0xff]
      %v3430 = vld [vmem:[%s1217 + $0x150] sm:$0xff]
      %v3431 = vld [vmem:[%s1217 + $0x158] sm:$0xff]
      %v3432 = vld [vmem:[%s1217 + $0x168] sm:$0xff]
      %v3433 = vld [vmem:[%s1217 + $0x170] sm:$0xff]
      %s3434 = scalar_lea.vmem %s4, 8
      %v3435 = vld [vmem:[%s3434] sm:$0x1]
      %v3436 = vlaneseq
      %v3437 = vshrl.u32 %v3436, 7
      %v3438 = vsub.s32 0, %v3437
      %v3439 = vrot.slane %v3435, %v3438
      %v3440 = vmul.f32 %v3402, %v3439
      %v3441 = vmul.f32 %v3403, %v3439
      %v3442 = vmul.f32 %v3404, %v3439
      %v3443 = vmul.f32 %v3405, %v3439
      %v3444 = vmul.f32 %v3406, %v3439
      %v3445 = vmul.f32 %v3407, %v3439
      %v3446 = vmul.f32 %v3408, %v3439
      %v3447 = vmul.f32 %v3409, %v3439
      %v3448 = vmul.f32 %v3410, %v3439
      %v3449 = vmul.f32 %v3411, %v3439
      %v3450 = vmul.f32 %v3412, %v3439
      %v3451 = vmul.f32 %v3413, %v3439
      %v3452 = vmul.f32 %v3414, %v3439
      %v3453 = vmul.f32 %v3415, %v3439
      %v3454 = vmul.f32 %v3416, %v3439
      %v3455 = vmul.f32 %v3417, %v3439
      %v3456 = vmul.f32 %v3418, %v3439
      %v3457 = vmul.f32 %v3419, %v3439
      %v3458 = vmul.f32 %v3420, %v3439
      %v3459 = vmul.f32 %v3421, %v3439
      %v3460 = vmul.f32 %v3422, %v3439
      %v3461 = vmul.f32 %v3423, %v3439
      %v3462 = vmul.f32 %v3424, %v3439
      %v3463 = vmul.f32 %v3425, %v3439
      %v3464 = vmul.f32 %v3426, %v3439
      %v3465 = vmul.f32 %v3427, %v3439
      %v3466 = vmul.f32 %v3428, %v3439
      %v3467 = vmul.f32 %v3429, %v3439
      %v3468 = vmul.f32 %v3430, %v3439
      %v3469 = vmul.f32 %v3431, %v3439
      %v3470 = vmul.f32 %v3432, %v3439
      %v3471 = vmul.f32 %v3433, %v3439
      %v3472 = vadd.f32 %v3370, %v3440
      %v3473 = vadd.f32 %v3371, %v3441
      %v3474 = vadd.f32 %v3372, %v3442
      %v3475 = vadd.f32 %v3373, %v3443
      %v3476 = vadd.f32 %v3374, %v3444
      %v3477 = vadd.f32 %v3375, %v3445
      %v3478 = vadd.f32 %v3376, %v3446
      %v3479 = vadd.f32 %v3377, %v3447
      %v3480 = vadd.f32 %v3378, %v3448
      %v3481 = vadd.f32 %v3379, %v3449
      %v3482 = vadd.f32 %v3380, %v3450
      %v3483 = vadd.f32 %v3381, %v3451
      %v3484 = vadd.f32 %v3382, %v3452
      %v3485 = vadd.f32 %v3383, %v3453
      %v3486 = vadd.f32 %v3384, %v3454
      %v3487 = vadd.f32 %v3385, %v3455
      %v3488 = vadd.f32 %v3386, %v3456
      %v3489 = vadd.f32 %v3387, %v3457
      %v3490 = vadd.f32 %v3388, %v3458
      %v3491 = vadd.f32 %v3389, %v3459
      %v3492 = vadd.f32 %v3390, %v3460
      %v3493 = vadd.f32 %v3391, %v3461
      %v3494 = vadd.f32 %v3392, %v3462
      %v3495 = vadd.f32 %v3393, %v3463
      %v3496 = vadd.f32 %v3394, %v3464
      %v3497 = vadd.f32 %v3395, %v3465
      %v3498 = vadd.f32 %v3396, %v3466
      %v3499 = vadd.f32 %v3397, %v3467
      %v3500 = vadd.f32 %v3398, %v3468
      %v3501 = vadd.f32 %v3399, %v3469
      %v3502 = vadd.f32 %v3400, %v3470
      %v3503 = vadd.f32 %v3401, %v3471
      %v3504 = vld [vmem:[%s1217 + $0x1] sm:$0xff]
      %v3505 = vld [vmem:[%s1217 + $0x9] sm:$0xff]
      %v3506 = vld [vmem:[%s1217 + $0x19] sm:$0xff]
      %v3507 = vld [vmem:[%s1217 + $0x21] sm:$0xff]
      %v3508 = vld [vmem:[%s1217 + $0x31] sm:$0xff]
      %v3509 = vld [vmem:[%s1217 + $0x39] sm:$0xff]
      %v3510 = vld [vmem:[%s1217 + $0x49] sm:$0xff]
      %v3511 = vld [vmem:[%s1217 + $0x51] sm:$0xff]
      %v3512 = vld [vmem:[%s1217 + $0x61] sm:$0xff]
      %v3513 = vld [vmem:[%s1217 + $0x69] sm:$0xff]
      %v3514 = vld [vmem:[%s1217 + $0x79] sm:$0xff]
      %v3515 = vld [vmem:[%s1217 + $0x81] sm:$0xff]
      %v3516 = vld [vmem:[%s1217 + $0x91] sm:$0xff]
      %v3517 = vld [vmem:[%s1217 + $0x99] sm:$0xff]
      %v3518 = vld [vmem:[%s1217 + $0xa9] sm:$0xff]
      %v3519 = vld [vmem:[%s1217 + $0xb1] sm:$0xff]
      %v3520 = vld [vmem:[%s1217 + $0xc1] sm:$0xff]
      %v3521 = vld [vmem:[%s1217 + $0xc9] sm:$0xff]
      %v3522 = vld [vmem:[%s1217 + $0xd9] sm:$0xff]
      %v3523 = vld [vmem:[%s1217 + $0xe1] sm:$0xff]
      %v3524 = vld [vmem:[%s1217 + $0xf1] sm:$0xff]
      %v3525 = vld [vmem:[%s1217 + $0xf9] sm:$0xff]
      %v3526 = vld [vmem:[%s1217 + $0x109] sm:$0xff]
      %v3527 = vld [vmem:[%s1217 + $0x111] sm:$0xff]
      %v3528 = vld [vmem:[%s1217 + $0x121] sm:$0xff]
      %v3529 = vld [vmem:[%s1217 + $0x129] sm:$0xff]
      %v3530 = vld [vmem:[%s1217 + $0x139] sm:$0xff]
      %v3531 = vld [vmem:[%s1217 + $0x141] sm:$0xff]
      %v3532 = vld [vmem:[%s1217 + $0x151] sm:$0xff]
      %v3533 = vld [vmem:[%s1217 + $0x159] sm:$0xff]
      %v3534 = vld [vmem:[%s1217 + $0x169] sm:$0xff]
      %v3535 = vld [vmem:[%s1217 + $0x171] sm:$0xff]
      %v3536 = vld [vmem:[%s3434 + $0x1] sm:$0x1]
      %v3537 = vlaneseq
      %v3538 = vshrl.u32 %v3537, 7
      %v3539 = vsub.s32 0, %v3538
      %v3540 = vrot.slane %v3536, %v3539
      %v3541 = vmul.f32 %v3504, %v3540
      %v3542 = vmul.f32 %v3505, %v3540
      %v3543 = vmul.f32 %v3506, %v3540
      %v3544 = vmul.f32 %v3507, %v3540
      %v3545 = vmul.f32 %v3508, %v3540
      %v3546 = vmul.f32 %v3509, %v3540
      %v3547 = vmul.f32 %v3510, %v3540
      %v3548 = vmul.f32 %v3511, %v3540
      %v3549 = vmul.f32 %v3512, %v3540
      %v3550 = vmul.f32 %v3513, %v3540
      %v3551 = vmul.f32 %v3514, %v3540
      %v3552 = vmul.f32 %v3515, %v3540
      %v3553 = vmul.f32 %v3516, %v3540
      %v3554 = vmul.f32 %v3517, %v3540
      %v3555 = vmul.f32 %v3518, %v3540
      %v3556 = vmul.f32 %v3519, %v3540
      %v3557 = vmul.f32 %v3520, %v3540
      %v3558 = vmul.f32 %v3521, %v3540
      %v3559 = vmul.f32 %v3522, %v3540
      %v3560 = vmul.f32 %v3523, %v3540
      %v3561 = vmul.f32 %v3524, %v3540
      %v3562 = vmul.f32 %v3525, %v3540
      %v3563 = vmul.f32 %v3526, %v3540
      %v3564 = vmul.f32 %v3527, %v3540
      %v3565 = vmul.f32 %v3528, %v3540
      %v3566 = vmul.f32 %v3529, %v3540
      %v3567 = vmul.f32 %v3530, %v3540
      %v3568 = vmul.f32 %v3531, %v3540
      %v3569 = vmul.f32 %v3532, %v3540
      %v3570 = vmul.f32 %v3533, %v3540
      %v3571 = vmul.f32 %v3534, %v3540
      %v3572 = vmul.f32 %v3535, %v3540
      %v3573 = vadd.f32 %v3472, %v3541
      %v3574 = vadd.f32 %v3473, %v3542
      %v3575 = vadd.f32 %v3474, %v3543
      %v3576 = vadd.f32 %v3475, %v3544
      %v3577 = vadd.f32 %v3476, %v3545
      %v3578 = vadd.f32 %v3477, %v3546
      %v3579 = vadd.f32 %v3478, %v3547
      %v3580 = vadd.f32 %v3479, %v3548
      %v3581 = vadd.f32 %v3480, %v3549
      %v3582 = vadd.f32 %v3481, %v3550
      %v3583 = vadd.f32 %v3482, %v3551
      %v3584 = vadd.f32 %v3483, %v3552
      %v3585 = vadd.f32 %v3484, %v3553
      %v3586 = vadd.f32 %v3485, %v3554
      %v3587 = vadd.f32 %v3486, %v3555
      %v3588 = vadd.f32 %v3487, %v3556
      %v3589 = vadd.f32 %v3488, %v3557
      %v3590 = vadd.f32 %v3489, %v3558
      %v3591 = vadd.f32 %v3490, %v3559
      %v3592 = vadd.f32 %v3491, %v3560
      %v3593 = vadd.f32 %v3492, %v3561
      %v3594 = vadd.f32 %v3493, %v3562
      %v3595 = vadd.f32 %v3494, %v3563
      %v3596 = vadd.f32 %v3495, %v3564
      %v3597 = vadd.f32 %v3496, %v3565
      %v3598 = vadd.f32 %v3497, %v3566
      %v3599 = vadd.f32 %v3498, %v3567
      %v3600 = vadd.f32 %v3499, %v3568
      %v3601 = vadd.f32 %v3500, %v3569
      %v3602 = vadd.f32 %v3501, %v3570
      %v3603 = vadd.f32 %v3502, %v3571
      %v3604 = vadd.f32 %v3503, %v3572
      %v3605 = vld [vmem:[%s1217 + $0x2] sm:$0xff]
      %v3606 = vld [vmem:[%s1217 + $0xa] sm:$0xff]
      %v3607 = vld [vmem:[%s1217 + $0x1a] sm:$0xff]
      %v3608 = vld [vmem:[%s1217 + $0x22] sm:$0xff]
      %v3609 = vld [vmem:[%s1217 + $0x32] sm:$0xff]
      %v3610 = vld [vmem:[%s1217 + $0x3a] sm:$0xff]
      %v3611 = vld [vmem:[%s1217 + $0x4a] sm:$0xff]
      %v3612 = vld [vmem:[%s1217 + $0x52] sm:$0xff]
      %v3613 = vld [vmem:[%s1217 + $0x62] sm:$0xff]
      %v3614 = vld [vmem:[%s1217 + $0x6a] sm:$0xff]
      %v3615 = vld [vmem:[%s1217 + $0x7a] sm:$0xff]
      %v3616 = vld [vmem:[%s1217 + $0x82] sm:$0xff]
      %v3617 = vld [vmem:[%s1217 + $0x92] sm:$0xff]
      %v3618 = vld [vmem:[%s1217 + $0x9a] sm:$0xff]
      %v3619 = vld [vmem:[%s1217 + $0xaa] sm:$0xff]
      %v3620 = vld [vmem:[%s1217 + $0xb2] sm:$0xff]
      %v3621 = vld [vmem:[%s1217 + $0xc2] sm:$0xff]
      %v3622 = vld [vmem:[%s1217 + $0xca] sm:$0xff]
      %v3623 = vld [vmem:[%s1217 + $0xda] sm:$0xff]
      %v3624 = vld [vmem:[%s1217 + $0xe2] sm:$0xff]
      %v3625 = vld [vmem:[%s1217 + $0xf2] sm:$0xff]
      %v3626 = vld [vmem:[%s1217 + $0xfa] sm:$0xff]
      %v3627 = vld [vmem:[%s1217 + $0x10a] sm:$0xff]
      %v3628 = vld [vmem:[%s1217 + $0x112] sm:$0xff]
      %v3629 = vld [vmem:[%s1217 + $0x122] sm:$0xff]
      %v3630 = vld [vmem:[%s1217 + $0x12a] sm:$0xff]
      %v3631 = vld [vmem:[%s1217 + $0x13a] sm:$0xff]
      %v3632 = vld [vmem:[%s1217 + $0x142] sm:$0xff]
      %v3633 = vld [vmem:[%s1217 + $0x152] sm:$0xff]
      %v3634 = vld [vmem:[%s1217 + $0x15a] sm:$0xff]
      %v3635 = vld [vmem:[%s1217 + $0x16a] sm:$0xff]
      %v3636 = vld [vmem:[%s1217 + $0x172] sm:$0xff]
      %v3637 = vld [vmem:[%s3434 + $0x2] sm:$0x1]
      %v3638 = vlaneseq
      %v3639 = vshrl.u32 %v3638, 7
      %v3640 = vsub.s32 0, %v3639
      %v3641 = vrot.slane %v3637, %v3640
      %v3642 = vmul.f32 %v3605, %v3641
      %v3643 = vmul.f32 %v3606, %v3641
      %v3644 = vmul.f32 %v3607, %v3641
      %v3645 = vmul.f32 %v3608, %v3641
      %v3646 = vmul.f32 %v3609, %v3641
      %v3647 = vmul.f32 %v3610, %v3641
      %v3648 = vmul.f32 %v3611, %v3641
      %v3649 = vmul.f32 %v3612, %v3641
      %v3650 = vmul.f32 %v3613, %v3641
      %v3651 = vmul.f32 %v3614, %v3641
      %v3652 = vmul.f32 %v3615, %v3641
      %v3653 = vmul.f32 %v3616, %v3641
      %v3654 = vmul.f32 %v3617, %v3641
      %v3655 = vmul.f32 %v3618, %v3641
      %v3656 = vmul.f32 %v3619, %v3641
      %v3657 = vmul.f32 %v3620, %v3641
      %v3658 = vmul.f32 %v3621, %v3641
      %v3659 = vmul.f32 %v3622, %v3641
      %v3660 = vmul.f32 %v3623, %v3641
      %v3661 = vmul.f32 %v3624, %v3641
      %v3662 = vmul.f32 %v3625, %v3641
      %v3663 = vmul.f32 %v3626, %v3641
      %v3664 = vmul.f32 %v3627, %v3641
      %v3665 = vmul.f32 %v3628, %v3641
      %v3666 = vmul.f32 %v3629, %v3641
      %v3667 = vmul.f32 %v3630, %v3641
      %v3668 = vmul.f32 %v3631, %v3641
      %v3669 = vmul.f32 %v3632, %v3641
      %v3670 = vmul.f32 %v3633, %v3641
      %v3671 = vmul.f32 %v3634, %v3641
      %v3672 = vmul.f32 %v3635, %v3641
      %v3673 = vmul.f32 %v3636, %v3641
      %v3674 = vadd.f32 %v3573, %v3642
      %v3675 = vadd.f32 %v3574, %v3643
      %v3676 = vadd.f32 %v3575, %v3644
      %v3677 = vadd.f32 %v3576, %v3645
      %v3678 = vadd.f32 %v3577, %v3646
      %v3679 = vadd.f32 %v3578, %v3647
      %v3680 = vadd.f32 %v3579, %v3648
      %v3681 = vadd.f32 %v3580, %v3649
      %v3682 = vadd.f32 %v3581, %v3650
      %v3683 = vadd.f32 %v3582, %v3651
      %v3684 = vadd.f32 %v3583, %v3652
      %v3685 = vadd.f32 %v3584, %v3653
      %v3686 = vadd.f32 %v3585, %v3654
      %v3687 = vadd.f32 %v3586, %v3655
      %v3688 = vadd.f32 %v3587, %v3656
      %v3689 = vadd.f32 %v3588, %v3657
      %v3690 = vadd.f32 %v3589, %v3658
      %v3691 = vadd.f32 %v3590, %v3659
      %v3692 = vadd.f32 %v3591, %v3660
      %v3693 = vadd.f32 %v3592, %v3661
      %v3694 = vadd.f32 %v3593, %v3662
      %v3695 = vadd.f32 %v3594, %v3663
      %v3696 = vadd.f32 %v3595, %v3664
      %v3697 = vadd.f32 %v3596, %v3665
      %v3698 = vadd.f32 %v3597, %v3666
      %v3699 = vadd.f32 %v3598, %v3667
      %v3700 = vadd.f32 %v3599, %v3668
      %v3701 = vadd.f32 %v3600, %v3669
      %v3702 = vadd.f32 %v3601, %v3670
      %v3703 = vadd.f32 %v3602, %v3671
      %v3704 = vadd.f32 %v3603, %v3672
      %v3705 = vadd.f32 %v3604, %v3673
      %v3706 = vpack.c.bf16 %v3675, %v3674
      %v3707 = vpack.c.bf16 %v3677, %v3676
      %v3708 = vpack.c.bf16 %v3679, %v3678
      %v3709 = vpack.c.bf16 %v3681, %v3680
      %v3710 = vpack.c.bf16 %v3683, %v3682
      %v3711 = vpack.c.bf16 %v3685, %v3684
      %v3712 = vpack.c.bf16 %v3687, %v3686
      %v3713 = vpack.c.bf16 %v3689, %v3688
      %v3714 = vpack.c.bf16 %v3691, %v3690
      %v3715 = vpack.c.bf16 %v3693, %v3692
      %v3716 = vpack.c.bf16 %v3695, %v3694
      %v3717 = vpack.c.bf16 %v3697, %v3696
      %v3718 = vpack.c.bf16 %v3699, %v3698
      %v3719 = vpack.c.bf16 %v3701, %v3700
      %v3720 = vpack.c.bf16 %v3703, %v3702
      %v3721 = vpack.c.bf16 %v3705, %v3704
      %v3722 = vld [vmem:[%s5] sm:$0xf]
      %v3723 = vld [vmem:[%s5 + $0x4] sm:$0xf]
      %v3724 = vld [vmem:[%s6] sm:$0xff]
      %v3725 = vld [vmem:[%s6 + $0x8] sm:$0xff]
      %3727 = vset.pattern.permute.xlu0 0
      %3728 = vperm.xlu0 %3727, %v3724
      %v3729 = vpop.permute.xlu0 %3728
      %3732 = vset.pattern.permute.xlu0 0
      %3733 = vperm.xlu0 %3732, %v3725
      %v3734 = vpop.permute.xlu0 %3733
      %v3738 = vunpack.c.l.b16 %v3722
      %v3739 = vunpack.c.l.b16 %v3723
      %v3740 = vpack.c.b16 %v3739, %v3738
      %v3742 = vsel %vm300, %v3740, 0
      %v3745 = vsel %vm300, %v3706, 0
      %v3748 = vsel %vm300, %v3707, 0
      %v3751 = vsel %vm300, %v3708, 0
      %v3754 = vsel %vm300, %v3709, 0
      %v3757 = vsel %vm300, %v3710, 0
      %v3760 = vsel %vm300, %v3711, 0
      %v3763 = vsel %vm300, %v3712, 0
      %v3766 = vsel %vm300, %v3713, 0
      %v3769 = vsel %vm300, %v3714, 0
      %v3772 = vsel %vm300, %v3715, 0
      %v3775 = vsel %vm300, %v3716, 0
      %v3778 = vsel %vm300, %v3717, 0
      %v3781 = vsel %vm300, %v3718, 0
      %v3784 = vsel %vm300, %v3719, 0
      %v3787 = vsel %vm300, %v3720, 0
      %v3790 = vsel %vm300, %v3721, 0
      %3792 = vmatprep.subr.bf16.mxu0 0
      %3793 = vmatpush1.bf16.xpose.msra.mxu0 %v3766
      %3794 = vmatprep.subr.bf16.mxu0 0
      %3795 = vmatpush1.bf16.xpose.msra.mxu0 %v3763
      %3796 = vmatprep.subr.bf16.mxu0 0
      %3797 = vmatpush1.bf16.xpose.msra.mxu0 %v3760
      %3798 = vmatprep.subr.bf16.mxu0 0
      %3799 = vmatpush1.bf16.xpose.msra.mxu0 %v3757
      %3800 = vmatprep.subr.bf16.mxu0 0
      %3801 = vmatpush1.bf16.xpose.msra.mxu0 %v3754
      %3802 = vmatprep.subr.bf16.mxu0 0
      %3803 = vmatpush1.bf16.xpose.msra.mxu0 %v3751
      %3804 = vmatprep.subr.bf16.mxu0 0
      %3805 = vmatpush1.bf16.xpose.msra.mxu0 %v3748
      %3806 = vmatprep.subr.bf16.mxu0 0
      %3807 = vmatpush1.bf16.xpose.msra.mxu0 %v3745
      %3808 = vmatprep.subr.bf16.mxu0 0
      %3809 = vmatpush2.bf16.xpose.msra.mxu0 %v3790
      %3810 = vmatprep.subr.bf16.mxu0 0
      %3811 = vmatpush2.bf16.xpose.msra.mxu0 %v3787
      %3812 = vmatprep.subr.bf16.mxu0 0
      %3813 = vmatpush2.bf16.xpose.msra.mxu0 %v3784
      %3814 = vmatprep.subr.bf16.mxu0 0
      %3815 = vmatpush2.bf16.xpose.msra.mxu0 %v3781
      %3816 = vmatprep.subr.bf16.mxu0 0
      %3817 = vmatpush2.bf16.xpose.msra.mxu0 %v3778
      %3818 = vmatprep.subr.bf16.mxu0 0
      %3819 = vmatpush2.bf16.xpose.msra.mxu0 %v3775
      %3820 = vmatprep.subr.bf16.mxu0 0
      %3821 = vmatpush2.bf16.xpose.msra.mxu0 %v3772
      %3822 = vmatprep.subr.bf16.mxu0 0
      %3823 = vmatpush2.bf16.xpose.msra.mxu0 %v3769
      %3824 = vmatprep.mubr.bf16.mxu0 0
      %3825 = vmatmul.mubr.bf16.gmra.mxu0 %v3742
      %v3826 = vpop.f32.mrf.mxu0
      %v3827 = vadd.f32 %v3729, %v3826
      %v3828 = vpop.f32.mrf.mxu0
      %v3829 = vadd.f32 %v3729, %v3828
      %v3830 = vpop.f32.mrf.mxu0
      %v3831 = vadd.f32 %v3734, %v3830
      %v3832 = vpop.f32.mrf.mxu0
      %v3833 = vadd.f32 %v3734, %v3832
      %3834 = vdwg.mxu0
      %v3835 = vpack.c.bf16 %v3831, %v3827
      %v3836 = vpack.c.bf16 %v3833, %v3829
      %v3839 = vunpack.c.l.b16 %v3835
      %v3840 = vunpack.c.l.b16 %v3836
      %v3841 = vunpack.c.h.b16 %v3835
      %v3842 = vunpack.c.h.b16 %v3836
      %v3843 = vpack.c.b16 %v3840, %v3839
      %v3844 = vpack.c.b16 %v3842, %v3841
      %3847 = vst [vmem:[%s298] sm:$0xff] %v3843
      %3848 = vst [vmem:[%s298 + $0x8] sm:$0xff] %v3844
      %p3849 = scmp.lt.s32.totalorder %s18, 1
      %s3850 = scalar_select %p3849, %s18, 1
      %s3851 = smul.addr %s3850, 4
      %s3852 = smul.addr %s3851, 4
      %s3853 = scalar_lea.vmem %s7, %s3852
      // Predicated region
      $region49: #{mixer_forward.5} parent=47 // pred_check
        %p3854 = pneg %p193
      $region50: #{mixer_forward.5} parent=47 // pred_check_branch
        %3856 = sbr.rel (%p3854) target = $region52
      $region51: #{mixer_forward.5} parent=47 // pred_region
        _
      $region52: #{mixer_forward.5} parent=47 // pred_fallthru
        _
    $region48: #{mixer_forward.5} parent=5 // pred_fallthru
      _
    %p3857 = scmp.le.s32.totalorder 2, %s13
    // Predicated region
    $region53: #{mixer_forward.5} parent=5 // pred_check
      %p3858 = pneg %p3857
    $region54: #{mixer_forward.5} parent=5 // pred_check_branch
      %3860 = sbr.rel (%p3858) target = $region56
    $region55: #{mixer_forward.5} parent=5 // pred_region
      %s3861 = ssub.s32 %s13, 2
      // Predicated region
      $region57: #{mixer_forward.5} parent=55 // pred_check
        %p3862 = pneg %p199
      $region58: #{mixer_forward.5} parent=55 // pred_check_branch
        %3864 = sbr.rel (%p3862) target = $region60
      $region59: #{mixer_forward.5} parent=55 // pred_region
        %p3865 = scmp.lt.s32.totalorder %s19, 1
        %s3866 = scalar_select %p3865, %s19, 1
        %s3867 = smul.addr %s3866, 4
        %s3868 = smul.addr %s3867, 4
        %s3869 = scalar_lea.vmem %s7, %s3868
      $region60: #{mixer_forward.5} parent=55 // pred_fallthru
        _
    $region56: #{mixer_forward.5} parent=5 // pred_fallthru
      _
  $region6: #{mixer_forward.5} parent=0 // loop_footer
    %s17 = sadd.s32 1, %s13
  $region7: #{mixer_forward.5} parent=0 // loop_footer_branch
    %12 = sbr.rel target = $region3
  $region8: #{mixer_forward.5} parent=0 // loop_exit
    _

</llo_original>
